<compile_context>
chip_gen: v7x
topology: tpu7x:2x2x1
jax: 0.10.0
libtpu: 0.0.40
codegen_flags: <defaults>
</compile_context>

<pallas_src>
import functools

import jax
import jax.numpy as jnp
from jax.experimental import pallas as pl
from jax.experimental.pallas import tpu as pltpu

EPS = 1e-5
_BF16 = jnp.bfloat16


# ----------------------------------------------------------------------------
# Small helpers: compiler params / tile selection
# ----------------------------------------------------------------------------
def _vmem_limit_bytes():
    """Explicit scoped-VMEM limit (3/4 of physical), per-generation (v7x has 64 MiB)."""
    try:
        cap = int(getattr(pltpu.get_tpu_info(), "vmem_capacity_bytes"))
        if cap <= 16 * 1024 * 1024:
            return None
        return min((cap * 3) // 4, 100 * 1024 * 1024)
    except Exception:
        return None


def _compiler_params(dim_sem):
    kw = dict(dimension_semantics=dim_sem)
    v = _vmem_limit_bytes()
    if v is not None:
        kw["vmem_limit_bytes"] = v
    return pltpu.CompilerParams(**kw)


def _pick_tile(hw, row_bytes):
    """Largest spatial tile (multiple of 16 rows, dividing hw) that keeps the per-step
    working set around a few MiB so double-buffered tiles fit even v7x's 64 MiB VMEM."""
    budget = 4 * 1024 * 1024
    max_rows = int(min(2048, max(128, budget // max(int(row_bytes), 1))))
    if hw <= max_rows:
        return hw
    t = (max_rows // 16) * 16
    while t >= 16:
        if hw % t == 0:
            return t
        t -= 16
    return hw  # fallback: no tiling (always correct)


# ----------------------------------------------------------------------------
# Kernel 1: fused [optional GN-affine + ReLU prologue] -> bf16 matmul (branches summed)
#           -> bf16 pre-activation + per-channel GN statistics (accumulated over HW tiles)
# ----------------------------------------------------------------------------
def _mm_stats_kernel(*refs, branch_has_norm):
    n_in = sum(2 + 2 * int(h) for h in branch_has_norm)
    o_ref, s1_ref, s2_ref = refs[n_in], refs[n_in + 1], refs[n_in + 2]

    @pl.when(pl.program_id(1) == 0)
    def _():
        s1_ref[...] = jnp.zeros_like(s1_ref)
        s2_ref[...] = jnp.zeros_like(s2_ref)

    y = None
    idx = 0
    for has_norm in branch_has_norm:
        x_ref, w_ref = refs[idx], refs[idx + 1]
        idx += 2
        if has_norm:
            sc_ref, sh_ref = refs[idx], refs[idx + 1]
            idx += 2
            # previous layer's GroupNorm (pre-folded per-channel affine) + ReLU, in f32
            x = x_ref[0].astype(jnp.float32)
            x = jnp.maximum(x * sc_ref[0] + sh_ref[0], 0.0).astype(_BF16)
        else:
            x = x_ref[0]                                   # already-activated bf16 input
        part = jnp.dot(x, w_ref[...], preferred_element_type=jnp.float32)  # (T, C) f32
        y = part if y is None else y + part

    o_ref[0] = y.astype(o_ref.dtype)
    # GroupNorm statistics for *this* layer's output, accumulated across spatial tiles.
    s1_ref[0] += jnp.sum(y, axis=0, keepdims=True)
    s2_ref[0] += jnp.sum(y * y, axis=0, keepdims=True)


def conv1x1_stats(branches):
    """branches: list of (x:(N,HW,K), w:(K,C), scale:(N,1,K)|None, shift:(N,1,K)|None).
    Branch results are SUMMED (all share C).  Returns:
      pre-activation (N, HW, C) bf16,  s1, s2 per-channel sums (N, 1, C) f32."""
    N, HW, _ = branches[0][0].shape
    c_total = int(branches[0][1].shape[1])
    k_total = sum(int(b[0].shape[2]) for b in branches)
    T = _pick_tile(HW, 2 * k_total + 6 * c_total)
    grid = (N, HW // T)

    in_specs, args, has_norm = [], [], []
    for x, w, scale, shift in branches:
        K, Cb = int(w.shape[0]), int(w.shape[1])
        assert Cb == c_total
        in_specs.append(pl.BlockSpec((1, T, K), lambda n, t: (n, t, 0)))
        args.append(x.astype(_BF16))
        in_specs.append(pl.BlockSpec((K, Cb), lambda n, t: (0, 0)))
        args.append(jnp.asarray(w).astype(_BF16))
        if scale is not None:
            in_specs.append(pl.BlockSpec((1, 1, K), lambda n, t: (n, 0, 0)))
            args.append(scale.astype(jnp.float32))
            in_specs.append(pl.BlockSpec((1, 1, K), lambda n, t: (n, 0, 0)))
            args.append(shift.astype(jnp.float32))
            has_norm.append(True)
        else:
            has_norm.append(False)

    kernel = functools.partial(_mm_stats_kernel, branch_has_norm=tuple(has_norm))
    out_shape = (jax.ShapeDtypeStruct((N, HW, c_total), _BF16),
                 jax.ShapeDtypeStruct((N, 1, c_total), jnp.float32),
                 jax.ShapeDtypeStruct((N, 1, c_total), jnp.float32))
    out_specs = (pl.BlockSpec((1, T, c_total), lambda n, t: (n, t, 0)),
                 pl.BlockSpec((1, 1, c_total), lambda n, t: (n, 0, 0)),
                 pl.BlockSpec((1, 1, c_total), lambda n, t: (n, 0, 0)))
    return pl.pallas_call(
        kernel,
        grid=grid,
        in_specs=in_specs,
        out_specs=out_specs,
        out_shape=out_shape,
        compiler_params=_compiler_params(("parallel", "arbitrary")),
    )(*args)


# ----------------------------------------------------------------------------
# Kernel 2: GN (per-channel affine) + ReLU [+ residual], used only where the activation
#           must be materialized (before im2col, residual adds, final output).
# ----------------------------------------------------------------------------
def _scale_act_kernel(*refs, res_mode):
    x_ref, sc_ref, sh_ref = refs[0], refs[1], refs[2]
    idx = 3
    y = jnp.maximum(x_ref[0].astype(jnp.float32) * sc_ref[0] + sh_ref[0], 0.0)
    if res_mode == "plain":
        y = y + refs[idx][0].astype(jnp.float32)
        idx += 1
    elif res_mode == "norm":
        r_ref, rsc_ref, rsh_ref = refs[idx], refs[idx + 1], refs[idx + 2]
        idx += 3
        y = y + jnp.maximum(r_ref[0].astype(jnp.float32) * rsc_ref[0] + rsh_ref[0], 0.0)
    o_ref = refs[idx]
    o_ref[0] = y.astype(o_ref.dtype)


def gn_act(x_pre, scale, shift, residual=None, res_scale=None, res_shift=None,
           out_dtype=_BF16):
    N, HW, C = x_pre.shape
    T = _pick_tile(HW, 12 * C)
    grid = (N, HW // T)
    tile = pl.BlockSpec((1, T, C), lambda n, t: (n, t, 0))
    vec = pl.BlockSpec((1, 1, C), lambda n, t: (n, 0, 0))

    in_specs = [tile, vec, vec]
    args = [x_pre.astype(_BF16), scale.astype(jnp.float32), shift.astype(jnp.float32)]
    if residual is None:
        res_mode = "none"
    elif res_scale is None:
        res_mode = "plain"
        in_specs.append(tile)
        args.append(residual.astype(_BF16))
    else:
        res_mode = "norm"
        in_specs += [tile, vec, vec]
        args += [residual.astype(_BF16), res_scale.astype(jnp.float32),
                 res_shift.astype(jnp.float32)]

    kernel = functools.partial(_scale_act_kernel, res_mode=res_mode)
    return pl.pallas_call(
        kernel,
        grid=grid,
        in_specs=in_specs,
        out_specs=pl.BlockSpec((1, T, C), lambda n, t: (n, t, 0)),
        out_shape=jax.ShapeDtypeStruct((N, HW, C), out_dtype),
        compiler_params=_compiler_params(("parallel", "parallel")),
    )(*args)


# ----------------------------------------------------------------------------
# XLA glue: fold GroupNorm (group reduction of the tiny per-channel stats, eps, gamma,
# beta) into a per-channel affine scale/shift.  Matches PyTorch GN (biased variance).
# ----------------------------------------------------------------------------
def gn_affine(s1, s2, gamma, beta, num_groups, hw):
    N, _, C = s1.shape
    G = num_groups
    Cg = C // G
    cnt = float(hw * Cg)
    s1g = jnp.sum(s1.reshape(N, G, Cg), axis=-1, keepdims=True)     # (N, G, 1)
    s2g = jnp.sum(s2.reshape(N, G, Cg), axis=-1, keepdims=True)
    mean = s1g / cnt
    var = jnp.maximum(s2g / cnt - mean * mean, 0.0)                 # clamp >= 0
    inv = jax.lax.rsqrt(var + EPS)
    mean_c = jnp.broadcast_to(mean, (N, G, Cg)).reshape(N, 1, C)
    inv_c = jnp.broadcast_to(inv, (N, G, Cg)).reshape(N, 1, C)
    g = jnp.asarray(gamma, jnp.float32).reshape(1, 1, C)
    b = jnp.asarray(beta, jnp.float32).reshape(1, 1, C)
    scale = g * inv_c
    shift = b - mean_c * scale
    return scale, shift


# ----------------------------------------------------------------------------
# JAX glue: im2col for 3x3 convs (padding=1), PyTorch window placement, dtype-preserving.
# TODO(synk): replace with in-kernel halo-row DMAs (9 shifted matmuls) to avoid the 9x
#             patch materialization in HBM.
# ----------------------------------------------------------------------------
def im2col_3x3(x_nhwc, stride):
    N, H, W, C = x_nhwc.shape
    xp = jnp.pad(x_nhwc, ((0, 0), (1, 1), (1, 1), (0, 0)))
    Ho = (H + 2 - 3) // stride + 1
    Wo = (W + 2 - 3) // stride + 1
    cols = []
    for dy in range(3):
        for dx in range(3):
            cols.append(xp[:, dy:dy + (Ho - 1) * stride + 1:stride,
                           dx:dx + (Wo - 1) * stride + 1:stride, :])
    patches = jnp.concatenate(cols, axis=-1)           # (N, Ho, Wo, 9*C)
    return patches.reshape(N, Ho * Wo, 9 * C), Ho, Wo


# ----------------------------------------------------------------------------
# Parameters (deterministic synthetic init).  3x3 weights (3,3,Cin,Cout), 1x1 as (Cin,Cout).
# ----------------------------------------------------------------------------
def init_params(key, ch_in, ch_out, num_reps):
    hidden = int(ch_out * 0.5)
    keys = iter(jax.random.split(key, 16 + 8 * max(num_reps, 1)))

    def w(shape, scale=0.2):
        return scale * jax.random.normal(next(keys), shape, jnp.float32)

    def gn(c):
        return (1.0 + 0.1 * jax.random.normal(next(keys), (c,), jnp.float32),
                0.1 * jax.random.normal(next(keys), (c,), jnp.float32))

    p = {}
    p['w_ds'] = w((3, 3, ch_in, ch_out))            # downsample 3x3 s2
    p['g_ds'], p['b_ds'] = gn(ch_out)
    p['w_b1'] = w((ch_out, hidden))                 # bottleneck_conv1 (ConvNormAct 1x1)
    p['g_b1'], p['b_b1'] = gn(hidden)
    p['w_b2'] = w((ch_out, hidden))                 # bottleneck_conv2 (plain 1x1)
    p['w_c1'] = w((hidden, hidden))                 # conv1 (plain 1x1)
    p['g_n'], p['b_n'] = gn(2 * hidden)             # norm on concat
    p['w_c2'] = w((2 * hidden, ch_out))             # conv2 (ConvNormAct 1x1)
    p['g_c2'], p['b_c2'] = gn(ch_out)
    p['res'] = []
    for _ in range(num_reps):
        r = {}
        r['w1'] = w((hidden, hidden))               # ResidualBlock 1x1
        r['g1'], r['b1'] = gn(hidden)
        r['w2'] = w((3, 3, hidden, hidden))         # ResidualBlock 3x3
        r['g2'], r['b2'] = gn(hidden)
        p['res'].append(r)
    return p


# ----------------------------------------------------------------------------
# CSPDark forward (Pallas)
# ----------------------------------------------------------------------------
def csp_dark_forward(x_nchw, params, num_groups, num_reps):
    G = num_groups
    ch_out = params['w_ds'].shape[-1]
    h = ch_out // 2
    x = jnp.transpose(x_nchw, (0, 2, 3, 1)).astype(_BF16)           # NCHW -> NHWC (bf16)
    N, H, W, cin = x.shape

    # downsample: ConvNormAct 3x3 / stride 2 / pad 1
    patches, Ho, Wo = im2col_3x3(x, stride=2)
    HW = Ho * Wo
    d_pre, s1, s2 = conv1x1_stats([(patches, params['w_ds'].reshape(9 * cin, ch_out),
                                    None, None)])
    d_sc, d_sh = gn_affine(s1, s2, params['g_ds'], params['b_ds'], G, HW)

    # CSP bottleneck_conv1 (ConvNormAct 1x1); GN+ReLU of d fused into the matmul prologue.
    x1_pre, s1, s2 = conv1x1_stats([(d_pre, params['w_b1'], d_sc, d_sh)])
    x1_sc, x1_sh = gn_affine(s1, s2, params['g_b1'], params['b_b1'], G, HW)

    # residual blocks
    cur = None                                       # materialized x2 (after 1st block)
    for r in range(num_reps):
        p = params['res'][r]
        if r == 0:
            t_pre, s1, s2 = conv1x1_stats([(x1_pre, p['w1'], x1_sc, x1_sh)])
        else:
            t_pre, s1, s2 = conv1x1_stats([(cur, p['w1'], None, None)])
        t_sc, t_sh = gn_affine(s1, s2, p['g1'], p['b1'], G, HW)
        t = gn_act(t_pre, t_sc, t_sh)                # materialize for im2col
        tp, _, _ = im2col_3x3(t.reshape(N, Ho, Wo, h), stride=1)
        u_pre, s1, s2 = conv1x1_stats([(tp, p['w2'].reshape(9 * h, h), None, None)])
        u_sc, u_sh = gn_affine(s1, s2, p['g2'], p['b2'], G, HW)
        if r == 0:                                   # residual base x1 normalized on the fly
            cur = gn_act(u_pre, u_sc, u_sh,
                         residual=x1_pre, res_scale=x1_sc, res_shift=x1_sh)
        else:
            cur = gn_act(u_pre, u_sc, u_sh, residual=cur)
    if cur is None:                                  # num_reps == 0
        cur = gn_act(x1_pre, x1_sc, x1_sh)

    # CSP tail: y = cat(conv1(x2), bottleneck_conv2(d)); act(norm(y)); conv2(...)
    # The concatenated tensor is never materialized: per-half stats feed one GN affine,
    # and conv2 is the sum of two half-K matmuls with the per-half affine in the prologue.
    y1, s1a, s2a = conv1x1_stats([(cur, params['w_c1'], None, None)])
    y2, s1b, s2b = conv1x1_stats([(d_pre, params['w_b2'], d_sc, d_sh)])
    s1 = jnp.concatenate([s1a, s1b], axis=-1)
    s2 = jnp.concatenate([s2a, s2b], axis=-1)
    y_sc, y_sh = gn_affine(s1, s2, params['g_n'], params['b_n'], G, HW)

    o_pre, s1, s2 = conv1x1_stats([
        (y1, params['w_c2'][:h], y_sc[:, :, :h], y_sh[:, :, :h]),
        (y2, params['w_c2'][h:], y_sc[:, :, h:], y_sh[:, :, h:]),
    ])
    o_sc, o_sh = gn_affine(s1, s2, params['g_c2'], params['b_c2'], G, HW)
    out = gn_act(o_pre, o_sc, o_sh, out_dtype=jnp.float32)

    return jnp.transpose(out.reshape(N, Ho, Wo, ch_out), (0, 3, 1, 2))   # -> NCHW


# ----------------------------------------------------------------------------
# Pure-JAX f32 reference (numerical validation)
# ----------------------------------------------------------------------------
def _ref_mm(x, w):
    return jnp.einsum('nsk,kc->nsc', x.astype(jnp.float32),
                      jnp.asarray(w, jnp.float32), precision='highest')


def _ref_gn_act(y, gamma, beta, G):
    N, HW, C = y.shape
    yg = y.reshape(N, HW, G, C // G)
    mean = yg.mean(axis=(1, 3), keepdims=True)
    var = yg.var(axis=(1, 3), keepdims=True)
    y = ((yg - mean) * jax.lax.rsqrt(var + EPS)).reshape(N, HW, C)
    y = y * gamma.reshape(1, 1, C) + beta.reshape(1, 1, C)
    return jnp.maximum(y, 0.0)


def csp_dark_reference(x_nchw, params, num_groups, num_reps):
    G = num_groups
    ch_out = params['w_ds'].shape[-1]
    h = ch_out // 2
    x = jnp.transpose(x_nchw, (0, 2, 3, 1)).astype(jnp.float32)
    N, H, W, cin = x.shape
    patches, Ho, Wo = im2col_3x3(x, 2)
    d = _ref_gn_act(_ref_mm(patches, params['w_ds'].reshape(9 * cin, ch_out)),
                    params['g_ds'], params['b_ds'], G)
    x1 = _ref_gn_act(_ref_mm(d, params['w_b1']), params['g_b1'], params['b_b1'], G)
    x2 = x1
    for r in range(num_reps):
        p = params['res'][r]
        t = _ref_gn_act(_ref_mm(x2, p['w1']), p['g1'], p['b1'], G)
        tp, _, _ = im2col_3x3(t.reshape(N, Ho, Wo, h), 1)
        x2 = x2 + _ref_gn_act(_ref_mm(tp, p['w2'].reshape(9 * h, h)), p['g2'], p['b2'], G)
    y1 = _ref_mm(x2, params['w_c1'])
    y2 = _ref_mm(d, params['w_b2'])
    y = _ref_gn_act(jnp.concatenate([y1, y2], axis=-1), params['g_n'], params['b_n'], G)
    out = _ref_gn_act(_ref_mm(y, params['w_c2']), params['g_c2'], params['b_c2'], G)
    return jnp.transpose(out.reshape(N, Ho, Wo, ch_out), (0, 3, 1, 2))


# ----------------------------------------------------------------------------
if __name__ == "__main__":
    ch_in, ch_out, num_reps, num_groups = 4, 8, 2, 2
    N, H, W = 2, 16, 16

    key = jax.random.PRNGKey(0)
    kx, kp = jax.random.split(key)
    x = jax.random.normal(kx, (N, ch_in, H, W), jnp.float32)
    params = init_params(kp, ch_in, ch_out, num_reps)

    fwd = jax.jit(csp_dark_forward, static_argnums=(2, 3))
    out = jax.block_until_ready(fwd(x, params, num_groups, num_reps))
    ref = jax.block_until_ready(csp_dark_reference(x, params, num_groups, num_reps))

    assert out.shape == (N, ch_out, H // 2, W // 2), out.shape
    assert bool(jnp.all(jnp.isfinite(out)))
    max_err = float(jnp.max(jnp.abs(out - ref)))
    rel_err = float(jnp.linalg.norm((out - ref).ravel()) /
                    (jnp.linalg.norm(ref.ravel()) + 1e-12))
    # bf16 matmuls / bf16 intermediate activations vs a pure-f32 reference.
    assert max_err < 1.5e-1 and rel_err < 3e-2, (max_err, rel_err)
    print("KERNEL_OK")
</pallas_src>

<mosaic_0001>
module attributes {stable_mosaic.version = 11 : i64} {
  func.func @_mm_stats_kernel(%arg0: i32, %arg1: i32, %arg2: memref<1x64x36xbf16, #tpu.memory_space<vmem>>, %arg3: memref<36x8xbf16, #tpu.memory_space<vmem>>, %arg4: memref<1x64x8xbf16, #tpu.memory_space<vmem>>, %arg5: memref<1x1x8xf32, #tpu.memory_space<vmem>>, %arg6: memref<1x1x8xf32, #tpu.memory_space<vmem>>) attributes {dimension_semantics = [#tpu.dimension_semantics<parallel>, #tpu.dimension_semantics<arbitrary>], iteration_bounds = array<i64: 2, 1>, scalar_prefetch = 0 : i64, scratch_operands = 0 : i64, tpu.core_type = #tpu.core_type<tc>, window_params = [{transform_indices = @transform_0, window_bounds = array<i64: 1, 64, 36>}, {pipeline_mode = #tpu.pipeline_mode<synchronous>, transform_indices = @transform_1, window_bounds = array<i64: 36, 8>}, {transform_indices = @transform_2, window_bounds = array<i64: 1, 64, 8>}, {transform_indices = @transform_3, window_bounds = array<i64: 1, 1, 8>}, {transform_indices = @transform_4, window_bounds = array<i64: 1, 1, 8>}]} {
    %c0_i32 = arith.constant 0 : i32
    %0 = arith.cmpi eq, %arg1, %c0_i32 : i32
    %1 = arith.extui %0 : i1 to i32
    %c0_i32_0 = arith.constant 0 : i32
    %2 = arith.cmpi ne, %1, %c0_i32_0 : i32
    scf.if %2 {
      %cst_22 = arith.constant 0.000000e+00 : f32
      %28 = vector.broadcast %cst_22 : f32 to vector<1x1x8xf32>
      %c0_23 = arith.constant 0 : index
      %c0_24 = arith.constant 0 : index
      %c0_25 = arith.constant 0 : index
      %29 = vector.load %arg5[%c0_23, %c0_24, %c0_25] : memref<1x1x8xf32, #tpu.memory_space<vmem>>, vector<1x1x8xf32>
      tpu.vector_store %arg5[%c0_23, %c0_24, %c0_25], %28 {strides = array<i32>} : memref<1x1x8xf32, #tpu.memory_space<vmem>>, vector<1x1x8xf32>,
      %cst_26 = arith.constant 0.000000e+00 : f32
      %30 = vector.broadcast %cst_26 : f32 to vector<1x1x8xf32>
      %c0_27 = arith.constant 0 : index
      %c0_28 = arith.constant 0 : index
      %c0_29 = arith.constant 0 : index
      %31 = vector.load %arg6[%c0_27, %c0_28, %c0_29] : memref<1x1x8xf32, #tpu.memory_space<vmem>>, vector<1x1x8xf32>
      tpu.vector_store %arg6[%c0_27, %c0_28, %c0_29], %30 {strides = array<i32>} : memref<1x1x8xf32, #tpu.memory_space<vmem>>, vector<1x1x8xf32>,
    } else {
    }
    %c0 = arith.constant 0 : index
    %c0_1 = arith.constant 0 : index
    %c0_2 = arith.constant 0 : index
    %3 = vector.load %arg2[%c0, %c0_1, %c0_2] : memref<1x64x36xbf16, #tpu.memory_space<vmem>>, vector<1x64x36xbf16>
    %4 = vector.shape_cast %3 : vector<1x64x36xbf16> to vector<64x36xbf16>
    %c0_3 = arith.constant 0 : index
    %c0_4 = arith.constant 0 : index
    %5 = vector.load %arg3[%c0_3, %c0_4] : memref<36x8xbf16, #tpu.memory_space<vmem>>, vector<36x8xbf16>
    %cst = arith.constant dense<0.000000e+00> : vector<64x8xf32>
    %6 = tpu.matmul %4, %5, %cst {dimension_numbers = #tpu.dot_dimension_numbers<[1], [0], [0], [1], [0, 0, 1, 1], [], []>} : vector<64x36xbf16>, vector<36x8xbf16>, vector<64x8xf32> -> vector<64x8xf32>
    %7 = arith.truncf %6 : vector<64x8xf32> to vector<64x8xbf16>
    %c0_5 = arith.constant 0 : index
    %c0_6 = arith.constant 0 : index
    %c0_7 = arith.constant 0 : index
    %8 = vector.load %arg4[%c0_5, %c0_6, %c0_7] : memref<1x64x8xbf16, #tpu.memory_space<vmem>>, vector<1x64x8xbf16>
    %9 = vector.shape_cast %8 : vector<1x64x8xbf16> to vector<64x8xbf16>
    %10 = vector.shape_cast %7 : vector<64x8xbf16> to vector<1x64x8xbf16>
    tpu.vector_store %arg4[%c0_5, %c0_6, %c0_7], %10 {strides = array<i32>} : memref<1x64x8xbf16, #tpu.memory_space<vmem>>, vector<1x64x8xbf16>,
    %c0_8 = arith.constant 0 : index
    %c0_9 = arith.constant 0 : index
    %c0_10 = arith.constant 0 : index
    %11 = vector.load %arg5[%c0_8, %c0_9, %c0_10] : memref<1x1x8xf32, #tpu.memory_space<vmem>>, vector<1x1x8xf32>
    %12 = vector.shape_cast %11 : vector<1x1x8xf32> to vector<1x8xf32>
    %cst_11 = arith.constant dense<0.000000e+00> : vector<8xf32>
    %13 = vector.multi_reduction <add>, %6, %cst_11 [0] : vector<64x8xf32> to vector<8xf32>
    %14 = vector.shape_cast %13 : vector<8xf32> to vector<1x8xf32>
    %15 = arith.addf %12, %14 : vector<1x8xf32>
    %c0_12 = arith.constant 0 : index
    %c0_13 = arith.constant 0 : index
    %c0_14 = arith.constant 0 : index
    %16 = vector.load %arg5[%c0_12, %c0_13, %c0_14] : memref<1x1x8xf32, #tpu.memory_space<vmem>>, vector<1x1x8xf32>
    %17 = vector.shape_cast %16 : vector<1x1x8xf32> to vector<1x8xf32>
    %18 = vector.shape_cast %15 : vector<1x8xf32> to vector<1x1x8xf32>
    tpu.vector_store %arg5[%c0_12, %c0_13, %c0_14], %18 {strides = array<i32>} : memref<1x1x8xf32, #tpu.memory_space<vmem>>, vector<1x1x8xf32>,
    %c0_15 = arith.constant 0 : index
    %c0_16 = arith.constant 0 : index
    %c0_17 = arith.constant 0 : index
    %19 = vector.load %arg6[%c0_15, %c0_16, %c0_17] : memref<1x1x8xf32, #tpu.memory_space<vmem>>, vector<1x1x8xf32>
    %20 = vector.shape_cast %19 : vector<1x1x8xf32> to vector<1x8xf32>
    %21 = arith.mulf %6, %6 : vector<64x8xf32>
    %cst_18 = arith.constant dense<0.000000e+00> : vector<8xf32>
    %22 = vector.multi_reduction <add>, %21, %cst_18 [0] : vector<64x8xf32> to vector<8xf32>
    %23 = vector.shape_cast %22 : vector<8xf32> to vector<1x8xf32>
    %24 = arith.addf %20, %23 : vector<1x8xf32>
    %c0_19 = arith.constant 0 : index
    %c0_20 = arith.constant 0 : index
    %c0_21 = arith.constant 0 : index
    %25 = vector.load %arg6[%c0_19, %c0_20, %c0_21] : memref<1x1x8xf32, #tpu.memory_space<vmem>>, vector<1x1x8xf32>
    %26 = vector.shape_cast %25 : vector<1x1x8xf32> to vector<1x8xf32>
    %27 = vector.shape_cast %24 : vector<1x8xf32> to vector<1x1x8xf32>
    tpu.vector_store %arg6[%c0_19, %c0_20, %c0_21], %27 {strides = array<i32>} : memref<1x1x8xf32, #tpu.memory_space<vmem>>, vector<1x1x8xf32>,
    return
  }
  func.func @transform_0(%arg0: i32, %arg1: i32) -> (i32, i32, i32) {
    %c0_i32 = arith.constant 0 : i32
    %c0_i32_0 = arith.constant 0 : i32
    return %arg0, %arg1, %c0_i32 : i32, i32, i32
  }
  func.func @transform_1(%arg0: i32, %arg1: i32) -> (i32, i32) {
    %c0_i32 = arith.constant 0 : i32
    %c0_i32_0 = arith.constant 0 : i32
    %c0_i32_1 = arith.constant 0 : i32
    return %c0_i32, %c0_i32_0 : i32, i32
  }
  func.func @transform_2(%arg0: i32, %arg1: i32) -> (i32, i32, i32) {
    %c0_i32 = arith.constant 0 : i32
    %c0_i32_0 = arith.constant 0 : i32
    return %arg0, %arg1, %c0_i32 : i32, i32, i32
  }
  func.func @transform_3(%arg0: i32, %arg1: i32) -> (i32, i32, i32) {
    %c0_i32 = arith.constant 0 : i32
    %c0_i32_0 = arith.constant 0 : i32
    %c0_i32_1 = arith.constant 0 : i32
    return %arg0, %c0_i32, %c0_i32_0 : i32, i32, i32
  }
  func.func @transform_4(%arg0: i32, %arg1: i32) -> (i32, i32, i32) {
    %c0_i32 = arith.constant 0 : i32
    %c0_i32_0 = arith.constant 0 : i32
    %c0_i32_1 = arith.constant 0 : i32
    return %arg0, %c0_i32, %c0_i32_0 : i32, i32, i32
  }
}

module attributes {stable_mosaic.version = 11 : i64} {
  func.func @_mm_stats_kernel(%arg0: i32, %arg1: i32, %arg2: memref<1x64x8xbf16, #tpu.memory_space<vmem>>, %arg3: memref<8x4xbf16, #tpu.memory_space<vmem>>, %arg4: memref<1x1x8xf32, #tpu.memory_space<vmem>>, %arg5: memref<1x1x8xf32, #tpu.memory_space<vmem>>, %arg6: memref<1x64x4xbf16, #tpu.memory_space<vmem>>, %arg7: memref<1x1x4xf32, #tpu.memory_space<vmem>>, %arg8: memref<1x1x4xf32, #tpu.memory_space<vmem>>) attributes {dimension_semantics = [#tpu.dimension_semantics<parallel>, #tpu.dimension_semantics<arbitrary>], iteration_bounds = array<i64: 2, 1>, scalar_prefetch = 0 : i64, scratch_operands = 0 : i64, tpu.core_type = #tpu.core_type<tc>, window_params = [{transform_indices = @transform_0, window_bounds = array<i64: 1, 64, 8>}, {pipeline_mode = #tpu.pipeline_mode<synchronous>, transform_indices = @transform_1, window_bounds = array<i64: 8, 4>}, {transform_indices = @transform_2, window_bounds = array<i64: 1, 1, 8>}, {transform_indices = @transform_3, window_bounds = array<i64: 1, 1, 8>}, {transform_indices = @transform_4, window_bounds = array<i64: 1, 64, 4>}, {transform_indices = @transform_5, window_bounds = array<i64: 1, 1, 4>}, {transform_indices = @transform_6, window_bounds = array<i64: 1, 1, 4>}]} {
    %c0_i32 = arith.constant 0 : i32
    %0 = arith.cmpi eq, %arg1, %c0_i32 : i32
    %1 = arith.extui %0 : i1 to i32
    %c0_i32_0 = arith.constant 0 : i32
    %2 = arith.cmpi ne, %1, %c0_i32_0 : i32
    scf.if %2 {
      %cst_29 = arith.constant 0.000000e+00 : f32
      %40 = vector.broadcast %cst_29 : f32 to vector<1x1x4xf32>
      %c0_30 = arith.constant 0 : index
      %c0_31 = arith.constant 0 : index
      %c0_32 = arith.constant 0 : index
      %41 = vector.load %arg7[%c0_30, %c0_31, %c0_32] : memref<1x1x4xf32, #tpu.memory_space<vmem>>, vector<1x1x4xf32>
      tpu.vector_store %arg7[%c0_30, %c0_31, %c0_32], %40 {strides = array<i32>} : memref<1x1x4xf32, #tpu.memory_space<vmem>>, vector<1x1x4xf32>,
      %cst_33 = arith.constant 0.000000e+00 : f32
      %42 = vector.broadcast %cst_33 : f32 to vector<1x1x4xf32>
      %c0_34 = arith.constant 0 : index
      %c0_35 = arith.constant 0 : index
      %c0_36 = arith.constant 0 : index
      %43 = vector.load %arg8[%c0_34, %c0_35, %c0_36] : memref<1x1x4xf32, #tpu.memory_space<vmem>>, vector<1x1x4xf32>
      tpu.vector_store %arg8[%c0_34, %c0_35, %c0_36], %42 {strides = array<i32>} : memref<1x1x4xf32, #tpu.memory_space<vmem>>, vector<1x1x4xf32>,
    } else {
    }
    %c0 = arith.constant 0 : index
    %c0_1 = arith.constant 0 : index
    %c0_2 = arith.constant 0 : index
    %3 = vector.load %arg2[%c0, %c0_1, %c0_2] : memref<1x64x8xbf16, #tpu.memory_space<vmem>>, vector<1x64x8xbf16>
    %4 = vector.shape_cast %3 : vector<1x64x8xbf16> to vector<64x8xbf16>
    %5 = arith.extf %4 : vector<64x8xbf16> to vector<64x8xf32>
    %c0_3 = arith.constant 0 : index
    %c0_4 = arith.constant 0 : index
    %c0_5 = arith.constant 0 : index
    %6 = vector.load %arg4[%c0_3, %c0_4, %c0_5] : memref<1x1x8xf32, #tpu.memory_space<vmem>>, vector<1x1x8xf32>
    %7 = vector.shape_cast %6 : vector<1x1x8xf32> to vector<1x8xf32>
    %8 = vector.broadcast %7 : vector<1x8xf32> to vector<64x8xf32>
    %9 = arith.mulf %5, %8 : vector<64x8xf32>
    %c0_6 = arith.constant 0 : index
    %c0_7 = arith.constant 0 : index
    %c0_8 = arith.constant 0 : index
    %10 = vector.load %arg5[%c0_6, %c0_7, %c0_8] : memref<1x1x8xf32, #tpu.memory_space<vmem>>, vector<1x1x8xf32>
    %11 = vector.shape_cast %10 : vector<1x1x8xf32> to vector<1x8xf32>
    %12 = vector.broadcast %11 : vector<1x8xf32> to vector<64x8xf32>
    %13 = arith.addf %9, %12 : vector<64x8xf32>
    %cst = arith.constant 0.000000e+00 : f32
    %14 = vector.broadcast %cst : f32 to vector<64x8xf32>
    %15 = arith.maximumf %13, %14 : vector<64x8xf32>
    %16 = arith.truncf %15 : vector<64x8xf32> to vector<64x8xbf16>
    %c0_9 = arith.constant 0 : index
    %c0_10 = arith.constant 0 : index
    %17 = vector.load %arg3[%c0_9, %c0_10] : memref<8x4xbf16, #tpu.memory_space<vmem>>, vector<8x4xbf16>
    %cst_11 = arith.constant dense<0.000000e+00> : vector<64x4xf32>
    %18 = tpu.matmul %16, %17, %cst_11 {dimension_numbers = #tpu.dot_dimension_numbers<[1], [0], [0], [1], [0, 0, 1, 1], [], []>} : vector<64x8xbf16>, vector<8x4xbf16>, vector<64x4xf32> -> vector<64x4xf32>
    %19 = arith.truncf %18 : vector<64x4xf32> to vector<64x4xbf16>
    %c0_12 = arith.constant 0 : index
    %c0_13 = arith.constant 0 : index
    %c0_14 = arith.constant 0 : index
    %20 = vector.load %arg6[%c0_12, %c0_13, %c0_14] : memref<1x64x4xbf16, #tpu.memory_space<vmem>>, vector<1x64x4xbf16>
    %21 = vector.shape_cast %20 : vector<1x64x4xbf16> to vector<64x4xbf16>
    %22 = vector.shape_cast %19 : vector<64x4xbf16> to vector<1x64x4xbf16>
    tpu.vector_store %arg6[%c0_12, %c0_13, %c0_14], %22 {strides = array<i32>} : memref<1x64x4xbf16, #tpu.memory_space<vmem>>, vector<1x64x4xbf16>,
    %c0_15 = arith.constant 0 : index
    %c0_16 = arith.constant 0 : index
    %c0_17 = arith.constant 0 : index
    %23 = vector.load %arg7[%c0_15, %c0_16, %c0_17] : memref<1x1x4xf32, #tpu.memory_space<vmem>>, vector<1x1x4xf32>
    %24 = vector.shape_cast %23 : vector<1x1x4xf32> to vector<1x4xf32>
    %cst_18 = arith.constant dense<0.000000e+00> : vector<4xf32>
    %25 = vector.multi_reduction <add>, %18, %cst_18 [0] : vector<64x4xf32> to vector<4xf32>
    %26 = vector.shape_cast %25 : vector<4xf32> to vector<1x4xf32>
    %27 = arith.addf %24, %26 : vector<1x4xf32>
    %c0_19 = arith.constant 0 : index
    %c0_20 = arith.constant 0 : index
    %c0_21 = arith.constant 0 : index
    %28 = vector.load %arg7[%c0_19, %c0_20, %c0_21] : memref<1x1x4xf32, #tpu.memory_space<vmem>>, vector<1x1x4xf32>
    %29 = vector.shape_cast %28 : vector<1x1x4xf32> to vector<1x4xf32>
    %30 = vector.shape_cast %27 : vector<1x4xf32> to vector<1x1x4xf32>
    tpu.vector_store %arg7[%c0_19, %c0_20, %c0_21], %30 {strides = array<i32>} : memref<1x1x4xf32, #tpu.memory_space<vmem>>, vector<1x1x4xf32>,
    %c0_22 = arith.constant 0 : index
    %c0_23 = arith.constant 0 : index
    %c0_24 = arith.constant 0 : index
    %31 = vector.load %arg8[%c0_22, %c0_23, %c0_24] : memref<1x1x4xf32, #tpu.memory_space<vmem>>, vector<1x1x4xf32>
    %32 = vector.shape_cast %31 : vector<1x1x4xf32> to vector<1x4xf32>
    %33 = arith.mulf %18, %18 : vector<64x4xf32>
    %cst_25 = arith.constant dense<0.000000e+00> : vector<4xf32>
    %34 = vector.multi_reduction <add>, %33, %cst_25 [0] : vector<64x4xf32> to vector<4xf32>
    %35 = vector.shape_cast %34 : vector<4xf32> to vector<1x4xf32>
    %36 = arith.addf %32, %35 : vector<1x4xf32>
    %c0_26 = arith.constant 0 : index
    %c0_27 = arith.constant 0 : index
    %c0_28 = arith.constant 0 : index
    %37 = vector.load %arg8[%c0_26, %c0_27, %c0_28] : memref<1x1x4xf32, #tpu.memory_space<vmem>>, vector<1x1x4xf32>
    %38 = vector.shape_cast %37 : vector<1x1x4xf32> to vector<1x4xf32>
    %39 = vector.shape_cast %36 : vector<1x4xf32> to vector<1x1x4xf32>
    tpu.vector_store %arg8[%c0_26, %c0_27, %c0_28], %39 {strides = array<i32>} : memref<1x1x4xf32, #tpu.memory_space<vmem>>, vector<1x1x4xf32>,
    return
  }
  func.func @transform_0(%arg0: i32, %arg1: i32) -> (i32, i32, i32) {
    %c0_i32 = arith.constant 0 : i32
    %c0_i32_0 = arith.constant 0 : i32
    return %arg0, %arg1, %c0_i32 : i32, i32, i32
  }
  func.func @transform_1(%arg0: i32, %arg1: i32) -> (i32, i32) {
    %c0_i32 = arith.constant 0 : i32
    %c0_i32_0 = arith.constant 0 : i32
    %c0_i32_1 = arith.constant 0 : i32
    return %c0_i32, %c0_i32_0 : i32, i32
  }
  func.func @transform_2(%arg0: i32, %arg1: i32) -> (i32, i32, i32) {
    %c0_i32 = arith.constant 0 : i32
    %c0_i32_0 = arith.constant 0 : i32
    %c0_i32_1 = arith.constant 0 : i32
    return %arg0, %c0_i32, %c0_i32_0 : i32, i32, i32
  }
  func.func @transform_3(%arg0: i32, %arg1: i32) -> (i32, i32, i32) {
    %c0_i32 = arith.constant 0 : i32
    %c0_i32_0 = arith.constant 0 : i32
    %c0_i32_1 = arith.constant 0 : i32
    return %arg0, %c0_i32, %c0_i32_0 : i32, i32, i32
  }
  func.func @transform_4(%arg0: i32, %arg1: i32) -> (i32, i32, i32) {
    %c0_i32 = arith.constant 0 : i32
    %c0_i32_0 = arith.constant 0 : i32
    return %arg0, %arg1, %c0_i32 : i32, i32, i32
  }
  func.func @transform_5(%arg0: i32, %arg1: i32) -> (i32, i32, i32) {
    %c0_i32 = arith.constant 0 : i32
    %c0_i32_0 = arith.constant 0 : i32
    %c0_i32_1 = arith.constant 0 : i32
    return %arg0, %c0_i32, %c0_i32_0 : i32, i32, i32
  }
  func.func @transform_6(%arg0: i32, %arg1: i32) -> (i32, i32, i32) {
    %c0_i32 = arith.constant 0 : i32
    %c0_i32_0 = arith.constant 0 : i32
    %c0_i32_1 = arith.constant 0 : i32
    return %arg0, %c0_i32, %c0_i32_0 : i32, i32, i32
  }
}

module attributes {stable_mosaic.version = 11 : i64} {
  func.func @_scale_act_kernel(%arg0: i32, %arg1: i32, %arg2: memref<1x64x4xbf16, #tpu.memory_space<vmem>>, %arg3: memref<1x1x4xf32, #tpu.memory_space<vmem>>, %arg4: memref<1x1x4xf32, #tpu.memory_space<vmem>>, %arg5: memref<1x64x4xbf16, #tpu.memory_space<vmem>>) attributes {dimension_semantics = [#tpu.dimension_semantics<parallel>, #tpu.dimension_semantics<parallel>], iteration_bounds = array<i64: 2, 1>, scalar_prefetch = 0 : i64, scratch_operands = 0 : i64, tpu.core_type = #tpu.core_type<tc>, window_params = [{transform_indices = @transform_0, window_bounds = array<i64: 1, 64, 4>}, {transform_indices = @transform_1, window_bounds = array<i64: 1, 1, 4>}, {transform_indices = @transform_2, window_bounds = array<i64: 1, 1, 4>}, {transform_indices = @transform_3, window_bounds = array<i64: 1, 64, 4>}]} {
    %c0 = arith.constant 0 : index
    %c0_0 = arith.constant 0 : index
    %c0_1 = arith.constant 0 : index
    %0 = vector.load %arg2[%c0, %c0_0, %c0_1] : memref<1x64x4xbf16, #tpu.memory_space<vmem>>, vector<1x64x4xbf16>
    %1 = vector.shape_cast %0 : vector<1x64x4xbf16> to vector<64x4xbf16>
    %2 = arith.extf %1 : vector<64x4xbf16> to vector<64x4xf32>
    %c0_2 = arith.constant 0 : index
    %c0_3 = arith.constant 0 : index
    %c0_4 = arith.constant 0 : index
    %3 = vector.load %arg3[%c0_2, %c0_3, %c0_4] : memref<1x1x4xf32, #tpu.memory_space<vmem>>, vector<1x1x4xf32>
    %4 = vector.shape_cast %3 : vector<1x1x4xf32> to vector<1x4xf32>
    %5 = vector.broadcast %4 : vector<1x4xf32> to vector<64x4xf32>
    %6 = arith.mulf %2, %5 : vector<64x4xf32>
    %c0_5 = arith.constant 0 : index
    %c0_6 = arith.constant 0 : index
    %c0_7 = arith.constant 0 : index
    %7 = vector.load %arg4[%c0_5, %c0_6, %c0_7] : memref<1x1x4xf32, #tpu.memory_space<vmem>>, vector<1x1x4xf32>
    %8 = vector.shape_cast %7 : vector<1x1x4xf32> to vector<1x4xf32>
    %9 = vector.broadcast %8 : vector<1x4xf32> to vector<64x4xf32>
    %10 = arith.addf %6, %9 : vector<64x4xf32>
    %cst = arith.constant 0.000000e+00 : f32
    %11 = vector.broadcast %cst : f32 to vector<64x4xf32>
    %12 = arith.maximumf %10, %11 : vector<64x4xf32>
    %13 = arith.truncf %12 : vector<64x4xf32> to vector<64x4xbf16>
    %c0_8 = arith.constant 0 : index
    %c0_9 = arith.constant 0 : index
    %c0_10 = arith.constant 0 : index
    %14 = vector.load %arg5[%c0_8, %c0_9, %c0_10] : memref<1x64x4xbf16, #tpu.memory_space<vmem>>, vector<1x64x4xbf16>
    %15 = vector.shape_cast %14 : vector<1x64x4xbf16> to vector<64x4xbf16>
    %16 = vector.shape_cast %13 : vector<64x4xbf16> to vector<1x64x4xbf16>
    tpu.vector_store %arg5[%c0_8, %c0_9, %c0_10], %16 {strides = array<i32>} : memref<1x64x4xbf16, #tpu.memory_space<vmem>>, vector<1x64x4xbf16>,
    return
  }
  func.func @transform_0(%arg0: i32, %arg1: i32) -> (i32, i32, i32) {
    %c0_i32 = arith.constant 0 : i32
    %c0_i32_0 = arith.constant 0 : i32
    return %arg0, %arg1, %c0_i32 : i32, i32, i32
  }
  func.func @transform_1(%arg0: i32, %arg1: i32) -> (i32, i32, i32) {
    %c0_i32 = arith.constant 0 : i32
    %c0_i32_0 = arith.constant 0 : i32
    %c0_i32_1 = arith.constant 0 : i32
    return %arg0, %c0_i32, %c0_i32_0 : i32, i32, i32
  }
  func.func @transform_2(%arg0: i32, %arg1: i32) -> (i32, i32, i32) {
    %c0_i32 = arith.constant 0 : i32
    %c0_i32_0 = arith.constant 0 : i32
    %c0_i32_1 = arith.constant 0 : i32
    return %arg0, %c0_i32, %c0_i32_0 : i32, i32, i32
  }
  func.func @transform_3(%arg0: i32, %arg1: i32) -> (i32, i32, i32) {
    %c0_i32 = arith.constant 0 : i32
    %c0_i32_0 = arith.constant 0 : i32
    return %arg0, %arg1, %c0_i32 : i32, i32, i32
  }
}

module attributes {stable_mosaic.version = 11 : i64} {
  func.func @_mm_stats_kernel(%arg0: i32, %arg1: i32, %arg2: memref<1x64x4xbf16, #tpu.memory_space<vmem>>, %arg3: memref<4x4xbf16, #tpu.memory_space<vmem>>, %arg4: memref<1x1x4xf32, #tpu.memory_space<vmem>>, %arg5: memref<1x1x4xf32, #tpu.memory_space<vmem>>, %arg6: memref<1x64x4xbf16, #tpu.memory_space<vmem>>, %arg7: memref<1x1x4xf32, #tpu.memory_space<vmem>>, %arg8: memref<1x1x4xf32, #tpu.memory_space<vmem>>) attributes {dimension_semantics = [#tpu.dimension_semantics<parallel>, #tpu.dimension_semantics<arbitrary>], iteration_bounds = array<i64: 2, 1>, scalar_prefetch = 0 : i64, scratch_operands = 0 : i64, tpu.core_type = #tpu.core_type<tc>, window_params = [{transform_indices = @transform_0, window_bounds = array<i64: 1, 64, 4>}, {pipeline_mode = #tpu.pipeline_mode<synchronous>, transform_indices = @transform_1, window_bounds = array<i64: 4, 4>}, {transform_indices = @transform_2, window_bounds = array<i64: 1, 1, 4>}, {transform_indices = @transform_3, window_bounds = array<i64: 1, 1, 4>}, {transform_indices = @transform_4, window_bounds = array<i64: 1, 64, 4>}, {transform_indices = @transform_5, window_bounds = array<i64: 1, 1, 4>}, {transform_indices = @transform_6, window_bounds = array<i64: 1, 1, 4>}]} {
    %c0_i32 = arith.constant 0 : i32
    %0 = arith.cmpi eq, %arg1, %c0_i32 : i32
    %1 = arith.extui %0 : i1 to i32
    %c0_i32_0 = arith.constant 0 : i32
    %2 = arith.cmpi ne, %1, %c0_i32_0 : i32
    scf.if %2 {
      %cst_29 = arith.constant 0.000000e+00 : f32
      %40 = vector.broadcast %cst_29 : f32 to vector<1x1x4xf32>
      %c0_30 = arith.constant 0 : index
      %c0_31 = arith.constant 0 : index
      %c0_32 = arith.constant 0 : index
      %41 = vector.load %arg7[%c0_30, %c0_31, %c0_32] : memref<1x1x4xf32, #tpu.memory_space<vmem>>, vector<1x1x4xf32>
      tpu.vector_store %arg7[%c0_30, %c0_31, %c0_32], %40 {strides = array<i32>} : memref<1x1x4xf32, #tpu.memory_space<vmem>>, vector<1x1x4xf32>,
      %cst_33 = arith.constant 0.000000e+00 : f32
      %42 = vector.broadcast %cst_33 : f32 to vector<1x1x4xf32>
      %c0_34 = arith.constant 0 : index
      %c0_35 = arith.constant 0 : index
      %c0_36 = arith.constant 0 : index
      %43 = vector.load %arg8[%c0_34, %c0_35, %c0_36] : memref<1x1x4xf32, #tpu.memory_space<vmem>>, vector<1x1x4xf32>
      tpu.vector_store %arg8[%c0_34, %c0_35, %c0_36], %42 {strides = array<i32>} : memref<1x1x4xf32, #tpu.memory_space<vmem>>, vector<1x1x4xf32>,
    } else {
    }
    %c0 = arith.constant 0 : index
    %c0_1 = arith.constant 0 : index
    %c0_2 = arith.constant 0 : index
    %3 = vector.load %arg2[%c0, %c0_1, %c0_2] : memref<1x64x4xbf16, #tpu.memory_space<vmem>>, vector<1x64x4xbf16>
    %4 = vector.shape_cast %3 : vector<1x64x4xbf16> to vector<64x4xbf16>
    %5 = arith.extf %4 : vector<64x4xbf16> to vector<64x4xf32>
    %c0_3 = arith.constant 0 : index
    %c0_4 = arith.constant 0 : index
    %c0_5 = arith.constant 0 : index
    %6 = vector.load %arg4[%c0_3, %c0_4, %c0_5] : memref<1x1x4xf32, #tpu.memory_space<vmem>>, vector<1x1x4xf32>
    %7 = vector.shape_cast %6 : vector<1x1x4xf32> to vector<1x4xf32>
    %8 = vector.broadcast %7 : vector<1x4xf32> to vector<64x4xf32>
    %9 = arith.mulf %5, %8 : vector<64x4xf32>
    %c0_6 = arith.constant 0 : index
    %c0_7 = arith.constant 0 : index
    %c0_8 = arith.constant 0 : index
    %10 = vector.load %arg5[%c0_6, %c0_7, %c0_8] : memref<1x1x4xf32, #tpu.memory_space<vmem>>, vector<1x1x4xf32>
    %11 = vector.shape_cast %10 : vector<1x1x4xf32> to vector<1x4xf32>
    %12 = vector.broadcast %11 : vector<1x4xf32> to vector<64x4xf32>
    %13 = arith.addf %9, %12 : vector<64x4xf32>
    %cst = arith.constant 0.000000e+00 : f32
    %14 = vector.broadcast %cst : f32 to vector<64x4xf32>
    %15 = arith.maximumf %13, %14 : vector<64x4xf32>
    %16 = arith.truncf %15 : vector<64x4xf32> to vector<64x4xbf16>
    %c0_9 = arith.constant 0 : index
    %c0_10 = arith.constant 0 : index
    %17 = vector.load %arg3[%c0_9, %c0_10] : memref<4x4xbf16, #tpu.memory_space<vmem>>, vector<4x4xbf16>
    %cst_11 = arith.constant dense<0.000000e+00> : vector<64x4xf32>
    %18 = tpu.matmul %16, %17, %cst_11 {dimension_numbers = #tpu.dot_dimension_numbers<[1], [0], [0], [1], [0, 0, 1, 1], [], []>} : vector<64x4xbf16>, vector<4x4xbf16>, vector<64x4xf32> -> vector<64x4xf32>
    %19 = arith.truncf %18 : vector<64x4xf32> to vector<64x4xbf16>
    %c0_12 = arith.constant 0 : index
    %c0_13 = arith.constant 0 : index
    %c0_14 = arith.constant 0 : index
    %20 = vector.load %arg6[%c0_12, %c0_13, %c0_14] : memref<1x64x4xbf16, #tpu.memory_space<vmem>>, vector<1x64x4xbf16>
    %21 = vector.shape_cast %20 : vector<1x64x4xbf16> to vector<64x4xbf16>
    %22 = vector.shape_cast %19 : vector<64x4xbf16> to vector<1x64x4xbf16>
    tpu.vector_store %arg6[%c0_12, %c0_13, %c0_14], %22 {strides = array<i32>} : memref<1x64x4xbf16, #tpu.memory_space<vmem>>, vector<1x64x4xbf16>,
    %c0_15 = arith.constant 0 : index
    %c0_16 = arith.constant 0 : index
    %c0_17 = arith.constant 0 : index
    %23 = vector.load %arg7[%c0_15, %c0_16, %c0_17] : memref<1x1x4xf32, #tpu.memory_space<vmem>>, vector<1x1x4xf32>
    %24 = vector.shape_cast %23 : vector<1x1x4xf32> to vector<1x4xf32>
    %cst_18 = arith.constant dense<0.000000e+00> : vector<4xf32>
    %25 = vector.multi_reduction <add>, %18, %cst_18 [0] : vector<64x4xf32> to vector<4xf32>
    %26 = vector.shape_cast %25 : vector<4xf32> to vector<1x4xf32>
    %27 = arith.addf %24, %26 : vector<1x4xf32>
    %c0_19 = arith.constant 0 : index
    %c0_20 = arith.constant 0 : index
    %c0_21 = arith.constant 0 : index
    %28 = vector.load %arg7[%c0_19, %c0_20, %c0_21] : memref<1x1x4xf32, #tpu.memory_space<vmem>>, vector<1x1x4xf32>
    %29 = vector.shape_cast %28 : vector<1x1x4xf32> to vector<1x4xf32>
    %30 = vector.shape_cast %27 : vector<1x4xf32> to vector<1x1x4xf32>
    tpu.vector_store %arg7[%c0_19, %c0_20, %c0_21], %30 {strides = array<i32>} : memref<1x1x4xf32, #tpu.memory_space<vmem>>, vector<1x1x4xf32>,
    %c0_22 = arith.constant 0 : index
    %c0_23 = arith.constant 0 : index
    %c0_24 = arith.constant 0 : index
    %31 = vector.load %arg8[%c0_22, %c0_23, %c0_24] : memref<1x1x4xf32, #tpu.memory_space<vmem>>, vector<1x1x4xf32>
    %32 = vector.shape_cast %31 : vector<1x1x4xf32> to vector<1x4xf32>
    %33 = arith.mulf %18, %18 : vector<64x4xf32>
    %cst_25 = arith.constant dense<0.000000e+00> : vector<4xf32>
    %34 = vector.multi_reduction <add>, %33, %cst_25 [0] : vector<64x4xf32> to vector<4xf32>
    %35 = vector.shape_cast %34 : vector<4xf32> to vector<1x4xf32>
    %36 = arith.addf %32, %35 : vector<1x4xf32>
    %c0_26 = arith.constant 0 : index
    %c0_27 = arith.constant 0 : index
    %c0_28 = arith.constant 0 : index
    %37 = vector.load %arg8[%c0_26, %c0_27, %c0_28] : memref<1x1x4xf32, #tpu.memory_space<vmem>>, vector<1x1x4xf32>
    %38 = vector.shape_cast %37 : vector<1x1x4xf32> to vector<1x4xf32>
    %39 = vector.shape_cast %36 : vector<1x4xf32> to vector<1x1x4xf32>
    tpu.vector_store %arg8[%c0_26, %c0_27, %c0_28], %39 {strides = array<i32>} : memref<1x1x4xf32, #tpu.memory_space<vmem>>, vector<1x1x4xf32>,
    return
  }
  func.func @transform_0(%arg0: i32, %arg1: i32) -> (i32, i32, i32) {
    %c0_i32 = arith.constant 0 : i32
    %c0_i32_0 = arith.constant 0 : i32
    return %arg0, %arg1, %c0_i32 : i32, i32, i32
  }
  func.func @transform_1(%arg0: i32, %arg1: i32) -> (i32, i32) {
    %c0_i32 = arith.constant 0 : i32
    %c0_i32_0 = arith.constant 0 : i32
    %c0_i32_1 = arith.constant 0 : i32
    return %c0_i32, %c0_i32_0 : i32, i32
  }
  func.func @transform_2(%arg0: i32, %arg1: i32) -> (i32, i32, i32) {
    %c0_i32 = arith.constant 0 : i32
    %c0_i32_0 = arith.constant 0 : i32
    %c0_i32_1 = arith.constant 0 : i32
    return %arg0, %c0_i32, %c0_i32_0 : i32, i32, i32
  }
  func.func @transform_3(%arg0: i32, %arg1: i32) -> (i32, i32, i32) {
    %c0_i32 = arith.constant 0 : i32
    %c0_i32_0 = arith.constant 0 : i32
    %c0_i32_1 = arith.constant 0 : i32
    return %arg0, %c0_i32, %c0_i32_0 : i32, i32, i32
  }
  func.func @transform_4(%arg0: i32, %arg1: i32) -> (i32, i32, i32) {
    %c0_i32 = arith.constant 0 : i32
    %c0_i32_0 = arith.constant 0 : i32
    return %arg0, %arg1, %c0_i32 : i32, i32, i32
  }
  func.func @transform_5(%arg0: i32, %arg1: i32) -> (i32, i32, i32) {
    %c0_i32 = arith.constant 0 : i32
    %c0_i32_0 = arith.constant 0 : i32
    %c0_i32_1 = arith.constant 0 : i32
    return %arg0, %c0_i32, %c0_i32_0 : i32, i32, i32
  }
  func.func @transform_6(%arg0: i32, %arg1: i32) -> (i32, i32, i32) {
    %c0_i32 = arith.constant 0 : i32
    %c0_i32_0 = arith.constant 0 : i32
    %c0_i32_1 = arith.constant 0 : i32
    return %arg0, %c0_i32, %c0_i32_0 : i32, i32, i32
  }
}

module attributes {stable_mosaic.version = 11 : i64} {
  func.func @_mm_stats_kernel(%arg0: i32, %arg1: i32, %arg2: memref<1x64x36xbf16, #tpu.memory_space<vmem>>, %arg3: memref<36x4xbf16, #tpu.memory_space<vmem>>, %arg4: memref<1x64x4xbf16, #tpu.memory_space<vmem>>, %arg5: memref<1x1x4xf32, #tpu.memory_space<vmem>>, %arg6: memref<1x1x4xf32, #tpu.memory_space<vmem>>) attributes {dimension_semantics = [#tpu.dimension_semantics<parallel>, #tpu.dimension_semantics<arbitrary>], iteration_bounds = array<i64: 2, 1>, scalar_prefetch = 0 : i64, scratch_operands = 0 : i64, tpu.core_type = #tpu.core_type<tc>, window_params = [{transform_indices = @transform_0, window_bounds = array<i64: 1, 64, 36>}, {pipeline_mode = #tpu.pipeline_mode<synchronous>, transform_indices = @transform_1, window_bounds = array<i64: 36, 4>}, {transform_indices = @transform_2, window_bounds = array<i64: 1, 64, 4>}, {transform_indices = @transform_3, window_bounds = array<i64: 1, 1, 4>}, {transform_indices = @transform_4, window_bounds = array<i64: 1, 1, 4>}]} {
    %c0_i32 = arith.constant 0 : i32
    %0 = arith.cmpi eq, %arg1, %c0_i32 : i32
    %1 = arith.extui %0 : i1 to i32
    %c0_i32_0 = arith.constant 0 : i32
    %2 = arith.cmpi ne, %1, %c0_i32_0 : i32
    scf.if %2 {
      %cst_22 = arith.constant 0.000000e+00 : f32
      %28 = vector.broadcast %cst_22 : f32 to vector<1x1x4xf32>
      %c0_23 = arith.constant 0 : index
      %c0_24 = arith.constant 0 : index
      %c0_25 = arith.constant 0 : index
      %29 = vector.load %arg5[%c0_23, %c0_24, %c0_25] : memref<1x1x4xf32, #tpu.memory_space<vmem>>, vector<1x1x4xf32>
      tpu.vector_store %arg5[%c0_23, %c0_24, %c0_25], %28 {strides = array<i32>} : memref<1x1x4xf32, #tpu.memory_space<vmem>>, vector<1x1x4xf32>,
      %cst_26 = arith.constant 0.000000e+00 : f32
      %30 = vector.broadcast %cst_26 : f32 to vector<1x1x4xf32>
      %c0_27 = arith.constant 0 : index
      %c0_28 = arith.constant 0 : index
      %c0_29 = arith.constant 0 : index
      %31 = vector.load %arg6[%c0_27, %c0_28, %c0_29] : memref<1x1x4xf32, #tpu.memory_space<vmem>>, vector<1x1x4xf32>
      tpu.vector_store %arg6[%c0_27, %c0_28, %c0_29], %30 {strides = array<i32>} : memref<1x1x4xf32, #tpu.memory_space<vmem>>, vector<1x1x4xf32>,
    } else {
    }
    %c0 = arith.constant 0 : index
    %c0_1 = arith.constant 0 : index
    %c0_2 = arith.constant 0 : index
    %3 = vector.load %arg2[%c0, %c0_1, %c0_2] : memref<1x64x36xbf16, #tpu.memory_space<vmem>>, vector<1x64x36xbf16>
    %4 = vector.shape_cast %3 : vector<1x64x36xbf16> to vector<64x36xbf16>
    %c0_3 = arith.constant 0 : index
    %c0_4 = arith.constant 0 : index
    %5 = vector.load %arg3[%c0_3, %c0_4] : memref<36x4xbf16, #tpu.memory_space<vmem>>, vector<36x4xbf16>
    %cst = arith.constant dense<0.000000e+00> : vector<64x4xf32>
    %6 = tpu.matmul %4, %5, %cst {dimension_numbers = #tpu.dot_dimension_numbers<[1], [0], [0], [1], [0, 0, 1, 1], [], []>} : vector<64x36xbf16>, vector<36x4xbf16>, vector<64x4xf32> -> vector<64x4xf32>
    %7 = arith.truncf %6 : vector<64x4xf32> to vector<64x4xbf16>
    %c0_5 = arith.constant 0 : index
    %c0_6 = arith.constant 0 : index
    %c0_7 = arith.constant 0 : index
    %8 = vector.load %arg4[%c0_5, %c0_6, %c0_7] : memref<1x64x4xbf16, #tpu.memory_space<vmem>>, vector<1x64x4xbf16>
    %9 = vector.shape_cast %8 : vector<1x64x4xbf16> to vector<64x4xbf16>
    %10 = vector.shape_cast %7 : vector<64x4xbf16> to vector<1x64x4xbf16>
    tpu.vector_store %arg4[%c0_5, %c0_6, %c0_7], %10 {strides = array<i32>} : memref<1x64x4xbf16, #tpu.memory_space<vmem>>, vector<1x64x4xbf16>,
    %c0_8 = arith.constant 0 : index
    %c0_9 = arith.constant 0 : index
    %c0_10 = arith.constant 0 : index
    %11 = vector.load %arg5[%c0_8, %c0_9, %c0_10] : memref<1x1x4xf32, #tpu.memory_space<vmem>>, vector<1x1x4xf32>
    %12 = vector.shape_cast %11 : vector<1x1x4xf32> to vector<1x4xf32>
    %cst_11 = arith.constant dense<0.000000e+00> : vector<4xf32>
    %13 = vector.multi_reduction <add>, %6, %cst_11 [0] : vector<64x4xf32> to vector<4xf32>
    %14 = vector.shape_cast %13 : vector<4xf32> to vector<1x4xf32>
    %15 = arith.addf %12, %14 : vector<1x4xf32>
    %c0_12 = arith.constant 0 : index
    %c0_13 = arith.constant 0 : index
    %c0_14 = arith.constant 0 : index
    %16 = vector.load %arg5[%c0_12, %c0_13, %c0_14] : memref<1x1x4xf32, #tpu.memory_space<vmem>>, vector<1x1x4xf32>
    %17 = vector.shape_cast %16 : vector<1x1x4xf32> to vector<1x4xf32>
    %18 = vector.shape_cast %15 : vector<1x4xf32> to vector<1x1x4xf32>
    tpu.vector_store %arg5[%c0_12, %c0_13, %c0_14], %18 {strides = array<i32>} : memref<1x1x4xf32, #tpu.memory_space<vmem>>, vector<1x1x4xf32>,
    %c0_15 = arith.constant 0 : index
    %c0_16 = arith.constant 0 : index
    %c0_17 = arith.constant 0 : index
    %19 = vector.load %arg6[%c0_15, %c0_16, %c0_17] : memref<1x1x4xf32, #tpu.memory_space<vmem>>, vector<1x1x4xf32>
    %20 = vector.shape_cast %19 : vector<1x1x4xf32> to vector<1x4xf32>
    %21 = arith.mulf %6, %6 : vector<64x4xf32>
    %cst_18 = arith.constant dense<0.000000e+00> : vector<4xf32>
    %22 = vector.multi_reduction <add>, %21, %cst_18 [0] : vector<64x4xf32> to vector<4xf32>
    %23 = vector.shape_cast %22 : vector<4xf32> to vector<1x4xf32>
    %24 = arith.addf %20, %23 : vector<1x4xf32>
    %c0_19 = arith.constant 0 : index
    %c0_20 = arith.constant 0 : index
    %c0_21 = arith.constant 0 : index
    %25 = vector.load %arg6[%c0_19, %c0_20, %c0_21] : memref<1x1x4xf32, #tpu.memory_space<vmem>>, vector<1x1x4xf32>
    %26 = vector.shape_cast %25 : vector<1x1x4xf32> to vector<1x4xf32>
    %27 = vector.shape_cast %24 : vector<1x4xf32> to vector<1x1x4xf32>
    tpu.vector_store %arg6[%c0_19, %c0_20, %c0_21], %27 {strides = array<i32>} : memref<1x1x4xf32, #tpu.memory_space<vmem>>, vector<1x1x4xf32>,
    return
  }
  func.func @transform_0(%arg0: i32, %arg1: i32) -> (i32, i32, i32) {
    %c0_i32 = arith.constant 0 : i32
    %c0_i32_0 = arith.constant 0 : i32
    return %arg0, %arg1, %c0_i32 : i32, i32, i32
  }
  func.func @transform_1(%arg0: i32, %arg1: i32) -> (i32, i32) {
    %c0_i32 = arith.constant 0 : i32
    %c0_i32_0 = arith.constant 0 : i32
    %c0_i32_1 = arith.constant 0 : i32
    return %c0_i32, %c0_i32_0 : i32, i32
  }
  func.func @transform_2(%arg0: i32, %arg1: i32) -> (i32, i32, i32) {
    %c0_i32 = arith.constant 0 : i32
    %c0_i32_0 = arith.constant 0 : i32
    return %arg0, %arg1, %c0_i32 : i32, i32, i32
  }
  func.func @transform_3(%arg0: i32, %arg1: i32) -> (i32, i32, i32) {
    %c0_i32 = arith.constant 0 : i32
    %c0_i32_0 = arith.constant 0 : i32
    %c0_i32_1 = arith.constant 0 : i32
    return %arg0, %c0_i32, %c0_i32_0 : i32, i32, i32
  }
  func.func @transform_4(%arg0: i32, %arg1: i32) -> (i32, i32, i32) {
    %c0_i32 = arith.constant 0 : i32
    %c0_i32_0 = arith.constant 0 : i32
    %c0_i32_1 = arith.constant 0 : i32
    return %arg0, %c0_i32, %c0_i32_0 : i32, i32, i32
  }
}

module attributes {stable_mosaic.version = 11 : i64} {
  func.func @_scale_act_kernel(%arg0: i32, %arg1: i32, %arg2: memref<1x64x4xbf16, #tpu.memory_space<vmem>>, %arg3: memref<1x1x4xf32, #tpu.memory_space<vmem>>, %arg4: memref<1x1x4xf32, #tpu.memory_space<vmem>>, %arg5: memref<1x64x4xbf16, #tpu.memory_space<vmem>>, %arg6: memref<1x1x4xf32, #tpu.memory_space<vmem>>, %arg7: memref<1x1x4xf32, #tpu.memory_space<vmem>>, %arg8: memref<1x64x4xbf16, #tpu.memory_space<vmem>>) attributes {dimension_semantics = [#tpu.dimension_semantics<parallel>, #tpu.dimension_semantics<parallel>], iteration_bounds = array<i64: 2, 1>, scalar_prefetch = 0 : i64, scratch_operands = 0 : i64, tpu.core_type = #tpu.core_type<tc>, window_params = [{transform_indices = @transform_0, window_bounds = array<i64: 1, 64, 4>}, {transform_indices = @transform_1, window_bounds = array<i64: 1, 1, 4>}, {transform_indices = @transform_2, window_bounds = array<i64: 1, 1, 4>}, {transform_indices = @transform_3, window_bounds = array<i64: 1, 64, 4>}, {transform_indices = @transform_4, window_bounds = array<i64: 1, 1, 4>}, {transform_indices = @transform_5, window_bounds = array<i64: 1, 1, 4>}, {transform_indices = @transform_6, window_bounds = array<i64: 1, 64, 4>}]} {
    %c0 = arith.constant 0 : index
    %c0_0 = arith.constant 0 : index
    %c0_1 = arith.constant 0 : index
    %0 = vector.load %arg2[%c0, %c0_0, %c0_1] : memref<1x64x4xbf16, #tpu.memory_space<vmem>>, vector<1x64x4xbf16>
    %1 = vector.shape_cast %0 : vector<1x64x4xbf16> to vector<64x4xbf16>
    %2 = arith.extf %1 : vector<64x4xbf16> to vector<64x4xf32>
    %c0_2 = arith.constant 0 : index
    %c0_3 = arith.constant 0 : index
    %c0_4 = arith.constant 0 : index
    %3 = vector.load %arg3[%c0_2, %c0_3, %c0_4] : memref<1x1x4xf32, #tpu.memory_space<vmem>>, vector<1x1x4xf32>
    %4 = vector.shape_cast %3 : vector<1x1x4xf32> to vector<1x4xf32>
    %5 = vector.broadcast %4 : vector<1x4xf32> to vector<64x4xf32>
    %6 = arith.mulf %2, %5 : vector<64x4xf32>
    %c0_5 = arith.constant 0 : index
    %c0_6 = arith.constant 0 : index
    %c0_7 = arith.constant 0 : index
    %7 = vector.load %arg4[%c0_5, %c0_6, %c0_7] : memref<1x1x4xf32, #tpu.memory_space<vmem>>, vector<1x1x4xf32>
    %8 = vector.shape_cast %7 : vector<1x1x4xf32> to vector<1x4xf32>
    %9 = vector.broadcast %8 : vector<1x4xf32> to vector<64x4xf32>
    %10 = arith.addf %6, %9 : vector<64x4xf32>
    %cst = arith.constant 0.000000e+00 : f32
    %11 = vector.broadcast %cst : f32 to vector<64x4xf32>
    %12 = arith.maximumf %10, %11 : vector<64x4xf32>
    %c0_8 = arith.constant 0 : index
    %c0_9 = arith.constant 0 : index
    %c0_10 = arith.constant 0 : index
    %13 = vector.load %arg5[%c0_8, %c0_9, %c0_10] : memref<1x64x4xbf16, #tpu.memory_space<vmem>>, vector<1x64x4xbf16>
    %14 = vector.shape_cast %13 : vector<1x64x4xbf16> to vector<64x4xbf16>
    %15 = arith.extf %14 : vector<64x4xbf16> to vector<64x4xf32>
    %c0_11 = arith.constant 0 : index
    %c0_12 = arith.constant 0 : index
    %c0_13 = arith.constant 0 : index
    %16 = vector.load %arg6[%c0_11, %c0_12, %c0_13] : memref<1x1x4xf32, #tpu.memory_space<vmem>>, vector<1x1x4xf32>
    %17 = vector.shape_cast %16 : vector<1x1x4xf32> to vector<1x4xf32>
    %18 = vector.broadcast %17 : vector<1x4xf32> to vector<64x4xf32>
    %19 = arith.mulf %15, %18 : vector<64x4xf32>
    %c0_14 = arith.constant 0 : index
    %c0_15 = arith.constant 0 : index
    %c0_16 = arith.constant 0 : index
    %20 = vector.load %arg7[%c0_14, %c0_15, %c0_16] : memref<1x1x4xf32, #tpu.memory_space<vmem>>, vector<1x1x4xf32>
    %21 = vector.shape_cast %20 : vector<1x1x4xf32> to vector<1x4xf32>
    %22 = vector.broadcast %21 : vector<1x4xf32> to vector<64x4xf32>
    %23 = arith.addf %19, %22 : vector<64x4xf32>
    %cst_17 = arith.constant 0.000000e+00 : f32
    %24 = vector.broadcast %cst_17 : f32 to vector<64x4xf32>
    %25 = arith.maximumf %23, %24 : vector<64x4xf32>
    %26 = arith.addf %12, %25 : vector<64x4xf32>
    %27 = arith.truncf %26 : vector<64x4xf32> to vector<64x4xbf16>
    %c0_18 = arith.constant 0 : index
    %c0_19 = arith.constant 0 : index
    %c0_20 = arith.constant 0 : index
    %28 = vector.load %arg8[%c0_18, %c0_19, %c0_20] : memref<1x64x4xbf16, #tpu.memory_space<vmem>>, vector<1x64x4xbf16>
    %29 = vector.shape_cast %28 : vector<1x64x4xbf16> to vector<64x4xbf16>
    %30 = vector.shape_cast %27 : vector<64x4xbf16> to vector<1x64x4xbf16>
    tpu.vector_store %arg8[%c0_18, %c0_19, %c0_20], %30 {strides = array<i32>} : memref<1x64x4xbf16, #tpu.memory_space<vmem>>, vector<1x64x4xbf16>,
    return
  }
  func.func @transform_0(%arg0: i32, %arg1: i32) -> (i32, i32, i32) {
    %c0_i32 = arith.constant 0 : i32
    %c0_i32_0 = arith.constant 0 : i32
    return %arg0, %arg1, %c0_i32 : i32, i32, i32
  }
  func.func @transform_1(%arg0: i32, %arg1: i32) -> (i32, i32, i32) {
    %c0_i32 = arith.constant 0 : i32
    %c0_i32_0 = arith.constant 0 : i32
    %c0_i32_1 = arith.constant 0 : i32
    return %arg0, %c0_i32, %c0_i32_0 : i32, i32, i32
  }
  func.func @transform_2(%arg0: i32, %arg1: i32) -> (i32, i32, i32) {
    %c0_i32 = arith.constant 0 : i32
    %c0_i32_0 = arith.constant 0 : i32
    %c0_i32_1 = arith.constant 0 : i32
    return %arg0, %c0_i32, %c0_i32_0 : i32, i32, i32
  }
  func.func @transform_3(%arg0: i32, %arg1: i32) -> (i32, i32, i32) {
    %c0_i32 = arith.constant 0 : i32
    %c0_i32_0 = arith.constant 0 : i32
    return %arg0, %arg1, %c0_i32 : i32, i32, i32
  }
  func.func @transform_4(%arg0: i32, %arg1: i32) -> (i32, i32, i32) {
    %c0_i32 = arith.constant 0 : i32
    %c0_i32_0 = arith.constant 0 : i32
    %c0_i32_1 = arith.constant 0 : i32
    return %arg0, %c0_i32, %c0_i32_0 : i32, i32, i32
  }
  func.func @transform_5(%arg0: i32, %arg1: i32) -> (i32, i32, i32) {
    %c0_i32 = arith.constant 0 : i32
    %c0_i32_0 = arith.constant 0 : i32
    %c0_i32_1 = arith.constant 0 : i32
    return %arg0, %c0_i32, %c0_i32_0 : i32, i32, i32
  }
  func.func @transform_6(%arg0: i32, %arg1: i32) -> (i32, i32, i32) {
    %c0_i32 = arith.constant 0 : i32
    %c0_i32_0 = arith.constant 0 : i32
    return %arg0, %arg1, %c0_i32 : i32, i32, i32
  }
}

module attributes {stable_mosaic.version = 11 : i64} {
  func.func @_mm_stats_kernel(%arg0: i32, %arg1: i32, %arg2: memref<1x64x4xbf16, #tpu.memory_space<vmem>>, %arg3: memref<4x4xbf16, #tpu.memory_space<vmem>>, %arg4: memref<1x64x4xbf16, #tpu.memory_space<vmem>>, %arg5: memref<1x1x4xf32, #tpu.memory_space<vmem>>, %arg6: memref<1x1x4xf32, #tpu.memory_space<vmem>>) attributes {dimension_semantics = [#tpu.dimension_semantics<parallel>, #tpu.dimension_semantics<arbitrary>], iteration_bounds = array<i64: 2, 1>, scalar_prefetch = 0 : i64, scratch_operands = 0 : i64, tpu.core_type = #tpu.core_type<tc>, window_params = [{transform_indices = @transform_0, window_bounds = array<i64: 1, 64, 4>}, {pipeline_mode = #tpu.pipeline_mode<synchronous>, transform_indices = @transform_1, window_bounds = array<i64: 4, 4>}, {transform_indices = @transform_2, window_bounds = array<i64: 1, 64, 4>}, {transform_indices = @transform_3, window_bounds = array<i64: 1, 1, 4>}, {transform_indices = @transform_4, window_bounds = array<i64: 1, 1, 4>}]} {
    %c0_i32 = arith.constant 0 : i32
    %0 = arith.cmpi eq, %arg1, %c0_i32 : i32
    %1 = arith.extui %0 : i1 to i32
    %c0_i32_0 = arith.constant 0 : i32
    %2 = arith.cmpi ne, %1, %c0_i32_0 : i32
    scf.if %2 {
      %cst_22 = arith.constant 0.000000e+00 : f32
      %28 = vector.broadcast %cst_22 : f32 to vector<1x1x4xf32>
      %c0_23 = arith.constant 0 : index
      %c0_24 = arith.constant 0 : index
      %c0_25 = arith.constant 0 : index
      %29 = vector.load %arg5[%c0_23, %c0_24, %c0_25] : memref<1x1x4xf32, #tpu.memory_space<vmem>>, vector<1x1x4xf32>
      tpu.vector_store %arg5[%c0_23, %c0_24, %c0_25], %28 {strides = array<i32>} : memref<1x1x4xf32, #tpu.memory_space<vmem>>, vector<1x1x4xf32>,
      %cst_26 = arith.constant 0.000000e+00 : f32
      %30 = vector.broadcast %cst_26 : f32 to vector<1x1x4xf32>
      %c0_27 = arith.constant 0 : index
      %c0_28 = arith.constant 0 : index
      %c0_29 = arith.constant 0 : index
      %31 = vector.load %arg6[%c0_27, %c0_28, %c0_29] : memref<1x1x4xf32, #tpu.memory_space<vmem>>, vector<1x1x4xf32>
      tpu.vector_store %arg6[%c0_27, %c0_28, %c0_29], %30 {strides = array<i32>} : memref<1x1x4xf32, #tpu.memory_space<vmem>>, vector<1x1x4xf32>,
    } else {
    }
    %c0 = arith.constant 0 : index
    %c0_1 = arith.constant 0 : index
    %c0_2 = arith.constant 0 : index
    %3 = vector.load %arg2[%c0, %c0_1, %c0_2] : memref<1x64x4xbf16, #tpu.memory_space<vmem>>, vector<1x64x4xbf16>
    %4 = vector.shape_cast %3 : vector<1x64x4xbf16> to vector<64x4xbf16>
    %c0_3 = arith.constant 0 : index
    %c0_4 = arith.constant 0 : index
    %5 = vector.load %arg3[%c0_3, %c0_4] : memref<4x4xbf16, #tpu.memory_space<vmem>>, vector<4x4xbf16>
    %cst = arith.constant dense<0.000000e+00> : vector<64x4xf32>
    %6 = tpu.matmul %4, %5, %cst {dimension_numbers = #tpu.dot_dimension_numbers<[1], [0], [0], [1], [0, 0, 1, 1], [], []>} : vector<64x4xbf16>, vector<4x4xbf16>, vector<64x4xf32> -> vector<64x4xf32>
    %7 = arith.truncf %6 : vector<64x4xf32> to vector<64x4xbf16>
    %c0_5 = arith.constant 0 : index
    %c0_6 = arith.constant 0 : index
    %c0_7 = arith.constant 0 : index
    %8 = vector.load %arg4[%c0_5, %c0_6, %c0_7] : memref<1x64x4xbf16, #tpu.memory_space<vmem>>, vector<1x64x4xbf16>
    %9 = vector.shape_cast %8 : vector<1x64x4xbf16> to vector<64x4xbf16>
    %10 = vector.shape_cast %7 : vector<64x4xbf16> to vector<1x64x4xbf16>
    tpu.vector_store %arg4[%c0_5, %c0_6, %c0_7], %10 {strides = array<i32>} : memref<1x64x4xbf16, #tpu.memory_space<vmem>>, vector<1x64x4xbf16>,
    %c0_8 = arith.constant 0 : index
    %c0_9 = arith.constant 0 : index
    %c0_10 = arith.constant 0 : index
    %11 = vector.load %arg5[%c0_8, %c0_9, %c0_10] : memref<1x1x4xf32, #tpu.memory_space<vmem>>, vector<1x1x4xf32>
    %12 = vector.shape_cast %11 : vector<1x1x4xf32> to vector<1x4xf32>
    %cst_11 = arith.constant dense<0.000000e+00> : vector<4xf32>
    %13 = vector.multi_reduction <add>, %6, %cst_11 [0] : vector<64x4xf32> to vector<4xf32>
    %14 = vector.shape_cast %13 : vector<4xf32> to vector<1x4xf32>
    %15 = arith.addf %12, %14 : vector<1x4xf32>
    %c0_12 = arith.constant 0 : index
    %c0_13 = arith.constant 0 : index
    %c0_14 = arith.constant 0 : index
    %16 = vector.load %arg5[%c0_12, %c0_13, %c0_14] : memref<1x1x4xf32, #tpu.memory_space<vmem>>, vector<1x1x4xf32>
    %17 = vector.shape_cast %16 : vector<1x1x4xf32> to vector<1x4xf32>
    %18 = vector.shape_cast %15 : vector<1x4xf32> to vector<1x1x4xf32>
    tpu.vector_store %arg5[%c0_12, %c0_13, %c0_14], %18 {strides = array<i32>} : memref<1x1x4xf32, #tpu.memory_space<vmem>>, vector<1x1x4xf32>,
    %c0_15 = arith.constant 0 : index
    %c0_16 = arith.constant 0 : index
    %c0_17 = arith.constant 0 : index
    %19 = vector.load %arg6[%c0_15, %c0_16, %c0_17] : memref<1x1x4xf32, #tpu.memory_space<vmem>>, vector<1x1x4xf32>
    %20 = vector.shape_cast %19 : vector<1x1x4xf32> to vector<1x4xf32>
    %21 = arith.mulf %6, %6 : vector<64x4xf32>
    %cst_18 = arith.constant dense<0.000000e+00> : vector<4xf32>
    %22 = vector.multi_reduction <add>, %21, %cst_18 [0] : vector<64x4xf32> to vector<4xf32>
    %23 = vector.shape_cast %22 : vector<4xf32> to vector<1x4xf32>
    %24 = arith.addf %20, %23 : vector<1x4xf32>
    %c0_19 = arith.constant 0 : index
    %c0_20 = arith.constant 0 : index
    %c0_21 = arith.constant 0 : index
    %25 = vector.load %arg6[%c0_19, %c0_20, %c0_21] : memref<1x1x4xf32, #tpu.memory_space<vmem>>, vector<1x1x4xf32>
    %26 = vector.shape_cast %25 : vector<1x1x4xf32> to vector<1x4xf32>
    %27 = vector.shape_cast %24 : vector<1x4xf32> to vector<1x1x4xf32>
    tpu.vector_store %arg6[%c0_19, %c0_20, %c0_21], %27 {strides = array<i32>} : memref<1x1x4xf32, #tpu.memory_space<vmem>>, vector<1x1x4xf32>,
    return
  }
  func.func @transform_0(%arg0: i32, %arg1: i32) -> (i32, i32, i32) {
    %c0_i32 = arith.constant 0 : i32
    %c0_i32_0 = arith.constant 0 : i32
    return %arg0, %arg1, %c0_i32 : i32, i32, i32
  }
  func.func @transform_1(%arg0: i32, %arg1: i32) -> (i32, i32) {
    %c0_i32 = arith.constant 0 : i32
    %c0_i32_0 = arith.constant 0 : i32
    %c0_i32_1 = arith.constant 0 : i32
    return %c0_i32, %c0_i32_0 : i32, i32
  }
  func.func @transform_2(%arg0: i32, %arg1: i32) -> (i32, i32, i32) {
    %c0_i32 = arith.constant 0 : i32
    %c0_i32_0 = arith.constant 0 : i32
    return %arg0, %arg1, %c0_i32 : i32, i32, i32
  }
  func.func @transform_3(%arg0: i32, %arg1: i32) -> (i32, i32, i32) {
    %c0_i32 = arith.constant 0 : i32
    %c0_i32_0 = arith.constant 0 : i32
    %c0_i32_1 = arith.constant 0 : i32
    return %arg0, %c0_i32, %c0_i32_0 : i32, i32, i32
  }
  func.func @transform_4(%arg0: i32, %arg1: i32) -> (i32, i32, i32) {
    %c0_i32 = arith.constant 0 : i32
    %c0_i32_0 = arith.constant 0 : i32
    %c0_i32_1 = arith.constant 0 : i32
    return %arg0, %c0_i32, %c0_i32_0 : i32, i32, i32
  }
}

module attributes {stable_mosaic.version = 11 : i64} {
  func.func @_scale_act_kernel(%arg0: i32, %arg1: i32, %arg2: memref<1x64x4xbf16, #tpu.memory_space<vmem>>, %arg3: memref<1x1x4xf32, #tpu.memory_space<vmem>>, %arg4: memref<1x1x4xf32, #tpu.memory_space<vmem>>, %arg5: memref<1x64x4xbf16, #tpu.memory_space<vmem>>, %arg6: memref<1x64x4xbf16, #tpu.memory_space<vmem>>) attributes {dimension_semantics = [#tpu.dimension_semantics<parallel>, #tpu.dimension_semantics<parallel>], iteration_bounds = array<i64: 2, 1>, scalar_prefetch = 0 : i64, scratch_operands = 0 : i64, tpu.core_type = #tpu.core_type<tc>, window_params = [{transform_indices = @transform_0, window_bounds = array<i64: 1, 64, 4>}, {transform_indices = @transform_1, window_bounds = array<i64: 1, 1, 4>}, {transform_indices = @transform_2, window_bounds = array<i64: 1, 1, 4>}, {transform_indices = @transform_3, window_bounds = array<i64: 1, 64, 4>}, {transform_indices = @transform_4, window_bounds = array<i64: 1, 64, 4>}]} {
    %c0 = arith.constant 0 : index
    %c0_0 = arith.constant 0 : index
    %c0_1 = arith.constant 0 : index
    %0 = vector.load %arg2[%c0, %c0_0, %c0_1] : memref<1x64x4xbf16, #tpu.memory_space<vmem>>, vector<1x64x4xbf16>
    %1 = vector.shape_cast %0 : vector<1x64x4xbf16> to vector<64x4xbf16>
    %2 = arith.extf %1 : vector<64x4xbf16> to vector<64x4xf32>
    %c0_2 = arith.constant 0 : index
    %c0_3 = arith.constant 0 : index
    %c0_4 = arith.constant 0 : index
    %3 = vector.load %arg3[%c0_2, %c0_3, %c0_4] : memref<1x1x4xf32, #tpu.memory_space<vmem>>, vector<1x1x4xf32>
    %4 = vector.shape_cast %3 : vector<1x1x4xf32> to vector<1x4xf32>
    %5 = vector.broadcast %4 : vector<1x4xf32> to vector<64x4xf32>
    %6 = arith.mulf %2, %5 : vector<64x4xf32>
    %c0_5 = arith.constant 0 : index
    %c0_6 = arith.constant 0 : index
    %c0_7 = arith.constant 0 : index
    %7 = vector.load %arg4[%c0_5, %c0_6, %c0_7] : memref<1x1x4xf32, #tpu.memory_space<vmem>>, vector<1x1x4xf32>
    %8 = vector.shape_cast %7 : vector<1x1x4xf32> to vector<1x4xf32>
    %9 = vector.broadcast %8 : vector<1x4xf32> to vector<64x4xf32>
    %10 = arith.addf %6, %9 : vector<64x4xf32>
    %cst = arith.constant 0.000000e+00 : f32
    %11 = vector.broadcast %cst : f32 to vector<64x4xf32>
    %12 = arith.maximumf %10, %11 : vector<64x4xf32>
    %c0_8 = arith.constant 0 : index
    %c0_9 = arith.constant 0 : index
    %c0_10 = arith.constant 0 : index
    %13 = vector.load %arg5[%c0_8, %c0_9, %c0_10] : memref<1x64x4xbf16, #tpu.memory_space<vmem>>, vector<1x64x4xbf16>
    %14 = vector.shape_cast %13 : vector<1x64x4xbf16> to vector<64x4xbf16>
    %15 = arith.extf %14 : vector<64x4xbf16> to vector<64x4xf32>
    %16 = arith.addf %12, %15 : vector<64x4xf32>
    %17 = arith.truncf %16 : vector<64x4xf32> to vector<64x4xbf16>
    %c0_11 = arith.constant 0 : index
    %c0_12 = arith.constant 0 : index
    %c0_13 = arith.constant 0 : index
    %18 = vector.load %arg6[%c0_11, %c0_12, %c0_13] : memref<1x64x4xbf16, #tpu.memory_space<vmem>>, vector<1x64x4xbf16>
    %19 = vector.shape_cast %18 : vector<1x64x4xbf16> to vector<64x4xbf16>
    %20 = vector.shape_cast %17 : vector<64x4xbf16> to vector<1x64x4xbf16>
    tpu.vector_store %arg6[%c0_11, %c0_12, %c0_13], %20 {strides = array<i32>} : memref<1x64x4xbf16, #tpu.memory_space<vmem>>, vector<1x64x4xbf16>,
    return
  }
  func.func @transform_0(%arg0: i32, %arg1: i32) -> (i32, i32, i32) {
    %c0_i32 = arith.constant 0 : i32
    %c0_i32_0 = arith.constant 0 : i32
    return %arg0, %arg1, %c0_i32 : i32, i32, i32
  }
  func.func @transform_1(%arg0: i32, %arg1: i32) -> (i32, i32, i32) {
    %c0_i32 = arith.constant 0 : i32
    %c0_i32_0 = arith.constant 0 : i32
    %c0_i32_1 = arith.constant 0 : i32
    return %arg0, %c0_i32, %c0_i32_0 : i32, i32, i32
  }
  func.func @transform_2(%arg0: i32, %arg1: i32) -> (i32, i32, i32) {
    %c0_i32 = arith.constant 0 : i32
    %c0_i32_0 = arith.constant 0 : i32
    %c0_i32_1 = arith.constant 0 : i32
    return %arg0, %c0_i32, %c0_i32_0 : i32, i32, i32
  }
  func.func @transform_3(%arg0: i32, %arg1: i32) -> (i32, i32, i32) {
    %c0_i32 = arith.constant 0 : i32
    %c0_i32_0 = arith.constant 0 : i32
    return %arg0, %arg1, %c0_i32 : i32, i32, i32
  }
  func.func @transform_4(%arg0: i32, %arg1: i32) -> (i32, i32, i32) {
    %c0_i32 = arith.constant 0 : i32
    %c0_i32_0 = arith.constant 0 : i32
    return %arg0, %arg1, %c0_i32 : i32, i32, i32
  }
}

module attributes {stable_mosaic.version = 11 : i64} {
  func.func @_scale_act_kernel(%arg0: i32, %arg1: i32, %arg2: memref<1x64x8xbf16, #tpu.memory_space<vmem>>, %arg3: memref<1x1x8xf32, #tpu.memory_space<vmem>>, %arg4: memref<1x1x8xf32, #tpu.memory_space<vmem>>, %arg5: memref<1x64x8xf32, #tpu.memory_space<vmem>>) attributes {dimension_semantics = [#tpu.dimension_semantics<parallel>, #tpu.dimension_semantics<parallel>], iteration_bounds = array<i64: 2, 1>, scalar_prefetch = 0 : i64, scratch_operands = 0 : i64, tpu.core_type = #tpu.core_type<tc>, window_params = [{transform_indices = @transform_0, window_bounds = array<i64: 1, 64, 8>}, {transform_indices = @transform_1, window_bounds = array<i64: 1, 1, 8>}, {transform_indices = @transform_2, window_bounds = array<i64: 1, 1, 8>}, {transform_indices = @transform_3, window_bounds = array<i64: 1, 64, 8>}]} {
    %c0 = arith.constant 0 : index
    %c0_0 = arith.constant 0 : index
    %c0_1 = arith.constant 0 : index
    %0 = vector.load %arg2[%c0, %c0_0, %c0_1] : memref<1x64x8xbf16, #tpu.memory_space<vmem>>, vector<1x64x8xbf16>
    %1 = vector.shape_cast %0 : vector<1x64x8xbf16> to vector<64x8xbf16>
    %2 = arith.extf %1 : vector<64x8xbf16> to vector<64x8xf32>
    %c0_2 = arith.constant 0 : index
    %c0_3 = arith.constant 0 : index
    %c0_4 = arith.constant 0 : index
    %3 = vector.load %arg3[%c0_2, %c0_3, %c0_4] : memref<1x1x8xf32, #tpu.memory_space<vmem>>, vector<1x1x8xf32>
    %4 = vector.shape_cast %3 : vector<1x1x8xf32> to vector<1x8xf32>
    %5 = vector.broadcast %4 : vector<1x8xf32> to vector<64x8xf32>
    %6 = arith.mulf %2, %5 : vector<64x8xf32>
    %c0_5 = arith.constant 0 : index
    %c0_6 = arith.constant 0 : index
    %c0_7 = arith.constant 0 : index
    %7 = vector.load %arg4[%c0_5, %c0_6, %c0_7] : memref<1x1x8xf32, #tpu.memory_space<vmem>>, vector<1x1x8xf32>
    %8 = vector.shape_cast %7 : vector<1x1x8xf32> to vector<1x8xf32>
    %9 = vector.broadcast %8 : vector<1x8xf32> to vector<64x8xf32>
    %10 = arith.addf %6, %9 : vector<64x8xf32>
    %cst = arith.constant 0.000000e+00 : f32
    %11 = vector.broadcast %cst : f32 to vector<64x8xf32>
    %12 = arith.maximumf %10, %11 : vector<64x8xf32>
    %c0_8 = arith.constant 0 : index
    %c0_9 = arith.constant 0 : index
    %c0_10 = arith.constant 0 : index
    %13 = vector.load %arg5[%c0_8, %c0_9, %c0_10] : memref<1x64x8xf32, #tpu.memory_space<vmem>>, vector<1x64x8xf32>
    %14 = vector.shape_cast %13 : vector<1x64x8xf32> to vector<64x8xf32>
    %15 = vector.shape_cast %12 : vector<64x8xf32> to vector<1x64x8xf32>
    tpu.vector_store %arg5[%c0_8, %c0_9, %c0_10], %15 {strides = array<i32>} : memref<1x64x8xf32, #tpu.memory_space<vmem>>, vector<1x64x8xf32>,
    return
  }
  func.func @transform_0(%arg0: i32, %arg1: i32) -> (i32, i32, i32) {
    %c0_i32 = arith.constant 0 : i32
    %c0_i32_0 = arith.constant 0 : i32
    return %arg0, %arg1, %c0_i32 : i32, i32, i32
  }
  func.func @transform_1(%arg0: i32, %arg1: i32) -> (i32, i32, i32) {
    %c0_i32 = arith.constant 0 : i32
    %c0_i32_0 = arith.constant 0 : i32
    %c0_i32_1 = arith.constant 0 : i32
    return %arg0, %c0_i32, %c0_i32_0 : i32, i32, i32
  }
  func.func @transform_2(%arg0: i32, %arg1: i32) -> (i32, i32, i32) {
    %c0_i32 = arith.constant 0 : i32
    %c0_i32_0 = arith.constant 0 : i32
    %c0_i32_1 = arith.constant 0 : i32
    return %arg0, %c0_i32, %c0_i32_0 : i32, i32, i32
  }
  func.func @transform_3(%arg0: i32, %arg1: i32) -> (i32, i32, i32) {
    %c0_i32 = arith.constant 0 : i32
    %c0_i32_0 = arith.constant 0 : i32
    return %arg0, %arg1, %c0_i32 : i32, i32, i32
  }
}

module attributes {stable_mosaic.version = 11 : i64} {
  func.func @_mm_stats_kernel(%arg0: i32, %arg1: i32, %arg2: memref<1x64x4xbf16, #tpu.memory_space<vmem>>, %arg3: memref<4x8xbf16, #tpu.memory_space<vmem>>, %arg4: memref<1x1x4xf32, #tpu.memory_space<vmem>>, %arg5: memref<1x1x4xf32, #tpu.memory_space<vmem>>, %arg6: memref<1x64x4xbf16, #tpu.memory_space<vmem>>, %arg7: memref<4x8xbf16, #tpu.memory_space<vmem>>, %arg8: memref<1x1x4xf32, #tpu.memory_space<vmem>>, %arg9: memref<1x1x4xf32, #tpu.memory_space<vmem>>, %arg10: memref<1x64x8xbf16, #tpu.memory_space<vmem>>, %arg11: memref<1x1x8xf32, #tpu.memory_space<vmem>>, %arg12: memref<1x1x8xf32, #tpu.memory_space<vmem>>) attributes {dimension_semantics = [#tpu.dimension_semantics<parallel>, #tpu.dimension_semantics<arbitrary>], iteration_bounds = array<i64: 2, 1>, scalar_prefetch = 0 : i64, scratch_operands = 0 : i64, tpu.core_type = #tpu.core_type<tc>, window_params = [{transform_indices = @transform_0, window_bounds = array<i64: 1, 64, 4>}, {pipeline_mode = #tpu.pipeline_mode<synchronous>, transform_indices = @transform_1, window_bounds = array<i64: 4, 8>}, {transform_indices = @transform_2, window_bounds = array<i64: 1, 1, 4>}, {transform_indices = @transform_3, window_bounds = array<i64: 1, 1, 4>}, {transform_indices = @transform_4, window_bounds = array<i64: 1, 64, 4>}, {pipeline_mode = #tpu.pipeline_mode<synchronous>, transform_indices = @transform_5, window_bounds = array<i64: 4, 8>}, {transform_indices = @transform_6, window_bounds = array<i64: 1, 1, 4>}, {transform_indices = @transform_7, window_bounds = array<i64: 1, 1, 4>}, {transform_indices = @transform_8, window_bounds = array<i64: 1, 64, 8>}, {transform_indices = @transform_9, window_bounds = array<i64: 1, 1, 8>}, {transform_indices = @transform_10, window_bounds = array<i64: 1, 1, 8>}]} {
    %c0_i32 = arith.constant 0 : i32
    %0 = arith.cmpi eq, %arg1, %c0_i32 : i32
    %1 = arith.extui %0 : i1 to i32
    %c0_i32_0 = arith.constant 0 : i32
    %2 = arith.cmpi ne, %1, %c0_i32_0 : i32
    scf.if %2 {
      %cst_42 = arith.constant 0.000000e+00 : f32
      %57 = vector.broadcast %cst_42 : f32 to vector<1x1x8xf32>
      %c0_43 = arith.constant 0 : index
      %c0_44 = arith.constant 0 : index
      %c0_45 = arith.constant 0 : index
      %58 = vector.load %arg11[%c0_43, %c0_44, %c0_45] : memref<1x1x8xf32, #tpu.memory_space<vmem>>, vector<1x1x8xf32>
      tpu.vector_store %arg11[%c0_43, %c0_44, %c0_45], %57 {strides = array<i32>} : memref<1x1x8xf32, #tpu.memory_space<vmem>>, vector<1x1x8xf32>,
      %cst_46 = arith.constant 0.000000e+00 : f32
      %59 = vector.broadcast %cst_46 : f32 to vector<1x1x8xf32>
      %c0_47 = arith.constant 0 : index
      %c0_48 = arith.constant 0 : index
      %c0_49 = arith.constant 0 : index
      %60 = vector.load %arg12[%c0_47, %c0_48, %c0_49] : memref<1x1x8xf32, #tpu.memory_space<vmem>>, vector<1x1x8xf32>
      tpu.vector_store %arg12[%c0_47, %c0_48, %c0_49], %59 {strides = array<i32>} : memref<1x1x8xf32, #tpu.memory_space<vmem>>, vector<1x1x8xf32>,
    } else {
    }
    %c0 = arith.constant 0 : index
    %c0_1 = arith.constant 0 : index
    %c0_2 = arith.constant 0 : index
    %3 = vector.load %arg2[%c0, %c0_1, %c0_2] : memref<1x64x4xbf16, #tpu.memory_space<vmem>>, vector<1x64x4xbf16>
    %4 = vector.shape_cast %3 : vector<1x64x4xbf16> to vector<64x4xbf16>
    %5 = arith.extf %4 : vector<64x4xbf16> to vector<64x4xf32>
    %c0_3 = arith.constant 0 : index
    %c0_4 = arith.constant 0 : index
    %c0_5 = arith.constant 0 : index
    %6 = vector.load %arg4[%c0_3, %c0_4, %c0_5] : memref<1x1x4xf32, #tpu.memory_space<vmem>>, vector<1x1x4xf32>
    %7 = vector.shape_cast %6 : vector<1x1x4xf32> to vector<1x4xf32>
    %8 = vector.broadcast %7 : vector<1x4xf32> to vector<64x4xf32>
    %9 = arith.mulf %5, %8 : vector<64x4xf32>
    %c0_6 = arith.constant 0 : index
    %c0_7 = arith.constant 0 : index
    %c0_8 = arith.constant 0 : index
    %10 = vector.load %arg5[%c0_6, %c0_7, %c0_8] : memref<1x1x4xf32, #tpu.memory_space<vmem>>, vector<1x1x4xf32>
    %11 = vector.shape_cast %10 : vector<1x1x4xf32> to vector<1x4xf32>
    %12 = vector.broadcast %11 : vector<1x4xf32> to vector<64x4xf32>
    %13 = arith.addf %9, %12 : vector<64x4xf32>
    %cst = arith.constant 0.000000e+00 : f32
    %14 = vector.broadcast %cst : f32 to vector<64x4xf32>
    %15 = arith.maximumf %13, %14 : vector<64x4xf32>
    %16 = arith.truncf %15 : vector<64x4xf32> to vector<64x4xbf16>
    %c0_9 = arith.constant 0 : index
    %c0_10 = arith.constant 0 : index
    %17 = vector.load %arg3[%c0_9, %c0_10] : memref<4x8xbf16, #tpu.memory_space<vmem>>, vector<4x8xbf16>
    %cst_11 = arith.constant dense<0.000000e+00> : vector<64x8xf32>
    %18 = tpu.matmul %16, %17, %cst_11 {dimension_numbers = #tpu.dot_dimension_numbers<[1], [0], [0], [1], [0, 0, 1, 1], [], []>} : vector<64x4xbf16>, vector<4x8xbf16>, vector<64x8xf32> -> vector<64x8xf32>
    %c0_12 = arith.constant 0 : index
    %c0_13 = arith.constant 0 : index
    %c0_14 = arith.constant 0 : index
    %19 = vector.load %arg6[%c0_12, %c0_13, %c0_14] : memref<1x64x4xbf16, #tpu.memory_space<vmem>>, vector<1x64x4xbf16>
    %20 = vector.shape_cast %19 : vector<1x64x4xbf16> to vector<64x4xbf16>
    %21 = arith.extf %20 : vector<64x4xbf16> to vector<64x4xf32>
    %c0_15 = arith.constant 0 : index
    %c0_16 = arith.constant 0 : index
    %c0_17 = arith.constant 0 : index
    %22 = vector.load %arg8[%c0_15, %c0_16, %c0_17] : memref<1x1x4xf32, #tpu.memory_space<vmem>>, vector<1x1x4xf32>
    %23 = vector.shape_cast %22 : vector<1x1x4xf32> to vector<1x4xf32>
    %24 = vector.broadcast %23 : vector<1x4xf32> to vector<64x4xf32>
    %25 = arith.mulf %21, %24 : vector<64x4xf32>
    %c0_18 = arith.constant 0 : index
    %c0_19 = arith.constant 0 : index
    %c0_20 = arith.constant 0 : index
    %26 = vector.load %arg9[%c0_18, %c0_19, %c0_20] : memref<1x1x4xf32, #tpu.memory_space<vmem>>, vector<1x1x4xf32>
    %27 = vector.shape_cast %26 : vector<1x1x4xf32> to vector<1x4xf32>
    %28 = vector.broadcast %27 : vector<1x4xf32> to vector<64x4xf32>
    %29 = arith.addf %25, %28 : vector<64x4xf32>
    %cst_21 = arith.constant 0.000000e+00 : f32
    %30 = vector.broadcast %cst_21 : f32 to vector<64x4xf32>
    %31 = arith.maximumf %29, %30 : vector<64x4xf32>
    %32 = arith.truncf %31 : vector<64x4xf32> to vector<64x4xbf16>
    %c0_22 = arith.constant 0 : index
    %c0_23 = arith.constant 0 : index
    %33 = vector.load %arg7[%c0_22, %c0_23] : memref<4x8xbf16, #tpu.memory_space<vmem>>, vector<4x8xbf16>
    %cst_24 = arith.constant dense<0.000000e+00> : vector<64x8xf32>
    %34 = tpu.matmul %32, %33, %cst_24 {dimension_numbers = #tpu.dot_dimension_numbers<[1], [0], [0], [1], [0, 0, 1, 1], [], []>} : vector<64x4xbf16>, vector<4x8xbf16>, vector<64x8xf32> -> vector<64x8xf32>
    %35 = arith.addf %18, %34 : vector<64x8xf32>
    %36 = arith.truncf %35 : vector<64x8xf32> to vector<64x8xbf16>
    %c0_25 = arith.constant 0 : index
    %c0_26 = arith.constant 0 : index
    %c0_27 = arith.constant 0 : index
    %37 = vector.load %arg10[%c0_25, %c0_26, %c0_27] : memref<1x64x8xbf16, #tpu.memory_space<vmem>>, vector<1x64x8xbf16>
    %38 = vector.shape_cast %37 : vector<1x64x8xbf16> to vector<64x8xbf16>
    %39 = vector.shape_cast %36 : vector<64x8xbf16> to vector<1x64x8xbf16>
    tpu.vector_store %arg10[%c0_25, %c0_26, %c0_27], %39 {strides = array<i32>} : memref<1x64x8xbf16, #tpu.memory_space<vmem>>, vector<1x64x8xbf16>,
    %c0_28 = arith.constant 0 : index
    %c0_29 = arith.constant 0 : index
    %c0_30 = arith.constant 0 : index
    %40 = vector.load %arg11[%c0_28, %c0_29, %c0_30] : memref<1x1x8xf32, #tpu.memory_space<vmem>>, vector<1x1x8xf32>
    %41 = vector.shape_cast %40 : vector<1x1x8xf32> to vector<1x8xf32>
    %cst_31 = arith.constant dense<0.000000e+00> : vector<8xf32>
    %42 = vector.multi_reduction <add>, %35, %cst_31 [0] : vector<64x8xf32> to vector<8xf32>
    %43 = vector.shape_cast %42 : vector<8xf32> to vector<1x8xf32>
    %44 = arith.addf %41, %43 : vector<1x8xf32>
    %c0_32 = arith.constant 0 : index
    %c0_33 = arith.constant 0 : index
    %c0_34 = arith.constant 0 : index
    %45 = vector.load %arg11[%c0_32, %c0_33, %c0_34] : memref<1x1x8xf32, #tpu.memory_space<vmem>>, vector<1x1x8xf32>
    %46 = vector.shape_cast %45 : vector<1x1x8xf32> to vector<1x8xf32>
    %47 = vector.shape_cast %44 : vector<1x8xf32> to vector<1x1x8xf32>
    tpu.vector_store %arg11[%c0_32, %c0_33, %c0_34], %47 {strides = array<i32>} : memref<1x1x8xf32, #tpu.memory_space<vmem>>, vector<1x1x8xf32>,
    %c0_35 = arith.constant 0 : index
    %c0_36 = arith.constant 0 : index
    %c0_37 = arith.constant 0 : index
    %48 = vector.load %arg12[%c0_35, %c0_36, %c0_37] : memref<1x1x8xf32, #tpu.memory_space<vmem>>, vector<1x1x8xf32>
    %49 = vector.shape_cast %48 : vector<1x1x8xf32> to vector<1x8xf32>
    %50 = arith.mulf %35, %35 : vector<64x8xf32>
    %cst_38 = arith.constant dense<0.000000e+00> : vector<8xf32>
    %51 = vector.multi_reduction <add>, %50, %cst_38 [0] : vector<64x8xf32> to vector<8xf32>
    %52 = vector.shape_cast %51 : vector<8xf32> to vector<1x8xf32>
    %53 = arith.addf %49, %52 : vector<1x8xf32>
    %c0_39 = arith.constant 0 : index
    %c0_40 = arith.constant 0 : index
    %c0_41 = arith.constant 0 : index
    %54 = vector.load %arg12[%c0_39, %c0_40, %c0_41] : memref<1x1x8xf32, #tpu.memory_space<vmem>>, vector<1x1x8xf32>
    %55 = vector.shape_cast %54 : vector<1x1x8xf32> to vector<1x8xf32>
    %56 = vector.shape_cast %53 : vector<1x8xf32> to vector<1x1x8xf32>
    tpu.vector_store %arg12[%c0_39, %c0_40, %c0_41], %56 {strides = array<i32>} : memref<1x1x8xf32, #tpu.memory_space<vmem>>, vector<1x1x8xf32>,
    return
  }
  func.func @transform_0(%arg0: i32, %arg1: i32) -> (i32, i32, i32) {
    %c0_i32 = arith.constant 0 : i32
    %c0_i32_0 = arith.constant 0 : i32
    return %arg0, %arg1, %c0_i32 : i32, i32, i32
  }
  func.func @transform_1(%arg0: i32, %arg1: i32) -> (i32, i32) {
    %c0_i32 = arith.constant 0 : i32
    %c0_i32_0 = arith.constant 0 : i32
    %c0_i32_1 = arith.constant 0 : i32
    return %c0_i32, %c0_i32_0 : i32, i32
  }
  func.func @transform_2(%arg0: i32, %arg1: i32) -> (i32, i32, i32) {
    %c0_i32 = arith.constant 0 : i32
    %c0_i32_0 = arith.constant 0 : i32
    %c0_i32_1 = arith.constant 0 : i32
    return %arg0, %c0_i32, %c0_i32_0 : i32, i32, i32
  }
  func.func @transform_3(%arg0: i32, %arg1: i32) -> (i32, i32, i32) {
    %c0_i32 = arith.constant 0 : i32
    %c0_i32_0 = arith.constant 0 : i32
    %c0_i32_1 = arith.constant 0 : i32
    return %arg0, %c0_i32, %c0_i32_0 : i32, i32, i32
  }
  func.func @transform_4(%arg0: i32, %arg1: i32) -> (i32, i32, i32) {
    %c0_i32 = arith.constant 0 : i32
    %c0_i32_0 = arith.constant 0 : i32
    return %arg0, %arg1, %c0_i32 : i32, i32, i32
  }
  func.func @transform_5(%arg0: i32, %arg1: i32) -> (i32, i32) {
    %c0_i32 = arith.constant 0 : i32
    %c0_i32_0 = arith.constant 0 : i32
    %c0_i32_1 = arith.constant 0 : i32
    return %c0_i32, %c0_i32_0 : i32, i32
  }
  func.func @transform_6(%arg0: i32, %arg1: i32) -> (i32, i32, i32) {
    %c0_i32 = arith.constant 0 : i32
    %c0_i32_0 = arith.constant 0 : i32
    %c0_i32_1 = arith.constant 0 : i32
    return %arg0, %c0_i32, %c0_i32_0 : i32, i32, i32
  }
  func.func @transform_7(%arg0: i32, %arg1: i32) -> (i32, i32, i32) {
    %c0_i32 = arith.constant 0 : i32
    %c0_i32_0 = arith.constant 0 : i32
    %c0_i32_1 = arith.constant 0 : i32
    return %arg0, %c0_i32, %c0_i32_0 : i32, i32, i32
  }
  func.func @transform_8(%arg0: i32, %arg1: i32) -> (i32, i32, i32) {
    %c0_i32 = arith.constant 0 : i32
    %c0_i32_0 = arith.constant 0 : i32
    return %arg0, %arg1, %c0_i32 : i32, i32, i32
  }
  func.func @transform_9(%arg0: i32, %arg1: i32) -> (i32, i32, i32) {
    %c0_i32 = arith.constant 0 : i32
    %c0_i32_0 = arith.constant 0 : i32
    %c0_i32_1 = arith.constant 0 : i32
    return %arg0, %c0_i32, %c0_i32_0 : i32, i32, i32
  }
  func.func @transform_10(%arg0: i32, %arg1: i32) -> (i32, i32, i32) {
    %c0_i32 = arith.constant 0 : i32
    %c0_i32_0 = arith.constant 0 : i32
    %c0_i32_1 = arith.constant 0 : i32
    return %arg0, %c0_i32, %c0_i32_0 : i32, i32, i32
  }
}

</mosaic_0001>

<llo_original>
// kernel: csp_dark_forward.15
$region0: #{csp_dark_forward.15}
  #allocation0 [shape = 'u32[]', space=smem, size = 0x4, offset = 0x4, fixed_abs, tag = 'smem constant byte address 0x4 - core index']
  #allocation1 [shape = 'u32[144,128]{1,0:T(1,128)}', space=vmem, size = 0x12000, scoped, tag = 'internal scratch']
  %s0 = inlined_call_operand.vmem [shape: bf16[2,64,8], index: 0, kind: input, shape index: {}]
  %s1 = inlined_call_operand.vmem [shape: bf16[8,4], index: 1, kind: input, shape index: {}]
  %s2 = inlined_call_operand.vmem [shape: f32[2,1,8], index: 2, kind: input, shape index: {}]
  %s3 = inlined_call_operand.vmem [shape: f32[2,1,8], index: 3, kind: input, shape index: {}]
  %s4 = inlined_call_operand.vmem [shape: bf16[2,64,4], index: 4, kind: output, shape index: {0}]
  %s5 = inlined_call_operand.vmem [shape: f32[2,1,4], index: 5, kind: output, shape index: {1}]
  %s6 = inlined_call_operand.vmem [shape: f32[2,1,4], index: 6, kind: output, shape index: {2}]
  %7 = xla_tuple %s4, %s5, %s6
  %s8 = sld [smem:[#allocation0]]
  $region69: #{csp_dark_forward.15} parent=0
    _
  %s10 = ssub.s32 1, %s8
  %s11 = scalar_select 0, %s10, %s8
  loop: start=0, step=1, limit=4
  $region2: #{csp_dark_forward.15} parent=0 // loop_pre_header
    _
  $region3: #{csp_dark_forward.15} parent=0 // loop_header
    %s13 = sphi 0, %s17
    %p14 = scmp.ge.s32.totalorder %s13, 4
    %s20 = sphi 0, %s32
    %s21 = sphi 0, %s28
    %s22 = sphi 0, %s20
    %s23 = sphi 0, %s21
    %s24 = sphi 0, %s22
    %s25 = sphi 0, %s23
    %s37 = sphi 0, %s39
    %s40 = sphi 0, %s37
    %s41 = sphi 0, %s40
    %s57 = sphi 0, %s41
    %s61 = sphi 0, %s61
    %s63 = sphi 0, %s61
    %s64 = sphi 0, %s63
    %s78 = sphi 0, %s64
    %s84 = sphi 0, %s86
    %s87 = sphi 0, %s84
    %s88 = sphi 0, %s87
    %s104 = sphi 0, %s88
    %s110 = sphi 0, %s112
    %s113 = sphi 0, %s110
    %s114 = sphi 0, %s113
    %s130 = sphi 0, %s114
    %s138 = sphi 0, %s140
    %s141 = sphi 0, %s138
    %s142 = sphi 0, %s141
    %s158 = sphi 0, %s142
    %s164 = sphi 0, %s166
    %s167 = sphi 0, %s164
    %s168 = sphi 0, %s167
    %s184 = sphi 0, %s168
    %s190 = sphi 0, %s192
    %s193 = sphi 0, %s190
    %s194 = sphi 0, %s193
    %s210 = sphi 0, %s194
  $region4: #{csp_dark_forward.15} parent=0 // loop_header_branch
    %16 = sbr.rel (%p14) target = $region8
  $region5: #{csp_dark_forward.15} parent=0 // loop_body
    %s18 = ssub.s32 %s13, 1
    %s19 = ssub.s32 %s13, 2
    %s26 = sadd.s32 1, %s21
    %p27 = scmp.ge.s32.totalorder %s26, 1
    %s28 = scalar_select %p27, 0, %s26
    %s29 = sadd.s32 1, %s20
    %s30 = scalar_select %p27, %s29, %s20
    %p31 = scmp.ge.s32.totalorder %s30, 2
    %s32 = scalar_select %p31, 0, %s30
    %s33 = ssub.s32 %s20, %s32
    %s34 = ssub.s32 %s21, %s28
    %s35 = sor.u32 %s33, %s34
    %p36 = scmp.eq.s32.totalorder %s35, 0
    %s38 = sadd.s32 %s37, 1
    %s39 = scalar_select %p36, %s37, %s38
    %p42 = pneg %p36
    %p43 = scmp.eq.s32.totalorder %s13, 1
    %p44 = por %p42, %p43
    %p45 = scmp.ne.s32.totalorder %s37, %s40
    %p46 = scmp.eq.s32.totalorder %s13, 0
    %p47 = por %p45, %p46
    %p48 = scmp.ne.s32.totalorder %s37, %s40
    %p49 = scmp.eq.s32.totalorder %s18, 1
    %p50 = por %p48, %p49
    %p51 = scmp.ne.s32.totalorder %s40, %s41
    %p52 = scmp.eq.s32.totalorder %s18, 0
    %p53 = por %p51, %p52
    %p54 = scmp.ne.s32.totalorder %s40, %s41
    %p55 = scmp.eq.s32.totalorder %s19, 1
    %p56 = por %p54, %p55
    %p58 = scmp.ne.s32.totalorder %s41, %s57
    %p59 = scmp.eq.s32.totalorder %s19, 0
    %p60 = por %p58, %p59
    %s62 = sadd.s32 %s61, 1
    %p65 = scmp.eq.s32.totalorder %s13, 1
    %p66 = scmp.ne.s32.totalorder %s61, %s63
    %p67 = scmp.eq.s32.totalorder %s13, 0
    %p68 = por %p66, %p67
    %p69 = scmp.ne.s32.totalorder %s61, %s63
    %p70 = scmp.eq.s32.totalorder %s18, 1
    %p71 = por %p69, %p70
    %p72 = scmp.ne.s32.totalorder %s63, %s64
    %p73 = scmp.eq.s32.totalorder %s18, 0
    %p74 = por %p72, %p73
    %p75 = scmp.ne.s32.totalorder %s63, %s64
    %p76 = scmp.eq.s32.totalorder %s19, 1
    %p77 = por %p75, %p76
    %p79 = scmp.ne.s32.totalorder %s64, %s78
    %p80 = scmp.eq.s32.totalorder %s19, 0
    %p81 = por %p79, %p80
    %s82 = ssub.s32 %s20, %s32
    %p83 = scmp.eq.s32.totalorder %s82, 0
    %s85 = sadd.s32 %s84, 1
    %s86 = scalar_select %p83, %s84, %s85
    %p89 = pneg %p83
    %p90 = scmp.eq.s32.totalorder %s13, 1
    %p91 = por %p89, %p90
    %p92 = scmp.ne.s32.totalorder %s84, %s87
    %p93 = scmp.eq.s32.totalorder %s13, 0
    %p94 = por %p92, %p93
    %p95 = scmp.ne.s32.totalorder %s84, %s87
    %p96 = scmp.eq.s32.totalorder %s18, 1
    %p97 = por %p95, %p96
    %p98 = scmp.ne.s32.totalorder %s87, %s88
    %p99 = scmp.eq.s32.totalorder %s18, 0
    %p100 = por %p98, %p99
    %p101 = scmp.ne.s32.totalorder %s87, %s88
    %p102 = scmp.eq.s32.totalorder %s19, 1
    %p103 = por %p101, %p102
    %p105 = scmp.ne.s32.totalorder %s88, %s104
    %p106 = scmp.eq.s32.totalorder %s19, 0
    %p107 = por %p105, %p106
    %s108 = ssub.s32 %s20, %s32
    %p109 = scmp.eq.s32.totalorder %s108, 0
    %s111 = sadd.s32 %s110, 1
    %s112 = scalar_select %p109, %s110, %s111
    %p115 = pneg %p109
    %p116 = scmp.eq.s32.totalorder %s13, 1
    %p117 = por %p115, %p116
    %p118 = scmp.ne.s32.totalorder %s110, %s113
    %p119 = scmp.eq.s32.totalorder %s13, 0
    %p120 = por %p118, %p119
    %p121 = scmp.ne.s32.totalorder %s110, %s113
    %p122 = scmp.eq.s32.totalorder %s18, 1
    %p123 = por %p121, %p122
    %p124 = scmp.ne.s32.totalorder %s113, %s114
    %p125 = scmp.eq.s32.totalorder %s18, 0
    %p126 = por %p124, %p125
    %p127 = scmp.ne.s32.totalorder %s113, %s114
    %p128 = scmp.eq.s32.totalorder %s19, 1
    %p129 = por %p127, %p128
    %p131 = scmp.ne.s32.totalorder %s114, %s130
    %p132 = scmp.eq.s32.totalorder %s19, 0
    %p133 = por %p131, %p132
    %s134 = ssub.s32 %s20, %s32
    %s135 = ssub.s32 %s21, %s28
    %s136 = sor.u32 %s134, %s135
    %p137 = scmp.eq.s32.totalorder %s136, 0
    %s139 = sadd.s32 %s138, 1
    %s140 = scalar_select %p137, %s138, %s139
    %p143 = pneg %p137
    %p144 = scmp.eq.s32.totalorder %s13, 1
    %p145 = por %p143, %p144
    %p146 = scmp.ne.s32.totalorder %s138, %s141
    %p147 = scmp.eq.s32.totalorder %s13, 0
    %p148 = por %p146, %p147
    %p149 = scmp.ne.s32.totalorder %s138, %s141
    %p150 = scmp.eq.s32.totalorder %s18, 1
    %p151 = por %p149, %p150
    %p152 = scmp.ne.s32.totalorder %s141, %s142
    %p153 = scmp.eq.s32.totalorder %s18, 0
    %p154 = por %p152, %p153
    %p155 = scmp.ne.s32.totalorder %s141, %s142
    %p156 = scmp.eq.s32.totalorder %s19, 1
    %p157 = por %p155, %p156
    %p159 = scmp.ne.s32.totalorder %s142, %s158
    %p160 = scmp.eq.s32.totalorder %s19, 0
    %p161 = por %p159, %p160
    %s162 = ssub.s32 %s20, %s32
    %p163 = scmp.eq.s32.totalorder %s162, 0
    %s165 = sadd.s32 %s164, 1
    %s166 = scalar_select %p163, %s164, %s165
    %p169 = pneg %p163
    %p170 = scmp.eq.s32.totalorder %s13, 1
    %p171 = por %p169, %p170
    %p172 = scmp.ne.s32.totalorder %s164, %s167
    %p173 = scmp.eq.s32.totalorder %s13, 0
    %p174 = por %p172, %p173
    %p175 = scmp.ne.s32.totalorder %s164, %s167
    %p176 = scmp.eq.s32.totalorder %s18, 1
    %p177 = por %p175, %p176
    %p178 = scmp.ne.s32.totalorder %s167, %s168
    %p179 = scmp.eq.s32.totalorder %s18, 0
    %p180 = por %p178, %p179
    %p181 = scmp.ne.s32.totalorder %s167, %s168
    %p182 = scmp.eq.s32.totalorder %s19, 1
    %p183 = por %p181, %p182
    %p185 = scmp.ne.s32.totalorder %s168, %s184
    %p186 = scmp.eq.s32.totalorder %s19, 0
    %p187 = por %p185, %p186
    %s188 = ssub.s32 %s20, %s32
    %p189 = scmp.eq.s32.totalorder %s188, 0
    %s191 = sadd.s32 %s190, 1
    %s192 = scalar_select %p189, %s190, %s191
    %p195 = pneg %p189
    %p196 = scmp.eq.s32.totalorder %s13, 1
    %p197 = por %p195, %p196
    %p198 = scmp.ne.s32.totalorder %s190, %s193
    %p199 = scmp.eq.s32.totalorder %s13, 0
    %p200 = por %p198, %p199
    %p201 = scmp.ne.s32.totalorder %s190, %s193
    %p202 = scmp.eq.s32.totalorder %s18, 1
    %p203 = por %p201, %p202
    %p204 = scmp.ne.s32.totalorder %s193, %s194
    %p205 = scmp.eq.s32.totalorder %s18, 0
    %p206 = por %p204, %p205
    %p207 = scmp.ne.s32.totalorder %s193, %s194
    %p208 = scmp.eq.s32.totalorder %s19, 1
    %p209 = por %p207, %p208
    %p211 = scmp.ne.s32.totalorder %s194, %s210
    %p212 = scmp.eq.s32.totalorder %s19, 0
    %p213 = por %p211, %p212
    %p214 = scmp.le.s32.totalorder 1, %s13
    %p215 = scmp.lt.s32.totalorder %s13, 3
    %p216 = pnand %p214, %p215
    %p217 = pneg %p216
    // Predicated region
    $region9: #{csp_dark_forward.15} parent=5 // pred_check
      _
    $region10: #{csp_dark_forward.15} parent=5 // pred_check_branch
      %219 = sbr.rel (%p216) target = $region12
    $region11: #{csp_dark_forward.15} parent=5 // pred_region
      %s220 = ssub.s32 %s13, 1
      // Predicated region
      $region13: #{csp_dark_forward.15} parent=11 // pred_check
        %p221 = pneg %p74
      $region14: #{csp_dark_forward.15} parent=11 // pred_check_branch
        %223 = sbr.rel (%p221) target = $region16
      $region15: #{csp_dark_forward.15} parent=11 // pred_region
        _
      $region16: #{csp_dark_forward.15} parent=11 // pred_fallthru
        _
    $region12: #{csp_dark_forward.15} parent=5 // pred_fallthru
      _
    %p224 = scmp.lt.s32.totalorder %s13, 2
    // Predicated region
    $region17: #{csp_dark_forward.15} parent=5 // pred_check
      %p225 = pneg %p224
    $region18: #{csp_dark_forward.15} parent=5 // pred_check_branch
      %227 = sbr.rel (%p225) target = $region20
    $region19: #{csp_dark_forward.15} parent=5 // pred_region
      // Predicated region
      $region21: #{csp_dark_forward.15} parent=19 // pred_check
        %p228 = pneg %p47
      $region22: #{csp_dark_forward.15} parent=19 // pred_check_branch
        %230 = sbr.rel (%p228) target = $region24
      $region23: #{csp_dark_forward.15} parent=19 // pred_region
        %s231 = smul.u32 8, %s21
        %p232 = scmp.lt.s32.totalorder %s20, 1
        %s233 = scalar_select %p232, %s20, 1
        %p234 = scmp.lt.s32.totalorder %s231, 7
        %s235 = scalar_select %p234, %s231, 7
        %s236 = smul.addr %s233, 8
        %s237 = sadd.s32 %s235, %s236
        %s238 = smul.addr %s237, 4
        %s239 = scalar_lea.vmem %s0, %s238
        %s240 = smul.u32 8, %s21
      $region24: #{csp_dark_forward.15} parent=19 // pred_fallthru
        _
      // Predicated region
      $region25: #{csp_dark_forward.15} parent=19 // pred_check
        %p241 = pneg %p94
      $region26: #{csp_dark_forward.15} parent=19 // pred_check_branch
        %243 = sbr.rel (%p241) target = $region28
      $region27: #{csp_dark_forward.15} parent=19 // pred_region
        %p244 = scmp.lt.s32.totalorder %s20, 1
        %s245 = scalar_select %p244, %s20, 1
        %s246 = scalar_lea.vmem %s2, %s245
      $region28: #{csp_dark_forward.15} parent=19 // pred_fallthru
        _
      // Predicated region
      $region29: #{csp_dark_forward.15} parent=19 // pred_check
        %p247 = pneg %p120
      $region30: #{csp_dark_forward.15} parent=19 // pred_check_branch
        %249 = sbr.rel (%p247) target = $region32
      $region31: #{csp_dark_forward.15} parent=19 // pred_region
        %p250 = scmp.lt.s32.totalorder %s20, 1
        %s251 = scalar_select %p250, %s20, 1
        %s252 = scalar_lea.vmem %s3, %s251
      $region32: #{csp_dark_forward.15} parent=19 // pred_fallthru
        _
    $region20: #{csp_dark_forward.15} parent=5 // pred_fallthru
      _
    %p253 = scmp.le.s32.totalorder 1, %s13
    %p254 = scmp.lt.s32.totalorder %s13, 3
    %p255 = pnand %p253, %p254
    %p256 = pneg %p255
    // Predicated region
    $region33: #{csp_dark_forward.15} parent=5 // pred_check
      _
    $region34: #{csp_dark_forward.15} parent=5 // pred_check_branch
      %258 = sbr.rel (%p255) target = $region36
    $region35: #{csp_dark_forward.15} parent=5 // pred_region
      %s259 = ssub.s32 %s13, 1
      %s260 = smul.u32 8, %s23
      %p261 = scmp.lt.s32.totalorder %s22, 1
      %s262 = scalar_select %p261, %s22, 1
      %p263 = scmp.lt.s32.totalorder %s260, 7
      %s264 = scalar_select %p263, %s260, 7
      %s265 = smul.addr %s262, 8
      %s266 = sadd.s32 %s264, %s265
      %s267 = smul.addr %s266, 4
      %s268 = scalar_lea.vmem %s0, %s267
      %p269 = pneg %p53
      %p270 = pneg %p50
      %p271 = pneg %p74
      %p272 = pneg %p71
      %p273 = scmp.lt.s32.totalorder %s22, 1
      %s274 = scalar_select %p273, %s22, 1
      %s275 = scalar_lea.vmem %s2, %s274
      %p276 = pneg %p100
      %p277 = pneg %p97
      %p278 = scmp.lt.s32.totalorder %s22, 1
      %s279 = scalar_select %p278, %s22, 1
      %s280 = scalar_lea.vmem %s3, %s279
      %p281 = pneg %p126
      %p282 = pneg %p123
      %p283 = pneg %p154
      %p284 = pneg %p151
      %s285 = smul.u32 8, %s23
      %p286 = scmp.lt.s32.totalorder %s22, 1
      %s287 = scalar_select %p286, %s22, 1
      %p288 = scmp.lt.s32.totalorder %s285, 7
      %s289 = scalar_select %p288, %s285, 7
      %s290 = smul.addr %s287, 8
      %s291 = sadd.s32 %s289, %s290
      %s292 = smul.addr %s291, 4
      %s293 = scalar_lea.vmem %s4, %s292
      %p294 = pneg %p180
      %p295 = pneg %p177
      %p296 = scmp.lt.s32.totalorder %s22, 1
      %s297 = scalar_select %p296, %s22, 1
      %s298 = scalar_lea.vmem %s5, %s297
      %p299 = pneg %p206
      %p300 = pneg %p203
      %p301 = scmp.lt.s32.totalorder %s22, 1
      %s302 = scalar_select %p301, %s22, 1
      %s303 = scalar_lea.vmem %s6, %s302
      %s304 = smul.u32 8, %s23
      %p305 = scmp.lt.s32.totalorder %s22, 1
      %s306 = scalar_select %p305, %s22, 1
      %p307 = scmp.lt.s32.totalorder %s304, 7
      %s308 = scalar_select %p307, %s304, 7
      %s309 = smul.addr %s306, 8
      %s310 = sadd.s32 %s308, %s309
      %s311 = smul.addr %s310, 4
      %s312 = scalar_lea.vmem %s0, %s311
      %s313 = smul.u32 8, %s23
      %p314 = scmp.lt.s32.totalorder %s22, 1
      %s315 = scalar_select %p314, %s22, 1
      %s316 = scalar_lea.vmem %s2, %s315
      %p317 = scmp.lt.s32.totalorder %s22, 1
      %s318 = scalar_select %p317, %s22, 1
      %s319 = scalar_lea.vmem %s3, %s318
      %s320 = smul.u32 8, %s23
      %p321 = scmp.lt.s32.totalorder %s22, 1
      %s322 = scalar_select %p321, %s22, 1
      %p323 = scmp.lt.s32.totalorder %s320, 7
      %s324 = scalar_select %p323, %s320, 7
      %s325 = smul.addr %s322, 8
      %s326 = sadd.s32 %s324, %s325
      %s327 = smul.addr %s326, 4
      %s328 = scalar_lea.vmem %s4, %s327
      %s329 = smul.u32 8, %s23
      %p330 = scmp.lt.s32.totalorder %s22, 1
      %s331 = scalar_select %p330, %s22, 1
      %s332 = scalar_lea.vmem %s5, %s331
      %p333 = scmp.lt.s32.totalorder %s22, 1
      %s334 = scalar_select %p333, %s22, 1
      %s335 = scalar_lea.vmem %s6, %s334
      %p337 = scmp.eq.s32.totalorder %s23, 0
      // Predicated region
      $region37: #{csp_dark_forward.15} parent=35 // pred_check
        %p338 = pneg %p337
      $region38: #{csp_dark_forward.15} parent=35 // pred_check_branch
        %340 = sbr.rel (%p338) target = $region40
      $region39: #{csp_dark_forward.15} parent=35 // pred_region
        %vm341 = vcmask 24576
        %342 = vst.msk [vmem:[%s332] sm:$0x1] %vm341, 0.0
        %343 = vst.msk [vmem:[%s335] sm:$0x1] %vm341, 0.0
      $region40: #{csp_dark_forward.15} parent=35 // pred_fallthru
        _
      %v344 = vld [vmem:[%s312] sm:$0xf]
      %v345 = vld [vmem:[%s312 + $0x4] sm:$0xf]
      %v346 = vld [vmem:[%s312 + $0x8] sm:$0xf]
      %v347 = vld [vmem:[%s312 + $0xc] sm:$0xf]
      %v348 = vld [vmem:[%s312 + $0x10] sm:$0xf]
      %v349 = vld [vmem:[%s312 + $0x14] sm:$0xf]
      %v350 = vld [vmem:[%s312 + $0x18] sm:$0xf]
      %v351 = vld [vmem:[%s312 + $0x1c] sm:$0xf]
      %v352 = vunpack.c.l.bf16 %v344
      %v353 = vunpack.c.l.bf16 %v345
      %v354 = vunpack.c.l.bf16 %v346
      %v355 = vunpack.c.l.bf16 %v347
      %v356 = vunpack.c.l.bf16 %v348
      %v357 = vunpack.c.l.bf16 %v349
      %v358 = vunpack.c.l.bf16 %v350
      %v359 = vunpack.c.l.bf16 %v351
      %v360 = vld [vmem:[%s316] sm:$0x1]
      %v362 = vlaneseq
      %v363 = vshrl.u32 %v362, 7
      %v364 = vsub.s32 0, %v363
      %v365 = vrot.slane %v360, %v364
      %v367 = vmul.f32 %v352, %v365
      %v368 = vmul.f32 %v353, %v365
      %v369 = vmul.f32 %v354, %v365
      %v370 = vmul.f32 %v355, %v365
      %v371 = vmul.f32 %v356, %v365
      %v372 = vmul.f32 %v357, %v365
      %v373 = vmul.f32 %v358, %v365
      %v374 = vmul.f32 %v359, %v365
      %v375 = vld [vmem:[%s319] sm:$0x1]
      %v377 = vlaneseq
      %v378 = vshrl.u32 %v377, 7
      %v379 = vsub.s32 0, %v378
      %v380 = vrot.slane %v375, %v379
      %v382 = vadd.f32 %v367, %v380
      %v383 = vadd.f32 %v368, %v380
      %v384 = vadd.f32 %v369, %v380
      %v385 = vadd.f32 %v370, %v380
      %v386 = vadd.f32 %v371, %v380
      %v387 = vadd.f32 %v372, %v380
      %v388 = vadd.f32 %v373, %v380
      %v389 = vadd.f32 %v374, %v380
      %v390 = vmax.f32 %v382, 0.0
      %v391 = vmax.f32 %v383, 0.0
      %v392 = vmax.f32 %v384, 0.0
      %v393 = vmax.f32 %v385, 0.0
      %v394 = vmax.f32 %v386, 0.0
      %v395 = vmax.f32 %v387, 0.0
      %v396 = vmax.f32 %v388, 0.0
      %v397 = vmax.f32 %v389, 0.0
      %v398 = vpack.c.bf16 %v391, %v390
      %v399 = vpack.c.bf16 %v393, %v392
      %v400 = vpack.c.bf16 %v395, %v394
      %v401 = vpack.c.bf16 %v397, %v396
      %v402 = vld [vmem:[%s1] sm:$0xf]
      %vm403 = vcmask 64512
      %v405 = vsel %vm403, %v398, 0
      %v408 = vsel %vm403, %v399, 0
      %v411 = vsel %vm403, %v400, 0
      %v414 = vsel %vm403, %v401, 0
      %vm416 = vcmask 1043456
      %v418 = vsel %vm416, %v402, 0
      %420 = vmatprep.subr.bf16.mxu0 0
      %421 = vmatpush1.bf16.msra.mxu0 %v418
      %422 = vmatprep.subr.bf16.mxu0 0
      %423 = vmatpush1.bf16.msra.mxu0 0
      %424 = vmatprep.subr.bf16.mxu0 0
      %425 = vmatpush1.bf16.msra.mxu0 0
      %426 = vmatprep.subr.bf16.mxu0 0
      %427 = vmatpush1.bf16.msra.mxu0 0
      %428 = vmatprep.subr.bf16.mxu0 0
      %429 = vmatpush1.bf16.msra.mxu0 0
      %430 = vmatprep.subr.bf16.mxu0 0
      %431 = vmatpush1.bf16.msra.mxu0 0
      %432 = vmatprep.subr.bf16.mxu0 0
      %433 = vmatpush1.bf16.msra.mxu0 0
      %434 = vmatprep.subr.bf16.mxu0 0
      %435 = vmatpush1.bf16.msra.mxu0 0
      %436 = vmatprep.subr.bf16.mxu0 0
      %437 = vmatpush1.bf16.msra.mxu0 0
      %438 = vmatprep.subr.bf16.mxu0 0
      %439 = vmatpush1.bf16.msra.mxu0 0
      %440 = vmatprep.subr.bf16.mxu0 0
      %441 = vmatpush1.bf16.msra.mxu0 0
      %442 = vmatprep.subr.bf16.mxu0 0
      %443 = vmatpush1.bf16.msra.mxu0 0
      %444 = vmatprep.subr.bf16.mxu0 0
      %445 = vmatpush1.bf16.msra.mxu0 0
      %446 = vmatprep.subr.bf16.mxu0 0
      %447 = vmatpush1.bf16.msra.mxu0 0
      %448 = vmatprep.subr.bf16.mxu0 0
      %449 = vmatpush1.bf16.msra.mxu0 0
      %450 = vmatprep.subr.bf16.mxu0 0
      %451 = vmatpush1.bf16.msra.mxu0 0
      %452 = vmatprep.mubr.bf16.mxu0 0
      %453 = vmatmul.mubr.bf16.gmra.mrb[0].mxu0 %v405
      %v454 = vpop.f32.mrb[0].mxu0
      %v455 = vadd.f32 0.0, %v454
      %v456 = vpop.f32.mrb[0].mxu0
      %v457 = vpop.f32.mrb[0].mxu0
      %v458 = vadd.f32 0.0, %v457
      %v459 = vpop.f32.mrb[0].mxu0
      %460 = vmatprep.mubr.bf16.mxu0 0
      %461 = vmatmul.mubr.bf16.gmra.mrb[0].mxu0 %v408
      %v462 = vpop.f32.mrb[0].mxu0
      %v463 = vadd.f32 0.0, %v462
      %v464 = vpop.f32.mrb[0].mxu0
      %v465 = vpop.f32.mrb[0].mxu0
      %v466 = vadd.f32 0.0, %v465
      %v467 = vpop.f32.mrb[0].mxu0
      %468 = vmatprep.mubr.bf16.mxu0 0
      %469 = vmatmul.mubr.bf16.gmra.mrb[0].mxu0 %v411
      %v470 = vpop.f32.mrb[0].mxu0
      %v471 = vadd.f32 0.0, %v470
      %v472 = vpop.f32.mrb[0].mxu0
      %v473 = vpop.f32.mrb[0].mxu0
      %v474 = vadd.f32 0.0, %v473
      %v475 = vpop.f32.mrb[0].mxu0
      %476 = vmatprep.mubr.bf16.mxu0 0
      %477 = vmatmul.mubr.bf16.gmra.mrb[0].mxu0 %v414
      %v478 = vpop.f32.mrb[0].mxu0
      %v479 = vadd.f32 0.0, %v478
      %v480 = vpop.f32.mrb[0].mxu0
      %v481 = vpop.f32.mrb[0].mxu0
      %v482 = vadd.f32 0.0, %v481
      %v483 = vpop.f32.mrb[0].mxu0
      %484 = vdwg.mxu0
      %v485 = vpack.c.bf16 %v458, %v455
      %v486 = vpack.c.bf16 %v466, %v463
      %v487 = vpack.c.bf16 %v474, %v471
      %v488 = vpack.c.bf16 %v482, %v479
      %v493 = vunpack.c.l.b16 %v485
      %v494 = vunpack.c.h.b16 %v485
      %v495 = vunpack.c.l.b16 %v486
      %v496 = vunpack.c.h.b16 %v486
      %v497 = vunpack.c.l.b16 %v487
      %v498 = vunpack.c.h.b16 %v487
      %v499 = vunpack.c.l.b16 %v488
      %v500 = vunpack.c.h.b16 %v488
      %v501 = vpack.c.b16 %v493, %v493
      %v502 = vpack.c.b16 %v494, %v494
      %v503 = vpack.c.b16 %v495, %v495
      %v504 = vpack.c.b16 %v496, %v496
      %v505 = vpack.c.b16 %v497, %v497
      %v506 = vpack.c.b16 %v498, %v498
      %v507 = vpack.c.b16 %v499, %v499
      %v508 = vpack.c.b16 %v500, %v500
      %vm517 = vcmask 27648
      %518 = vst.msk [vmem:[%s328] sm:$0xf] %vm517, %v501
      %519 = vst.msk [vmem:[%s328 + $0x4] sm:$0xf] %vm517, %v502
      %520 = vst.msk [vmem:[%s328 + $0x8] sm:$0xf] %vm517, %v503
      %521 = vst.msk [vmem:[%s328 + $0xc] sm:$0xf] %vm517, %v504
      %522 = vst.msk [vmem:[%s328 + $0x10] sm:$0xf] %vm517, %v505
      %523 = vst.msk [vmem:[%s328 + $0x14] sm:$0xf] %vm517, %v506
      %524 = vst.msk [vmem:[%s328 + $0x18] sm:$0xf] %vm517, %v507
      %525 = vst.msk [vmem:[%s328 + $0x1c] sm:$0xf] %vm517, %v508
      %v526 = vld [vmem:[%s332] sm:$0x1]
      %vm527 = vcmask 31744
      %v528 = vsel %vm527, %v455, 0.0
      %v529 = vsel %vm527, %v458, 0.0
      %v530 = vadd.f32 %v528, %v529
      %v531 = vsel %vm527, %v463, 0.0
      %v532 = vadd.f32 %v530, %v531
      %v533 = vsel %vm527, %v466, 0.0
      %v534 = vadd.f32 %v532, %v533
      %v535 = vsel %vm527, %v471, 0.0
      %v536 = vadd.f32 %v534, %v535
      %v537 = vsel %vm527, %v474, 0.0
      %v538 = vadd.f32 %v536, %v537
      %v539 = vsel %vm527, %v479, 0.0
      %v540 = vadd.f32 %v538, %v539
      %v541 = vsel %vm527, %v482, 0.0
      %v542 = vadd.f32 %v540, %v541
      %v543 = vrot.slane %v542, 4
      %v544 = vadd.f32 %v542, %v543
      %v545 = vrot.slane %v544, 2
      %v546 = vadd.f32 %v544, %v545
      %v547 = vrot.slane %v546, 1
      %v548 = vadd.f32 %v546, %v547
      %v549 = vadd.f32 %v526, %v548
      %vm550 = vcmask 24576
      %551 = vst.msk [vmem:[%s332] sm:$0x1] %vm550, %v549
      %v552 = vld [vmem:[%s335] sm:$0x1]
      %v553 = vmul.f32 %v455, %v455
      %v554 = vmul.f32 %v458, %v458
      %v555 = vmul.f32 %v463, %v463
      %v556 = vmul.f32 %v466, %v466
      %v557 = vmul.f32 %v471, %v471
      %v558 = vmul.f32 %v474, %v474
      %v559 = vmul.f32 %v479, %v479
      %v560 = vmul.f32 %v482, %v482
      %v561 = vsel %vm527, %v553, 0.0
      %v562 = vsel %vm527, %v554, 0.0
      %v563 = vadd.f32 %v561, %v562
      %v564 = vsel %vm527, %v555, 0.0
      %v565 = vadd.f32 %v563, %v564
      %v566 = vsel %vm527, %v556, 0.0
      %v567 = vadd.f32 %v565, %v566
      %v568 = vsel %vm527, %v557, 0.0
      %v569 = vadd.f32 %v567, %v568
      %v570 = vsel %vm527, %v558, 0.0
      %v571 = vadd.f32 %v569, %v570
      %v572 = vsel %vm527, %v559, 0.0
      %v573 = vadd.f32 %v571, %v572
      %v574 = vsel %vm527, %v560, 0.0
      %v575 = vadd.f32 %v573, %v574
      %v576 = vrot.slane %v575, 4
      %v577 = vadd.f32 %v575, %v576
      %v578 = vrot.slane %v577, 2
      %v579 = vadd.f32 %v577, %v578
      %v580 = vrot.slane %v579, 1
      %v581 = vadd.f32 %v579, %v580
      %v582 = vadd.f32 %v552, %v581
      %583 = vst.msk [vmem:[%s335] sm:$0x1] %vm550, %v582
      %s584 = smul.u32 8, %s23
      %p585 = scmp.lt.s32.totalorder %s22, 1
      %s586 = scalar_select %p585, %s22, 1
      %p587 = scmp.lt.s32.totalorder %s584, 7
      %s588 = scalar_select %p587, %s584, 7
      %s589 = smul.addr %s586, 8
      %s590 = sadd.s32 %s588, %s589
      %s591 = smul.addr %s590, 4
      %s592 = scalar_lea.vmem %s4, %s591
      %p593 = scmp.lt.s32.totalorder %s22, 1
      %s594 = scalar_select %p593, %s22, 1
      %s595 = scalar_lea.vmem %s5, %s594
      %p596 = scmp.lt.s32.totalorder %s22, 1
      %s597 = scalar_select %p596, %s22, 1
      %s598 = scalar_lea.vmem %s6, %s597
      // Predicated region
      $region41: #{csp_dark_forward.15} parent=35 // pred_check
        %p599 = pneg %p151
      $region42: #{csp_dark_forward.15} parent=35 // pred_check_branch
        %601 = sbr.rel (%p599) target = $region44
      $region43: #{csp_dark_forward.15} parent=35 // pred_region
        %s602 = smul.u32 8, %s23
      $region44: #{csp_dark_forward.15} parent=35 // pred_fallthru
        _
      // Predicated region
      $region45: #{csp_dark_forward.15} parent=35 // pred_check
        %p603 = pneg %p177
      $region46: #{csp_dark_forward.15} parent=35 // pred_check_branch
        %605 = sbr.rel (%p603) target = $region48
      $region47: #{csp_dark_forward.15} parent=35 // pred_region
        _
      $region48: #{csp_dark_forward.15} parent=35 // pred_fallthru
        _
      // Predicated region
      $region49: #{csp_dark_forward.15} parent=35 // pred_check
        %p606 = pneg %p203
      $region50: #{csp_dark_forward.15} parent=35 // pred_check_branch
        %608 = sbr.rel (%p606) target = $region52
      $region51: #{csp_dark_forward.15} parent=35 // pred_region
        _
      $region52: #{csp_dark_forward.15} parent=35 // pred_fallthru
        _
    $region36: #{csp_dark_forward.15} parent=5 // pred_fallthru
      _
    %p609 = scmp.le.s32.totalorder 2, %s13
    // Predicated region
    $region53: #{csp_dark_forward.15} parent=5 // pred_check
      %p610 = pneg %p609
    $region54: #{csp_dark_forward.15} parent=5 // pred_check_branch
      %612 = sbr.rel (%p610) target = $region56
    $region55: #{csp_dark_forward.15} parent=5 // pred_region
      %s613 = ssub.s32 %s13, 2
      // Predicated region
      $region57: #{csp_dark_forward.15} parent=55 // pred_check
        %p614 = pneg %p157
      $region58: #{csp_dark_forward.15} parent=55 // pred_check_branch
        %616 = sbr.rel (%p614) target = $region60
      $region59: #{csp_dark_forward.15} parent=55 // pred_region
        %s617 = smul.u32 8, %s25
        %p618 = scmp.lt.s32.totalorder %s24, 1
        %s619 = scalar_select %p618, %s24, 1
        %p620 = scmp.lt.s32.totalorder %s617, 7
        %s621 = scalar_select %p620, %s617, 7
        %s622 = smul.addr %s619, 8
        %s623 = sadd.s32 %s621, %s622
        %s624 = smul.addr %s623, 4
        %s625 = scalar_lea.vmem %s4, %s624
      $region60: #{csp_dark_forward.15} parent=55 // pred_fallthru
        _
      // Predicated region
      $region61: #{csp_dark_forward.15} parent=55 // pred_check
        %p626 = pneg %p183
      $region62: #{csp_dark_forward.15} parent=55 // pred_check_branch
        %628 = sbr.rel (%p626) target = $region64
      $region63: #{csp_dark_forward.15} parent=55 // pred_region
        %p629 = scmp.lt.s32.totalorder %s24, 1
        %s630 = scalar_select %p629, %s24, 1
        %s631 = scalar_lea.vmem %s5, %s630
      $region64: #{csp_dark_forward.15} parent=55 // pred_fallthru
        _
      // Predicated region
      $region65: #{csp_dark_forward.15} parent=55 // pred_check
        %p632 = pneg %p209
      $region66: #{csp_dark_forward.15} parent=55 // pred_check_branch
        %634 = sbr.rel (%p632) target = $region68
      $region67: #{csp_dark_forward.15} parent=55 // pred_region
        %p635 = scmp.lt.s32.totalorder %s24, 1
        %s636 = scalar_select %p635, %s24, 1
        %s637 = scalar_lea.vmem %s6, %s636
      $region68: #{csp_dark_forward.15} parent=55 // pred_fallthru
        _
    $region56: #{csp_dark_forward.15} parent=5 // pred_fallthru
      _
  $region6: #{csp_dark_forward.15} parent=0 // loop_footer
    %s17 = sadd.s32 1, %s13
  $region7: #{csp_dark_forward.15} parent=0 // loop_footer_branch
    %12 = sbr.rel target = $region3
  $region8: #{csp_dark_forward.15} parent=0 // loop_exit
    _

// kernel: csp_dark_forward.14
$region0: #{csp_dark_forward.14}
  #allocation0 [shape = 'u32[]', space=smem, size = 0x4, offset = 0x4, fixed_abs, tag = 'smem constant byte address 0x4 - core index']
  #allocation1 [shape = 'u32[144,128]{1,0:T(1,128)}', space=vmem, size = 0x12000, scoped, tag = 'internal scratch']
  %s0 = inlined_call_operand.vmem [shape: bf16[2,64,36], index: 0, kind: input, shape index: {}]
  %s1 = inlined_call_operand.vmem [shape: bf16[36,8], index: 1, kind: input, shape index: {}]
  %s2 = inlined_call_operand.vmem [shape: bf16[2,64,8], index: 2, kind: output, shape index: {0}]
  %s3 = inlined_call_operand.vmem [shape: f32[2,1,8], index: 3, kind: output, shape index: {1}]
  %s4 = inlined_call_operand.vmem [shape: f32[2,1,8], index: 4, kind: output, shape index: {2}]
  %5 = xla_tuple %s2, %s3, %s4
  %s6 = sld [smem:[#allocation0]]
  $region61: #{csp_dark_forward.14} parent=0
    _
  %s8 = ssub.s32 1, %s6
  %s9 = scalar_select 0, %s8, %s6
  loop: start=0, step=1, limit=4
  $region2: #{csp_dark_forward.14} parent=0 // loop_pre_header
    _
  $region3: #{csp_dark_forward.14} parent=0 // loop_header
    %s11 = sphi 0, %s15
    %p12 = scmp.ge.s32.totalorder %s11, 4
    %s18 = sphi 0, %s30
    %s19 = sphi 0, %s26
    %s20 = sphi 0, %s18
    %s21 = sphi 0, %s19
    %s22 = sphi 0, %s20
    %s23 = sphi 0, %s21
    %s35 = sphi 0, %s37
    %s38 = sphi 0, %s35
    %s39 = sphi 0, %s38
    %s55 = sphi 0, %s39
    %s59 = sphi 0, %s59
    %s61 = sphi 0, %s59
    %s62 = sphi 0, %s61
    %s76 = sphi 0, %s62
    %s84 = sphi 0, %s86
    %s87 = sphi 0, %s84
    %s88 = sphi 0, %s87
    %s104 = sphi 0, %s88
    %s110 = sphi 0, %s112
    %s113 = sphi 0, %s110
    %s114 = sphi 0, %s113
    %s130 = sphi 0, %s114
    %s136 = sphi 0, %s138
    %s139 = sphi 0, %s136
    %s140 = sphi 0, %s139
    %s156 = sphi 0, %s140
  $region4: #{csp_dark_forward.14} parent=0 // loop_header_branch
    %14 = sbr.rel (%p12) target = $region8
  $region5: #{csp_dark_forward.14} parent=0 // loop_body
    %s16 = ssub.s32 %s11, 1
    %s17 = ssub.s32 %s11, 2
    %s24 = sadd.s32 1, %s19
    %p25 = scmp.ge.s32.totalorder %s24, 1
    %s26 = scalar_select %p25, 0, %s24
    %s27 = sadd.s32 1, %s18
    %s28 = scalar_select %p25, %s27, %s18
    %p29 = scmp.ge.s32.totalorder %s28, 2
    %s30 = scalar_select %p29, 0, %s28
    %s31 = ssub.s32 %s18, %s30
    %s32 = ssub.s32 %s19, %s26
    %s33 = sor.u32 %s31, %s32
    %p34 = scmp.eq.s32.totalorder %s33, 0
    %s36 = sadd.s32 %s35, 1
    %s37 = scalar_select %p34, %s35, %s36
    %p40 = pneg %p34
    %p41 = scmp.eq.s32.totalorder %s11, 1
    %p42 = por %p40, %p41
    %p43 = scmp.ne.s32.totalorder %s35, %s38
    %p44 = scmp.eq.s32.totalorder %s11, 0
    %p45 = por %p43, %p44
    %p46 = scmp.ne.s32.totalorder %s35, %s38
    %p47 = scmp.eq.s32.totalorder %s16, 1
    %p48 = por %p46, %p47
    %p49 = scmp.ne.s32.totalorder %s38, %s39
    %p50 = scmp.eq.s32.totalorder %s16, 0
    %p51 = por %p49, %p50
    %p52 = scmp.ne.s32.totalorder %s38, %s39
    %p53 = scmp.eq.s32.totalorder %s17, 1
    %p54 = por %p52, %p53
    %p56 = scmp.ne.s32.totalorder %s39, %s55
    %p57 = scmp.eq.s32.totalorder %s17, 0
    %p58 = por %p56, %p57
    %s60 = sadd.s32 %s59, 1
    %p63 = scmp.eq.s32.totalorder %s11, 1
    %p64 = scmp.ne.s32.totalorder %s59, %s61
    %p65 = scmp.eq.s32.totalorder %s11, 0
    %p66 = por %p64, %p65
    %p67 = scmp.ne.s32.totalorder %s59, %s61
    %p68 = scmp.eq.s32.totalorder %s16, 1
    %p69 = por %p67, %p68
    %p70 = scmp.ne.s32.totalorder %s61, %s62
    %p71 = scmp.eq.s32.totalorder %s16, 0
    %p72 = por %p70, %p71
    %p73 = scmp.ne.s32.totalorder %s61, %s62
    %p74 = scmp.eq.s32.totalorder %s17, 1
    %p75 = por %p73, %p74
    %p77 = scmp.ne.s32.totalorder %s62, %s76
    %p78 = scmp.eq.s32.totalorder %s17, 0
    %p79 = por %p77, %p78
    %s80 = ssub.s32 %s18, %s30
    %s81 = ssub.s32 %s19, %s26
    %s82 = sor.u32 %s80, %s81
    %p83 = scmp.eq.s32.totalorder %s82, 0
    %s85 = sadd.s32 %s84, 1
    %s86 = scalar_select %p83, %s84, %s85
    %p89 = pneg %p83
    %p90 = scmp.eq.s32.totalorder %s11, 1
    %p91 = por %p89, %p90
    %p92 = scmp.ne.s32.totalorder %s84, %s87
    %p93 = scmp.eq.s32.totalorder %s11, 0
    %p94 = por %p92, %p93
    %p95 = scmp.ne.s32.totalorder %s84, %s87
    %p96 = scmp.eq.s32.totalorder %s16, 1
    %p97 = por %p95, %p96
    %p98 = scmp.ne.s32.totalorder %s87, %s88
    %p99 = scmp.eq.s32.totalorder %s16, 0
    %p100 = por %p98, %p99
    %p101 = scmp.ne.s32.totalorder %s87, %s88
    %p102 = scmp.eq.s32.totalorder %s17, 1
    %p103 = por %p101, %p102
    %p105 = scmp.ne.s32.totalorder %s88, %s104
    %p106 = scmp.eq.s32.totalorder %s17, 0
    %p107 = por %p105, %p106
    %s108 = ssub.s32 %s18, %s30
    %p109 = scmp.eq.s32.totalorder %s108, 0
    %s111 = sadd.s32 %s110, 1
    %s112 = scalar_select %p109, %s110, %s111
    %p115 = pneg %p109
    %p116 = scmp.eq.s32.totalorder %s11, 1
    %p117 = por %p115, %p116
    %p118 = scmp.ne.s32.totalorder %s110, %s113
    %p119 = scmp.eq.s32.totalorder %s11, 0
    %p120 = por %p118, %p119
    %p121 = scmp.ne.s32.totalorder %s110, %s113
    %p122 = scmp.eq.s32.totalorder %s16, 1
    %p123 = por %p121, %p122
    %p124 = scmp.ne.s32.totalorder %s113, %s114
    %p125 = scmp.eq.s32.totalorder %s16, 0
    %p126 = por %p124, %p125
    %p127 = scmp.ne.s32.totalorder %s113, %s114
    %p128 = scmp.eq.s32.totalorder %s17, 1
    %p129 = por %p127, %p128
    %p131 = scmp.ne.s32.totalorder %s114, %s130
    %p132 = scmp.eq.s32.totalorder %s17, 0
    %p133 = por %p131, %p132
    %s134 = ssub.s32 %s18, %s30
    %p135 = scmp.eq.s32.totalorder %s134, 0
    %s137 = sadd.s32 %s136, 1
    %s138 = scalar_select %p135, %s136, %s137
    %p141 = pneg %p135
    %p142 = scmp.eq.s32.totalorder %s11, 1
    %p143 = por %p141, %p142
    %p144 = scmp.ne.s32.totalorder %s136, %s139
    %p145 = scmp.eq.s32.totalorder %s11, 0
    %p146 = por %p144, %p145
    %p147 = scmp.ne.s32.totalorder %s136, %s139
    %p148 = scmp.eq.s32.totalorder %s16, 1
    %p149 = por %p147, %p148
    %p150 = scmp.ne.s32.totalorder %s139, %s140
    %p151 = scmp.eq.s32.totalorder %s16, 0
    %p152 = por %p150, %p151
    %p153 = scmp.ne.s32.totalorder %s139, %s140
    %p154 = scmp.eq.s32.totalorder %s17, 1
    %p155 = por %p153, %p154
    %p157 = scmp.ne.s32.totalorder %s140, %s156
    %p158 = scmp.eq.s32.totalorder %s17, 0
    %p159 = por %p157, %p158
    %p160 = scmp.le.s32.totalorder 1, %s11
    %p161 = scmp.lt.s32.totalorder %s11, 3
    %p162 = pnand %p160, %p161
    %p163 = pneg %p162
    // Predicated region
    $region9: #{csp_dark_forward.14} parent=5 // pred_check
      _
    $region10: #{csp_dark_forward.14} parent=5 // pred_check_branch
      %165 = sbr.rel (%p162) target = $region12
    $region11: #{csp_dark_forward.14} parent=5 // pred_region
      %s166 = ssub.s32 %s11, 1
      // Predicated region
      $region13: #{csp_dark_forward.14} parent=11 // pred_check
        %p167 = pneg %p72
      $region14: #{csp_dark_forward.14} parent=11 // pred_check_branch
        %169 = sbr.rel (%p167) target = $region16
      $region15: #{csp_dark_forward.14} parent=11 // pred_region
        _
      $region16: #{csp_dark_forward.14} parent=11 // pred_fallthru
        _
    $region12: #{csp_dark_forward.14} parent=5 // pred_fallthru
      _
    %p170 = scmp.lt.s32.totalorder %s11, 2
    // Predicated region
    $region17: #{csp_dark_forward.14} parent=5 // pred_check
      %p171 = pneg %p170
    $region18: #{csp_dark_forward.14} parent=5 // pred_check_branch
      %173 = sbr.rel (%p171) target = $region20
    $region19: #{csp_dark_forward.14} parent=5 // pred_region
      // Predicated region
      $region21: #{csp_dark_forward.14} parent=19 // pred_check
        %p174 = pneg %p45
      $region22: #{csp_dark_forward.14} parent=19 // pred_check_branch
        %176 = sbr.rel (%p174) target = $region24
      $region23: #{csp_dark_forward.14} parent=19 // pred_region
        %s177 = smul.u32 8, %s19
        %p178 = scmp.lt.s32.totalorder %s18, 1
        %s179 = scalar_select %p178, %s18, 1
        %p180 = scmp.lt.s32.totalorder %s177, 7
        %s181 = scalar_select %p180, %s177, 7
        %s182 = smul.addr %s179, 8
        %s183 = sadd.s32 %s181, %s182
        %s184 = smul.addr %s183, 4
        %s185 = scalar_lea.vmem %s0, %s184
        %s186 = smul.u32 8, %s19
      $region24: #{csp_dark_forward.14} parent=19 // pred_fallthru
        _
    $region20: #{csp_dark_forward.14} parent=5 // pred_fallthru
      _
    %p187 = scmp.le.s32.totalorder 1, %s11
    %p188 = scmp.lt.s32.totalorder %s11, 3
    %p189 = pnand %p187, %p188
    %p190 = pneg %p189
    // Predicated region
    $region25: #{csp_dark_forward.14} parent=5 // pred_check
      _
    $region26: #{csp_dark_forward.14} parent=5 // pred_check_branch
      %192 = sbr.rel (%p189) target = $region28
    $region27: #{csp_dark_forward.14} parent=5 // pred_region
      %s193 = ssub.s32 %s11, 1
      %s194 = smul.u32 8, %s21
      %p195 = scmp.lt.s32.totalorder %s20, 1
      %s196 = scalar_select %p195, %s20, 1
      %p197 = scmp.lt.s32.totalorder %s194, 7
      %s198 = scalar_select %p197, %s194, 7
      %s199 = smul.addr %s196, 8
      %s200 = sadd.s32 %s198, %s199
      %s201 = smul.addr %s200, 4
      %s202 = scalar_lea.vmem %s0, %s201
      %p203 = pneg %p51
      %p204 = pneg %p48
      %p205 = pneg %p72
      %p206 = pneg %p69
      %p207 = pneg %p100
      %p208 = pneg %p97
      %s209 = smul.u32 8, %s21
      %p210 = scmp.lt.s32.totalorder %s20, 1
      %s211 = scalar_select %p210, %s20, 1
      %p212 = scmp.lt.s32.totalorder %s209, 7
      %s213 = scalar_select %p212, %s209, 7
      %s214 = smul.addr %s211, 8
      %s215 = sadd.s32 %s213, %s214
      %s216 = smul.addr %s215, 4
      %s217 = scalar_lea.vmem %s2, %s216
      %p218 = pneg %p126
      %p219 = pneg %p123
      %p220 = scmp.lt.s32.totalorder %s20, 1
      %s221 = scalar_select %p220, %s20, 1
      %s222 = scalar_lea.vmem %s3, %s221
      %p223 = pneg %p152
      %p224 = pneg %p149
      %p225 = scmp.lt.s32.totalorder %s20, 1
      %s226 = scalar_select %p225, %s20, 1
      %s227 = scalar_lea.vmem %s4, %s226
      %s228 = smul.u32 8, %s21
      %p229 = scmp.lt.s32.totalorder %s20, 1
      %s230 = scalar_select %p229, %s20, 1
      %p231 = scmp.lt.s32.totalorder %s228, 7
      %s232 = scalar_select %p231, %s228, 7
      %s233 = smul.addr %s230, 8
      %s234 = sadd.s32 %s232, %s233
      %s235 = smul.addr %s234, 4
      %s236 = scalar_lea.vmem %s0, %s235
      %s237 = smul.u32 8, %s21
      %s238 = smul.u32 8, %s21
      %p239 = scmp.lt.s32.totalorder %s20, 1
      %s240 = scalar_select %p239, %s20, 1
      %p241 = scmp.lt.s32.totalorder %s238, 7
      %s242 = scalar_select %p241, %s238, 7
      %s243 = smul.addr %s240, 8
      %s244 = sadd.s32 %s242, %s243
      %s245 = smul.addr %s244, 4
      %s246 = scalar_lea.vmem %s2, %s245
      %s247 = smul.u32 8, %s21
      %p248 = scmp.lt.s32.totalorder %s20, 1
      %s249 = scalar_select %p248, %s20, 1
      %s250 = scalar_lea.vmem %s3, %s249
      %p251 = scmp.lt.s32.totalorder %s20, 1
      %s252 = scalar_select %p251, %s20, 1
      %s253 = scalar_lea.vmem %s4, %s252
      %p255 = scmp.eq.s32.totalorder %s21, 0
      // Predicated region
      $region29: #{csp_dark_forward.14} parent=27 // pred_check
        %p256 = pneg %p255
      $region30: #{csp_dark_forward.14} parent=27 // pred_check_branch
        %258 = sbr.rel (%p256) target = $region32
      $region31: #{csp_dark_forward.14} parent=27 // pred_region
        %vm259 = vcmask 57344
        %260 = vst.msk [vmem:[%s250] sm:$0x1] %vm259, 0.0
        %261 = vst.msk [vmem:[%s253] sm:$0x1] %vm259, 0.0
      $region32: #{csp_dark_forward.14} parent=27 // pred_fallthru
        _
      %v262 = vld [vmem:[%s236] sm:$0xf]
      %v263 = vld [vmem:[%s236 + $0x4] sm:$0xf]
      %v264 = vld [vmem:[%s236 + $0x8] sm:$0xf]
      %v265 = vld [vmem:[%s236 + $0xc] sm:$0xf]
      %v266 = vld [vmem:[%s236 + $0x10] sm:$0xf]
      %v267 = vld [vmem:[%s236 + $0x14] sm:$0xf]
      %v268 = vld [vmem:[%s236 + $0x18] sm:$0xf]
      %v269 = vld [vmem:[%s236 + $0x1c] sm:$0xf]
      %v270 = vld [vmem:[%s1] sm:$0xf]
      %v271 = vld [vmem:[%s1 + $0x4] sm:$0xf]
      %v272 = vld [vmem:[%s1 + $0x8] sm:$0xf]
      %v273 = vld [vmem:[%s1 + $0xc] sm:$0xf]
      %v274 = vld [vmem:[%s1 + $0x10] sm:$0x3]
      %v283 = vunpack.c.l.b16 %v262
      %v284 = vunpack.c.l.b16 %v263
      %v285 = vunpack.c.l.b16 %v264
      %v286 = vunpack.c.l.b16 %v265
      %v287 = vunpack.c.l.b16 %v266
      %v288 = vunpack.c.l.b16 %v267
      %v289 = vunpack.c.l.b16 %v268
      %v290 = vunpack.c.l.b16 %v269
      %v291 = vpack.c.b16 %v284, %v283
      %v292 = vpack.c.b16 %v286, %v285
      %v293 = vpack.c.b16 %v288, %v287
      %v294 = vpack.c.b16 %v290, %v289
      %v300 = vunpack.c.l.b16 %v270
      %v301 = vunpack.c.l.b16 %v271
      %v302 = vunpack.c.l.b16 %v272
      %v303 = vunpack.c.l.b16 %v273
      %v304 = vunpack.c.l.b16 %v274
      %v305 = vpack.c.b16 %v301, %v300
      %v306 = vpack.c.b16 %v303, %v302
      %v307 = vpack.c.b16 %v304, %v304
      %vm310 = vcmask 293888
      %v312 = vsel %vm310, %v291, 0
      %v315 = vsel %vm310, %v292, 0
      %v318 = vsel %vm310, %v293, 0
      %v321 = vsel %vm310, %v294, 0
      %vm323 = vcmask 1041408
      %v325 = vsel %vm323, %v307, 0
      %327 = vmatprep.subr.bf16.mxu0 0
      %328 = vmatpush1.bf16.msra.mxu0 %v305
      %329 = vmatprep.subr.bf16.mxu0 0
      %330 = vmatpush1.bf16.msra.mxu0 %v306
      %331 = vmatprep.subr.bf16.mxu0 0
      %332 = vmatpush1.bf16.msra.mxu0 %v325
      %333 = vmatprep.subr.bf16.mxu0 0
      %334 = vmatpush1.bf16.msra.mxu0 0
      %335 = vmatprep.subr.bf16.mxu0 0
      %336 = vmatpush1.bf16.msra.mxu0 0
      %337 = vmatprep.subr.bf16.mxu0 0
      %338 = vmatpush1.bf16.msra.mxu0 0
      %339 = vmatprep.subr.bf16.mxu0 0
      %340 = vmatpush1.bf16.msra.mxu0 0
      %341 = vmatprep.subr.bf16.mxu0 0
      %342 = vmatpush1.bf16.msra.mxu0 0
      %343 = vmatprep.subr.bf16.mxu0 0
      %344 = vmatpush1.bf16.msra.mxu0 0
      %345 = vmatprep.subr.bf16.mxu0 0
      %346 = vmatpush1.bf16.msra.mxu0 0
      %347 = vmatprep.subr.bf16.mxu0 0
      %348 = vmatpush1.bf16.msra.mxu0 0
      %349 = vmatprep.subr.bf16.mxu0 0
      %350 = vmatpush1.bf16.msra.mxu0 0
      %351 = vmatprep.subr.bf16.mxu0 0
      %352 = vmatpush1.bf16.msra.mxu0 0
      %353 = vmatprep.subr.bf16.mxu0 0
      %354 = vmatpush1.bf16.msra.mxu0 0
      %355 = vmatprep.subr.bf16.mxu0 0
      %356 = vmatpush1.bf16.msra.mxu0 0
      %357 = vmatprep.subr.bf16.mxu0 0
      %358 = vmatpush1.bf16.msra.mxu0 0
      %359 = vmatprep.mubr.bf16.mxu0 0
      %360 = vmatmul.mubr.bf16.gmra.mrb[0].mxu0 %v312
      %v361 = vpop.f32.mrb[0].mxu0
      %v362 = vadd.f32 0.0, %v361
      %v363 = vpop.f32.mrb[0].mxu0
      %v364 = vpop.f32.mrb[0].mxu0
      %v365 = vadd.f32 0.0, %v364
      %v366 = vpop.f32.mrb[0].mxu0
      %367 = vmatprep.mubr.bf16.mxu0 0
      %368 = vmatmul.mubr.bf16.gmra.mrb[0].mxu0 %v315
      %v369 = vpop.f32.mrb[0].mxu0
      %v370 = vadd.f32 0.0, %v369
      %v371 = vpop.f32.mrb[0].mxu0
      %v372 = vpop.f32.mrb[0].mxu0
      %v373 = vadd.f32 0.0, %v372
      %v374 = vpop.f32.mrb[0].mxu0
      %375 = vmatprep.mubr.bf16.mxu0 0
      %376 = vmatmul.mubr.bf16.gmra.mrb[0].mxu0 %v318
      %v377 = vpop.f32.mrb[0].mxu0
      %v378 = vadd.f32 0.0, %v377
      %v379 = vpop.f32.mrb[0].mxu0
      %v380 = vpop.f32.mrb[0].mxu0
      %v381 = vadd.f32 0.0, %v380
      %v382 = vpop.f32.mrb[0].mxu0
      %383 = vmatprep.mubr.bf16.mxu0 0
      %384 = vmatmul.mubr.bf16.gmra.mrb[0].mxu0 %v321
      %v385 = vpop.f32.mrb[0].mxu0
      %v386 = vadd.f32 0.0, %v385
      %v387 = vpop.f32.mrb[0].mxu0
      %v388 = vpop.f32.mrb[0].mxu0
      %v389 = vadd.f32 0.0, %v388
      %v390 = vpop.f32.mrb[0].mxu0
      %391 = vdwg.mxu0
      %v392 = vpack.c.bf16 %v365, %v362
      %v393 = vpack.c.bf16 %v373, %v370
      %v394 = vpack.c.bf16 %v381, %v378
      %v395 = vpack.c.bf16 %v389, %v386
      %v400 = vunpack.c.l.b16 %v392
      %v401 = vunpack.c.h.b16 %v392
      %v402 = vunpack.c.l.b16 %v393
      %v403 = vunpack.c.h.b16 %v393
      %v404 = vunpack.c.l.b16 %v394
      %v405 = vunpack.c.h.b16 %v394
      %v406 = vunpack.c.l.b16 %v395
      %v407 = vunpack.c.h.b16 %v395
      %v408 = vpack.c.b16 %v400, %v400
      %v409 = vpack.c.b16 %v401, %v401
      %v410 = vpack.c.b16 %v402, %v402
      %v411 = vpack.c.b16 %v403, %v403
      %v412 = vpack.c.b16 %v404, %v404
      %v413 = vpack.c.b16 %v405, %v405
      %v414 = vpack.c.b16 %v406, %v406
      %v415 = vpack.c.b16 %v407, %v407
      %vm424 = vcmask 60416
      %425 = vst.msk [vmem:[%s246] sm:$0xf] %vm424, %v408
      %426 = vst.msk [vmem:[%s246 + $0x4] sm:$0xf] %vm424, %v409
      %427 = vst.msk [vmem:[%s246 + $0x8] sm:$0xf] %vm424, %v410
      %428 = vst.msk [vmem:[%s246 + $0xc] sm:$0xf] %vm424, %v411
      %429 = vst.msk [vmem:[%s246 + $0x10] sm:$0xf] %vm424, %v412
      %430 = vst.msk [vmem:[%s246 + $0x14] sm:$0xf] %vm424, %v413
      %431 = vst.msk [vmem:[%s246 + $0x18] sm:$0xf] %vm424, %v414
      %432 = vst.msk [vmem:[%s246 + $0x1c] sm:$0xf] %vm424, %v415
      %v433 = vld [vmem:[%s250] sm:$0x1]
      %vm434 = vcmask 64512
      %v435 = vsel %vm434, %v362, 0.0
      %v436 = vsel %vm434, %v365, 0.0
      %v437 = vadd.f32 %v435, %v436
      %v438 = vsel %vm434, %v370, 0.0
      %v439 = vadd.f32 %v437, %v438
      %v440 = vsel %vm434, %v373, 0.0
      %v441 = vadd.f32 %v439, %v440
      %v442 = vsel %vm434, %v378, 0.0
      %v443 = vadd.f32 %v441, %v442
      %v444 = vsel %vm434, %v381, 0.0
      %v445 = vadd.f32 %v443, %v444
      %v446 = vsel %vm434, %v386, 0.0
      %v447 = vadd.f32 %v445, %v446
      %v448 = vsel %vm434, %v389, 0.0
      %v449 = vadd.f32 %v447, %v448
      %v450 = vrot.slane %v449, 4
      %v451 = vadd.f32 %v449, %v450
      %v452 = vrot.slane %v451, 2
      %v453 = vadd.f32 %v451, %v452
      %v454 = vrot.slane %v453, 1
      %v455 = vadd.f32 %v453, %v454
      %v456 = vadd.f32 %v433, %v455
      %vm457 = vcmask 57344
      %458 = vst.msk [vmem:[%s250] sm:$0x1] %vm457, %v456
      %v459 = vld [vmem:[%s253] sm:$0x1]
      %v460 = vmul.f32 %v362, %v362
      %v461 = vmul.f32 %v365, %v365
      %v462 = vmul.f32 %v370, %v370
      %v463 = vmul.f32 %v373, %v373
      %v464 = vmul.f32 %v378, %v378
      %v465 = vmul.f32 %v381, %v381
      %v466 = vmul.f32 %v386, %v386
      %v467 = vmul.f32 %v389, %v389
      %v468 = vsel %vm434, %v460, 0.0
      %v469 = vsel %vm434, %v461, 0.0
      %v470 = vadd.f32 %v468, %v469
      %v471 = vsel %vm434, %v462, 0.0
      %v472 = vadd.f32 %v470, %v471
      %v473 = vsel %vm434, %v463, 0.0
      %v474 = vadd.f32 %v472, %v473
      %v475 = vsel %vm434, %v464, 0.0
      %v476 = vadd.f32 %v474, %v475
      %v477 = vsel %vm434, %v465, 0.0
      %v478 = vadd.f32 %v476, %v477
      %v479 = vsel %vm434, %v466, 0.0
      %v480 = vadd.f32 %v478, %v479
      %v481 = vsel %vm434, %v467, 0.0
      %v482 = vadd.f32 %v480, %v481
      %v483 = vrot.slane %v482, 4
      %v484 = vadd.f32 %v482, %v483
      %v485 = vrot.slane %v484, 2
      %v486 = vadd.f32 %v484, %v485
      %v487 = vrot.slane %v486, 1
      %v488 = vadd.f32 %v486, %v487
      %v489 = vadd.f32 %v459, %v488
      %490 = vst.msk [vmem:[%s253] sm:$0x1] %vm457, %v489
      %s491 = smul.u32 8, %s21
      %p492 = scmp.lt.s32.totalorder %s20, 1
      %s493 = scalar_select %p492, %s20, 1
      %p494 = scmp.lt.s32.totalorder %s491, 7
      %s495 = scalar_select %p494, %s491, 7
      %s496 = smul.addr %s493, 8
      %s497 = sadd.s32 %s495, %s496
      %s498 = smul.addr %s497, 4
      %s499 = scalar_lea.vmem %s2, %s498
      %p500 = scmp.lt.s32.totalorder %s20, 1
      %s501 = scalar_select %p500, %s20, 1
      %s502 = scalar_lea.vmem %s3, %s501
      %p503 = scmp.lt.s32.totalorder %s20, 1
      %s504 = scalar_select %p503, %s20, 1
      %s505 = scalar_lea.vmem %s4, %s504
      // Predicated region
      $region33: #{csp_dark_forward.14} parent=27 // pred_check
        %p506 = pneg %p97
      $region34: #{csp_dark_forward.14} parent=27 // pred_check_branch
        %508 = sbr.rel (%p506) target = $region36
      $region35: #{csp_dark_forward.14} parent=27 // pred_region
        %s509 = smul.u32 8, %s21
      $region36: #{csp_dark_forward.14} parent=27 // pred_fallthru
        _
      // Predicated region
      $region37: #{csp_dark_forward.14} parent=27 // pred_check
        %p510 = pneg %p123
      $region38: #{csp_dark_forward.14} parent=27 // pred_check_branch
        %512 = sbr.rel (%p510) target = $region40
      $region39: #{csp_dark_forward.14} parent=27 // pred_region
        _
      $region40: #{csp_dark_forward.14} parent=27 // pred_fallthru
        _
      // Predicated region
      $region41: #{csp_dark_forward.14} parent=27 // pred_check
        %p513 = pneg %p149
      $region42: #{csp_dark_forward.14} parent=27 // pred_check_branch
        %515 = sbr.rel (%p513) target = $region44
      $region43: #{csp_dark_forward.14} parent=27 // pred_region
        _
      $region44: #{csp_dark_forward.14} parent=27 // pred_fallthru
        _
    $region28: #{csp_dark_forward.14} parent=5 // pred_fallthru
      _
    %p516 = scmp.le.s32.totalorder 2, %s11
    // Predicated region
    $region45: #{csp_dark_forward.14} parent=5 // pred_check
      %p517 = pneg %p516
    $region46: #{csp_dark_forward.14} parent=5 // pred_check_branch
      %519 = sbr.rel (%p517) target = $region48
    $region47: #{csp_dark_forward.14} parent=5 // pred_region
      %s520 = ssub.s32 %s11, 2
      // Predicated region
      $region49: #{csp_dark_forward.14} parent=47 // pred_check
        %p521 = pneg %p103
      $region50: #{csp_dark_forward.14} parent=47 // pred_check_branch
        %523 = sbr.rel (%p521) target = $region52
      $region51: #{csp_dark_forward.14} parent=47 // pred_region
        %s524 = smul.u32 8, %s23
        %p525 = scmp.lt.s32.totalorder %s22, 1
        %s526 = scalar_select %p525, %s22, 1
        %p527 = scmp.lt.s32.totalorder %s524, 7
        %s528 = scalar_select %p527, %s524, 7
        %s529 = smul.addr %s526, 8
        %s530 = sadd.s32 %s528, %s529
        %s531 = smul.addr %s530, 4
        %s532 = scalar_lea.vmem %s2, %s531
      $region52: #{csp_dark_forward.14} parent=47 // pred_fallthru
        _
      // Predicated region
      $region53: #{csp_dark_forward.14} parent=47 // pred_check
        %p533 = pneg %p129
      $region54: #{csp_dark_forward.14} parent=47 // pred_check_branch
        %535 = sbr.rel (%p533) target = $region56
      $region55: #{csp_dark_forward.14} parent=47 // pred_region
        %p536 = scmp.lt.s32.totalorder %s22, 1
        %s537 = scalar_select %p536, %s22, 1
        %s538 = scalar_lea.vmem %s3, %s537
      $region56: #{csp_dark_forward.14} parent=47 // pred_fallthru
        _
      // Predicated region
      $region57: #{csp_dark_forward.14} parent=47 // pred_check
        %p539 = pneg %p155
      $region58: #{csp_dark_forward.14} parent=47 // pred_check_branch
        %541 = sbr.rel (%p539) target = $region60
      $region59: #{csp_dark_forward.14} parent=47 // pred_region
        %p542 = scmp.lt.s32.totalorder %s22, 1
        %s543 = scalar_select %p542, %s22, 1
        %s544 = scalar_lea.vmem %s4, %s543
      $region60: #{csp_dark_forward.14} parent=47 // pred_fallthru
        _
    $region48: #{csp_dark_forward.14} parent=5 // pred_fallthru
      _
  $region6: #{csp_dark_forward.14} parent=0 // loop_footer
    %s15 = sadd.s32 1, %s11
  $region7: #{csp_dark_forward.14} parent=0 // loop_footer_branch
    %10 = sbr.rel target = $region3
  $region8: #{csp_dark_forward.14} parent=0 // loop_exit
    _

// kernel: csp_dark_forward.17
$region0: #{csp_dark_forward.17}
  #allocation0 [shape = 'u32[]', space=smem, size = 0x4, offset = 0x4, fixed_abs, tag = 'smem constant byte address 0x4 - core index']
  #allocation1 [shape = 'u32[144,128]{1,0:T(1,128)}', space=vmem, size = 0x12000, scoped, tag = 'internal scratch']
  %s0 = inlined_call_operand.vmem [shape: bf16[2,64,4], index: 0, kind: input, shape index: {}]
  %s1 = inlined_call_operand.vmem [shape: f32[2,1,4], index: 1, kind: input, shape index: {}]
  %s2 = inlined_call_operand.vmem [shape: f32[2,1,4], index: 2, kind: input, shape index: {}]
  %s3 = inlined_call_operand.vmem [shape: bf16[2,64,4], index: 3, kind: output, shape index: {}]
  %s4 = sld [smem:[#allocation0]]
  $region45: #{csp_dark_forward.17} parent=0
    _
  %s6 = ssub.s32 1, %s4
  %s7 = scalar_select 0, %s6, %s4
  loop: start=0, step=1, limit=4
  $region2: #{csp_dark_forward.17} parent=0 // loop_pre_header
    _
  $region3: #{csp_dark_forward.17} parent=0 // loop_header
    %s9 = sphi 0, %s13
    %p10 = scmp.ge.s32.totalorder %s9, 4
    %s16 = sphi 0, %s28
    %s17 = sphi 0, %s24
    %s18 = sphi 0, %s16
    %s19 = sphi 0, %s17
    %s20 = sphi 0, %s18
    %s21 = sphi 0, %s19
    %s33 = sphi 0, %s35
    %s36 = sphi 0, %s33
    %s37 = sphi 0, %s36
    %s53 = sphi 0, %s37
    %s59 = sphi 0, %s61
    %s62 = sphi 0, %s59
    %s63 = sphi 0, %s62
    %s79 = sphi 0, %s63
    %s85 = sphi 0, %s87
    %s88 = sphi 0, %s85
    %s89 = sphi 0, %s88
    %s105 = sphi 0, %s89
    %s113 = sphi 0, %s115
    %s116 = sphi 0, %s113
    %s117 = sphi 0, %s116
    %s133 = sphi 0, %s117
  $region4: #{csp_dark_forward.17} parent=0 // loop_header_branch
    %12 = sbr.rel (%p10) target = $region8
  $region5: #{csp_dark_forward.17} parent=0 // loop_body
    %s14 = ssub.s32 %s9, 1
    %s15 = ssub.s32 %s9, 2
    %s22 = sadd.s32 1, %s17
    %p23 = scmp.ge.s32.totalorder %s22, 1
    %s24 = scalar_select %p23, 0, %s22
    %s25 = sadd.s32 1, %s16
    %s26 = scalar_select %p23, %s25, %s16
    %p27 = scmp.ge.s32.totalorder %s26, 2
    %s28 = scalar_select %p27, 0, %s26
    %s29 = ssub.s32 %s16, %s28
    %s30 = ssub.s32 %s17, %s24
    %s31 = sor.u32 %s29, %s30
    %p32 = scmp.eq.s32.totalorder %s31, 0
    %s34 = sadd.s32 %s33, 1
    %s35 = scalar_select %p32, %s33, %s34
    %p38 = pneg %p32
    %p39 = scmp.eq.s32.totalorder %s9, 1
    %p40 = por %p38, %p39
    %p41 = scmp.ne.s32.totalorder %s33, %s36
    %p42 = scmp.eq.s32.totalorder %s9, 0
    %p43 = por %p41, %p42
    %p44 = scmp.ne.s32.totalorder %s33, %s36
    %p45 = scmp.eq.s32.totalorder %s14, 1
    %p46 = por %p44, %p45
    %p47 = scmp.ne.s32.totalorder %s36, %s37
    %p48 = scmp.eq.s32.totalorder %s14, 0
    %p49 = por %p47, %p48
    %p50 = scmp.ne.s32.totalorder %s36, %s37
    %p51 = scmp.eq.s32.totalorder %s15, 1
    %p52 = por %p50, %p51
    %p54 = scmp.ne.s32.totalorder %s37, %s53
    %p55 = scmp.eq.s32.totalorder %s15, 0
    %p56 = por %p54, %p55
    %s57 = ssub.s32 %s16, %s28
    %p58 = scmp.eq.s32.totalorder %s57, 0
    %s60 = sadd.s32 %s59, 1
    %s61 = scalar_select %p58, %s59, %s60
    %p64 = pneg %p58
    %p65 = scmp.eq.s32.totalorder %s9, 1
    %p66 = por %p64, %p65
    %p67 = scmp.ne.s32.totalorder %s59, %s62
    %p68 = scmp.eq.s32.totalorder %s9, 0
    %p69 = por %p67, %p68
    %p70 = scmp.ne.s32.totalorder %s59, %s62
    %p71 = scmp.eq.s32.totalorder %s14, 1
    %p72 = por %p70, %p71
    %p73 = scmp.ne.s32.totalorder %s62, %s63
    %p74 = scmp.eq.s32.totalorder %s14, 0
    %p75 = por %p73, %p74
    %p76 = scmp.ne.s32.totalorder %s62, %s63
    %p77 = scmp.eq.s32.totalorder %s15, 1
    %p78 = por %p76, %p77
    %p80 = scmp.ne.s32.totalorder %s63, %s79
    %p81 = scmp.eq.s32.totalorder %s15, 0
    %p82 = por %p80, %p81
    %s83 = ssub.s32 %s16, %s28
    %p84 = scmp.eq.s32.totalorder %s83, 0
    %s86 = sadd.s32 %s85, 1
    %s87 = scalar_select %p84, %s85, %s86
    %p90 = pneg %p84
    %p91 = scmp.eq.s32.totalorder %s9, 1
    %p92 = por %p90, %p91
    %p93 = scmp.ne.s32.totalorder %s85, %s88
    %p94 = scmp.eq.s32.totalorder %s9, 0
    %p95 = por %p93, %p94
    %p96 = scmp.ne.s32.totalorder %s85, %s88
    %p97 = scmp.eq.s32.totalorder %s14, 1
    %p98 = por %p96, %p97
    %p99 = scmp.ne.s32.totalorder %s88, %s89
    %p100 = scmp.eq.s32.totalorder %s14, 0
    %p101 = por %p99, %p100
    %p102 = scmp.ne.s32.totalorder %s88, %s89
    %p103 = scmp.eq.s32.totalorder %s15, 1
    %p104 = por %p102, %p103
    %p106 = scmp.ne.s32.totalorder %s89, %s105
    %p107 = scmp.eq.s32.totalorder %s15, 0
    %p108 = por %p106, %p107
    %s109 = ssub.s32 %s16, %s28
    %s110 = ssub.s32 %s17, %s24
    %s111 = sor.u32 %s109, %s110
    %p112 = scmp.eq.s32.totalorder %s111, 0
    %s114 = sadd.s32 %s113, 1
    %s115 = scalar_select %p112, %s113, %s114
    %p118 = pneg %p112
    %p119 = scmp.eq.s32.totalorder %s9, 1
    %p120 = por %p118, %p119
    %p121 = scmp.ne.s32.totalorder %s113, %s116
    %p122 = scmp.eq.s32.totalorder %s9, 0
    %p123 = por %p121, %p122
    %p124 = scmp.ne.s32.totalorder %s113, %s116
    %p125 = scmp.eq.s32.totalorder %s14, 1
    %p126 = por %p124, %p125
    %p127 = scmp.ne.s32.totalorder %s116, %s117
    %p128 = scmp.eq.s32.totalorder %s14, 0
    %p129 = por %p127, %p128
    %p130 = scmp.ne.s32.totalorder %s116, %s117
    %p131 = scmp.eq.s32.totalorder %s15, 1
    %p132 = por %p130, %p131
    %p134 = scmp.ne.s32.totalorder %s117, %s133
    %p135 = scmp.eq.s32.totalorder %s15, 0
    %p136 = por %p134, %p135
    %p137 = scmp.le.s32.totalorder 1, %s9
    %p138 = scmp.lt.s32.totalorder %s9, 3
    %p139 = pnand %p137, %p138
    %p140 = pneg %p139
    // Predicated region
    $region9: #{csp_dark_forward.17} parent=5 // pred_check
      _
    $region10: #{csp_dark_forward.17} parent=5 // pred_check_branch
      %142 = sbr.rel (%p139) target = $region12
    $region11: #{csp_dark_forward.17} parent=5 // pred_region
      %s143 = ssub.s32 %s9, 1
    $region12: #{csp_dark_forward.17} parent=5 // pred_fallthru
      _
    %p144 = scmp.lt.s32.totalorder %s9, 2
    // Predicated region
    $region13: #{csp_dark_forward.17} parent=5 // pred_check
      %p145 = pneg %p144
    $region14: #{csp_dark_forward.17} parent=5 // pred_check_branch
      %147 = sbr.rel (%p145) target = $region16
    $region15: #{csp_dark_forward.17} parent=5 // pred_region
      // Predicated region
      $region17: #{csp_dark_forward.17} parent=15 // pred_check
        %p148 = pneg %p43
      $region18: #{csp_dark_forward.17} parent=15 // pred_check_branch
        %150 = sbr.rel (%p148) target = $region20
      $region19: #{csp_dark_forward.17} parent=15 // pred_region
        %s151 = smul.u32 8, %s17
        %p152 = scmp.lt.s32.totalorder %s16, 1
        %s153 = scalar_select %p152, %s16, 1
        %p154 = scmp.lt.s32.totalorder %s151, 7
        %s155 = scalar_select %p154, %s151, 7
        %s156 = smul.addr %s153, 8
        %s157 = sadd.s32 %s155, %s156
        %s158 = smul.addr %s157, 4
        %s159 = scalar_lea.vmem %s0, %s158
        %s160 = smul.u32 8, %s17
      $region20: #{csp_dark_forward.17} parent=15 // pred_fallthru
        _
      // Predicated region
      $region21: #{csp_dark_forward.17} parent=15 // pred_check
        %p161 = pneg %p69
      $region22: #{csp_dark_forward.17} parent=15 // pred_check_branch
        %163 = sbr.rel (%p161) target = $region24
      $region23: #{csp_dark_forward.17} parent=15 // pred_region
        %p164 = scmp.lt.s32.totalorder %s16, 1
        %s165 = scalar_select %p164, %s16, 1
        %s166 = scalar_lea.vmem %s1, %s165
      $region24: #{csp_dark_forward.17} parent=15 // pred_fallthru
        _
      // Predicated region
      $region25: #{csp_dark_forward.17} parent=15 // pred_check
        %p167 = pneg %p95
      $region26: #{csp_dark_forward.17} parent=15 // pred_check_branch
        %169 = sbr.rel (%p167) target = $region28
      $region27: #{csp_dark_forward.17} parent=15 // pred_region
        %p170 = scmp.lt.s32.totalorder %s16, 1
        %s171 = scalar_select %p170, %s16, 1
        %s172 = scalar_lea.vmem %s2, %s171
      $region28: #{csp_dark_forward.17} parent=15 // pred_fallthru
        _
    $region16: #{csp_dark_forward.17} parent=5 // pred_fallthru
      _
    %p173 = scmp.le.s32.totalorder 1, %s9
    %p174 = scmp.lt.s32.totalorder %s9, 3
    %p175 = pnand %p173, %p174
    %p176 = pneg %p175
    // Predicated region
    $region29: #{csp_dark_forward.17} parent=5 // pred_check
      _
    $region30: #{csp_dark_forward.17} parent=5 // pred_check_branch
      %178 = sbr.rel (%p175) target = $region32
    $region31: #{csp_dark_forward.17} parent=5 // pred_region
      %s179 = ssub.s32 %s9, 1
      %s180 = smul.u32 8, %s19
      %p181 = scmp.lt.s32.totalorder %s18, 1
      %s182 = scalar_select %p181, %s18, 1
      %p183 = scmp.lt.s32.totalorder %s180, 7
      %s184 = scalar_select %p183, %s180, 7
      %s185 = smul.addr %s182, 8
      %s186 = sadd.s32 %s184, %s185
      %s187 = smul.addr %s186, 4
      %s188 = scalar_lea.vmem %s0, %s187
      %p189 = pneg %p49
      %p190 = pneg %p46
      %p191 = scmp.lt.s32.totalorder %s18, 1
      %s192 = scalar_select %p191, %s18, 1
      %s193 = scalar_lea.vmem %s1, %s192
      %p194 = pneg %p75
      %p195 = pneg %p72
      %p196 = scmp.lt.s32.totalorder %s18, 1
      %s197 = scalar_select %p196, %s18, 1
      %s198 = scalar_lea.vmem %s2, %s197
      %p199 = pneg %p101
      %p200 = pneg %p98
      %p201 = pneg %p129
      %p202 = pneg %p126
      %s203 = smul.u32 8, %s19
      %p204 = scmp.lt.s32.totalorder %s18, 1
      %s205 = scalar_select %p204, %s18, 1
      %p206 = scmp.lt.s32.totalorder %s203, 7
      %s207 = scalar_select %p206, %s203, 7
      %s208 = smul.addr %s205, 8
      %s209 = sadd.s32 %s207, %s208
      %s210 = smul.addr %s209, 4
      %s211 = scalar_lea.vmem %s3, %s210
      %s212 = smul.u32 8, %s19
      %p213 = scmp.lt.s32.totalorder %s18, 1
      %s214 = scalar_select %p213, %s18, 1
      %p215 = scmp.lt.s32.totalorder %s212, 7
      %s216 = scalar_select %p215, %s212, 7
      %s217 = smul.addr %s214, 8
      %s218 = sadd.s32 %s216, %s217
      %s219 = smul.addr %s218, 4
      %s220 = scalar_lea.vmem %s0, %s219
      %s221 = smul.u32 8, %s19
      %p222 = scmp.lt.s32.totalorder %s18, 1
      %s223 = scalar_select %p222, %s18, 1
      %s224 = scalar_lea.vmem %s1, %s223
      %p225 = scmp.lt.s32.totalorder %s18, 1
      %s226 = scalar_select %p225, %s18, 1
      %s227 = scalar_lea.vmem %s2, %s226
      %s228 = smul.u32 8, %s19
      %p229 = scmp.lt.s32.totalorder %s18, 1
      %s230 = scalar_select %p229, %s18, 1
      %p231 = scmp.lt.s32.totalorder %s228, 7
      %s232 = scalar_select %p231, %s228, 7
      %s233 = smul.addr %s230, 8
      %s234 = sadd.s32 %s232, %s233
      %s235 = smul.addr %s234, 4
      %s236 = scalar_lea.vmem %s3, %s235
      %s237 = smul.u32 8, %s19
      %v238 = vld [vmem:[%s220] sm:$0xf]
      %v239 = vld [vmem:[%s220 + $0x4] sm:$0xf]
      %v240 = vld [vmem:[%s220 + $0x8] sm:$0xf]
      %v241 = vld [vmem:[%s220 + $0xc] sm:$0xf]
      %v242 = vld [vmem:[%s220 + $0x10] sm:$0xf]
      %v243 = vld [vmem:[%s220 + $0x14] sm:$0xf]
      %v244 = vld [vmem:[%s220 + $0x18] sm:$0xf]
      %v245 = vld [vmem:[%s220 + $0x1c] sm:$0xf]
      %v246 = vunpack.c.l.bf16 %v238
      %v247 = vunpack.c.l.bf16 %v239
      %v248 = vunpack.c.l.bf16 %v240
      %v249 = vunpack.c.l.bf16 %v241
      %v250 = vunpack.c.l.bf16 %v242
      %v251 = vunpack.c.l.bf16 %v243
      %v252 = vunpack.c.l.bf16 %v244
      %v253 = vunpack.c.l.bf16 %v245
      %v254 = vld [vmem:[%s224] sm:$0x1]
      %v256 = vlaneseq
      %v257 = vshrl.u32 %v256, 7
      %v258 = vsub.s32 0, %v257
      %v259 = vrot.slane %v254, %v258
      %v261 = vmul.f32 %v246, %v259
      %v262 = vmul.f32 %v247, %v259
      %v263 = vmul.f32 %v248, %v259
      %v264 = vmul.f32 %v249, %v259
      %v265 = vmul.f32 %v250, %v259
      %v266 = vmul.f32 %v251, %v259
      %v267 = vmul.f32 %v252, %v259
      %v268 = vmul.f32 %v253, %v259
      %v269 = vld [vmem:[%s227] sm:$0x1]
      %v271 = vlaneseq
      %v272 = vshrl.u32 %v271, 7
      %v273 = vsub.s32 0, %v272
      %v274 = vrot.slane %v269, %v273
      %v276 = vadd.f32 %v261, %v274
      %v277 = vadd.f32 %v262, %v274
      %v278 = vadd.f32 %v263, %v274
      %v279 = vadd.f32 %v264, %v274
      %v280 = vadd.f32 %v265, %v274
      %v281 = vadd.f32 %v266, %v274
      %v282 = vadd.f32 %v267, %v274
      %v283 = vadd.f32 %v268, %v274
      %v284 = vmax.f32 %v276, 0.0
      %v285 = vmax.f32 %v277, 0.0
      %v286 = vmax.f32 %v278, 0.0
      %v287 = vmax.f32 %v279, 0.0
      %v288 = vmax.f32 %v280, 0.0
      %v289 = vmax.f32 %v281, 0.0
      %v290 = vmax.f32 %v282, 0.0
      %v291 = vmax.f32 %v283, 0.0
      %v292 = vpack.c.bf16 %v285, %v284
      %v293 = vpack.c.bf16 %v287, %v286
      %v294 = vpack.c.bf16 %v289, %v288
      %v295 = vpack.c.bf16 %v291, %v290
      %v300 = vunpack.c.l.b16 %v292
      %v301 = vunpack.c.h.b16 %v292
      %v302 = vunpack.c.l.b16 %v293
      %v303 = vunpack.c.h.b16 %v293
      %v304 = vunpack.c.l.b16 %v294
      %v305 = vunpack.c.h.b16 %v294
      %v306 = vunpack.c.l.b16 %v295
      %v307 = vunpack.c.h.b16 %v295
      %v308 = vpack.c.b16 %v300, %v300
      %v309 = vpack.c.b16 %v301, %v301
      %v310 = vpack.c.b16 %v302, %v302
      %v311 = vpack.c.b16 %v303, %v303
      %v312 = vpack.c.b16 %v304, %v304
      %v313 = vpack.c.b16 %v305, %v305
      %v314 = vpack.c.b16 %v306, %v306
      %v315 = vpack.c.b16 %v307, %v307
      %vm324 = vcmask 27648
      %325 = vst.msk [vmem:[%s236] sm:$0xf] %vm324, %v308
      %326 = vst.msk [vmem:[%s236 + $0x4] sm:$0xf] %vm324, %v309
      %327 = vst.msk [vmem:[%s236 + $0x8] sm:$0xf] %vm324, %v310
      %328 = vst.msk [vmem:[%s236 + $0xc] sm:$0xf] %vm324, %v311
      %329 = vst.msk [vmem:[%s236 + $0x10] sm:$0xf] %vm324, %v312
      %330 = vst.msk [vmem:[%s236 + $0x14] sm:$0xf] %vm324, %v313
      %331 = vst.msk [vmem:[%s236 + $0x18] sm:$0xf] %vm324, %v314
      %332 = vst.msk [vmem:[%s236 + $0x1c] sm:$0xf] %vm324, %v315
      %s333 = smul.u32 8, %s19
      %p334 = scmp.lt.s32.totalorder %s18, 1
      %s335 = scalar_select %p334, %s18, 1
      %p336 = scmp.lt.s32.totalorder %s333, 7
      %s337 = scalar_select %p336, %s333, 7
      %s338 = smul.addr %s335, 8
      %s339 = sadd.s32 %s337, %s338
      %s340 = smul.addr %s339, 4
      %s341 = scalar_lea.vmem %s3, %s340
      // Predicated region
      $region33: #{csp_dark_forward.17} parent=31 // pred_check
        %p342 = pneg %p126
      $region34: #{csp_dark_forward.17} parent=31 // pred_check_branch
        %344 = sbr.rel (%p342) target = $region36
      $region35: #{csp_dark_forward.17} parent=31 // pred_region
        %s345 = smul.u32 8, %s19
      $region36: #{csp_dark_forward.17} parent=31 // pred_fallthru
        _
    $region32: #{csp_dark_forward.17} parent=5 // pred_fallthru
      _
    %p346 = scmp.le.s32.totalorder 2, %s9
    // Predicated region
    $region37: #{csp_dark_forward.17} parent=5 // pred_check
      %p347 = pneg %p346
    $region38: #{csp_dark_forward.17} parent=5 // pred_check_branch
      %349 = sbr.rel (%p347) target = $region40
    $region39: #{csp_dark_forward.17} parent=5 // pred_region
      %s350 = ssub.s32 %s9, 2
      // Predicated region
      $region41: #{csp_dark_forward.17} parent=39 // pred_check
        %p351 = pneg %p132
      $region42: #{csp_dark_forward.17} parent=39 // pred_check_branch
        %353 = sbr.rel (%p351) target = $region44
      $region43: #{csp_dark_forward.17} parent=39 // pred_region
        %s354 = smul.u32 8, %s21
        %p355 = scmp.lt.s32.totalorder %s20, 1
        %s356 = scalar_select %p355, %s20, 1
        %p357 = scmp.lt.s32.totalorder %s354, 7
        %s358 = scalar_select %p357, %s354, 7
        %s359 = smul.addr %s356, 8
        %s360 = sadd.s32 %s358, %s359
        %s361 = smul.addr %s360, 4
        %s362 = scalar_lea.vmem %s3, %s361
      $region44: #{csp_dark_forward.17} parent=39 // pred_fallthru
        _
    $region40: #{csp_dark_forward.17} parent=5 // pred_fallthru
      _
  $region6: #{csp_dark_forward.17} parent=0 // loop_footer
    %s13 = sadd.s32 1, %s9
  $region7: #{csp_dark_forward.17} parent=0 // loop_footer_branch
    %8 = sbr.rel target = $region3
  $region8: #{csp_dark_forward.17} parent=0 // loop_exit
    _

// kernel: csp_dark_forward.16
$region0: #{csp_dark_forward.16}
  #allocation0 [shape = 'u32[]', space=smem, size = 0x4, offset = 0x4, fixed_abs, tag = 'smem constant byte address 0x4 - core index']
  #allocation1 [shape = 'u32[144,128]{1,0:T(1,128)}', space=vmem, size = 0x12000, scoped, tag = 'internal scratch']
  %s0 = inlined_call_operand.vmem [shape: bf16[2,64,4], index: 0, kind: input, shape index: {}]
  %s1 = inlined_call_operand.vmem [shape: bf16[4,4], index: 1, kind: input, shape index: {}]
  %s2 = inlined_call_operand.vmem [shape: f32[2,1,4], index: 2, kind: input, shape index: {}]
  %s3 = inlined_call_operand.vmem [shape: f32[2,1,4], index: 3, kind: input, shape index: {}]
  %s4 = inlined_call_operand.vmem [shape: bf16[2,64,4], index: 4, kind: output, shape index: {0}]
  %s5 = inlined_call_operand.vmem [shape: f32[2,1,4], index: 5, kind: output, shape index: {1}]
  %s6 = inlined_call_operand.vmem [shape: f32[2,1,4], index: 6, kind: output, shape index: {2}]
  %7 = xla_tuple %s4, %s5, %s6
  %s8 = sld [smem:[#allocation0]]
  $region69: #{csp_dark_forward.16} parent=0
    _
  %s10 = ssub.s32 1, %s8
  %s11 = scalar_select 0, %s10, %s8
  loop: start=0, step=1, limit=4
  $region2: #{csp_dark_forward.16} parent=0 // loop_pre_header
    _
  $region3: #{csp_dark_forward.16} parent=0 // loop_header
    %s13 = sphi 0, %s17
    %p14 = scmp.ge.s32.totalorder %s13, 4
    %s20 = sphi 0, %s32
    %s21 = sphi 0, %s28
    %s22 = sphi 0, %s20
    %s23 = sphi 0, %s21
    %s24 = sphi 0, %s22
    %s25 = sphi 0, %s23
    %s37 = sphi 0, %s39
    %s40 = sphi 0, %s37
    %s41 = sphi 0, %s40
    %s57 = sphi 0, %s41
    %s61 = sphi 0, %s61
    %s63 = sphi 0, %s61
    %s64 = sphi 0, %s63
    %s78 = sphi 0, %s64
    %s84 = sphi 0, %s86
    %s87 = sphi 0, %s84
    %s88 = sphi 0, %s87
    %s104 = sphi 0, %s88
    %s110 = sphi 0, %s112
    %s113 = sphi 0, %s110
    %s114 = sphi 0, %s113
    %s130 = sphi 0, %s114
    %s138 = sphi 0, %s140
    %s141 = sphi 0, %s138
    %s142 = sphi 0, %s141
    %s158 = sphi 0, %s142
    %s164 = sphi 0, %s166
    %s167 = sphi 0, %s164
    %s168 = sphi 0, %s167
    %s184 = sphi 0, %s168
    %s190 = sphi 0, %s192
    %s193 = sphi 0, %s190
    %s194 = sphi 0, %s193
    %s210 = sphi 0, %s194
  $region4: #{csp_dark_forward.16} parent=0 // loop_header_branch
    %16 = sbr.rel (%p14) target = $region8
  $region5: #{csp_dark_forward.16} parent=0 // loop_body
    %s18 = ssub.s32 %s13, 1
    %s19 = ssub.s32 %s13, 2
    %s26 = sadd.s32 1, %s21
    %p27 = scmp.ge.s32.totalorder %s26, 1
    %s28 = scalar_select %p27, 0, %s26
    %s29 = sadd.s32 1, %s20
    %s30 = scalar_select %p27, %s29, %s20
    %p31 = scmp.ge.s32.totalorder %s30, 2
    %s32 = scalar_select %p31, 0, %s30
    %s33 = ssub.s32 %s20, %s32
    %s34 = ssub.s32 %s21, %s28
    %s35 = sor.u32 %s33, %s34
    %p36 = scmp.eq.s32.totalorder %s35, 0
    %s38 = sadd.s32 %s37, 1
    %s39 = scalar_select %p36, %s37, %s38
    %p42 = pneg %p36
    %p43 = scmp.eq.s32.totalorder %s13, 1
    %p44 = por %p42, %p43
    %p45 = scmp.ne.s32.totalorder %s37, %s40
    %p46 = scmp.eq.s32.totalorder %s13, 0
    %p47 = por %p45, %p46
    %p48 = scmp.ne.s32.totalorder %s37, %s40
    %p49 = scmp.eq.s32.totalorder %s18, 1
    %p50 = por %p48, %p49
    %p51 = scmp.ne.s32.totalorder %s40, %s41
    %p52 = scmp.eq.s32.totalorder %s18, 0
    %p53 = por %p51, %p52
    %p54 = scmp.ne.s32.totalorder %s40, %s41
    %p55 = scmp.eq.s32.totalorder %s19, 1
    %p56 = por %p54, %p55
    %p58 = scmp.ne.s32.totalorder %s41, %s57
    %p59 = scmp.eq.s32.totalorder %s19, 0
    %p60 = por %p58, %p59
    %s62 = sadd.s32 %s61, 1
    %p65 = scmp.eq.s32.totalorder %s13, 1
    %p66 = scmp.ne.s32.totalorder %s61, %s63
    %p67 = scmp.eq.s32.totalorder %s13, 0
    %p68 = por %p66, %p67
    %p69 = scmp.ne.s32.totalorder %s61, %s63
    %p70 = scmp.eq.s32.totalorder %s18, 1
    %p71 = por %p69, %p70
    %p72 = scmp.ne.s32.totalorder %s63, %s64
    %p73 = scmp.eq.s32.totalorder %s18, 0
    %p74 = por %p72, %p73
    %p75 = scmp.ne.s32.totalorder %s63, %s64
    %p76 = scmp.eq.s32.totalorder %s19, 1
    %p77 = por %p75, %p76
    %p79 = scmp.ne.s32.totalorder %s64, %s78
    %p80 = scmp.eq.s32.totalorder %s19, 0
    %p81 = por %p79, %p80
    %s82 = ssub.s32 %s20, %s32
    %p83 = scmp.eq.s32.totalorder %s82, 0
    %s85 = sadd.s32 %s84, 1
    %s86 = scalar_select %p83, %s84, %s85
    %p89 = pneg %p83
    %p90 = scmp.eq.s32.totalorder %s13, 1
    %p91 = por %p89, %p90
    %p92 = scmp.ne.s32.totalorder %s84, %s87
    %p93 = scmp.eq.s32.totalorder %s13, 0
    %p94 = por %p92, %p93
    %p95 = scmp.ne.s32.totalorder %s84, %s87
    %p96 = scmp.eq.s32.totalorder %s18, 1
    %p97 = por %p95, %p96
    %p98 = scmp.ne.s32.totalorder %s87, %s88
    %p99 = scmp.eq.s32.totalorder %s18, 0
    %p100 = por %p98, %p99
    %p101 = scmp.ne.s32.totalorder %s87, %s88
    %p102 = scmp.eq.s32.totalorder %s19, 1
    %p103 = por %p101, %p102
    %p105 = scmp.ne.s32.totalorder %s88, %s104
    %p106 = scmp.eq.s32.totalorder %s19, 0
    %p107 = por %p105, %p106
    %s108 = ssub.s32 %s20, %s32
    %p109 = scmp.eq.s32.totalorder %s108, 0
    %s111 = sadd.s32 %s110, 1
    %s112 = scalar_select %p109, %s110, %s111
    %p115 = pneg %p109
    %p116 = scmp.eq.s32.totalorder %s13, 1
    %p117 = por %p115, %p116
    %p118 = scmp.ne.s32.totalorder %s110, %s113
    %p119 = scmp.eq.s32.totalorder %s13, 0
    %p120 = por %p118, %p119
    %p121 = scmp.ne.s32.totalorder %s110, %s113
    %p122 = scmp.eq.s32.totalorder %s18, 1
    %p123 = por %p121, %p122
    %p124 = scmp.ne.s32.totalorder %s113, %s114
    %p125 = scmp.eq.s32.totalorder %s18, 0
    %p126 = por %p124, %p125
    %p127 = scmp.ne.s32.totalorder %s113, %s114
    %p128 = scmp.eq.s32.totalorder %s19, 1
    %p129 = por %p127, %p128
    %p131 = scmp.ne.s32.totalorder %s114, %s130
    %p132 = scmp.eq.s32.totalorder %s19, 0
    %p133 = por %p131, %p132
    %s134 = ssub.s32 %s20, %s32
    %s135 = ssub.s32 %s21, %s28
    %s136 = sor.u32 %s134, %s135
    %p137 = scmp.eq.s32.totalorder %s136, 0
    %s139 = sadd.s32 %s138, 1
    %s140 = scalar_select %p137, %s138, %s139
    %p143 = pneg %p137
    %p144 = scmp.eq.s32.totalorder %s13, 1
    %p145 = por %p143, %p144
    %p146 = scmp.ne.s32.totalorder %s138, %s141
    %p147 = scmp.eq.s32.totalorder %s13, 0
    %p148 = por %p146, %p147
    %p149 = scmp.ne.s32.totalorder %s138, %s141
    %p150 = scmp.eq.s32.totalorder %s18, 1
    %p151 = por %p149, %p150
    %p152 = scmp.ne.s32.totalorder %s141, %s142
    %p153 = scmp.eq.s32.totalorder %s18, 0
    %p154 = por %p152, %p153
    %p155 = scmp.ne.s32.totalorder %s141, %s142
    %p156 = scmp.eq.s32.totalorder %s19, 1
    %p157 = por %p155, %p156
    %p159 = scmp.ne.s32.totalorder %s142, %s158
    %p160 = scmp.eq.s32.totalorder %s19, 0
    %p161 = por %p159, %p160
    %s162 = ssub.s32 %s20, %s32
    %p163 = scmp.eq.s32.totalorder %s162, 0
    %s165 = sadd.s32 %s164, 1
    %s166 = scalar_select %p163, %s164, %s165
    %p169 = pneg %p163
    %p170 = scmp.eq.s32.totalorder %s13, 1
    %p171 = por %p169, %p170
    %p172 = scmp.ne.s32.totalorder %s164, %s167
    %p173 = scmp.eq.s32.totalorder %s13, 0
    %p174 = por %p172, %p173
    %p175 = scmp.ne.s32.totalorder %s164, %s167
    %p176 = scmp.eq.s32.totalorder %s18, 1
    %p177 = por %p175, %p176
    %p178 = scmp.ne.s32.totalorder %s167, %s168
    %p179 = scmp.eq.s32.totalorder %s18, 0
    %p180 = por %p178, %p179
    %p181 = scmp.ne.s32.totalorder %s167, %s168
    %p182 = scmp.eq.s32.totalorder %s19, 1
    %p183 = por %p181, %p182
    %p185 = scmp.ne.s32.totalorder %s168, %s184
    %p186 = scmp.eq.s32.totalorder %s19, 0
    %p187 = por %p185, %p186
    %s188 = ssub.s32 %s20, %s32
    %p189 = scmp.eq.s32.totalorder %s188, 0
    %s191 = sadd.s32 %s190, 1
    %s192 = scalar_select %p189, %s190, %s191
    %p195 = pneg %p189
    %p196 = scmp.eq.s32.totalorder %s13, 1
    %p197 = por %p195, %p196
    %p198 = scmp.ne.s32.totalorder %s190, %s193
    %p199 = scmp.eq.s32.totalorder %s13, 0
    %p200 = por %p198, %p199
    %p201 = scmp.ne.s32.totalorder %s190, %s193
    %p202 = scmp.eq.s32.totalorder %s18, 1
    %p203 = por %p201, %p202
    %p204 = scmp.ne.s32.totalorder %s193, %s194
    %p205 = scmp.eq.s32.totalorder %s18, 0
    %p206 = por %p204, %p205
    %p207 = scmp.ne.s32.totalorder %s193, %s194
    %p208 = scmp.eq.s32.totalorder %s19, 1
    %p209 = por %p207, %p208
    %p211 = scmp.ne.s32.totalorder %s194, %s210
    %p212 = scmp.eq.s32.totalorder %s19, 0
    %p213 = por %p211, %p212
    %p214 = scmp.le.s32.totalorder 1, %s13
    %p215 = scmp.lt.s32.totalorder %s13, 3
    %p216 = pnand %p214, %p215
    %p217 = pneg %p216
    // Predicated region
    $region9: #{csp_dark_forward.16} parent=5 // pred_check
      _
    $region10: #{csp_dark_forward.16} parent=5 // pred_check_branch
      %219 = sbr.rel (%p216) target = $region12
    $region11: #{csp_dark_forward.16} parent=5 // pred_region
      %s220 = ssub.s32 %s13, 1
      // Predicated region
      $region13: #{csp_dark_forward.16} parent=11 // pred_check
        %p221 = pneg %p74
      $region14: #{csp_dark_forward.16} parent=11 // pred_check_branch
        %223 = sbr.rel (%p221) target = $region16
      $region15: #{csp_dark_forward.16} parent=11 // pred_region
        _
      $region16: #{csp_dark_forward.16} parent=11 // pred_fallthru
        _
    $region12: #{csp_dark_forward.16} parent=5 // pred_fallthru
      _
    %p224 = scmp.lt.s32.totalorder %s13, 2
    // Predicated region
    $region17: #{csp_dark_forward.16} parent=5 // pred_check
      %p225 = pneg %p224
    $region18: #{csp_dark_forward.16} parent=5 // pred_check_branch
      %227 = sbr.rel (%p225) target = $region20
    $region19: #{csp_dark_forward.16} parent=5 // pred_region
      // Predicated region
      $region21: #{csp_dark_forward.16} parent=19 // pred_check
        %p228 = pneg %p47
      $region22: #{csp_dark_forward.16} parent=19 // pred_check_branch
        %230 = sbr.rel (%p228) target = $region24
      $region23: #{csp_dark_forward.16} parent=19 // pred_region
        %s231 = smul.u32 8, %s21
        %p232 = scmp.lt.s32.totalorder %s20, 1
        %s233 = scalar_select %p232, %s20, 1
        %p234 = scmp.lt.s32.totalorder %s231, 7
        %s235 = scalar_select %p234, %s231, 7
        %s236 = smul.addr %s233, 8
        %s237 = sadd.s32 %s235, %s236
        %s238 = smul.addr %s237, 4
        %s239 = scalar_lea.vmem %s0, %s238
        %s240 = smul.u32 8, %s21
      $region24: #{csp_dark_forward.16} parent=19 // pred_fallthru
        _
      // Predicated region
      $region25: #{csp_dark_forward.16} parent=19 // pred_check
        %p241 = pneg %p94
      $region26: #{csp_dark_forward.16} parent=19 // pred_check_branch
        %243 = sbr.rel (%p241) target = $region28
      $region27: #{csp_dark_forward.16} parent=19 // pred_region
        %p244 = scmp.lt.s32.totalorder %s20, 1
        %s245 = scalar_select %p244, %s20, 1
        %s246 = scalar_lea.vmem %s2, %s245
      $region28: #{csp_dark_forward.16} parent=19 // pred_fallthru
        _
      // Predicated region
      $region29: #{csp_dark_forward.16} parent=19 // pred_check
        %p247 = pneg %p120
      $region30: #{csp_dark_forward.16} parent=19 // pred_check_branch
        %249 = sbr.rel (%p247) target = $region32
      $region31: #{csp_dark_forward.16} parent=19 // pred_region
        %p250 = scmp.lt.s32.totalorder %s20, 1
        %s251 = scalar_select %p250, %s20, 1
        %s252 = scalar_lea.vmem %s3, %s251
      $region32: #{csp_dark_forward.16} parent=19 // pred_fallthru
        _
    $region20: #{csp_dark_forward.16} parent=5 // pred_fallthru
      _
    %p253 = scmp.le.s32.totalorder 1, %s13
    %p254 = scmp.lt.s32.totalorder %s13, 3
    %p255 = pnand %p253, %p254
    %p256 = pneg %p255
    // Predicated region
    $region33: #{csp_dark_forward.16} parent=5 // pred_check
      _
    $region34: #{csp_dark_forward.16} parent=5 // pred_check_branch
      %258 = sbr.rel (%p255) target = $region36
    $region35: #{csp_dark_forward.16} parent=5 // pred_region
      %s259 = ssub.s32 %s13, 1
      %s260 = smul.u32 8, %s23
      %p261 = scmp.lt.s32.totalorder %s22, 1
      %s262 = scalar_select %p261, %s22, 1
      %p263 = scmp.lt.s32.totalorder %s260, 7
      %s264 = scalar_select %p263, %s260, 7
      %s265 = smul.addr %s262, 8
      %s266 = sadd.s32 %s264, %s265
      %s267 = smul.addr %s266, 4
      %s268 = scalar_lea.vmem %s0, %s267
      %p269 = pneg %p53
      %p270 = pneg %p50
      %p271 = pneg %p74
      %p272 = pneg %p71
      %p273 = scmp.lt.s32.totalorder %s22, 1
      %s274 = scalar_select %p273, %s22, 1
      %s275 = scalar_lea.vmem %s2, %s274
      %p276 = pneg %p100
      %p277 = pneg %p97
      %p278 = scmp.lt.s32.totalorder %s22, 1
      %s279 = scalar_select %p278, %s22, 1
      %s280 = scalar_lea.vmem %s3, %s279
      %p281 = pneg %p126
      %p282 = pneg %p123
      %p283 = pneg %p154
      %p284 = pneg %p151
      %s285 = smul.u32 8, %s23
      %p286 = scmp.lt.s32.totalorder %s22, 1
      %s287 = scalar_select %p286, %s22, 1
      %p288 = scmp.lt.s32.totalorder %s285, 7
      %s289 = scalar_select %p288, %s285, 7
      %s290 = smul.addr %s287, 8
      %s291 = sadd.s32 %s289, %s290
      %s292 = smul.addr %s291, 4
      %s293 = scalar_lea.vmem %s4, %s292
      %p294 = pneg %p180
      %p295 = pneg %p177
      %p296 = scmp.lt.s32.totalorder %s22, 1
      %s297 = scalar_select %p296, %s22, 1
      %s298 = scalar_lea.vmem %s5, %s297
      %p299 = pneg %p206
      %p300 = pneg %p203
      %p301 = scmp.lt.s32.totalorder %s22, 1
      %s302 = scalar_select %p301, %s22, 1
      %s303 = scalar_lea.vmem %s6, %s302
      %s304 = smul.u32 8, %s23
      %p305 = scmp.lt.s32.totalorder %s22, 1
      %s306 = scalar_select %p305, %s22, 1
      %p307 = scmp.lt.s32.totalorder %s304, 7
      %s308 = scalar_select %p307, %s304, 7
      %s309 = smul.addr %s306, 8
      %s310 = sadd.s32 %s308, %s309
      %s311 = smul.addr %s310, 4
      %s312 = scalar_lea.vmem %s0, %s311
      %s313 = smul.u32 8, %s23
      %p314 = scmp.lt.s32.totalorder %s22, 1
      %s315 = scalar_select %p314, %s22, 1
      %s316 = scalar_lea.vmem %s2, %s315
      %p317 = scmp.lt.s32.totalorder %s22, 1
      %s318 = scalar_select %p317, %s22, 1
      %s319 = scalar_lea.vmem %s3, %s318
      %s320 = smul.u32 8, %s23
      %p321 = scmp.lt.s32.totalorder %s22, 1
      %s322 = scalar_select %p321, %s22, 1
      %p323 = scmp.lt.s32.totalorder %s320, 7
      %s324 = scalar_select %p323, %s320, 7
      %s325 = smul.addr %s322, 8
      %s326 = sadd.s32 %s324, %s325
      %s327 = smul.addr %s326, 4
      %s328 = scalar_lea.vmem %s4, %s327
      %s329 = smul.u32 8, %s23
      %p330 = scmp.lt.s32.totalorder %s22, 1
      %s331 = scalar_select %p330, %s22, 1
      %s332 = scalar_lea.vmem %s5, %s331
      %p333 = scmp.lt.s32.totalorder %s22, 1
      %s334 = scalar_select %p333, %s22, 1
      %s335 = scalar_lea.vmem %s6, %s334
      %p337 = scmp.eq.s32.totalorder %s23, 0
      // Predicated region
      $region37: #{csp_dark_forward.16} parent=35 // pred_check
        %p338 = pneg %p337
      $region38: #{csp_dark_forward.16} parent=35 // pred_check_branch
        %340 = sbr.rel (%p338) target = $region40
      $region39: #{csp_dark_forward.16} parent=35 // pred_region
        %vm341 = vcmask 24576
        %342 = vst.msk [vmem:[%s332] sm:$0x1] %vm341, 0.0
        %343 = vst.msk [vmem:[%s335] sm:$0x1] %vm341, 0.0
      $region40: #{csp_dark_forward.16} parent=35 // pred_fallthru
        _
      %v344 = vld [vmem:[%s312] sm:$0xf]
      %v345 = vld [vmem:[%s312 + $0x4] sm:$0xf]
      %v346 = vld [vmem:[%s312 + $0x8] sm:$0xf]
      %v347 = vld [vmem:[%s312 + $0xc] sm:$0xf]
      %v348 = vld [vmem:[%s312 + $0x10] sm:$0xf]
      %v349 = vld [vmem:[%s312 + $0x14] sm:$0xf]
      %v350 = vld [vmem:[%s312 + $0x18] sm:$0xf]
      %v351 = vld [vmem:[%s312 + $0x1c] sm:$0xf]
      %v352 = vunpack.c.l.bf16 %v344
      %v353 = vunpack.c.l.bf16 %v345
      %v354 = vunpack.c.l.bf16 %v346
      %v355 = vunpack.c.l.bf16 %v347
      %v356 = vunpack.c.l.bf16 %v348
      %v357 = vunpack.c.l.bf16 %v349
      %v358 = vunpack.c.l.bf16 %v350
      %v359 = vunpack.c.l.bf16 %v351
      %v360 = vld [vmem:[%s316] sm:$0x1]
      %v362 = vlaneseq
      %v363 = vshrl.u32 %v362, 7
      %v364 = vsub.s32 0, %v363
      %v365 = vrot.slane %v360, %v364
      %v367 = vmul.f32 %v352, %v365
      %v368 = vmul.f32 %v353, %v365
      %v369 = vmul.f32 %v354, %v365
      %v370 = vmul.f32 %v355, %v365
      %v371 = vmul.f32 %v356, %v365
      %v372 = vmul.f32 %v357, %v365
      %v373 = vmul.f32 %v358, %v365
      %v374 = vmul.f32 %v359, %v365
      %v375 = vld [vmem:[%s319] sm:$0x1]
      %v377 = vlaneseq
      %v378 = vshrl.u32 %v377, 7
      %v379 = vsub.s32 0, %v378
      %v380 = vrot.slane %v375, %v379
      %v382 = vadd.f32 %v367, %v380
      %v383 = vadd.f32 %v368, %v380
      %v384 = vadd.f32 %v369, %v380
      %v385 = vadd.f32 %v370, %v380
      %v386 = vadd.f32 %v371, %v380
      %v387 = vadd.f32 %v372, %v380
      %v388 = vadd.f32 %v373, %v380
      %v389 = vadd.f32 %v374, %v380
      %v390 = vmax.f32 %v382, 0.0
      %v391 = vmax.f32 %v383, 0.0
      %v392 = vmax.f32 %v384, 0.0
      %v393 = vmax.f32 %v385, 0.0
      %v394 = vmax.f32 %v386, 0.0
      %v395 = vmax.f32 %v387, 0.0
      %v396 = vmax.f32 %v388, 0.0
      %v397 = vmax.f32 %v389, 0.0
      %v398 = vpack.c.bf16 %v391, %v390
      %v399 = vpack.c.bf16 %v393, %v392
      %v400 = vpack.c.bf16 %v395, %v394
      %v401 = vpack.c.bf16 %v397, %v396
      %v402 = vld [vmem:[%s1] sm:$0x3]
      %vm403 = vcmask 31744
      %v405 = vsel %vm403, %v398, 0
      %v408 = vsel %vm403, %v399, 0
      %v411 = vsel %vm403, %v400, 0
      %v414 = vsel %vm403, %v401, 0
      %vm416 = vcmask 1041408
      %v418 = vsel %vm416, %v402, 0
      %420 = vmatprep.subr.bf16.mxu0 0
      %421 = vmatpush1.bf16.msra.mxu0 %v418
      %422 = vmatprep.subr.bf16.mxu0 0
      %423 = vmatpush1.bf16.msra.mxu0 0
      %424 = vmatprep.subr.bf16.mxu0 0
      %425 = vmatpush1.bf16.msra.mxu0 0
      %426 = vmatprep.subr.bf16.mxu0 0
      %427 = vmatpush1.bf16.msra.mxu0 0
      %428 = vmatprep.subr.bf16.mxu0 0
      %429 = vmatpush1.bf16.msra.mxu0 0
      %430 = vmatprep.subr.bf16.mxu0 0
      %431 = vmatpush1.bf16.msra.mxu0 0
      %432 = vmatprep.subr.bf16.mxu0 0
      %433 = vmatpush1.bf16.msra.mxu0 0
      %434 = vmatprep.subr.bf16.mxu0 0
      %435 = vmatpush1.bf16.msra.mxu0 0
      %436 = vmatprep.subr.bf16.mxu0 0
      %437 = vmatpush1.bf16.msra.mxu0 0
      %438 = vmatprep.subr.bf16.mxu0 0
      %439 = vmatpush1.bf16.msra.mxu0 0
      %440 = vmatprep.subr.bf16.mxu0 0
      %441 = vmatpush1.bf16.msra.mxu0 0
      %442 = vmatprep.subr.bf16.mxu0 0
      %443 = vmatpush1.bf16.msra.mxu0 0
      %444 = vmatprep.subr.bf16.mxu0 0
      %445 = vmatpush1.bf16.msra.mxu0 0
      %446 = vmatprep.subr.bf16.mxu0 0
      %447 = vmatpush1.bf16.msra.mxu0 0
      %448 = vmatprep.subr.bf16.mxu0 0
      %449 = vmatpush1.bf16.msra.mxu0 0
      %450 = vmatprep.subr.bf16.mxu0 0
      %451 = vmatpush1.bf16.msra.mxu0 0
      %452 = vmatprep.mubr.bf16.mxu0 0
      %453 = vmatmul.mubr.bf16.gmra.mrb[0].mxu0 %v405
      %v454 = vpop.f32.mrb[0].mxu0
      %v455 = vadd.f32 0.0, %v454
      %v456 = vpop.f32.mrb[0].mxu0
      %v457 = vpop.f32.mrb[0].mxu0
      %v458 = vadd.f32 0.0, %v457
      %v459 = vpop.f32.mrb[0].mxu0
      %460 = vmatprep.mubr.bf16.mxu0 0
      %461 = vmatmul.mubr.bf16.gmra.mrb[0].mxu0 %v408
      %v462 = vpop.f32.mrb[0].mxu0
      %v463 = vadd.f32 0.0, %v462
      %v464 = vpop.f32.mrb[0].mxu0
      %v465 = vpop.f32.mrb[0].mxu0
      %v466 = vadd.f32 0.0, %v465
      %v467 = vpop.f32.mrb[0].mxu0
      %468 = vmatprep.mubr.bf16.mxu0 0
      %469 = vmatmul.mubr.bf16.gmra.mrb[0].mxu0 %v411
      %v470 = vpop.f32.mrb[0].mxu0
      %v471 = vadd.f32 0.0, %v470
      %v472 = vpop.f32.mrb[0].mxu0
      %v473 = vpop.f32.mrb[0].mxu0
      %v474 = vadd.f32 0.0, %v473
      %v475 = vpop.f32.mrb[0].mxu0
      %476 = vmatprep.mubr.bf16.mxu0 0
      %477 = vmatmul.mubr.bf16.gmra.mrb[0].mxu0 %v414
      %v478 = vpop.f32.mrb[0].mxu0
      %v479 = vadd.f32 0.0, %v478
      %v480 = vpop.f32.mrb[0].mxu0
      %v481 = vpop.f32.mrb[0].mxu0
      %v482 = vadd.f32 0.0, %v481
      %v483 = vpop.f32.mrb[0].mxu0
      %484 = vdwg.mxu0
      %v485 = vpack.c.bf16 %v458, %v455
      %v486 = vpack.c.bf16 %v466, %v463
      %v487 = vpack.c.bf16 %v474, %v471
      %v488 = vpack.c.bf16 %v482, %v479
      %v493 = vunpack.c.l.b16 %v485
      %v494 = vunpack.c.h.b16 %v485
      %v495 = vunpack.c.l.b16 %v486
      %v496 = vunpack.c.h.b16 %v486
      %v497 = vunpack.c.l.b16 %v487
      %v498 = vunpack.c.h.b16 %v487
      %v499 = vunpack.c.l.b16 %v488
      %v500 = vunpack.c.h.b16 %v488
      %v501 = vpack.c.b16 %v493, %v493
      %v502 = vpack.c.b16 %v494, %v494
      %v503 = vpack.c.b16 %v495, %v495
      %v504 = vpack.c.b16 %v496, %v496
      %v505 = vpack.c.b16 %v497, %v497
      %v506 = vpack.c.b16 %v498, %v498
      %v507 = vpack.c.b16 %v499, %v499
      %v508 = vpack.c.b16 %v500, %v500
      %vm517 = vcmask 27648
      %518 = vst.msk [vmem:[%s328] sm:$0xf] %vm517, %v501
      %519 = vst.msk [vmem:[%s328 + $0x4] sm:$0xf] %vm517, %v502
      %520 = vst.msk [vmem:[%s328 + $0x8] sm:$0xf] %vm517, %v503
      %521 = vst.msk [vmem:[%s328 + $0xc] sm:$0xf] %vm517, %v504
      %522 = vst.msk [vmem:[%s328 + $0x10] sm:$0xf] %vm517, %v505
      %523 = vst.msk [vmem:[%s328 + $0x14] sm:$0xf] %vm517, %v506
      %524 = vst.msk [vmem:[%s328 + $0x18] sm:$0xf] %vm517, %v507
      %525 = vst.msk [vmem:[%s328 + $0x1c] sm:$0xf] %vm517, %v508
      %v526 = vld [vmem:[%s332] sm:$0x1]
      %v527 = vsel %vm403, %v455, 0.0
      %v528 = vsel %vm403, %v458, 0.0
      %v529 = vadd.f32 %v527, %v528
      %v530 = vsel %vm403, %v463, 0.0
      %v531 = vadd.f32 %v529, %v530
      %v532 = vsel %vm403, %v466, 0.0
      %v533 = vadd.f32 %v531, %v532
      %v534 = vsel %vm403, %v471, 0.0
      %v535 = vadd.f32 %v533, %v534
      %v536 = vsel %vm403, %v474, 0.0
      %v537 = vadd.f32 %v535, %v536
      %v538 = vsel %vm403, %v479, 0.0
      %v539 = vadd.f32 %v537, %v538
      %v540 = vsel %vm403, %v482, 0.0
      %v541 = vadd.f32 %v539, %v540
      %v542 = vrot.slane %v541, 4
      %v543 = vadd.f32 %v541, %v542
      %v544 = vrot.slane %v543, 2
      %v545 = vadd.f32 %v543, %v544
      %v546 = vrot.slane %v545, 1
      %v547 = vadd.f32 %v545, %v546
      %v548 = vadd.f32 %v526, %v547
      %vm549 = vcmask 24576
      %550 = vst.msk [vmem:[%s332] sm:$0x1] %vm549, %v548
      %v551 = vld [vmem:[%s335] sm:$0x1]
      %v552 = vmul.f32 %v455, %v455
      %v553 = vmul.f32 %v458, %v458
      %v554 = vmul.f32 %v463, %v463
      %v555 = vmul.f32 %v466, %v466
      %v556 = vmul.f32 %v471, %v471
      %v557 = vmul.f32 %v474, %v474
      %v558 = vmul.f32 %v479, %v479
      %v559 = vmul.f32 %v482, %v482
      %v560 = vsel %vm403, %v552, 0.0
      %v561 = vsel %vm403, %v553, 0.0
      %v562 = vadd.f32 %v560, %v561
      %v563 = vsel %vm403, %v554, 0.0
      %v564 = vadd.f32 %v562, %v563
      %v565 = vsel %vm403, %v555, 0.0
      %v566 = vadd.f32 %v564, %v565
      %v567 = vsel %vm403, %v556, 0.0
      %v568 = vadd.f32 %v566, %v567
      %v569 = vsel %vm403, %v557, 0.0
      %v570 = vadd.f32 %v568, %v569
      %v571 = vsel %vm403, %v558, 0.0
      %v572 = vadd.f32 %v570, %v571
      %v573 = vsel %vm403, %v559, 0.0
      %v574 = vadd.f32 %v572, %v573
      %v575 = vrot.slane %v574, 4
      %v576 = vadd.f32 %v574, %v575
      %v577 = vrot.slane %v576, 2
      %v578 = vadd.f32 %v576, %v577
      %v579 = vrot.slane %v578, 1
      %v580 = vadd.f32 %v578, %v579
      %v581 = vadd.f32 %v551, %v580
      %582 = vst.msk [vmem:[%s335] sm:$0x1] %vm549, %v581
      %s583 = smul.u32 8, %s23
      %p584 = scmp.lt.s32.totalorder %s22, 1
      %s585 = scalar_select %p584, %s22, 1
      %p586 = scmp.lt.s32.totalorder %s583, 7
      %s587 = scalar_select %p586, %s583, 7
      %s588 = smul.addr %s585, 8
      %s589 = sadd.s32 %s587, %s588
      %s590 = smul.addr %s589, 4
      %s591 = scalar_lea.vmem %s4, %s590
      %p592 = scmp.lt.s32.totalorder %s22, 1
      %s593 = scalar_select %p592, %s22, 1
      %s594 = scalar_lea.vmem %s5, %s593
      %p595 = scmp.lt.s32.totalorder %s22, 1
      %s596 = scalar_select %p595, %s22, 1
      %s597 = scalar_lea.vmem %s6, %s596
      // Predicated region
      $region41: #{csp_dark_forward.16} parent=35 // pred_check
        %p598 = pneg %p151
      $region42: #{csp_dark_forward.16} parent=35 // pred_check_branch
        %600 = sbr.rel (%p598) target = $region44
      $region43: #{csp_dark_forward.16} parent=35 // pred_region
        %s601 = smul.u32 8, %s23
      $region44: #{csp_dark_forward.16} parent=35 // pred_fallthru
        _
      // Predicated region
      $region45: #{csp_dark_forward.16} parent=35 // pred_check
        %p602 = pneg %p177
      $region46: #{csp_dark_forward.16} parent=35 // pred_check_branch
        %604 = sbr.rel (%p602) target = $region48
      $region47: #{csp_dark_forward.16} parent=35 // pred_region
        _
      $region48: #{csp_dark_forward.16} parent=35 // pred_fallthru
        _
      // Predicated region
      $region49: #{csp_dark_forward.16} parent=35 // pred_check
        %p605 = pneg %p203
      $region50: #{csp_dark_forward.16} parent=35 // pred_check_branch
        %607 = sbr.rel (%p605) target = $region52
      $region51: #{csp_dark_forward.16} parent=35 // pred_region
        _
      $region52: #{csp_dark_forward.16} parent=35 // pred_fallthru
        _
    $region36: #{csp_dark_forward.16} parent=5 // pred_fallthru
      _
    %p608 = scmp.le.s32.totalorder 2, %s13
    // Predicated region
    $region53: #{csp_dark_forward.16} parent=5 // pred_check
      %p609 = pneg %p608
    $region54: #{csp_dark_forward.16} parent=5 // pred_check_branch
      %611 = sbr.rel (%p609) target = $region56
    $region55: #{csp_dark_forward.16} parent=5 // pred_region
      %s612 = ssub.s32 %s13, 2
      // Predicated region
      $region57: #{csp_dark_forward.16} parent=55 // pred_check
        %p613 = pneg %p157
      $region58: #{csp_dark_forward.16} parent=55 // pred_check_branch
        %615 = sbr.rel (%p613) target = $region60
      $region59: #{csp_dark_forward.16} parent=55 // pred_region
        %s616 = smul.u32 8, %s25
        %p617 = scmp.lt.s32.totalorder %s24, 1
        %s618 = scalar_select %p617, %s24, 1
        %p619 = scmp.lt.s32.totalorder %s616, 7
        %s620 = scalar_select %p619, %s616, 7
        %s621 = smul.addr %s618, 8
        %s622 = sadd.s32 %s620, %s621
        %s623 = smul.addr %s622, 4
        %s624 = scalar_lea.vmem %s4, %s623
      $region60: #{csp_dark_forward.16} parent=55 // pred_fallthru
        _
      // Predicated region
      $region61: #{csp_dark_forward.16} parent=55 // pred_check
        %p625 = pneg %p183
      $region62: #{csp_dark_forward.16} parent=55 // pred_check_branch
        %627 = sbr.rel (%p625) target = $region64
      $region63: #{csp_dark_forward.16} parent=55 // pred_region
        %p628 = scmp.lt.s32.totalorder %s24, 1
        %s629 = scalar_select %p628, %s24, 1
        %s630 = scalar_lea.vmem %s5, %s629
      $region64: #{csp_dark_forward.16} parent=55 // pred_fallthru
        _
      // Predicated region
      $region65: #{csp_dark_forward.16} parent=55 // pred_check
        %p631 = pneg %p209
      $region66: #{csp_dark_forward.16} parent=55 // pred_check_branch
        %633 = sbr.rel (%p631) target = $region68
      $region67: #{csp_dark_forward.16} parent=55 // pred_region
        %p634 = scmp.lt.s32.totalorder %s24, 1
        %s635 = scalar_select %p634, %s24, 1
        %s636 = scalar_lea.vmem %s6, %s635
      $region68: #{csp_dark_forward.16} parent=55 // pred_fallthru
        _
    $region56: #{csp_dark_forward.16} parent=5 // pred_fallthru
      _
  $region6: #{csp_dark_forward.16} parent=0 // loop_footer
    %s17 = sadd.s32 1, %s13
  $region7: #{csp_dark_forward.16} parent=0 // loop_footer_branch
    %12 = sbr.rel target = $region3
  $region8: #{csp_dark_forward.16} parent=0 // loop_exit
    _

// kernel: csp_dark_forward.18
$region0: #{csp_dark_forward.18}
  #allocation0 [shape = 'u32[]', space=smem, size = 0x4, offset = 0x4, fixed_abs, tag = 'smem constant byte address 0x4 - core index']
  #allocation1 [shape = 'u32[144,128]{1,0:T(1,128)}', space=vmem, size = 0x12000, scoped, tag = 'internal scratch']
  %s0 = inlined_call_operand.vmem [shape: bf16[2,64,36], index: 0, kind: input, shape index: {}]
  %s1 = inlined_call_operand.vmem [shape: bf16[36,4], index: 1, kind: input, shape index: {}]
  %s2 = inlined_call_operand.vmem [shape: bf16[2,64,4], index: 2, kind: output, shape index: {0}]
  %s3 = inlined_call_operand.vmem [shape: f32[2,1,4], index: 3, kind: output, shape index: {1}]
  %s4 = inlined_call_operand.vmem [shape: f32[2,1,4], index: 4, kind: output, shape index: {2}]
  %5 = xla_tuple %s2, %s3, %s4
  %s6 = sld [smem:[#allocation0]]
  $region61: #{csp_dark_forward.18} parent=0
    _
  %s8 = ssub.s32 1, %s6
  %s9 = scalar_select 0, %s8, %s6
  loop: start=0, step=1, limit=4
  $region2: #{csp_dark_forward.18} parent=0 // loop_pre_header
    _
  $region3: #{csp_dark_forward.18} parent=0 // loop_header
    %s11 = sphi 0, %s15
    %p12 = scmp.ge.s32.totalorder %s11, 4
    %s18 = sphi 0, %s30
    %s19 = sphi 0, %s26
    %s20 = sphi 0, %s18
    %s21 = sphi 0, %s19
    %s22 = sphi 0, %s20
    %s23 = sphi 0, %s21
    %s35 = sphi 0, %s37
    %s38 = sphi 0, %s35
    %s39 = sphi 0, %s38
    %s55 = sphi 0, %s39
    %s59 = sphi 0, %s59
    %s61 = sphi 0, %s59
    %s62 = sphi 0, %s61
    %s76 = sphi 0, %s62
    %s84 = sphi 0, %s86
    %s87 = sphi 0, %s84
    %s88 = sphi 0, %s87
    %s104 = sphi 0, %s88
    %s110 = sphi 0, %s112
    %s113 = sphi 0, %s110
    %s114 = sphi 0, %s113
    %s130 = sphi 0, %s114
    %s136 = sphi 0, %s138
    %s139 = sphi 0, %s136
    %s140 = sphi 0, %s139
    %s156 = sphi 0, %s140
  $region4: #{csp_dark_forward.18} parent=0 // loop_header_branch
    %14 = sbr.rel (%p12) target = $region8
  $region5: #{csp_dark_forward.18} parent=0 // loop_body
    %s16 = ssub.s32 %s11, 1
    %s17 = ssub.s32 %s11, 2
    %s24 = sadd.s32 1, %s19
    %p25 = scmp.ge.s32.totalorder %s24, 1
    %s26 = scalar_select %p25, 0, %s24
    %s27 = sadd.s32 1, %s18
    %s28 = scalar_select %p25, %s27, %s18
    %p29 = scmp.ge.s32.totalorder %s28, 2
    %s30 = scalar_select %p29, 0, %s28
    %s31 = ssub.s32 %s18, %s30
    %s32 = ssub.s32 %s19, %s26
    %s33 = sor.u32 %s31, %s32
    %p34 = scmp.eq.s32.totalorder %s33, 0
    %s36 = sadd.s32 %s35, 1
    %s37 = scalar_select %p34, %s35, %s36
    %p40 = pneg %p34
    %p41 = scmp.eq.s32.totalorder %s11, 1
    %p42 = por %p40, %p41
    %p43 = scmp.ne.s32.totalorder %s35, %s38
    %p44 = scmp.eq.s32.totalorder %s11, 0
    %p45 = por %p43, %p44
    %p46 = scmp.ne.s32.totalorder %s35, %s38
    %p47 = scmp.eq.s32.totalorder %s16, 1
    %p48 = por %p46, %p47
    %p49 = scmp.ne.s32.totalorder %s38, %s39
    %p50 = scmp.eq.s32.totalorder %s16, 0
    %p51 = por %p49, %p50
    %p52 = scmp.ne.s32.totalorder %s38, %s39
    %p53 = scmp.eq.s32.totalorder %s17, 1
    %p54 = por %p52, %p53
    %p56 = scmp.ne.s32.totalorder %s39, %s55
    %p57 = scmp.eq.s32.totalorder %s17, 0
    %p58 = por %p56, %p57
    %s60 = sadd.s32 %s59, 1
    %p63 = scmp.eq.s32.totalorder %s11, 1
    %p64 = scmp.ne.s32.totalorder %s59, %s61
    %p65 = scmp.eq.s32.totalorder %s11, 0
    %p66 = por %p64, %p65
    %p67 = scmp.ne.s32.totalorder %s59, %s61
    %p68 = scmp.eq.s32.totalorder %s16, 1
    %p69 = por %p67, %p68
    %p70 = scmp.ne.s32.totalorder %s61, %s62
    %p71 = scmp.eq.s32.totalorder %s16, 0
    %p72 = por %p70, %p71
    %p73 = scmp.ne.s32.totalorder %s61, %s62
    %p74 = scmp.eq.s32.totalorder %s17, 1
    %p75 = por %p73, %p74
    %p77 = scmp.ne.s32.totalorder %s62, %s76
    %p78 = scmp.eq.s32.totalorder %s17, 0
    %p79 = por %p77, %p78
    %s80 = ssub.s32 %s18, %s30
    %s81 = ssub.s32 %s19, %s26
    %s82 = sor.u32 %s80, %s81
    %p83 = scmp.eq.s32.totalorder %s82, 0
    %s85 = sadd.s32 %s84, 1
    %s86 = scalar_select %p83, %s84, %s85
    %p89 = pneg %p83
    %p90 = scmp.eq.s32.totalorder %s11, 1
    %p91 = por %p89, %p90
    %p92 = scmp.ne.s32.totalorder %s84, %s87
    %p93 = scmp.eq.s32.totalorder %s11, 0
    %p94 = por %p92, %p93
    %p95 = scmp.ne.s32.totalorder %s84, %s87
    %p96 = scmp.eq.s32.totalorder %s16, 1
    %p97 = por %p95, %p96
    %p98 = scmp.ne.s32.totalorder %s87, %s88
    %p99 = scmp.eq.s32.totalorder %s16, 0
    %p100 = por %p98, %p99
    %p101 = scmp.ne.s32.totalorder %s87, %s88
    %p102 = scmp.eq.s32.totalorder %s17, 1
    %p103 = por %p101, %p102
    %p105 = scmp.ne.s32.totalorder %s88, %s104
    %p106 = scmp.eq.s32.totalorder %s17, 0
    %p107 = por %p105, %p106
    %s108 = ssub.s32 %s18, %s30
    %p109 = scmp.eq.s32.totalorder %s108, 0
    %s111 = sadd.s32 %s110, 1
    %s112 = scalar_select %p109, %s110, %s111
    %p115 = pneg %p109
    %p116 = scmp.eq.s32.totalorder %s11, 1
    %p117 = por %p115, %p116
    %p118 = scmp.ne.s32.totalorder %s110, %s113
    %p119 = scmp.eq.s32.totalorder %s11, 0
    %p120 = por %p118, %p119
    %p121 = scmp.ne.s32.totalorder %s110, %s113
    %p122 = scmp.eq.s32.totalorder %s16, 1
    %p123 = por %p121, %p122
    %p124 = scmp.ne.s32.totalorder %s113, %s114
    %p125 = scmp.eq.s32.totalorder %s16, 0
    %p126 = por %p124, %p125
    %p127 = scmp.ne.s32.totalorder %s113, %s114
    %p128 = scmp.eq.s32.totalorder %s17, 1
    %p129 = por %p127, %p128
    %p131 = scmp.ne.s32.totalorder %s114, %s130
    %p132 = scmp.eq.s32.totalorder %s17, 0
    %p133 = por %p131, %p132
    %s134 = ssub.s32 %s18, %s30
    %p135 = scmp.eq.s32.totalorder %s134, 0
    %s137 = sadd.s32 %s136, 1
    %s138 = scalar_select %p135, %s136, %s137
    %p141 = pneg %p135
    %p142 = scmp.eq.s32.totalorder %s11, 1
    %p143 = por %p141, %p142
    %p144 = scmp.ne.s32.totalorder %s136, %s139
    %p145 = scmp.eq.s32.totalorder %s11, 0
    %p146 = por %p144, %p145
    %p147 = scmp.ne.s32.totalorder %s136, %s139
    %p148 = scmp.eq.s32.totalorder %s16, 1
    %p149 = por %p147, %p148
    %p150 = scmp.ne.s32.totalorder %s139, %s140
    %p151 = scmp.eq.s32.totalorder %s16, 0
    %p152 = por %p150, %p151
    %p153 = scmp.ne.s32.totalorder %s139, %s140
    %p154 = scmp.eq.s32.totalorder %s17, 1
    %p155 = por %p153, %p154
    %p157 = scmp.ne.s32.totalorder %s140, %s156
    %p158 = scmp.eq.s32.totalorder %s17, 0
    %p159 = por %p157, %p158
    %p160 = scmp.le.s32.totalorder 1, %s11
    %p161 = scmp.lt.s32.totalorder %s11, 3
    %p162 = pnand %p160, %p161
    %p163 = pneg %p162
    // Predicated region
    $region9: #{csp_dark_forward.18} parent=5 // pred_check
      _
    $region10: #{csp_dark_forward.18} parent=5 // pred_check_branch
      %165 = sbr.rel (%p162) target = $region12
    $region11: #{csp_dark_forward.18} parent=5 // pred_region
      %s166 = ssub.s32 %s11, 1
      // Predicated region
      $region13: #{csp_dark_forward.18} parent=11 // pred_check
        %p167 = pneg %p72
      $region14: #{csp_dark_forward.18} parent=11 // pred_check_branch
        %169 = sbr.rel (%p167) target = $region16
      $region15: #{csp_dark_forward.18} parent=11 // pred_region
        _
      $region16: #{csp_dark_forward.18} parent=11 // pred_fallthru
        _
    $region12: #{csp_dark_forward.18} parent=5 // pred_fallthru
      _
    %p170 = scmp.lt.s32.totalorder %s11, 2
    // Predicated region
    $region17: #{csp_dark_forward.18} parent=5 // pred_check
      %p171 = pneg %p170
    $region18: #{csp_dark_forward.18} parent=5 // pred_check_branch
      %173 = sbr.rel (%p171) target = $region20
    $region19: #{csp_dark_forward.18} parent=5 // pred_region
      // Predicated region
      $region21: #{csp_dark_forward.18} parent=19 // pred_check
        %p174 = pneg %p45
      $region22: #{csp_dark_forward.18} parent=19 // pred_check_branch
        %176 = sbr.rel (%p174) target = $region24
      $region23: #{csp_dark_forward.18} parent=19 // pred_region
        %s177 = smul.u32 8, %s19
        %p178 = scmp.lt.s32.totalorder %s18, 1
        %s179 = scalar_select %p178, %s18, 1
        %p180 = scmp.lt.s32.totalorder %s177, 7
        %s181 = scalar_select %p180, %s177, 7
        %s182 = smul.addr %s179, 8
        %s183 = sadd.s32 %s181, %s182
        %s184 = smul.addr %s183, 4
        %s185 = scalar_lea.vmem %s0, %s184
        %s186 = smul.u32 8, %s19
      $region24: #{csp_dark_forward.18} parent=19 // pred_fallthru
        _
    $region20: #{csp_dark_forward.18} parent=5 // pred_fallthru
      _
    %p187 = scmp.le.s32.totalorder 1, %s11
    %p188 = scmp.lt.s32.totalorder %s11, 3
    %p189 = pnand %p187, %p188
    %p190 = pneg %p189
    // Predicated region
    $region25: #{csp_dark_forward.18} parent=5 // pred_check
      _
    $region26: #{csp_dark_forward.18} parent=5 // pred_check_branch
      %192 = sbr.rel (%p189) target = $region28
    $region27: #{csp_dark_forward.18} parent=5 // pred_region
      %s193 = ssub.s32 %s11, 1
      %s194 = smul.u32 8, %s21
      %p195 = scmp.lt.s32.totalorder %s20, 1
      %s196 = scalar_select %p195, %s20, 1
      %p197 = scmp.lt.s32.totalorder %s194, 7
      %s198 = scalar_select %p197, %s194, 7
      %s199 = smul.addr %s196, 8
      %s200 = sadd.s32 %s198, %s199
      %s201 = smul.addr %s200, 4
      %s202 = scalar_lea.vmem %s0, %s201
      %p203 = pneg %p51
      %p204 = pneg %p48
      %p205 = pneg %p72
      %p206 = pneg %p69
      %p207 = pneg %p100
      %p208 = pneg %p97
      %s209 = smul.u32 8, %s21
      %p210 = scmp.lt.s32.totalorder %s20, 1
      %s211 = scalar_select %p210, %s20, 1
      %p212 = scmp.lt.s32.totalorder %s209, 7
      %s213 = scalar_select %p212, %s209, 7
      %s214 = smul.addr %s211, 8
      %s215 = sadd.s32 %s213, %s214
      %s216 = smul.addr %s215, 4
      %s217 = scalar_lea.vmem %s2, %s216
      %p218 = pneg %p126
      %p219 = pneg %p123
      %p220 = scmp.lt.s32.totalorder %s20, 1
      %s221 = scalar_select %p220, %s20, 1
      %s222 = scalar_lea.vmem %s3, %s221
      %p223 = pneg %p152
      %p224 = pneg %p149
      %p225 = scmp.lt.s32.totalorder %s20, 1
      %s226 = scalar_select %p225, %s20, 1
      %s227 = scalar_lea.vmem %s4, %s226
      %s228 = smul.u32 8, %s21
      %p229 = scmp.lt.s32.totalorder %s20, 1
      %s230 = scalar_select %p229, %s20, 1
      %p231 = scmp.lt.s32.totalorder %s228, 7
      %s232 = scalar_select %p231, %s228, 7
      %s233 = smul.addr %s230, 8
      %s234 = sadd.s32 %s232, %s233
      %s235 = smul.addr %s234, 4
      %s236 = scalar_lea.vmem %s0, %s235
      %s237 = smul.u32 8, %s21
      %s238 = smul.u32 8, %s21
      %p239 = scmp.lt.s32.totalorder %s20, 1
      %s240 = scalar_select %p239, %s20, 1
      %p241 = scmp.lt.s32.totalorder %s238, 7
      %s242 = scalar_select %p241, %s238, 7
      %s243 = smul.addr %s240, 8
      %s244 = sadd.s32 %s242, %s243
      %s245 = smul.addr %s244, 4
      %s246 = scalar_lea.vmem %s2, %s245
      %s247 = smul.u32 8, %s21
      %p248 = scmp.lt.s32.totalorder %s20, 1
      %s249 = scalar_select %p248, %s20, 1
      %s250 = scalar_lea.vmem %s3, %s249
      %p251 = scmp.lt.s32.totalorder %s20, 1
      %s252 = scalar_select %p251, %s20, 1
      %s253 = scalar_lea.vmem %s4, %s252
      %p255 = scmp.eq.s32.totalorder %s21, 0
      // Predicated region
      $region29: #{csp_dark_forward.18} parent=27 // pred_check
        %p256 = pneg %p255
      $region30: #{csp_dark_forward.18} parent=27 // pred_check_branch
        %258 = sbr.rel (%p256) target = $region32
      $region31: #{csp_dark_forward.18} parent=27 // pred_region
        %vm259 = vcmask 24576
        %260 = vst.msk [vmem:[%s250] sm:$0x1] %vm259, 0.0
        %261 = vst.msk [vmem:[%s253] sm:$0x1] %vm259, 0.0
      $region32: #{csp_dark_forward.18} parent=27 // pred_fallthru
        _
      %v262 = vld [vmem:[%s236] sm:$0xf]
      %v263 = vld [vmem:[%s236 + $0x4] sm:$0xf]
      %v264 = vld [vmem:[%s236 + $0x8] sm:$0xf]
      %v265 = vld [vmem:[%s236 + $0xc] sm:$0xf]
      %v266 = vld [vmem:[%s236 + $0x10] sm:$0xf]
      %v267 = vld [vmem:[%s236 + $0x14] sm:$0xf]
      %v268 = vld [vmem:[%s236 + $0x18] sm:$0xf]
      %v269 = vld [vmem:[%s236 + $0x1c] sm:$0xf]
      %v270 = vld [vmem:[%s1] sm:$0xf]
      %v271 = vld [vmem:[%s1 + $0x4] sm:$0xf]
      %v272 = vld [vmem:[%s1 + $0x8] sm:$0xf]
      %v273 = vld [vmem:[%s1 + $0xc] sm:$0xf]
      %v274 = vld [vmem:[%s1 + $0x10] sm:$0x3]
      %v283 = vunpack.c.l.b16 %v262
      %v284 = vunpack.c.l.b16 %v263
      %v285 = vunpack.c.l.b16 %v264
      %v286 = vunpack.c.l.b16 %v265
      %v287 = vunpack.c.l.b16 %v266
      %v288 = vunpack.c.l.b16 %v267
      %v289 = vunpack.c.l.b16 %v268
      %v290 = vunpack.c.l.b16 %v269
      %v291 = vpack.c.b16 %v284, %v283
      %v292 = vpack.c.b16 %v286, %v285
      %v293 = vpack.c.b16 %v288, %v287
      %v294 = vpack.c.b16 %v290, %v289
      %v300 = vunpack.c.l.b16 %v270
      %v301 = vunpack.c.l.b16 %v271
      %v302 = vunpack.c.l.b16 %v272
      %v303 = vunpack.c.l.b16 %v273
      %v304 = vunpack.c.l.b16 %v274
      %v305 = vpack.c.b16 %v301, %v300
      %v306 = vpack.c.b16 %v303, %v302
      %v307 = vpack.c.b16 %v304, %v304
      %vm310 = vcmask 293888
      %v312 = vsel %vm310, %v291, 0
      %v315 = vsel %vm310, %v292, 0
      %v318 = vsel %vm310, %v293, 0
      %v321 = vsel %vm310, %v294, 0
      %vm323 = vcmask 1041408
      %v325 = vsel %vm323, %v307, 0
      %327 = vmatprep.subr.bf16.mxu0 0
      %328 = vmatpush1.bf16.msra.mxu0 %v305
      %329 = vmatprep.subr.bf16.mxu0 0
      %330 = vmatpush1.bf16.msra.mxu0 %v306
      %331 = vmatprep.subr.bf16.mxu0 0
      %332 = vmatpush1.bf16.msra.mxu0 %v325
      %333 = vmatprep.subr.bf16.mxu0 0
      %334 = vmatpush1.bf16.msra.mxu0 0
      %335 = vmatprep.subr.bf16.mxu0 0
      %336 = vmatpush1.bf16.msra.mxu0 0
      %337 = vmatprep.subr.bf16.mxu0 0
      %338 = vmatpush1.bf16.msra.mxu0 0
      %339 = vmatprep.subr.bf16.mxu0 0
      %340 = vmatpush1.bf16.msra.mxu0 0
      %341 = vmatprep.subr.bf16.mxu0 0
      %342 = vmatpush1.bf16.msra.mxu0 0
      %343 = vmatprep.subr.bf16.mxu0 0
      %344 = vmatpush1.bf16.msra.mxu0 0
      %345 = vmatprep.subr.bf16.mxu0 0
      %346 = vmatpush1.bf16.msra.mxu0 0
      %347 = vmatprep.subr.bf16.mxu0 0
      %348 = vmatpush1.bf16.msra.mxu0 0
      %349 = vmatprep.subr.bf16.mxu0 0
      %350 = vmatpush1.bf16.msra.mxu0 0
      %351 = vmatprep.subr.bf16.mxu0 0
      %352 = vmatpush1.bf16.msra.mxu0 0
      %353 = vmatprep.subr.bf16.mxu0 0
      %354 = vmatpush1.bf16.msra.mxu0 0
      %355 = vmatprep.subr.bf16.mxu0 0
      %356 = vmatpush1.bf16.msra.mxu0 0
      %357 = vmatprep.subr.bf16.mxu0 0
      %358 = vmatpush1.bf16.msra.mxu0 0
      %359 = vmatprep.mubr.bf16.mxu0 0
      %360 = vmatmul.mubr.bf16.gmra.mrb[0].mxu0 %v312
      %v361 = vpop.f32.mrb[0].mxu0
      %v362 = vadd.f32 0.0, %v361
      %v363 = vpop.f32.mrb[0].mxu0
      %v364 = vpop.f32.mrb[0].mxu0
      %v365 = vadd.f32 0.0, %v364
      %v366 = vpop.f32.mrb[0].mxu0
      %367 = vmatprep.mubr.bf16.mxu0 0
      %368 = vmatmul.mubr.bf16.gmra.mrb[0].mxu0 %v315
      %v369 = vpop.f32.mrb[0].mxu0
      %v370 = vadd.f32 0.0, %v369
      %v371 = vpop.f32.mrb[0].mxu0
      %v372 = vpop.f32.mrb[0].mxu0
      %v373 = vadd.f32 0.0, %v372
      %v374 = vpop.f32.mrb[0].mxu0
      %375 = vmatprep.mubr.bf16.mxu0 0
      %376 = vmatmul.mubr.bf16.gmra.mrb[0].mxu0 %v318
      %v377 = vpop.f32.mrb[0].mxu0
      %v378 = vadd.f32 0.0, %v377
      %v379 = vpop.f32.mrb[0].mxu0
      %v380 = vpop.f32.mrb[0].mxu0
      %v381 = vadd.f32 0.0, %v380
      %v382 = vpop.f32.mrb[0].mxu0
      %383 = vmatprep.mubr.bf16.mxu0 0
      %384 = vmatmul.mubr.bf16.gmra.mrb[0].mxu0 %v321
      %v385 = vpop.f32.mrb[0].mxu0
      %v386 = vadd.f32 0.0, %v385
      %v387 = vpop.f32.mrb[0].mxu0
      %v388 = vpop.f32.mrb[0].mxu0
      %v389 = vadd.f32 0.0, %v388
      %v390 = vpop.f32.mrb[0].mxu0
      %391 = vdwg.mxu0
      %v392 = vpack.c.bf16 %v365, %v362
      %v393 = vpack.c.bf16 %v373, %v370
      %v394 = vpack.c.bf16 %v381, %v378
      %v395 = vpack.c.bf16 %v389, %v386
      %v400 = vunpack.c.l.b16 %v392
      %v401 = vunpack.c.h.b16 %v392
      %v402 = vunpack.c.l.b16 %v393
      %v403 = vunpack.c.h.b16 %v393
      %v404 = vunpack.c.l.b16 %v394
      %v405 = vunpack.c.h.b16 %v394
      %v406 = vunpack.c.l.b16 %v395
      %v407 = vunpack.c.h.b16 %v395
      %v408 = vpack.c.b16 %v400, %v400
      %v409 = vpack.c.b16 %v401, %v401
      %v410 = vpack.c.b16 %v402, %v402
      %v411 = vpack.c.b16 %v403, %v403
      %v412 = vpack.c.b16 %v404, %v404
      %v413 = vpack.c.b16 %v405, %v405
      %v414 = vpack.c.b16 %v406, %v406
      %v415 = vpack.c.b16 %v407, %v407
      %vm424 = vcmask 27648
      %425 = vst.msk [vmem:[%s246] sm:$0xf] %vm424, %v408
      %426 = vst.msk [vmem:[%s246 + $0x4] sm:$0xf] %vm424, %v409
      %427 = vst.msk [vmem:[%s246 + $0x8] sm:$0xf] %vm424, %v410
      %428 = vst.msk [vmem:[%s246 + $0xc] sm:$0xf] %vm424, %v411
      %429 = vst.msk [vmem:[%s246 + $0x10] sm:$0xf] %vm424, %v412
      %430 = vst.msk [vmem:[%s246 + $0x14] sm:$0xf] %vm424, %v413
      %431 = vst.msk [vmem:[%s246 + $0x18] sm:$0xf] %vm424, %v414
      %432 = vst.msk [vmem:[%s246 + $0x1c] sm:$0xf] %vm424, %v415
      %v433 = vld [vmem:[%s250] sm:$0x1]
      %vm434 = vcmask 31744
      %v435 = vsel %vm434, %v362, 0.0
      %v436 = vsel %vm434, %v365, 0.0
      %v437 = vadd.f32 %v435, %v436
      %v438 = vsel %vm434, %v370, 0.0
      %v439 = vadd.f32 %v437, %v438
      %v440 = vsel %vm434, %v373, 0.0
      %v441 = vadd.f32 %v439, %v440
      %v442 = vsel %vm434, %v378, 0.0
      %v443 = vadd.f32 %v441, %v442
      %v444 = vsel %vm434, %v381, 0.0
      %v445 = vadd.f32 %v443, %v444
      %v446 = vsel %vm434, %v386, 0.0
      %v447 = vadd.f32 %v445, %v446
      %v448 = vsel %vm434, %v389, 0.0
      %v449 = vadd.f32 %v447, %v448
      %v450 = vrot.slane %v449, 4
      %v451 = vadd.f32 %v449, %v450
      %v452 = vrot.slane %v451, 2
      %v453 = vadd.f32 %v451, %v452
      %v454 = vrot.slane %v453, 1
      %v455 = vadd.f32 %v453, %v454
      %v456 = vadd.f32 %v433, %v455
      %vm457 = vcmask 24576
      %458 = vst.msk [vmem:[%s250] sm:$0x1] %vm457, %v456
      %v459 = vld [vmem:[%s253] sm:$0x1]
      %v460 = vmul.f32 %v362, %v362
      %v461 = vmul.f32 %v365, %v365
      %v462 = vmul.f32 %v370, %v370
      %v463 = vmul.f32 %v373, %v373
      %v464 = vmul.f32 %v378, %v378
      %v465 = vmul.f32 %v381, %v381
      %v466 = vmul.f32 %v386, %v386
      %v467 = vmul.f32 %v389, %v389
      %v468 = vsel %vm434, %v460, 0.0
      %v469 = vsel %vm434, %v461, 0.0
      %v470 = vadd.f32 %v468, %v469
      %v471 = vsel %vm434, %v462, 0.0
      %v472 = vadd.f32 %v470, %v471
      %v473 = vsel %vm434, %v463, 0.0
      %v474 = vadd.f32 %v472, %v473
      %v475 = vsel %vm434, %v464, 0.0
      %v476 = vadd.f32 %v474, %v475
      %v477 = vsel %vm434, %v465, 0.0
      %v478 = vadd.f32 %v476, %v477
      %v479 = vsel %vm434, %v466, 0.0
      %v480 = vadd.f32 %v478, %v479
      %v481 = vsel %vm434, %v467, 0.0
      %v482 = vadd.f32 %v480, %v481
      %v483 = vrot.slane %v482, 4
      %v484 = vadd.f32 %v482, %v483
      %v485 = vrot.slane %v484, 2
      %v486 = vadd.f32 %v484, %v485
      %v487 = vrot.slane %v486, 1
      %v488 = vadd.f32 %v486, %v487
      %v489 = vadd.f32 %v459, %v488
      %490 = vst.msk [vmem:[%s253] sm:$0x1] %vm457, %v489
      %s491 = smul.u32 8, %s21
      %p492 = scmp.lt.s32.totalorder %s20, 1
      %s493 = scalar_select %p492, %s20, 1
      %p494 = scmp.lt.s32.totalorder %s491, 7
      %s495 = scalar_select %p494, %s491, 7
      %s496 = smul.addr %s493, 8
      %s497 = sadd.s32 %s495, %s496
      %s498 = smul.addr %s497, 4
      %s499 = scalar_lea.vmem %s2, %s498
      %p500 = scmp.lt.s32.totalorder %s20, 1
      %s501 = scalar_select %p500, %s20, 1
      %s502 = scalar_lea.vmem %s3, %s501
      %p503 = scmp.lt.s32.totalorder %s20, 1
      %s504 = scalar_select %p503, %s20, 1
      %s505 = scalar_lea.vmem %s4, %s504
      // Predicated region
      $region33: #{csp_dark_forward.18} parent=27 // pred_check
        %p506 = pneg %p97
      $region34: #{csp_dark_forward.18} parent=27 // pred_check_branch
        %508 = sbr.rel (%p506) target = $region36
      $region35: #{csp_dark_forward.18} parent=27 // pred_region
        %s509 = smul.u32 8, %s21
      $region36: #{csp_dark_forward.18} parent=27 // pred_fallthru
        _
      // Predicated region
      $region37: #{csp_dark_forward.18} parent=27 // pred_check
        %p510 = pneg %p123
      $region38: #{csp_dark_forward.18} parent=27 // pred_check_branch
        %512 = sbr.rel (%p510) target = $region40
      $region39: #{csp_dark_forward.18} parent=27 // pred_region
        _
      $region40: #{csp_dark_forward.18} parent=27 // pred_fallthru
        _
      // Predicated region
      $region41: #{csp_dark_forward.18} parent=27 // pred_check
        %p513 = pneg %p149
      $region42: #{csp_dark_forward.18} parent=27 // pred_check_branch
        %515 = sbr.rel (%p513) target = $region44
      $region43: #{csp_dark_forward.18} parent=27 // pred_region
        _
      $region44: #{csp_dark_forward.18} parent=27 // pred_fallthru
        _
    $region28: #{csp_dark_forward.18} parent=5 // pred_fallthru
      _
    %p516 = scmp.le.s32.totalorder 2, %s11
    // Predicated region
    $region45: #{csp_dark_forward.18} parent=5 // pred_check
      %p517 = pneg %p516
    $region46: #{csp_dark_forward.18} parent=5 // pred_check_branch
      %519 = sbr.rel (%p517) target = $region48
    $region47: #{csp_dark_forward.18} parent=5 // pred_region
      %s520 = ssub.s32 %s11, 2
      // Predicated region
      $region49: #{csp_dark_forward.18} parent=47 // pred_check
        %p521 = pneg %p103
      $region50: #{csp_dark_forward.18} parent=47 // pred_check_branch
        %523 = sbr.rel (%p521) target = $region52
      $region51: #{csp_dark_forward.18} parent=47 // pred_region
        %s524 = smul.u32 8, %s23
        %p525 = scmp.lt.s32.totalorder %s22, 1
        %s526 = scalar_select %p525, %s22, 1
        %p527 = scmp.lt.s32.totalorder %s524, 7
        %s528 = scalar_select %p527, %s524, 7
        %s529 = smul.addr %s526, 8
        %s530 = sadd.s32 %s528, %s529
        %s531 = smul.addr %s530, 4
        %s532 = scalar_lea.vmem %s2, %s531
      $region52: #{csp_dark_forward.18} parent=47 // pred_fallthru
        _
      // Predicated region
      $region53: #{csp_dark_forward.18} parent=47 // pred_check
        %p533 = pneg %p129
      $region54: #{csp_dark_forward.18} parent=47 // pred_check_branch
        %535 = sbr.rel (%p533) target = $region56
      $region55: #{csp_dark_forward.18} parent=47 // pred_region
        %p536 = scmp.lt.s32.totalorder %s22, 1
        %s537 = scalar_select %p536, %s22, 1
        %s538 = scalar_lea.vmem %s3, %s537
      $region56: #{csp_dark_forward.18} parent=47 // pred_fallthru
        _
      // Predicated region
      $region57: #{csp_dark_forward.18} parent=47 // pred_check
        %p539 = pneg %p155
      $region58: #{csp_dark_forward.18} parent=47 // pred_check_branch
        %541 = sbr.rel (%p539) target = $region60
      $region59: #{csp_dark_forward.18} parent=47 // pred_region
        %p542 = scmp.lt.s32.totalorder %s22, 1
        %s543 = scalar_select %p542, %s22, 1
        %s544 = scalar_lea.vmem %s4, %s543
      $region60: #{csp_dark_forward.18} parent=47 // pred_fallthru
        _
    $region48: #{csp_dark_forward.18} parent=5 // pred_fallthru
      _
  $region6: #{csp_dark_forward.18} parent=0 // loop_footer
    %s15 = sadd.s32 1, %s11
  $region7: #{csp_dark_forward.18} parent=0 // loop_footer_branch
    %10 = sbr.rel target = $region3
  $region8: #{csp_dark_forward.18} parent=0 // loop_exit
    _

// kernel: csp_dark_forward.19
$region0: #{csp_dark_forward.19}
  #allocation0 [shape = 'u32[]', space=smem, size = 0x4, offset = 0x4, fixed_abs, tag = 'smem constant byte address 0x4 - core index']
  #allocation1 [shape = 'u32[144,128]{1,0:T(1,128)}', space=vmem, size = 0x12000, scoped, tag = 'internal scratch']
  %s0 = inlined_call_operand.vmem [shape: bf16[2,64,4], index: 0, kind: input, shape index: {}]
  %s1 = inlined_call_operand.vmem [shape: f32[2,1,4], index: 1, kind: input, shape index: {}]
  %s2 = inlined_call_operand.vmem [shape: f32[2,1,4], index: 2, kind: input, shape index: {}]
  %s3 = inlined_call_operand.vmem [shape: bf16[2,64,4], index: 3, kind: input, shape index: {}]
  %s4 = inlined_call_operand.vmem [shape: f32[2,1,4], index: 4, kind: input, shape index: {}]
  %s5 = inlined_call_operand.vmem [shape: f32[2,1,4], index: 5, kind: input, shape index: {}]
  %s6 = inlined_call_operand.vmem [shape: bf16[2,64,4], index: 6, kind: output, shape index: {}]
  %s7 = sld [smem:[#allocation0]]
  $region57: #{csp_dark_forward.19} parent=0
    _
  %s9 = ssub.s32 1, %s7
  %s10 = scalar_select 0, %s9, %s7
  loop: start=0, step=1, limit=4
  $region2: #{csp_dark_forward.19} parent=0 // loop_pre_header
    _
  $region3: #{csp_dark_forward.19} parent=0 // loop_header
    %s12 = sphi 0, %s16
    %p13 = scmp.ge.s32.totalorder %s12, 4
    %s19 = sphi 0, %s31
    %s20 = sphi 0, %s27
    %s21 = sphi 0, %s19
    %s22 = sphi 0, %s20
    %s23 = sphi 0, %s21
    %s24 = sphi 0, %s22
    %s36 = sphi 0, %s38
    %s39 = sphi 0, %s36
    %s40 = sphi 0, %s39
    %s56 = sphi 0, %s40
    %s62 = sphi 0, %s64
    %s65 = sphi 0, %s62
    %s66 = sphi 0, %s65
    %s82 = sphi 0, %s66
    %s88 = sphi 0, %s90
    %s91 = sphi 0, %s88
    %s92 = sphi 0, %s91
    %s108 = sphi 0, %s92
    %s116 = sphi 0, %s118
    %s119 = sphi 0, %s116
    %s120 = sphi 0, %s119
    %s136 = sphi 0, %s120
    %s142 = sphi 0, %s144
    %s145 = sphi 0, %s142
    %s146 = sphi 0, %s145
    %s162 = sphi 0, %s146
    %s168 = sphi 0, %s170
    %s171 = sphi 0, %s168
    %s172 = sphi 0, %s171
    %s188 = sphi 0, %s172
    %s196 = sphi 0, %s198
    %s199 = sphi 0, %s196
    %s200 = sphi 0, %s199
    %s216 = sphi 0, %s200
  $region4: #{csp_dark_forward.19} parent=0 // loop_header_branch
    %15 = sbr.rel (%p13) target = $region8
  $region5: #{csp_dark_forward.19} parent=0 // loop_body
    %s17 = ssub.s32 %s12, 1
    %s18 = ssub.s32 %s12, 2
    %s25 = sadd.s32 1, %s20
    %p26 = scmp.ge.s32.totalorder %s25, 1
    %s27 = scalar_select %p26, 0, %s25
    %s28 = sadd.s32 1, %s19
    %s29 = scalar_select %p26, %s28, %s19
    %p30 = scmp.ge.s32.totalorder %s29, 2
    %s31 = scalar_select %p30, 0, %s29
    %s32 = ssub.s32 %s19, %s31
    %s33 = ssub.s32 %s20, %s27
    %s34 = sor.u32 %s32, %s33
    %p35 = scmp.eq.s32.totalorder %s34, 0
    %s37 = sadd.s32 %s36, 1
    %s38 = scalar_select %p35, %s36, %s37
    %p41 = pneg %p35
    %p42 = scmp.eq.s32.totalorder %s12, 1
    %p43 = por %p41, %p42
    %p44 = scmp.ne.s32.totalorder %s36, %s39
    %p45 = scmp.eq.s32.totalorder %s12, 0
    %p46 = por %p44, %p45
    %p47 = scmp.ne.s32.totalorder %s36, %s39
    %p48 = scmp.eq.s32.totalorder %s17, 1
    %p49 = por %p47, %p48
    %p50 = scmp.ne.s32.totalorder %s39, %s40
    %p51 = scmp.eq.s32.totalorder %s17, 0
    %p52 = por %p50, %p51
    %p53 = scmp.ne.s32.totalorder %s39, %s40
    %p54 = scmp.eq.s32.totalorder %s18, 1
    %p55 = por %p53, %p54
    %p57 = scmp.ne.s32.totalorder %s40, %s56
    %p58 = scmp.eq.s32.totalorder %s18, 0
    %p59 = por %p57, %p58
    %s60 = ssub.s32 %s19, %s31
    %p61 = scmp.eq.s32.totalorder %s60, 0
    %s63 = sadd.s32 %s62, 1
    %s64 = scalar_select %p61, %s62, %s63
    %p67 = pneg %p61
    %p68 = scmp.eq.s32.totalorder %s12, 1
    %p69 = por %p67, %p68
    %p70 = scmp.ne.s32.totalorder %s62, %s65
    %p71 = scmp.eq.s32.totalorder %s12, 0
    %p72 = por %p70, %p71
    %p73 = scmp.ne.s32.totalorder %s62, %s65
    %p74 = scmp.eq.s32.totalorder %s17, 1
    %p75 = por %p73, %p74
    %p76 = scmp.ne.s32.totalorder %s65, %s66
    %p77 = scmp.eq.s32.totalorder %s17, 0
    %p78 = por %p76, %p77
    %p79 = scmp.ne.s32.totalorder %s65, %s66
    %p80 = scmp.eq.s32.totalorder %s18, 1
    %p81 = por %p79, %p80
    %p83 = scmp.ne.s32.totalorder %s66, %s82
    %p84 = scmp.eq.s32.totalorder %s18, 0
    %p85 = por %p83, %p84
    %s86 = ssub.s32 %s19, %s31
    %p87 = scmp.eq.s32.totalorder %s86, 0
    %s89 = sadd.s32 %s88, 1
    %s90 = scalar_select %p87, %s88, %s89
    %p93 = pneg %p87
    %p94 = scmp.eq.s32.totalorder %s12, 1
    %p95 = por %p93, %p94
    %p96 = scmp.ne.s32.totalorder %s88, %s91
    %p97 = scmp.eq.s32.totalorder %s12, 0
    %p98 = por %p96, %p97
    %p99 = scmp.ne.s32.totalorder %s88, %s91
    %p100 = scmp.eq.s32.totalorder %s17, 1
    %p101 = por %p99, %p100
    %p102 = scmp.ne.s32.totalorder %s91, %s92
    %p103 = scmp.eq.s32.totalorder %s17, 0
    %p104 = por %p102, %p103
    %p105 = scmp.ne.s32.totalorder %s91, %s92
    %p106 = scmp.eq.s32.totalorder %s18, 1
    %p107 = por %p105, %p106
    %p109 = scmp.ne.s32.totalorder %s92, %s108
    %p110 = scmp.eq.s32.totalorder %s18, 0
    %p111 = por %p109, %p110
    %s112 = ssub.s32 %s19, %s31
    %s113 = ssub.s32 %s20, %s27
    %s114 = sor.u32 %s112, %s113
    %p115 = scmp.eq.s32.totalorder %s114, 0
    %s117 = sadd.s32 %s116, 1
    %s118 = scalar_select %p115, %s116, %s117
    %p121 = pneg %p115
    %p122 = scmp.eq.s32.totalorder %s12, 1
    %p123 = por %p121, %p122
    %p124 = scmp.ne.s32.totalorder %s116, %s119
    %p125 = scmp.eq.s32.totalorder %s12, 0
    %p126 = por %p124, %p125
    %p127 = scmp.ne.s32.totalorder %s116, %s119
    %p128 = scmp.eq.s32.totalorder %s17, 1
    %p129 = por %p127, %p128
    %p130 = scmp.ne.s32.totalorder %s119, %s120
    %p131 = scmp.eq.s32.totalorder %s17, 0
    %p132 = por %p130, %p131
    %p133 = scmp.ne.s32.totalorder %s119, %s120
    %p134 = scmp.eq.s32.totalorder %s18, 1
    %p135 = por %p133, %p134
    %p137 = scmp.ne.s32.totalorder %s120, %s136
    %p138 = scmp.eq.s32.totalorder %s18, 0
    %p139 = por %p137, %p138
    %s140 = ssub.s32 %s19, %s31
    %p141 = scmp.eq.s32.totalorder %s140, 0
    %s143 = sadd.s32 %s142, 1
    %s144 = scalar_select %p141, %s142, %s143
    %p147 = pneg %p141
    %p148 = scmp.eq.s32.totalorder %s12, 1
    %p149 = por %p147, %p148
    %p150 = scmp.ne.s32.totalorder %s142, %s145
    %p151 = scmp.eq.s32.totalorder %s12, 0
    %p152 = por %p150, %p151
    %p153 = scmp.ne.s32.totalorder %s142, %s145
    %p154 = scmp.eq.s32.totalorder %s17, 1
    %p155 = por %p153, %p154
    %p156 = scmp.ne.s32.totalorder %s145, %s146
    %p157 = scmp.eq.s32.totalorder %s17, 0
    %p158 = por %p156, %p157
    %p159 = scmp.ne.s32.totalorder %s145, %s146
    %p160 = scmp.eq.s32.totalorder %s18, 1
    %p161 = por %p159, %p160
    %p163 = scmp.ne.s32.totalorder %s146, %s162
    %p164 = scmp.eq.s32.totalorder %s18, 0
    %p165 = por %p163, %p164
    %s166 = ssub.s32 %s19, %s31
    %p167 = scmp.eq.s32.totalorder %s166, 0
    %s169 = sadd.s32 %s168, 1
    %s170 = scalar_select %p167, %s168, %s169
    %p173 = pneg %p167
    %p174 = scmp.eq.s32.totalorder %s12, 1
    %p175 = por %p173, %p174
    %p176 = scmp.ne.s32.totalorder %s168, %s171
    %p177 = scmp.eq.s32.totalorder %s12, 0
    %p178 = por %p176, %p177
    %p179 = scmp.ne.s32.totalorder %s168, %s171
    %p180 = scmp.eq.s32.totalorder %s17, 1
    %p181 = por %p179, %p180
    %p182 = scmp.ne.s32.totalorder %s171, %s172
    %p183 = scmp.eq.s32.totalorder %s17, 0
    %p184 = por %p182, %p183
    %p185 = scmp.ne.s32.totalorder %s171, %s172
    %p186 = scmp.eq.s32.totalorder %s18, 1
    %p187 = por %p185, %p186
    %p189 = scmp.ne.s32.totalorder %s172, %s188
    %p190 = scmp.eq.s32.totalorder %s18, 0
    %p191 = por %p189, %p190
    %s192 = ssub.s32 %s19, %s31
    %s193 = ssub.s32 %s20, %s27
    %s194 = sor.u32 %s192, %s193
    %p195 = scmp.eq.s32.totalorder %s194, 0
    %s197 = sadd.s32 %s196, 1
    %s198 = scalar_select %p195, %s196, %s197
    %p201 = pneg %p195
    %p202 = scmp.eq.s32.totalorder %s12, 1
    %p203 = por %p201, %p202
    %p204 = scmp.ne.s32.totalorder %s196, %s199
    %p205 = scmp.eq.s32.totalorder %s12, 0
    %p206 = por %p204, %p205
    %p207 = scmp.ne.s32.totalorder %s196, %s199
    %p208 = scmp.eq.s32.totalorder %s17, 1
    %p209 = por %p207, %p208
    %p210 = scmp.ne.s32.totalorder %s199, %s200
    %p211 = scmp.eq.s32.totalorder %s17, 0
    %p212 = por %p210, %p211
    %p213 = scmp.ne.s32.totalorder %s199, %s200
    %p214 = scmp.eq.s32.totalorder %s18, 1
    %p215 = por %p213, %p214
    %p217 = scmp.ne.s32.totalorder %s200, %s216
    %p218 = scmp.eq.s32.totalorder %s18, 0
    %p219 = por %p217, %p218
    %p220 = scmp.le.s32.totalorder 1, %s12
    %p221 = scmp.lt.s32.totalorder %s12, 3
    %p222 = pnand %p220, %p221
    %p223 = pneg %p222
    // Predicated region
    $region9: #{csp_dark_forward.19} parent=5 // pred_check
      _
    $region10: #{csp_dark_forward.19} parent=5 // pred_check_branch
      %225 = sbr.rel (%p222) target = $region12
    $region11: #{csp_dark_forward.19} parent=5 // pred_region
      %s226 = ssub.s32 %s12, 1
    $region12: #{csp_dark_forward.19} parent=5 // pred_fallthru
      _
    %p227 = scmp.lt.s32.totalorder %s12, 2
    // Predicated region
    $region13: #{csp_dark_forward.19} parent=5 // pred_check
      %p228 = pneg %p227
    $region14: #{csp_dark_forward.19} parent=5 // pred_check_branch
      %230 = sbr.rel (%p228) target = $region16
    $region15: #{csp_dark_forward.19} parent=5 // pred_region
      // Predicated region
      $region17: #{csp_dark_forward.19} parent=15 // pred_check
        %p231 = pneg %p46
      $region18: #{csp_dark_forward.19} parent=15 // pred_check_branch
        %233 = sbr.rel (%p231) target = $region20
      $region19: #{csp_dark_forward.19} parent=15 // pred_region
        %s234 = smul.u32 8, %s20
        %p235 = scmp.lt.s32.totalorder %s19, 1
        %s236 = scalar_select %p235, %s19, 1
        %p237 = scmp.lt.s32.totalorder %s234, 7
        %s238 = scalar_select %p237, %s234, 7
        %s239 = smul.addr %s236, 8
        %s240 = sadd.s32 %s238, %s239
        %s241 = smul.addr %s240, 4
        %s242 = scalar_lea.vmem %s0, %s241
        %s243 = smul.u32 8, %s20
      $region20: #{csp_dark_forward.19} parent=15 // pred_fallthru
        _
      // Predicated region
      $region21: #{csp_dark_forward.19} parent=15 // pred_check
        %p244 = pneg %p72
      $region22: #{csp_dark_forward.19} parent=15 // pred_check_branch
        %246 = sbr.rel (%p244) target = $region24
      $region23: #{csp_dark_forward.19} parent=15 // pred_region
        %p247 = scmp.lt.s32.totalorder %s19, 1
        %s248 = scalar_select %p247, %s19, 1
        %s249 = scalar_lea.vmem %s1, %s248
      $region24: #{csp_dark_forward.19} parent=15 // pred_fallthru
        _
      // Predicated region
      $region25: #{csp_dark_forward.19} parent=15 // pred_check
        %p250 = pneg %p98
      $region26: #{csp_dark_forward.19} parent=15 // pred_check_branch
        %252 = sbr.rel (%p250) target = $region28
      $region27: #{csp_dark_forward.19} parent=15 // pred_region
        %p253 = scmp.lt.s32.totalorder %s19, 1
        %s254 = scalar_select %p253, %s19, 1
        %s255 = scalar_lea.vmem %s2, %s254
      $region28: #{csp_dark_forward.19} parent=15 // pred_fallthru
        _
      // Predicated region
      $region29: #{csp_dark_forward.19} parent=15 // pred_check
        %p256 = pneg %p126
      $region30: #{csp_dark_forward.19} parent=15 // pred_check_branch
        %258 = sbr.rel (%p256) target = $region32
      $region31: #{csp_dark_forward.19} parent=15 // pred_region
        %s259 = smul.u32 8, %s20
        %p260 = scmp.lt.s32.totalorder %s19, 1
        %s261 = scalar_select %p260, %s19, 1
        %p262 = scmp.lt.s32.totalorder %s259, 7
        %s263 = scalar_select %p262, %s259, 7
        %s264 = smul.addr %s261, 8
        %s265 = sadd.s32 %s263, %s264
        %s266 = smul.addr %s265, 4
        %s267 = scalar_lea.vmem %s3, %s266
        %s268 = smul.u32 8, %s20
      $region32: #{csp_dark_forward.19} parent=15 // pred_fallthru
        _
      // Predicated region
      $region33: #{csp_dark_forward.19} parent=15 // pred_check
        %p269 = pneg %p152
      $region34: #{csp_dark_forward.19} parent=15 // pred_check_branch
        %271 = sbr.rel (%p269) target = $region36
      $region35: #{csp_dark_forward.19} parent=15 // pred_region
        %p272 = scmp.lt.s32.totalorder %s19, 1
        %s273 = scalar_select %p272, %s19, 1
        %s274 = scalar_lea.vmem %s4, %s273
      $region36: #{csp_dark_forward.19} parent=15 // pred_fallthru
        _
      // Predicated region
      $region37: #{csp_dark_forward.19} parent=15 // pred_check
        %p275 = pneg %p178
      $region38: #{csp_dark_forward.19} parent=15 // pred_check_branch
        %277 = sbr.rel (%p275) target = $region40
      $region39: #{csp_dark_forward.19} parent=15 // pred_region
        %p278 = scmp.lt.s32.totalorder %s19, 1
        %s279 = scalar_select %p278, %s19, 1
        %s280 = scalar_lea.vmem %s5, %s279
      $region40: #{csp_dark_forward.19} parent=15 // pred_fallthru
        _
    $region16: #{csp_dark_forward.19} parent=5 // pred_fallthru
      _
    %p281 = scmp.le.s32.totalorder 1, %s12
    %p282 = scmp.lt.s32.totalorder %s12, 3
    %p283 = pnand %p281, %p282
    %p284 = pneg %p283
    // Predicated region
    $region41: #{csp_dark_forward.19} parent=5 // pred_check
      _
    $region42: #{csp_dark_forward.19} parent=5 // pred_check_branch
      %286 = sbr.rel (%p283) target = $region44
    $region43: #{csp_dark_forward.19} parent=5 // pred_region
      %s287 = ssub.s32 %s12, 1
      %s288 = smul.u32 8, %s22
      %p289 = scmp.lt.s32.totalorder %s21, 1
      %s290 = scalar_select %p289, %s21, 1
      %p291 = scmp.lt.s32.totalorder %s288, 7
      %s292 = scalar_select %p291, %s288, 7
      %s293 = smul.addr %s290, 8
      %s294 = sadd.s32 %s292, %s293
      %s295 = smul.addr %s294, 4
      %s296 = scalar_lea.vmem %s0, %s295
      %p297 = pneg %p52
      %p298 = pneg %p49
      %p299 = scmp.lt.s32.totalorder %s21, 1
      %s300 = scalar_select %p299, %s21, 1
      %s301 = scalar_lea.vmem %s1, %s300
      %p302 = pneg %p78
      %p303 = pneg %p75
      %p304 = scmp.lt.s32.totalorder %s21, 1
      %s305 = scalar_select %p304, %s21, 1
      %s306 = scalar_lea.vmem %s2, %s305
      %p307 = pneg %p104
      %p308 = pneg %p101
      %s309 = smul.u32 8, %s22
      %p310 = scmp.lt.s32.totalorder %s21, 1
      %s311 = scalar_select %p310, %s21, 1
      %p312 = scmp.lt.s32.totalorder %s309, 7
      %s313 = scalar_select %p312, %s309, 7
      %s314 = smul.addr %s311, 8
      %s315 = sadd.s32 %s313, %s314
      %s316 = smul.addr %s315, 4
      %s317 = scalar_lea.vmem %s3, %s316
      %p318 = pneg %p132
      %p319 = pneg %p129
      %p320 = scmp.lt.s32.totalorder %s21, 1
      %s321 = scalar_select %p320, %s21, 1
      %s322 = scalar_lea.vmem %s4, %s321
      %p323 = pneg %p158
      %p324 = pneg %p155
      %p325 = scmp.lt.s32.totalorder %s21, 1
      %s326 = scalar_select %p325, %s21, 1
      %s327 = scalar_lea.vmem %s5, %s326
      %p328 = pneg %p184
      %p329 = pneg %p181
      %p330 = pneg %p212
      %p331 = pneg %p209
      %s332 = smul.u32 8, %s22
      %p333 = scmp.lt.s32.totalorder %s21, 1
      %s334 = scalar_select %p333, %s21, 1
      %p335 = scmp.lt.s32.totalorder %s332, 7
      %s336 = scalar_select %p335, %s332, 7
      %s337 = smul.addr %s334, 8
      %s338 = sadd.s32 %s336, %s337
      %s339 = smul.addr %s338, 4
      %s340 = scalar_lea.vmem %s6, %s339
      %s341 = smul.u32 8, %s22
      %p342 = scmp.lt.s32.totalorder %s21, 1
      %s343 = scalar_select %p342, %s21, 1
      %p344 = scmp.lt.s32.totalorder %s341, 7
      %s345 = scalar_select %p344, %s341, 7
      %s346 = smul.addr %s343, 8
      %s347 = sadd.s32 %s345, %s346
      %s348 = smul.addr %s347, 4
      %s349 = scalar_lea.vmem %s0, %s348
      %s350 = smul.u32 8, %s22
      %p351 = scmp.lt.s32.totalorder %s21, 1
      %s352 = scalar_select %p351, %s21, 1
      %s353 = scalar_lea.vmem %s1, %s352
      %p354 = scmp.lt.s32.totalorder %s21, 1
      %s355 = scalar_select %p354, %s21, 1
      %s356 = scalar_lea.vmem %s2, %s355
      %s357 = smul.u32 8, %s22
      %p358 = scmp.lt.s32.totalorder %s21, 1
      %s359 = scalar_select %p358, %s21, 1
      %p360 = scmp.lt.s32.totalorder %s357, 7
      %s361 = scalar_select %p360, %s357, 7
      %s362 = smul.addr %s359, 8
      %s363 = sadd.s32 %s361, %s362
      %s364 = smul.addr %s363, 4
      %s365 = scalar_lea.vmem %s3, %s364
      %s366 = smul.u32 8, %s22
      %p367 = scmp.lt.s32.totalorder %s21, 1
      %s368 = scalar_select %p367, %s21, 1
      %s369 = scalar_lea.vmem %s4, %s368
      %p370 = scmp.lt.s32.totalorder %s21, 1
      %s371 = scalar_select %p370, %s21, 1
      %s372 = scalar_lea.vmem %s5, %s371
      %s373 = smul.u32 8, %s22
      %p374 = scmp.lt.s32.totalorder %s21, 1
      %s375 = scalar_select %p374, %s21, 1
      %p376 = scmp.lt.s32.totalorder %s373, 7
      %s377 = scalar_select %p376, %s373, 7
      %s378 = smul.addr %s375, 8
      %s379 = sadd.s32 %s377, %s378
      %s380 = smul.addr %s379, 4
      %s381 = scalar_lea.vmem %s6, %s380
      %s382 = smul.u32 8, %s22
      %v383 = vld [vmem:[%s349] sm:$0xf]
      %v384 = vld [vmem:[%s349 + $0x4] sm:$0xf]
      %v385 = vld [vmem:[%s349 + $0x8] sm:$0xf]
      %v386 = vld [vmem:[%s349 + $0xc] sm:$0xf]
      %v387 = vld [vmem:[%s349 + $0x10] sm:$0xf]
      %v388 = vld [vmem:[%s349 + $0x14] sm:$0xf]
      %v389 = vld [vmem:[%s349 + $0x18] sm:$0xf]
      %v390 = vld [vmem:[%s349 + $0x1c] sm:$0xf]
      %v391 = vunpack.c.l.bf16 %v383
      %v392 = vunpack.c.l.bf16 %v384
      %v393 = vunpack.c.l.bf16 %v385
      %v394 = vunpack.c.l.bf16 %v386
      %v395 = vunpack.c.l.bf16 %v387
      %v396 = vunpack.c.l.bf16 %v388
      %v397 = vunpack.c.l.bf16 %v389
      %v398 = vunpack.c.l.bf16 %v390
      %v399 = vld [vmem:[%s353] sm:$0x1]
      %v401 = vlaneseq
      %v402 = vshrl.u32 %v401, 7
      %v403 = vsub.s32 0, %v402
      %v404 = vrot.slane %v399, %v403
      %v406 = vmul.f32 %v391, %v404
      %v407 = vmul.f32 %v392, %v404
      %v408 = vmul.f32 %v393, %v404
      %v409 = vmul.f32 %v394, %v404
      %v410 = vmul.f32 %v395, %v404
      %v411 = vmul.f32 %v396, %v404
      %v412 = vmul.f32 %v397, %v404
      %v413 = vmul.f32 %v398, %v404
      %v414 = vld [vmem:[%s356] sm:$0x1]
      %v416 = vlaneseq
      %v417 = vshrl.u32 %v416, 7
      %v418 = vsub.s32 0, %v417
      %v419 = vrot.slane %v414, %v418
      %v421 = vadd.f32 %v406, %v419
      %v422 = vadd.f32 %v407, %v419
      %v423 = vadd.f32 %v408, %v419
      %v424 = vadd.f32 %v409, %v419
      %v425 = vadd.f32 %v410, %v419
      %v426 = vadd.f32 %v411, %v419
      %v427 = vadd.f32 %v412, %v419
      %v428 = vadd.f32 %v413, %v419
      %v429 = vmax.f32 %v421, 0.0
      %v430 = vmax.f32 %v422, 0.0
      %v431 = vmax.f32 %v423, 0.0
      %v432 = vmax.f32 %v424, 0.0
      %v433 = vmax.f32 %v425, 0.0
      %v434 = vmax.f32 %v426, 0.0
      %v435 = vmax.f32 %v427, 0.0
      %v436 = vmax.f32 %v428, 0.0
      %v437 = vld [vmem:[%s365] sm:$0xf]
      %v438 = vld [vmem:[%s365 + $0x4] sm:$0xf]
      %v439 = vld [vmem:[%s365 + $0x8] sm:$0xf]
      %v440 = vld [vmem:[%s365 + $0xc] sm:$0xf]
      %v441 = vld [vmem:[%s365 + $0x10] sm:$0xf]
      %v442 = vld [vmem:[%s365 + $0x14] sm:$0xf]
      %v443 = vld [vmem:[%s365 + $0x18] sm:$0xf]
      %v444 = vld [vmem:[%s365 + $0x1c] sm:$0xf]
      %v445 = vunpack.c.l.bf16 %v437
      %v446 = vunpack.c.l.bf16 %v438
      %v447 = vunpack.c.l.bf16 %v439
      %v448 = vunpack.c.l.bf16 %v440
      %v449 = vunpack.c.l.bf16 %v441
      %v450 = vunpack.c.l.bf16 %v442
      %v451 = vunpack.c.l.bf16 %v443
      %v452 = vunpack.c.l.bf16 %v444
      %v453 = vld [vmem:[%s369] sm:$0x1]
      %v455 = vlaneseq
      %v456 = vshrl.u32 %v455, 7
      %v457 = vsub.s32 0, %v456
      %v458 = vrot.slane %v453, %v457
      %v460 = vmul.f32 %v445, %v458
      %v461 = vmul.f32 %v446, %v458
      %v462 = vmul.f32 %v447, %v458
      %v463 = vmul.f32 %v448, %v458
      %v464 = vmul.f32 %v449, %v458
      %v465 = vmul.f32 %v450, %v458
      %v466 = vmul.f32 %v451, %v458
      %v467 = vmul.f32 %v452, %v458
      %v468 = vld [vmem:[%s372] sm:$0x1]
      %v470 = vlaneseq
      %v471 = vshrl.u32 %v470, 7
      %v472 = vsub.s32 0, %v471
      %v473 = vrot.slane %v468, %v472
      %v475 = vadd.f32 %v460, %v473
      %v476 = vadd.f32 %v461, %v473
      %v477 = vadd.f32 %v462, %v473
      %v478 = vadd.f32 %v463, %v473
      %v479 = vadd.f32 %v464, %v473
      %v480 = vadd.f32 %v465, %v473
      %v481 = vadd.f32 %v466, %v473
      %v482 = vadd.f32 %v467, %v473
      %v483 = vmax.f32 %v475, 0.0
      %v484 = vmax.f32 %v476, 0.0
      %v485 = vmax.f32 %v477, 0.0
      %v486 = vmax.f32 %v478, 0.0
      %v487 = vmax.f32 %v479, 0.0
      %v488 = vmax.f32 %v480, 0.0
      %v489 = vmax.f32 %v481, 0.0
      %v490 = vmax.f32 %v482, 0.0
      %v491 = vadd.f32 %v429, %v483
      %v492 = vadd.f32 %v430, %v484
      %v493 = vadd.f32 %v431, %v485
      %v494 = vadd.f32 %v432, %v486
      %v495 = vadd.f32 %v433, %v487
      %v496 = vadd.f32 %v434, %v488
      %v497 = vadd.f32 %v435, %v489
      %v498 = vadd.f32 %v436, %v490
      %v499 = vpack.c.bf16 %v492, %v491
      %v500 = vpack.c.bf16 %v494, %v493
      %v501 = vpack.c.bf16 %v496, %v495
      %v502 = vpack.c.bf16 %v498, %v497
      %v507 = vunpack.c.l.b16 %v499
      %v508 = vunpack.c.h.b16 %v499
      %v509 = vunpack.c.l.b16 %v500
      %v510 = vunpack.c.h.b16 %v500
      %v511 = vunpack.c.l.b16 %v501
      %v512 = vunpack.c.h.b16 %v501
      %v513 = vunpack.c.l.b16 %v502
      %v514 = vunpack.c.h.b16 %v502
      %v515 = vpack.c.b16 %v507, %v507
      %v516 = vpack.c.b16 %v508, %v508
      %v517 = vpack.c.b16 %v509, %v509
      %v518 = vpack.c.b16 %v510, %v510
      %v519 = vpack.c.b16 %v511, %v511
      %v520 = vpack.c.b16 %v512, %v512
      %v521 = vpack.c.b16 %v513, %v513
      %v522 = vpack.c.b16 %v514, %v514
      %vm531 = vcmask 27648
      %532 = vst.msk [vmem:[%s381] sm:$0xf] %vm531, %v515
      %533 = vst.msk [vmem:[%s381 + $0x4] sm:$0xf] %vm531, %v516
      %534 = vst.msk [vmem:[%s381 + $0x8] sm:$0xf] %vm531, %v517
      %535 = vst.msk [vmem:[%s381 + $0xc] sm:$0xf] %vm531, %v518
      %536 = vst.msk [vmem:[%s381 + $0x10] sm:$0xf] %vm531, %v519
      %537 = vst.msk [vmem:[%s381 + $0x14] sm:$0xf] %vm531, %v520
      %538 = vst.msk [vmem:[%s381 + $0x18] sm:$0xf] %vm531, %v521
      %539 = vst.msk [vmem:[%s381 + $0x1c] sm:$0xf] %vm531, %v522
      %s540 = smul.u32 8, %s22
      %p541 = scmp.lt.s32.totalorder %s21, 1
      %s542 = scalar_select %p541, %s21, 1
      %p543 = scmp.lt.s32.totalorder %s540, 7
      %s544 = scalar_select %p543, %s540, 7
      %s545 = smul.addr %s542, 8
      %s546 = sadd.s32 %s544, %s545
      %s547 = smul.addr %s546, 4
      %s548 = scalar_lea.vmem %s6, %s547
      // Predicated region
      $region45: #{csp_dark_forward.19} parent=43 // pred_check
        %p549 = pneg %p209
      $region46: #{csp_dark_forward.19} parent=43 // pred_check_branch
        %551 = sbr.rel (%p549) target = $region48
      $region47: #{csp_dark_forward.19} parent=43 // pred_region
        %s552 = smul.u32 8, %s22
      $region48: #{csp_dark_forward.19} parent=43 // pred_fallthru
        _
    $region44: #{csp_dark_forward.19} parent=5 // pred_fallthru
      _
    %p553 = scmp.le.s32.totalorder 2, %s12
    // Predicated region
    $region49: #{csp_dark_forward.19} parent=5 // pred_check
      %p554 = pneg %p553
    $region50: #{csp_dark_forward.19} parent=5 // pred_check_branch
      %556 = sbr.rel (%p554) target = $region52
    $region51: #{csp_dark_forward.19} parent=5 // pred_region
      %s557 = ssub.s32 %s12, 2
      // Predicated region
      $region53: #{csp_dark_forward.19} parent=51 // pred_check
        %p558 = pneg %p215
      $region54: #{csp_dark_forward.19} parent=51 // pred_check_branch
        %560 = sbr.rel (%p558) target = $region56
      $region55: #{csp_dark_forward.19} parent=51 // pred_region
        %s561 = smul.u32 8, %s24
        %p562 = scmp.lt.s32.totalorder %s23, 1
        %s563 = scalar_select %p562, %s23, 1
        %p564 = scmp.lt.s32.totalorder %s561, 7
        %s565 = scalar_select %p564, %s561, 7
        %s566 = smul.addr %s563, 8
        %s567 = sadd.s32 %s565, %s566
        %s568 = smul.addr %s567, 4
        %s569 = scalar_lea.vmem %s6, %s568
      $region56: #{csp_dark_forward.19} parent=51 // pred_fallthru
        _
    $region52: #{csp_dark_forward.19} parent=5 // pred_fallthru
      _
  $region6: #{csp_dark_forward.19} parent=0 // loop_footer
    %s16 = sadd.s32 1, %s12
  $region7: #{csp_dark_forward.19} parent=0 // loop_footer_branch
    %11 = sbr.rel target = $region3
  $region8: #{csp_dark_forward.19} parent=0 // loop_exit
    _

// kernel: csp_dark_forward.20
$region0: #{csp_dark_forward.20}
  #allocation0 [shape = 'u32[]', space=smem, size = 0x4, offset = 0x4, fixed_abs, tag = 'smem constant byte address 0x4 - core index']
  #allocation1 [shape = 'u32[144,128]{1,0:T(1,128)}', space=vmem, size = 0x12000, scoped, tag = 'internal scratch']
  %s0 = inlined_call_operand.vmem [shape: bf16[2,64,4], index: 0, kind: input, shape index: {}]
  %s1 = inlined_call_operand.vmem [shape: bf16[4,4], index: 1, kind: input, shape index: {}]
  %s2 = inlined_call_operand.vmem [shape: bf16[2,64,4], index: 2, kind: output, shape index: {0}]
  %s3 = inlined_call_operand.vmem [shape: f32[2,1,4], index: 3, kind: output, shape index: {1}]
  %s4 = inlined_call_operand.vmem [shape: f32[2,1,4], index: 4, kind: output, shape index: {2}]
  %5 = xla_tuple %s2, %s3, %s4
  %s6 = sld [smem:[#allocation0]]
  $region61: #{csp_dark_forward.20} parent=0
    _
  %s8 = ssub.s32 1, %s6
  %s9 = scalar_select 0, %s8, %s6
  loop: start=0, step=1, limit=4
  $region2: #{csp_dark_forward.20} parent=0 // loop_pre_header
    _
  $region3: #{csp_dark_forward.20} parent=0 // loop_header
    %s11 = sphi 0, %s15
    %p12 = scmp.ge.s32.totalorder %s11, 4
    %s18 = sphi 0, %s30
    %s19 = sphi 0, %s26
    %s20 = sphi 0, %s18
    %s21 = sphi 0, %s19
    %s22 = sphi 0, %s20
    %s23 = sphi 0, %s21
    %s35 = sphi 0, %s37
    %s38 = sphi 0, %s35
    %s39 = sphi 0, %s38
    %s55 = sphi 0, %s39
    %s59 = sphi 0, %s59
    %s61 = sphi 0, %s59
    %s62 = sphi 0, %s61
    %s76 = sphi 0, %s62
    %s84 = sphi 0, %s86
    %s87 = sphi 0, %s84
    %s88 = sphi 0, %s87
    %s104 = sphi 0, %s88
    %s110 = sphi 0, %s112
    %s113 = sphi 0, %s110
    %s114 = sphi 0, %s113
    %s130 = sphi 0, %s114
    %s136 = sphi 0, %s138
    %s139 = sphi 0, %s136
    %s140 = sphi 0, %s139
    %s156 = sphi 0, %s140
  $region4: #{csp_dark_forward.20} parent=0 // loop_header_branch
    %14 = sbr.rel (%p12) target = $region8
  $region5: #{csp_dark_forward.20} parent=0 // loop_body
    %s16 = ssub.s32 %s11, 1
    %s17 = ssub.s32 %s11, 2
    %s24 = sadd.s32 1, %s19
    %p25 = scmp.ge.s32.totalorder %s24, 1
    %s26 = scalar_select %p25, 0, %s24
    %s27 = sadd.s32 1, %s18
    %s28 = scalar_select %p25, %s27, %s18
    %p29 = scmp.ge.s32.totalorder %s28, 2
    %s30 = scalar_select %p29, 0, %s28
    %s31 = ssub.s32 %s18, %s30
    %s32 = ssub.s32 %s19, %s26
    %s33 = sor.u32 %s31, %s32
    %p34 = scmp.eq.s32.totalorder %s33, 0
    %s36 = sadd.s32 %s35, 1
    %s37 = scalar_select %p34, %s35, %s36
    %p40 = pneg %p34
    %p41 = scmp.eq.s32.totalorder %s11, 1
    %p42 = por %p40, %p41
    %p43 = scmp.ne.s32.totalorder %s35, %s38
    %p44 = scmp.eq.s32.totalorder %s11, 0
    %p45 = por %p43, %p44
    %p46 = scmp.ne.s32.totalorder %s35, %s38
    %p47 = scmp.eq.s32.totalorder %s16, 1
    %p48 = por %p46, %p47
    %p49 = scmp.ne.s32.totalorder %s38, %s39
    %p50 = scmp.eq.s32.totalorder %s16, 0
    %p51 = por %p49, %p50
    %p52 = scmp.ne.s32.totalorder %s38, %s39
    %p53 = scmp.eq.s32.totalorder %s17, 1
    %p54 = por %p52, %p53
    %p56 = scmp.ne.s32.totalorder %s39, %s55
    %p57 = scmp.eq.s32.totalorder %s17, 0
    %p58 = por %p56, %p57
    %s60 = sadd.s32 %s59, 1
    %p63 = scmp.eq.s32.totalorder %s11, 1
    %p64 = scmp.ne.s32.totalorder %s59, %s61
    %p65 = scmp.eq.s32.totalorder %s11, 0
    %p66 = por %p64, %p65
    %p67 = scmp.ne.s32.totalorder %s59, %s61
    %p68 = scmp.eq.s32.totalorder %s16, 1
    %p69 = por %p67, %p68
    %p70 = scmp.ne.s32.totalorder %s61, %s62
    %p71 = scmp.eq.s32.totalorder %s16, 0
    %p72 = por %p70, %p71
    %p73 = scmp.ne.s32.totalorder %s61, %s62
    %p74 = scmp.eq.s32.totalorder %s17, 1
    %p75 = por %p73, %p74
    %p77 = scmp.ne.s32.totalorder %s62, %s76
    %p78 = scmp.eq.s32.totalorder %s17, 0
    %p79 = por %p77, %p78
    %s80 = ssub.s32 %s18, %s30
    %s81 = ssub.s32 %s19, %s26
    %s82 = sor.u32 %s80, %s81
    %p83 = scmp.eq.s32.totalorder %s82, 0
    %s85 = sadd.s32 %s84, 1
    %s86 = scalar_select %p83, %s84, %s85
    %p89 = pneg %p83
    %p90 = scmp.eq.s32.totalorder %s11, 1
    %p91 = por %p89, %p90
    %p92 = scmp.ne.s32.totalorder %s84, %s87
    %p93 = scmp.eq.s32.totalorder %s11, 0
    %p94 = por %p92, %p93
    %p95 = scmp.ne.s32.totalorder %s84, %s87
    %p96 = scmp.eq.s32.totalorder %s16, 1
    %p97 = por %p95, %p96
    %p98 = scmp.ne.s32.totalorder %s87, %s88
    %p99 = scmp.eq.s32.totalorder %s16, 0
    %p100 = por %p98, %p99
    %p101 = scmp.ne.s32.totalorder %s87, %s88
    %p102 = scmp.eq.s32.totalorder %s17, 1
    %p103 = por %p101, %p102
    %p105 = scmp.ne.s32.totalorder %s88, %s104
    %p106 = scmp.eq.s32.totalorder %s17, 0
    %p107 = por %p105, %p106
    %s108 = ssub.s32 %s18, %s30
    %p109 = scmp.eq.s32.totalorder %s108, 0
    %s111 = sadd.s32 %s110, 1
    %s112 = scalar_select %p109, %s110, %s111
    %p115 = pneg %p109
    %p116 = scmp.eq.s32.totalorder %s11, 1
    %p117 = por %p115, %p116
    %p118 = scmp.ne.s32.totalorder %s110, %s113
    %p119 = scmp.eq.s32.totalorder %s11, 0
    %p120 = por %p118, %p119
    %p121 = scmp.ne.s32.totalorder %s110, %s113
    %p122 = scmp.eq.s32.totalorder %s16, 1
    %p123 = por %p121, %p122
    %p124 = scmp.ne.s32.totalorder %s113, %s114
    %p125 = scmp.eq.s32.totalorder %s16, 0
    %p126 = por %p124, %p125
    %p127 = scmp.ne.s32.totalorder %s113, %s114
    %p128 = scmp.eq.s32.totalorder %s17, 1
    %p129 = por %p127, %p128
    %p131 = scmp.ne.s32.totalorder %s114, %s130
    %p132 = scmp.eq.s32.totalorder %s17, 0
    %p133 = por %p131, %p132
    %s134 = ssub.s32 %s18, %s30
    %p135 = scmp.eq.s32.totalorder %s134, 0
    %s137 = sadd.s32 %s136, 1
    %s138 = scalar_select %p135, %s136, %s137
    %p141 = pneg %p135
    %p142 = scmp.eq.s32.totalorder %s11, 1
    %p143 = por %p141, %p142
    %p144 = scmp.ne.s32.totalorder %s136, %s139
    %p145 = scmp.eq.s32.totalorder %s11, 0
    %p146 = por %p144, %p145
    %p147 = scmp.ne.s32.totalorder %s136, %s139
    %p148 = scmp.eq.s32.totalorder %s16, 1
    %p149 = por %p147, %p148
    %p150 = scmp.ne.s32.totalorder %s139, %s140
    %p151 = scmp.eq.s32.totalorder %s16, 0
    %p152 = por %p150, %p151
    %p153 = scmp.ne.s32.totalorder %s139, %s140
    %p154 = scmp.eq.s32.totalorder %s17, 1
    %p155 = por %p153, %p154
    %p157 = scmp.ne.s32.totalorder %s140, %s156
    %p158 = scmp.eq.s32.totalorder %s17, 0
    %p159 = por %p157, %p158
    %p160 = scmp.le.s32.totalorder 1, %s11
    %p161 = scmp.lt.s32.totalorder %s11, 3
    %p162 = pnand %p160, %p161
    %p163 = pneg %p162
    // Predicated region
    $region9: #{csp_dark_forward.20} parent=5 // pred_check
      _
    $region10: #{csp_dark_forward.20} parent=5 // pred_check_branch
      %165 = sbr.rel (%p162) target = $region12
    $region11: #{csp_dark_forward.20} parent=5 // pred_region
      %s166 = ssub.s32 %s11, 1
      // Predicated region
      $region13: #{csp_dark_forward.20} parent=11 // pred_check
        %p167 = pneg %p72
      $region14: #{csp_dark_forward.20} parent=11 // pred_check_branch
        %169 = sbr.rel (%p167) target = $region16
      $region15: #{csp_dark_forward.20} parent=11 // pred_region
        _
      $region16: #{csp_dark_forward.20} parent=11 // pred_fallthru
        _
    $region12: #{csp_dark_forward.20} parent=5 // pred_fallthru
      _
    %p170 = scmp.lt.s32.totalorder %s11, 2
    // Predicated region
    $region17: #{csp_dark_forward.20} parent=5 // pred_check
      %p171 = pneg %p170
    $region18: #{csp_dark_forward.20} parent=5 // pred_check_branch
      %173 = sbr.rel (%p171) target = $region20
    $region19: #{csp_dark_forward.20} parent=5 // pred_region
      // Predicated region
      $region21: #{csp_dark_forward.20} parent=19 // pred_check
        %p174 = pneg %p45
      $region22: #{csp_dark_forward.20} parent=19 // pred_check_branch
        %176 = sbr.rel (%p174) target = $region24
      $region23: #{csp_dark_forward.20} parent=19 // pred_region
        %s177 = smul.u32 8, %s19
        %p178 = scmp.lt.s32.totalorder %s18, 1
        %s179 = scalar_select %p178, %s18, 1
        %p180 = scmp.lt.s32.totalorder %s177, 7
        %s181 = scalar_select %p180, %s177, 7
        %s182 = smul.addr %s179, 8
        %s183 = sadd.s32 %s181, %s182
        %s184 = smul.addr %s183, 4
        %s185 = scalar_lea.vmem %s0, %s184
        %s186 = smul.u32 8, %s19
      $region24: #{csp_dark_forward.20} parent=19 // pred_fallthru
        _
    $region20: #{csp_dark_forward.20} parent=5 // pred_fallthru
      _
    %p187 = scmp.le.s32.totalorder 1, %s11
    %p188 = scmp.lt.s32.totalorder %s11, 3
    %p189 = pnand %p187, %p188
    %p190 = pneg %p189
    // Predicated region
    $region25: #{csp_dark_forward.20} parent=5 // pred_check
      _
    $region26: #{csp_dark_forward.20} parent=5 // pred_check_branch
      %192 = sbr.rel (%p189) target = $region28
    $region27: #{csp_dark_forward.20} parent=5 // pred_region
      %s193 = ssub.s32 %s11, 1
      %s194 = smul.u32 8, %s21
      %p195 = scmp.lt.s32.totalorder %s20, 1
      %s196 = scalar_select %p195, %s20, 1
      %p197 = scmp.lt.s32.totalorder %s194, 7
      %s198 = scalar_select %p197, %s194, 7
      %s199 = smul.addr %s196, 8
      %s200 = sadd.s32 %s198, %s199
      %s201 = smul.addr %s200, 4
      %s202 = scalar_lea.vmem %s0, %s201
      %p203 = pneg %p51
      %p204 = pneg %p48
      %p205 = pneg %p72
      %p206 = pneg %p69
      %p207 = pneg %p100
      %p208 = pneg %p97
      %s209 = smul.u32 8, %s21
      %p210 = scmp.lt.s32.totalorder %s20, 1
      %s211 = scalar_select %p210, %s20, 1
      %p212 = scmp.lt.s32.totalorder %s209, 7
      %s213 = scalar_select %p212, %s209, 7
      %s214 = smul.addr %s211, 8
      %s215 = sadd.s32 %s213, %s214
      %s216 = smul.addr %s215, 4
      %s217 = scalar_lea.vmem %s2, %s216
      %p218 = pneg %p126
      %p219 = pneg %p123
      %p220 = scmp.lt.s32.totalorder %s20, 1
      %s221 = scalar_select %p220, %s20, 1
      %s222 = scalar_lea.vmem %s3, %s221
      %p223 = pneg %p152
      %p224 = pneg %p149
      %p225 = scmp.lt.s32.totalorder %s20, 1
      %s226 = scalar_select %p225, %s20, 1
      %s227 = scalar_lea.vmem %s4, %s226
      %s228 = smul.u32 8, %s21
      %p229 = scmp.lt.s32.totalorder %s20, 1
      %s230 = scalar_select %p229, %s20, 1
      %p231 = scmp.lt.s32.totalorder %s228, 7
      %s232 = scalar_select %p231, %s228, 7
      %s233 = smul.addr %s230, 8
      %s234 = sadd.s32 %s232, %s233
      %s235 = smul.addr %s234, 4
      %s236 = scalar_lea.vmem %s0, %s235
      %s237 = smul.u32 8, %s21
      %s238 = smul.u32 8, %s21
      %p239 = scmp.lt.s32.totalorder %s20, 1
      %s240 = scalar_select %p239, %s20, 1
      %p241 = scmp.lt.s32.totalorder %s238, 7
      %s242 = scalar_select %p241, %s238, 7
      %s243 = smul.addr %s240, 8
      %s244 = sadd.s32 %s242, %s243
      %s245 = smul.addr %s244, 4
      %s246 = scalar_lea.vmem %s2, %s245
      %s247 = smul.u32 8, %s21
      %p248 = scmp.lt.s32.totalorder %s20, 1
      %s249 = scalar_select %p248, %s20, 1
      %s250 = scalar_lea.vmem %s3, %s249
      %p251 = scmp.lt.s32.totalorder %s20, 1
      %s252 = scalar_select %p251, %s20, 1
      %s253 = scalar_lea.vmem %s4, %s252
      %p255 = scmp.eq.s32.totalorder %s21, 0
      // Predicated region
      $region29: #{csp_dark_forward.20} parent=27 // pred_check
        %p256 = pneg %p255
      $region30: #{csp_dark_forward.20} parent=27 // pred_check_branch
        %258 = sbr.rel (%p256) target = $region32
      $region31: #{csp_dark_forward.20} parent=27 // pred_region
        %vm259 = vcmask 24576
        %260 = vst.msk [vmem:[%s250] sm:$0x1] %vm259, 0.0
        %261 = vst.msk [vmem:[%s253] sm:$0x1] %vm259, 0.0
      $region32: #{csp_dark_forward.20} parent=27 // pred_fallthru
        _
      %v262 = vld [vmem:[%s236] sm:$0xf]
      %v263 = vld [vmem:[%s236 + $0x4] sm:$0xf]
      %v264 = vld [vmem:[%s236 + $0x8] sm:$0xf]
      %v265 = vld [vmem:[%s236 + $0xc] sm:$0xf]
      %v266 = vld [vmem:[%s236 + $0x10] sm:$0xf]
      %v267 = vld [vmem:[%s236 + $0x14] sm:$0xf]
      %v268 = vld [vmem:[%s236 + $0x18] sm:$0xf]
      %v269 = vld [vmem:[%s236 + $0x1c] sm:$0xf]
      %v270 = vld [vmem:[%s1] sm:$0x3]
      %v279 = vunpack.c.l.b16 %v262
      %v280 = vunpack.c.l.b16 %v263
      %v281 = vunpack.c.l.b16 %v264
      %v282 = vunpack.c.l.b16 %v265
      %v283 = vunpack.c.l.b16 %v266
      %v284 = vunpack.c.l.b16 %v267
      %v285 = vunpack.c.l.b16 %v268
      %v286 = vunpack.c.l.b16 %v269
      %v287 = vpack.c.b16 %v280, %v279
      %v288 = vpack.c.b16 %v282, %v281
      %v289 = vpack.c.b16 %v284, %v283
      %v290 = vpack.c.b16 %v286, %v285
      %vm291 = vcmask 31744
      %v293 = vsel %vm291, %v287, 0
      %v296 = vsel %vm291, %v288, 0
      %v299 = vsel %vm291, %v289, 0
      %v302 = vsel %vm291, %v290, 0
      %vm304 = vcmask 1041408
      %v306 = vsel %vm304, %v270, 0
      %308 = vmatprep.subr.bf16.mxu0 0
      %309 = vmatpush1.bf16.msra.mxu0 %v306
      %310 = vmatprep.subr.bf16.mxu0 0
      %311 = vmatpush1.bf16.msra.mxu0 0
      %312 = vmatprep.subr.bf16.mxu0 0
      %313 = vmatpush1.bf16.msra.mxu0 0
      %314 = vmatprep.subr.bf16.mxu0 0
      %315 = vmatpush1.bf16.msra.mxu0 0
      %316 = vmatprep.subr.bf16.mxu0 0
      %317 = vmatpush1.bf16.msra.mxu0 0
      %318 = vmatprep.subr.bf16.mxu0 0
      %319 = vmatpush1.bf16.msra.mxu0 0
      %320 = vmatprep.subr.bf16.mxu0 0
      %321 = vmatpush1.bf16.msra.mxu0 0
      %322 = vmatprep.subr.bf16.mxu0 0
      %323 = vmatpush1.bf16.msra.mxu0 0
      %324 = vmatprep.subr.bf16.mxu0 0
      %325 = vmatpush1.bf16.msra.mxu0 0
      %326 = vmatprep.subr.bf16.mxu0 0
      %327 = vmatpush1.bf16.msra.mxu0 0
      %328 = vmatprep.subr.bf16.mxu0 0
      %329 = vmatpush1.bf16.msra.mxu0 0
      %330 = vmatprep.subr.bf16.mxu0 0
      %331 = vmatpush1.bf16.msra.mxu0 0
      %332 = vmatprep.subr.bf16.mxu0 0
      %333 = vmatpush1.bf16.msra.mxu0 0
      %334 = vmatprep.subr.bf16.mxu0 0
      %335 = vmatpush1.bf16.msra.mxu0 0
      %336 = vmatprep.subr.bf16.mxu0 0
      %337 = vmatpush1.bf16.msra.mxu0 0
      %338 = vmatprep.subr.bf16.mxu0 0
      %339 = vmatpush1.bf16.msra.mxu0 0
      %340 = vmatprep.mubr.bf16.mxu0 0
      %341 = vmatmul.mubr.bf16.gmra.mrb[0].mxu0 %v293
      %v342 = vpop.f32.mrb[0].mxu0
      %v343 = vadd.f32 0.0, %v342
      %v344 = vpop.f32.mrb[0].mxu0
      %v345 = vpop.f32.mrb[0].mxu0
      %v346 = vadd.f32 0.0, %v345
      %v347 = vpop.f32.mrb[0].mxu0
      %348 = vmatprep.mubr.bf16.mxu0 0
      %349 = vmatmul.mubr.bf16.gmra.mrb[0].mxu0 %v296
      %v350 = vpop.f32.mrb[0].mxu0
      %v351 = vadd.f32 0.0, %v350
      %v352 = vpop.f32.mrb[0].mxu0
      %v353 = vpop.f32.mrb[0].mxu0
      %v354 = vadd.f32 0.0, %v353
      %v355 = vpop.f32.mrb[0].mxu0
      %356 = vmatprep.mubr.bf16.mxu0 0
      %357 = vmatmul.mubr.bf16.gmra.mrb[0].mxu0 %v299
      %v358 = vpop.f32.mrb[0].mxu0
      %v359 = vadd.f32 0.0, %v358
      %v360 = vpop.f32.mrb[0].mxu0
      %v361 = vpop.f32.mrb[0].mxu0
      %v362 = vadd.f32 0.0, %v361
      %v363 = vpop.f32.mrb[0].mxu0
      %364 = vmatprep.mubr.bf16.mxu0 0
      %365 = vmatmul.mubr.bf16.gmra.mrb[0].mxu0 %v302
      %v366 = vpop.f32.mrb[0].mxu0
      %v367 = vadd.f32 0.0, %v366
      %v368 = vpop.f32.mrb[0].mxu0
      %v369 = vpop.f32.mrb[0].mxu0
      %v370 = vadd.f32 0.0, %v369
      %v371 = vpop.f32.mrb[0].mxu0
      %372 = vdwg.mxu0
      %v373 = vpack.c.bf16 %v346, %v343
      %v374 = vpack.c.bf16 %v354, %v351
      %v375 = vpack.c.bf16 %v362, %v359
      %v376 = vpack.c.bf16 %v370, %v367
      %v381 = vunpack.c.l.b16 %v373
      %v382 = vunpack.c.h.b16 %v373
      %v383 = vunpack.c.l.b16 %v374
      %v384 = vunpack.c.h.b16 %v374
      %v385 = vunpack.c.l.b16 %v375
      %v386 = vunpack.c.h.b16 %v375
      %v387 = vunpack.c.l.b16 %v376
      %v388 = vunpack.c.h.b16 %v376
      %v389 = vpack.c.b16 %v381, %v381
      %v390 = vpack.c.b16 %v382, %v382
      %v391 = vpack.c.b16 %v383, %v383
      %v392 = vpack.c.b16 %v384, %v384
      %v393 = vpack.c.b16 %v385, %v385
      %v394 = vpack.c.b16 %v386, %v386
      %v395 = vpack.c.b16 %v387, %v387
      %v396 = vpack.c.b16 %v388, %v388
      %vm405 = vcmask 27648
      %406 = vst.msk [vmem:[%s246] sm:$0xf] %vm405, %v389
      %407 = vst.msk [vmem:[%s246 + $0x4] sm:$0xf] %vm405, %v390
      %408 = vst.msk [vmem:[%s246 + $0x8] sm:$0xf] %vm405, %v391
      %409 = vst.msk [vmem:[%s246 + $0xc] sm:$0xf] %vm405, %v392
      %410 = vst.msk [vmem:[%s246 + $0x10] sm:$0xf] %vm405, %v393
      %411 = vst.msk [vmem:[%s246 + $0x14] sm:$0xf] %vm405, %v394
      %412 = vst.msk [vmem:[%s246 + $0x18] sm:$0xf] %vm405, %v395
      %413 = vst.msk [vmem:[%s246 + $0x1c] sm:$0xf] %vm405, %v396
      %v414 = vld [vmem:[%s250] sm:$0x1]
      %v415 = vsel %vm291, %v343, 0.0
      %v416 = vsel %vm291, %v346, 0.0
      %v417 = vadd.f32 %v415, %v416
      %v418 = vsel %vm291, %v351, 0.0
      %v419 = vadd.f32 %v417, %v418
      %v420 = vsel %vm291, %v354, 0.0
      %v421 = vadd.f32 %v419, %v420
      %v422 = vsel %vm291, %v359, 0.0
      %v423 = vadd.f32 %v421, %v422
      %v424 = vsel %vm291, %v362, 0.0
      %v425 = vadd.f32 %v423, %v424
      %v426 = vsel %vm291, %v367, 0.0
      %v427 = vadd.f32 %v425, %v426
      %v428 = vsel %vm291, %v370, 0.0
      %v429 = vadd.f32 %v427, %v428
      %v430 = vrot.slane %v429, 4
      %v431 = vadd.f32 %v429, %v430
      %v432 = vrot.slane %v431, 2
      %v433 = vadd.f32 %v431, %v432
      %v434 = vrot.slane %v433, 1
      %v435 = vadd.f32 %v433, %v434
      %v436 = vadd.f32 %v414, %v435
      %vm437 = vcmask 24576
      %438 = vst.msk [vmem:[%s250] sm:$0x1] %vm437, %v436
      %v439 = vld [vmem:[%s253] sm:$0x1]
      %v440 = vmul.f32 %v343, %v343
      %v441 = vmul.f32 %v346, %v346
      %v442 = vmul.f32 %v351, %v351
      %v443 = vmul.f32 %v354, %v354
      %v444 = vmul.f32 %v359, %v359
      %v445 = vmul.f32 %v362, %v362
      %v446 = vmul.f32 %v367, %v367
      %v447 = vmul.f32 %v370, %v370
      %v448 = vsel %vm291, %v440, 0.0
      %v449 = vsel %vm291, %v441, 0.0
      %v450 = vadd.f32 %v448, %v449
      %v451 = vsel %vm291, %v442, 0.0
      %v452 = vadd.f32 %v450, %v451
      %v453 = vsel %vm291, %v443, 0.0
      %v454 = vadd.f32 %v452, %v453
      %v455 = vsel %vm291, %v444, 0.0
      %v456 = vadd.f32 %v454, %v455
      %v457 = vsel %vm291, %v445, 0.0
      %v458 = vadd.f32 %v456, %v457
      %v459 = vsel %vm291, %v446, 0.0
      %v460 = vadd.f32 %v458, %v459
      %v461 = vsel %vm291, %v447, 0.0
      %v462 = vadd.f32 %v460, %v461
      %v463 = vrot.slane %v462, 4
      %v464 = vadd.f32 %v462, %v463
      %v465 = vrot.slane %v464, 2
      %v466 = vadd.f32 %v464, %v465
      %v467 = vrot.slane %v466, 1
      %v468 = vadd.f32 %v466, %v467
      %v469 = vadd.f32 %v439, %v468
      %470 = vst.msk [vmem:[%s253] sm:$0x1] %vm437, %v469
      %s471 = smul.u32 8, %s21
      %p472 = scmp.lt.s32.totalorder %s20, 1
      %s473 = scalar_select %p472, %s20, 1
      %p474 = scmp.lt.s32.totalorder %s471, 7
      %s475 = scalar_select %p474, %s471, 7
      %s476 = smul.addr %s473, 8
      %s477 = sadd.s32 %s475, %s476
      %s478 = smul.addr %s477, 4
      %s479 = scalar_lea.vmem %s2, %s478
      %p480 = scmp.lt.s32.totalorder %s20, 1
      %s481 = scalar_select %p480, %s20, 1
      %s482 = scalar_lea.vmem %s3, %s481
      %p483 = scmp.lt.s32.totalorder %s20, 1
      %s484 = scalar_select %p483, %s20, 1
      %s485 = scalar_lea.vmem %s4, %s484
      // Predicated region
      $region33: #{csp_dark_forward.20} parent=27 // pred_check
        %p486 = pneg %p97
      $region34: #{csp_dark_forward.20} parent=27 // pred_check_branch
        %488 = sbr.rel (%p486) target = $region36
      $region35: #{csp_dark_forward.20} parent=27 // pred_region
        %s489 = smul.u32 8, %s21
      $region36: #{csp_dark_forward.20} parent=27 // pred_fallthru
        _
      // Predicated region
      $region37: #{csp_dark_forward.20} parent=27 // pred_check
        %p490 = pneg %p123
      $region38: #{csp_dark_forward.20} parent=27 // pred_check_branch
        %492 = sbr.rel (%p490) target = $region40
      $region39: #{csp_dark_forward.20} parent=27 // pred_region
        _
      $region40: #{csp_dark_forward.20} parent=27 // pred_fallthru
        _
      // Predicated region
      $region41: #{csp_dark_forward.20} parent=27 // pred_check
        %p493 = pneg %p149
      $region42: #{csp_dark_forward.20} parent=27 // pred_check_branch
        %495 = sbr.rel (%p493) target = $region44
      $region43: #{csp_dark_forward.20} parent=27 // pred_region
        _
      $region44: #{csp_dark_forward.20} parent=27 // pred_fallthru
        _
    $region28: #{csp_dark_forward.20} parent=5 // pred_fallthru
      _
    %p496 = scmp.le.s32.totalorder 2, %s11
    // Predicated region
    $region45: #{csp_dark_forward.20} parent=5 // pred_check
      %p497 = pneg %p496
    $region46: #{csp_dark_forward.20} parent=5 // pred_check_branch
      %499 = sbr.rel (%p497) target = $region48
    $region47: #{csp_dark_forward.20} parent=5 // pred_region
      %s500 = ssub.s32 %s11, 2
      // Predicated region
      $region49: #{csp_dark_forward.20} parent=47 // pred_check
        %p501 = pneg %p103
      $region50: #{csp_dark_forward.20} parent=47 // pred_check_branch
        %503 = sbr.rel (%p501) target = $region52
      $region51: #{csp_dark_forward.20} parent=47 // pred_region
        %s504 = smul.u32 8, %s23
        %p505 = scmp.lt.s32.totalorder %s22, 1
        %s506 = scalar_select %p505, %s22, 1
        %p507 = scmp.lt.s32.totalorder %s504, 7
        %s508 = scalar_select %p507, %s504, 7
        %s509 = smul.addr %s506, 8
        %s510 = sadd.s32 %s508, %s509
        %s511 = smul.addr %s510, 4
        %s512 = scalar_lea.vmem %s2, %s511
      $region52: #{csp_dark_forward.20} parent=47 // pred_fallthru
        _
      // Predicated region
      $region53: #{csp_dark_forward.20} parent=47 // pred_check
        %p513 = pneg %p129
      $region54: #{csp_dark_forward.20} parent=47 // pred_check_branch
        %515 = sbr.rel (%p513) target = $region56
      $region55: #{csp_dark_forward.20} parent=47 // pred_region
        %p516 = scmp.lt.s32.totalorder %s22, 1
        %s517 = scalar_select %p516, %s22, 1
        %s518 = scalar_lea.vmem %s3, %s517
      $region56: #{csp_dark_forward.20} parent=47 // pred_fallthru
        _
      // Predicated region
      $region57: #{csp_dark_forward.20} parent=47 // pred_check
        %p519 = pneg %p155
      $region58: #{csp_dark_forward.20} parent=47 // pred_check_branch
        %521 = sbr.rel (%p519) target = $region60
      $region59: #{csp_dark_forward.20} parent=47 // pred_region
        %p522 = scmp.lt.s32.totalorder %s22, 1
        %s523 = scalar_select %p522, %s22, 1
        %s524 = scalar_lea.vmem %s4, %s523
      $region60: #{csp_dark_forward.20} parent=47 // pred_fallthru
        _
    $region48: #{csp_dark_forward.20} parent=5 // pred_fallthru
      _
  $region6: #{csp_dark_forward.20} parent=0 // loop_footer
    %s15 = sadd.s32 1, %s11
  $region7: #{csp_dark_forward.20} parent=0 // loop_footer_branch
    %10 = sbr.rel target = $region3
  $region8: #{csp_dark_forward.20} parent=0 // loop_exit
    _

// kernel: csp_dark_forward.23
$region0: #{csp_dark_forward.23}
  #allocation0 [shape = 'u32[]', space=smem, size = 0x4, offset = 0x4, fixed_abs, tag = 'smem constant byte address 0x4 - core index']
  #allocation1 [shape = 'u32[144,128]{1,0:T(1,128)}', space=vmem, size = 0x12000, scoped, tag = 'internal scratch']
  %s0 = inlined_call_operand.vmem [shape: bf16[2,64,4], index: 0, kind: input, shape index: {}]
  %s1 = inlined_call_operand.vmem [shape: f32[2,1,4], index: 1, kind: input, shape index: {}]
  %s2 = inlined_call_operand.vmem [shape: f32[2,1,4], index: 2, kind: input, shape index: {}]
  %s3 = inlined_call_operand.vmem [shape: bf16[2,64,4], index: 3, kind: input, shape index: {}]
  %s4 = inlined_call_operand.vmem [shape: bf16[2,64,4], index: 4, kind: output, shape index: {}]
  %s5 = sld [smem:[#allocation0]]
  $region49: #{csp_dark_forward.23} parent=0
    _
  %s7 = ssub.s32 1, %s5
  %s8 = scalar_select 0, %s7, %s5
  loop: start=0, step=1, limit=4
  $region2: #{csp_dark_forward.23} parent=0 // loop_pre_header
    _
  $region3: #{csp_dark_forward.23} parent=0 // loop_header
    %s10 = sphi 0, %s14
    %p11 = scmp.ge.s32.totalorder %s10, 4
    %s17 = sphi 0, %s29
    %s18 = sphi 0, %s25
    %s19 = sphi 0, %s17
    %s20 = sphi 0, %s18
    %s21 = sphi 0, %s19
    %s22 = sphi 0, %s20
    %s34 = sphi 0, %s36
    %s37 = sphi 0, %s34
    %s38 = sphi 0, %s37
    %s54 = sphi 0, %s38
    %s60 = sphi 0, %s62
    %s63 = sphi 0, %s60
    %s64 = sphi 0, %s63
    %s80 = sphi 0, %s64
    %s86 = sphi 0, %s88
    %s89 = sphi 0, %s86
    %s90 = sphi 0, %s89
    %s106 = sphi 0, %s90
    %s114 = sphi 0, %s116
    %s117 = sphi 0, %s114
    %s118 = sphi 0, %s117
    %s134 = sphi 0, %s118
    %s142 = sphi 0, %s144
    %s145 = sphi 0, %s142
    %s146 = sphi 0, %s145
    %s162 = sphi 0, %s146
  $region4: #{csp_dark_forward.23} parent=0 // loop_header_branch
    %13 = sbr.rel (%p11) target = $region8
  $region5: #{csp_dark_forward.23} parent=0 // loop_body
    %s15 = ssub.s32 %s10, 1
    %s16 = ssub.s32 %s10, 2
    %s23 = sadd.s32 1, %s18
    %p24 = scmp.ge.s32.totalorder %s23, 1
    %s25 = scalar_select %p24, 0, %s23
    %s26 = sadd.s32 1, %s17
    %s27 = scalar_select %p24, %s26, %s17
    %p28 = scmp.ge.s32.totalorder %s27, 2
    %s29 = scalar_select %p28, 0, %s27
    %s30 = ssub.s32 %s17, %s29
    %s31 = ssub.s32 %s18, %s25
    %s32 = sor.u32 %s30, %s31
    %p33 = scmp.eq.s32.totalorder %s32, 0
    %s35 = sadd.s32 %s34, 1
    %s36 = scalar_select %p33, %s34, %s35
    %p39 = pneg %p33
    %p40 = scmp.eq.s32.totalorder %s10, 1
    %p41 = por %p39, %p40
    %p42 = scmp.ne.s32.totalorder %s34, %s37
    %p43 = scmp.eq.s32.totalorder %s10, 0
    %p44 = por %p42, %p43
    %p45 = scmp.ne.s32.totalorder %s34, %s37
    %p46 = scmp.eq.s32.totalorder %s15, 1
    %p47 = por %p45, %p46
    %p48 = scmp.ne.s32.totalorder %s37, %s38
    %p49 = scmp.eq.s32.totalorder %s15, 0
    %p50 = por %p48, %p49
    %p51 = scmp.ne.s32.totalorder %s37, %s38
    %p52 = scmp.eq.s32.totalorder %s16, 1
    %p53 = por %p51, %p52
    %p55 = scmp.ne.s32.totalorder %s38, %s54
    %p56 = scmp.eq.s32.totalorder %s16, 0
    %p57 = por %p55, %p56
    %s58 = ssub.s32 %s17, %s29
    %p59 = scmp.eq.s32.totalorder %s58, 0
    %s61 = sadd.s32 %s60, 1
    %s62 = scalar_select %p59, %s60, %s61
    %p65 = pneg %p59
    %p66 = scmp.eq.s32.totalorder %s10, 1
    %p67 = por %p65, %p66
    %p68 = scmp.ne.s32.totalorder %s60, %s63
    %p69 = scmp.eq.s32.totalorder %s10, 0
    %p70 = por %p68, %p69
    %p71 = scmp.ne.s32.totalorder %s60, %s63
    %p72 = scmp.eq.s32.totalorder %s15, 1
    %p73 = por %p71, %p72
    %p74 = scmp.ne.s32.totalorder %s63, %s64
    %p75 = scmp.eq.s32.totalorder %s15, 0
    %p76 = por %p74, %p75
    %p77 = scmp.ne.s32.totalorder %s63, %s64
    %p78 = scmp.eq.s32.totalorder %s16, 1
    %p79 = por %p77, %p78
    %p81 = scmp.ne.s32.totalorder %s64, %s80
    %p82 = scmp.eq.s32.totalorder %s16, 0
    %p83 = por %p81, %p82
    %s84 = ssub.s32 %s17, %s29
    %p85 = scmp.eq.s32.totalorder %s84, 0
    %s87 = sadd.s32 %s86, 1
    %s88 = scalar_select %p85, %s86, %s87
    %p91 = pneg %p85
    %p92 = scmp.eq.s32.totalorder %s10, 1
    %p93 = por %p91, %p92
    %p94 = scmp.ne.s32.totalorder %s86, %s89
    %p95 = scmp.eq.s32.totalorder %s10, 0
    %p96 = por %p94, %p95
    %p97 = scmp.ne.s32.totalorder %s86, %s89
    %p98 = scmp.eq.s32.totalorder %s15, 1
    %p99 = por %p97, %p98
    %p100 = scmp.ne.s32.totalorder %s89, %s90
    %p101 = scmp.eq.s32.totalorder %s15, 0
    %p102 = por %p100, %p101
    %p103 = scmp.ne.s32.totalorder %s89, %s90
    %p104 = scmp.eq.s32.totalorder %s16, 1
    %p105 = por %p103, %p104
    %p107 = scmp.ne.s32.totalorder %s90, %s106
    %p108 = scmp.eq.s32.totalorder %s16, 0
    %p109 = por %p107, %p108
    %s110 = ssub.s32 %s17, %s29
    %s111 = ssub.s32 %s18, %s25
    %s112 = sor.u32 %s110, %s111
    %p113 = scmp.eq.s32.totalorder %s112, 0
    %s115 = sadd.s32 %s114, 1
    %s116 = scalar_select %p113, %s114, %s115
    %p119 = pneg %p113
    %p120 = scmp.eq.s32.totalorder %s10, 1
    %p121 = por %p119, %p120
    %p122 = scmp.ne.s32.totalorder %s114, %s117
    %p123 = scmp.eq.s32.totalorder %s10, 0
    %p124 = por %p122, %p123
    %p125 = scmp.ne.s32.totalorder %s114, %s117
    %p126 = scmp.eq.s32.totalorder %s15, 1
    %p127 = por %p125, %p126
    %p128 = scmp.ne.s32.totalorder %s117, %s118
    %p129 = scmp.eq.s32.totalorder %s15, 0
    %p130 = por %p128, %p129
    %p131 = scmp.ne.s32.totalorder %s117, %s118
    %p132 = scmp.eq.s32.totalorder %s16, 1
    %p133 = por %p131, %p132
    %p135 = scmp.ne.s32.totalorder %s118, %s134
    %p136 = scmp.eq.s32.totalorder %s16, 0
    %p137 = por %p135, %p136
    %s138 = ssub.s32 %s17, %s29
    %s139 = ssub.s32 %s18, %s25
    %s140 = sor.u32 %s138, %s139
    %p141 = scmp.eq.s32.totalorder %s140, 0
    %s143 = sadd.s32 %s142, 1
    %s144 = scalar_select %p141, %s142, %s143
    %p147 = pneg %p141
    %p148 = scmp.eq.s32.totalorder %s10, 1
    %p149 = por %p147, %p148
    %p150 = scmp.ne.s32.totalorder %s142, %s145
    %p151 = scmp.eq.s32.totalorder %s10, 0
    %p152 = por %p150, %p151
    %p153 = scmp.ne.s32.totalorder %s142, %s145
    %p154 = scmp.eq.s32.totalorder %s15, 1
    %p155 = por %p153, %p154
    %p156 = scmp.ne.s32.totalorder %s145, %s146
    %p157 = scmp.eq.s32.totalorder %s15, 0
    %p158 = por %p156, %p157
    %p159 = scmp.ne.s32.totalorder %s145, %s146
    %p160 = scmp.eq.s32.totalorder %s16, 1
    %p161 = por %p159, %p160
    %p163 = scmp.ne.s32.totalorder %s146, %s162
    %p164 = scmp.eq.s32.totalorder %s16, 0
    %p165 = por %p163, %p164
    %p166 = scmp.le.s32.totalorder 1, %s10
    %p167 = scmp.lt.s32.totalorder %s10, 3
    %p168 = pnand %p166, %p167
    %p169 = pneg %p168
    // Predicated region
    $region9: #{csp_dark_forward.23} parent=5 // pred_check
      _
    $region10: #{csp_dark_forward.23} parent=5 // pred_check_branch
      %171 = sbr.rel (%p168) target = $region12
    $region11: #{csp_dark_forward.23} parent=5 // pred_region
      %s172 = ssub.s32 %s10, 1
    $region12: #{csp_dark_forward.23} parent=5 // pred_fallthru
      _
    %p173 = scmp.lt.s32.totalorder %s10, 2
    // Predicated region
    $region13: #{csp_dark_forward.23} parent=5 // pred_check
      %p174 = pneg %p173
    $region14: #{csp_dark_forward.23} parent=5 // pred_check_branch
      %176 = sbr.rel (%p174) target = $region16
    $region15: #{csp_dark_forward.23} parent=5 // pred_region
      // Predicated region
      $region17: #{csp_dark_forward.23} parent=15 // pred_check
        %p177 = pneg %p44
      $region18: #{csp_dark_forward.23} parent=15 // pred_check_branch
        %179 = sbr.rel (%p177) target = $region20
      $region19: #{csp_dark_forward.23} parent=15 // pred_region
        %s180 = smul.u32 8, %s18
        %p181 = scmp.lt.s32.totalorder %s17, 1
        %s182 = scalar_select %p181, %s17, 1
        %p183 = scmp.lt.s32.totalorder %s180, 7
        %s184 = scalar_select %p183, %s180, 7
        %s185 = smul.addr %s182, 8
        %s186 = sadd.s32 %s184, %s185
        %s187 = smul.addr %s186, 4
        %s188 = scalar_lea.vmem %s0, %s187
        %s189 = smul.u32 8, %s18
      $region20: #{csp_dark_forward.23} parent=15 // pred_fallthru
        _
      // Predicated region
      $region21: #{csp_dark_forward.23} parent=15 // pred_check
        %p190 = pneg %p70
      $region22: #{csp_dark_forward.23} parent=15 // pred_check_branch
        %192 = sbr.rel (%p190) target = $region24
      $region23: #{csp_dark_forward.23} parent=15 // pred_region
        %p193 = scmp.lt.s32.totalorder %s17, 1
        %s194 = scalar_select %p193, %s17, 1
        %s195 = scalar_lea.vmem %s1, %s194
      $region24: #{csp_dark_forward.23} parent=15 // pred_fallthru
        _
      // Predicated region
      $region25: #{csp_dark_forward.23} parent=15 // pred_check
        %p196 = pneg %p96
      $region26: #{csp_dark_forward.23} parent=15 // pred_check_branch
        %198 = sbr.rel (%p196) target = $region28
      $region27: #{csp_dark_forward.23} parent=15 // pred_region
        %p199 = scmp.lt.s32.totalorder %s17, 1
        %s200 = scalar_select %p199, %s17, 1
        %s201 = scalar_lea.vmem %s2, %s200
      $region28: #{csp_dark_forward.23} parent=15 // pred_fallthru
        _
      // Predicated region
      $region29: #{csp_dark_forward.23} parent=15 // pred_check
        %p202 = pneg %p124
      $region30: #{csp_dark_forward.23} parent=15 // pred_check_branch
        %204 = sbr.rel (%p202) target = $region32
      $region31: #{csp_dark_forward.23} parent=15 // pred_region
        %s205 = smul.u32 8, %s18
        %p206 = scmp.lt.s32.totalorder %s17, 1
        %s207 = scalar_select %p206, %s17, 1
        %p208 = scmp.lt.s32.totalorder %s205, 7
        %s209 = scalar_select %p208, %s205, 7
        %s210 = smul.addr %s207, 8
        %s211 = sadd.s32 %s209, %s210
        %s212 = smul.addr %s211, 4
        %s213 = scalar_lea.vmem %s3, %s212
        %s214 = smul.u32 8, %s18
      $region32: #{csp_dark_forward.23} parent=15 // pred_fallthru
        _
    $region16: #{csp_dark_forward.23} parent=5 // pred_fallthru
      _
    %p215 = scmp.le.s32.totalorder 1, %s10
    %p216 = scmp.lt.s32.totalorder %s10, 3
    %p217 = pnand %p215, %p216
    %p218 = pneg %p217
    // Predicated region
    $region33: #{csp_dark_forward.23} parent=5 // pred_check
      _
    $region34: #{csp_dark_forward.23} parent=5 // pred_check_branch
      %220 = sbr.rel (%p217) target = $region36
    $region35: #{csp_dark_forward.23} parent=5 // pred_region
      %s221 = ssub.s32 %s10, 1
      %s222 = smul.u32 8, %s20
      %p223 = scmp.lt.s32.totalorder %s19, 1
      %s224 = scalar_select %p223, %s19, 1
      %p225 = scmp.lt.s32.totalorder %s222, 7
      %s226 = scalar_select %p225, %s222, 7
      %s227 = smul.addr %s224, 8
      %s228 = sadd.s32 %s226, %s227
      %s229 = smul.addr %s228, 4
      %s230 = scalar_lea.vmem %s0, %s229
      %p231 = pneg %p50
      %p232 = pneg %p47
      %p233 = scmp.lt.s32.totalorder %s19, 1
      %s234 = scalar_select %p233, %s19, 1
      %s235 = scalar_lea.vmem %s1, %s234
      %p236 = pneg %p76
      %p237 = pneg %p73
      %p238 = scmp.lt.s32.totalorder %s19, 1
      %s239 = scalar_select %p238, %s19, 1
      %s240 = scalar_lea.vmem %s2, %s239
      %p241 = pneg %p102
      %p242 = pneg %p99
      %s243 = smul.u32 8, %s20
      %p244 = scmp.lt.s32.totalorder %s19, 1
      %s245 = scalar_select %p244, %s19, 1
      %p246 = scmp.lt.s32.totalorder %s243, 7
      %s247 = scalar_select %p246, %s243, 7
      %s248 = smul.addr %s245, 8
      %s249 = sadd.s32 %s247, %s248
      %s250 = smul.addr %s249, 4
      %s251 = scalar_lea.vmem %s3, %s250
      %p252 = pneg %p130
      %p253 = pneg %p127
      %p254 = pneg %p158
      %p255 = pneg %p155
      %s256 = smul.u32 8, %s20
      %p257 = scmp.lt.s32.totalorder %s19, 1
      %s258 = scalar_select %p257, %s19, 1
      %p259 = scmp.lt.s32.totalorder %s256, 7
      %s260 = scalar_select %p259, %s256, 7
      %s261 = smul.addr %s258, 8
      %s262 = sadd.s32 %s260, %s261
      %s263 = smul.addr %s262, 4
      %s264 = scalar_lea.vmem %s4, %s263
      %s265 = smul.u32 8, %s20
      %p266 = scmp.lt.s32.totalorder %s19, 1
      %s267 = scalar_select %p266, %s19, 1
      %p268 = scmp.lt.s32.totalorder %s265, 7
      %s269 = scalar_select %p268, %s265, 7
      %s270 = smul.addr %s267, 8
      %s271 = sadd.s32 %s269, %s270
      %s272 = smul.addr %s271, 4
      %s273 = scalar_lea.vmem %s0, %s272
      %s274 = smul.u32 8, %s20
      %p275 = scmp.lt.s32.totalorder %s19, 1
      %s276 = scalar_select %p275, %s19, 1
      %s277 = scalar_lea.vmem %s1, %s276
      %p278 = scmp.lt.s32.totalorder %s19, 1
      %s279 = scalar_select %p278, %s19, 1
      %s280 = scalar_lea.vmem %s2, %s279
      %s281 = smul.u32 8, %s20
      %p282 = scmp.lt.s32.totalorder %s19, 1
      %s283 = scalar_select %p282, %s19, 1
      %p284 = scmp.lt.s32.totalorder %s281, 7
      %s285 = scalar_select %p284, %s281, 7
      %s286 = smul.addr %s283, 8
      %s287 = sadd.s32 %s285, %s286
      %s288 = smul.addr %s287, 4
      %s289 = scalar_lea.vmem %s3, %s288
      %s290 = smul.u32 8, %s20
      %s291 = smul.u32 8, %s20
      %p292 = scmp.lt.s32.totalorder %s19, 1
      %s293 = scalar_select %p292, %s19, 1
      %p294 = scmp.lt.s32.totalorder %s291, 7
      %s295 = scalar_select %p294, %s291, 7
      %s296 = smul.addr %s293, 8
      %s297 = sadd.s32 %s295, %s296
      %s298 = smul.addr %s297, 4
      %s299 = scalar_lea.vmem %s4, %s298
      %s300 = smul.u32 8, %s20
      %v301 = vld [vmem:[%s273] sm:$0xf]
      %v302 = vld [vmem:[%s273 + $0x4] sm:$0xf]
      %v303 = vld [vmem:[%s273 + $0x8] sm:$0xf]
      %v304 = vld [vmem:[%s273 + $0xc] sm:$0xf]
      %v305 = vld [vmem:[%s273 + $0x10] sm:$0xf]
      %v306 = vld [vmem:[%s273 + $0x14] sm:$0xf]
      %v307 = vld [vmem:[%s273 + $0x18] sm:$0xf]
      %v308 = vld [vmem:[%s273 + $0x1c] sm:$0xf]
      %v309 = vunpack.c.l.bf16 %v301
      %v310 = vunpack.c.l.bf16 %v302
      %v311 = vunpack.c.l.bf16 %v303
      %v312 = vunpack.c.l.bf16 %v304
      %v313 = vunpack.c.l.bf16 %v305
      %v314 = vunpack.c.l.bf16 %v306
      %v315 = vunpack.c.l.bf16 %v307
      %v316 = vunpack.c.l.bf16 %v308
      %v317 = vld [vmem:[%s277] sm:$0x1]
      %v319 = vlaneseq
      %v320 = vshrl.u32 %v319, 7
      %v321 = vsub.s32 0, %v320
      %v322 = vrot.slane %v317, %v321
      %v324 = vmul.f32 %v309, %v322
      %v325 = vmul.f32 %v310, %v322
      %v326 = vmul.f32 %v311, %v322
      %v327 = vmul.f32 %v312, %v322
      %v328 = vmul.f32 %v313, %v322
      %v329 = vmul.f32 %v314, %v322
      %v330 = vmul.f32 %v315, %v322
      %v331 = vmul.f32 %v316, %v322
      %v332 = vld [vmem:[%s280] sm:$0x1]
      %v334 = vlaneseq
      %v335 = vshrl.u32 %v334, 7
      %v336 = vsub.s32 0, %v335
      %v337 = vrot.slane %v332, %v336
      %v339 = vadd.f32 %v324, %v337
      %v340 = vadd.f32 %v325, %v337
      %v341 = vadd.f32 %v326, %v337
      %v342 = vadd.f32 %v327, %v337
      %v343 = vadd.f32 %v328, %v337
      %v344 = vadd.f32 %v329, %v337
      %v345 = vadd.f32 %v330, %v337
      %v346 = vadd.f32 %v331, %v337
      %v347 = vmax.f32 %v339, 0.0
      %v348 = vmax.f32 %v340, 0.0
      %v349 = vmax.f32 %v341, 0.0
      %v350 = vmax.f32 %v342, 0.0
      %v351 = vmax.f32 %v343, 0.0
      %v352 = vmax.f32 %v344, 0.0
      %v353 = vmax.f32 %v345, 0.0
      %v354 = vmax.f32 %v346, 0.0
      %v355 = vld [vmem:[%s289] sm:$0xf]
      %v356 = vld [vmem:[%s289 + $0x4] sm:$0xf]
      %v357 = vld [vmem:[%s289 + $0x8] sm:$0xf]
      %v358 = vld [vmem:[%s289 + $0xc] sm:$0xf]
      %v359 = vld [vmem:[%s289 + $0x10] sm:$0xf]
      %v360 = vld [vmem:[%s289 + $0x14] sm:$0xf]
      %v361 = vld [vmem:[%s289 + $0x18] sm:$0xf]
      %v362 = vld [vmem:[%s289 + $0x1c] sm:$0xf]
      %v363 = vunpack.c.l.bf16 %v355
      %v364 = vunpack.c.l.bf16 %v356
      %v365 = vunpack.c.l.bf16 %v357
      %v366 = vunpack.c.l.bf16 %v358
      %v367 = vunpack.c.l.bf16 %v359
      %v368 = vunpack.c.l.bf16 %v360
      %v369 = vunpack.c.l.bf16 %v361
      %v370 = vunpack.c.l.bf16 %v362
      %v371 = vadd.f32 %v347, %v363
      %v372 = vadd.f32 %v348, %v364
      %v373 = vadd.f32 %v349, %v365
      %v374 = vadd.f32 %v350, %v366
      %v375 = vadd.f32 %v351, %v367
      %v376 = vadd.f32 %v352, %v368
      %v377 = vadd.f32 %v353, %v369
      %v378 = vadd.f32 %v354, %v370
      %v379 = vpack.c.bf16 %v372, %v371
      %v380 = vpack.c.bf16 %v374, %v373
      %v381 = vpack.c.bf16 %v376, %v375
      %v382 = vpack.c.bf16 %v378, %v377
      %v387 = vunpack.c.l.b16 %v379
      %v388 = vunpack.c.h.b16 %v379
      %v389 = vunpack.c.l.b16 %v380
      %v390 = vunpack.c.h.b16 %v380
      %v391 = vunpack.c.l.b16 %v381
      %v392 = vunpack.c.h.b16 %v381
      %v393 = vunpack.c.l.b16 %v382
      %v394 = vunpack.c.h.b16 %v382
      %v395 = vpack.c.b16 %v387, %v387
      %v396 = vpack.c.b16 %v388, %v388
      %v397 = vpack.c.b16 %v389, %v389
      %v398 = vpack.c.b16 %v390, %v390
      %v399 = vpack.c.b16 %v391, %v391
      %v400 = vpack.c.b16 %v392, %v392
      %v401 = vpack.c.b16 %v393, %v393
      %v402 = vpack.c.b16 %v394, %v394
      %vm411 = vcmask 27648
      %412 = vst.msk [vmem:[%s299] sm:$0xf] %vm411, %v395
      %413 = vst.msk [vmem:[%s299 + $0x4] sm:$0xf] %vm411, %v396
      %414 = vst.msk [vmem:[%s299 + $0x8] sm:$0xf] %vm411, %v397
      %415 = vst.msk [vmem:[%s299 + $0xc] sm:$0xf] %vm411, %v398
      %416 = vst.msk [vmem:[%s299 + $0x10] sm:$0xf] %vm411, %v399
      %417 = vst.msk [vmem:[%s299 + $0x14] sm:$0xf] %vm411, %v400
      %418 = vst.msk [vmem:[%s299 + $0x18] sm:$0xf] %vm411, %v401
      %419 = vst.msk [vmem:[%s299 + $0x1c] sm:$0xf] %vm411, %v402
      %s420 = smul.u32 8, %s20
      %p421 = scmp.lt.s32.totalorder %s19, 1
      %s422 = scalar_select %p421, %s19, 1
      %p423 = scmp.lt.s32.totalorder %s420, 7
      %s424 = scalar_select %p423, %s420, 7
      %s425 = smul.addr %s422, 8
      %s426 = sadd.s32 %s424, %s425
      %s427 = smul.addr %s426, 4
      %s428 = scalar_lea.vmem %s4, %s427
      // Predicated region
      $region37: #{csp_dark_forward.23} parent=35 // pred_check
        %p429 = pneg %p155
      $region38: #{csp_dark_forward.23} parent=35 // pred_check_branch
        %431 = sbr.rel (%p429) target = $region40
      $region39: #{csp_dark_forward.23} parent=35 // pred_region
        %s432 = smul.u32 8, %s20
      $region40: #{csp_dark_forward.23} parent=35 // pred_fallthru
        _
    $region36: #{csp_dark_forward.23} parent=5 // pred_fallthru
      _
    %p433 = scmp.le.s32.totalorder 2, %s10
    // Predicated region
    $region41: #{csp_dark_forward.23} parent=5 // pred_check
      %p434 = pneg %p433
    $region42: #{csp_dark_forward.23} parent=5 // pred_check_branch
      %436 = sbr.rel (%p434) target = $region44
    $region43: #{csp_dark_forward.23} parent=5 // pred_region
      %s437 = ssub.s32 %s10, 2
      // Predicated region
      $region45: #{csp_dark_forward.23} parent=43 // pred_check
        %p438 = pneg %p161
      $region46: #{csp_dark_forward.23} parent=43 // pred_check_branch
        %440 = sbr.rel (%p438) target = $region48
      $region47: #{csp_dark_forward.23} parent=43 // pred_region
        %s441 = smul.u32 8, %s22
        %p442 = scmp.lt.s32.totalorder %s21, 1
        %s443 = scalar_select %p442, %s21, 1
        %p444 = scmp.lt.s32.totalorder %s441, 7
        %s445 = scalar_select %p444, %s441, 7
        %s446 = smul.addr %s443, 8
        %s447 = sadd.s32 %s445, %s446
        %s448 = smul.addr %s447, 4
        %s449 = scalar_lea.vmem %s4, %s448
      $region48: #{csp_dark_forward.23} parent=43 // pred_fallthru
        _
    $region44: #{csp_dark_forward.23} parent=5 // pred_fallthru
      _
  $region6: #{csp_dark_forward.23} parent=0 // loop_footer
    %s14 = sadd.s32 1, %s10
  $region7: #{csp_dark_forward.23} parent=0 // loop_footer_branch
    %9 = sbr.rel target = $region3
  $region8: #{csp_dark_forward.23} parent=0 // loop_exit
    _

// kernel: csp_dark_forward.27
$region0: #{csp_dark_forward.27}
  #allocation0 [shape = 'u32[]', space=smem, size = 0x4, offset = 0x4, fixed_abs, tag = 'smem constant byte address 0x4 - core index']
  #allocation1 [shape = 'u32[144,128]{1,0:T(1,128)}', space=vmem, size = 0x12000, scoped, tag = 'internal scratch']
  %s0 = inlined_call_operand.vmem [shape: bf16[2,64,8], index: 0, kind: input, shape index: {}]
  %s1 = inlined_call_operand.vmem [shape: f32[2,1,8], index: 1, kind: input, shape index: {}]
  %s2 = inlined_call_operand.vmem [shape: f32[2,1,8], index: 2, kind: input, shape index: {}]
  %s3 = inlined_call_operand.vmem [shape: f32[2,64,8], index: 3, kind: output, shape index: {}]
  %s4 = sld [smem:[#allocation0]]
  $region45: #{csp_dark_forward.27} parent=0
    _
  %s6 = ssub.s32 1, %s4
  %s7 = scalar_select 0, %s6, %s4
  loop: start=0, step=1, limit=4
  $region2: #{csp_dark_forward.27} parent=0 // loop_pre_header
    _
  $region3: #{csp_dark_forward.27} parent=0 // loop_header
    %s9 = sphi 0, %s13
    %p10 = scmp.ge.s32.totalorder %s9, 4
    %s16 = sphi 0, %s28
    %s17 = sphi 0, %s24
    %s18 = sphi 0, %s16
    %s19 = sphi 0, %s17
    %s20 = sphi 0, %s18
    %s21 = sphi 0, %s19
    %s33 = sphi 0, %s35
    %s36 = sphi 0, %s33
    %s37 = sphi 0, %s36
    %s53 = sphi 0, %s37
    %s59 = sphi 0, %s61
    %s62 = sphi 0, %s59
    %s63 = sphi 0, %s62
    %s79 = sphi 0, %s63
    %s85 = sphi 0, %s87
    %s88 = sphi 0, %s85
    %s89 = sphi 0, %s88
    %s105 = sphi 0, %s89
    %s113 = sphi 0, %s115
    %s116 = sphi 0, %s113
    %s117 = sphi 0, %s116
    %s133 = sphi 0, %s117
  $region4: #{csp_dark_forward.27} parent=0 // loop_header_branch
    %12 = sbr.rel (%p10) target = $region8
  $region5: #{csp_dark_forward.27} parent=0 // loop_body
    %s14 = ssub.s32 %s9, 1
    %s15 = ssub.s32 %s9, 2
    %s22 = sadd.s32 1, %s17
    %p23 = scmp.ge.s32.totalorder %s22, 1
    %s24 = scalar_select %p23, 0, %s22
    %s25 = sadd.s32 1, %s16
    %s26 = scalar_select %p23, %s25, %s16
    %p27 = scmp.ge.s32.totalorder %s26, 2
    %s28 = scalar_select %p27, 0, %s26
    %s29 = ssub.s32 %s16, %s28
    %s30 = ssub.s32 %s17, %s24
    %s31 = sor.u32 %s29, %s30
    %p32 = scmp.eq.s32.totalorder %s31, 0
    %s34 = sadd.s32 %s33, 1
    %s35 = scalar_select %p32, %s33, %s34
    %p38 = pneg %p32
    %p39 = scmp.eq.s32.totalorder %s9, 1
    %p40 = por %p38, %p39
    %p41 = scmp.ne.s32.totalorder %s33, %s36
    %p42 = scmp.eq.s32.totalorder %s9, 0
    %p43 = por %p41, %p42
    %p44 = scmp.ne.s32.totalorder %s33, %s36
    %p45 = scmp.eq.s32.totalorder %s14, 1
    %p46 = por %p44, %p45
    %p47 = scmp.ne.s32.totalorder %s36, %s37
    %p48 = scmp.eq.s32.totalorder %s14, 0
    %p49 = por %p47, %p48
    %p50 = scmp.ne.s32.totalorder %s36, %s37
    %p51 = scmp.eq.s32.totalorder %s15, 1
    %p52 = por %p50, %p51
    %p54 = scmp.ne.s32.totalorder %s37, %s53
    %p55 = scmp.eq.s32.totalorder %s15, 0
    %p56 = por %p54, %p55
    %s57 = ssub.s32 %s16, %s28
    %p58 = scmp.eq.s32.totalorder %s57, 0
    %s60 = sadd.s32 %s59, 1
    %s61 = scalar_select %p58, %s59, %s60
    %p64 = pneg %p58
    %p65 = scmp.eq.s32.totalorder %s9, 1
    %p66 = por %p64, %p65
    %p67 = scmp.ne.s32.totalorder %s59, %s62
    %p68 = scmp.eq.s32.totalorder %s9, 0
    %p69 = por %p67, %p68
    %p70 = scmp.ne.s32.totalorder %s59, %s62
    %p71 = scmp.eq.s32.totalorder %s14, 1
    %p72 = por %p70, %p71
    %p73 = scmp.ne.s32.totalorder %s62, %s63
    %p74 = scmp.eq.s32.totalorder %s14, 0
    %p75 = por %p73, %p74
    %p76 = scmp.ne.s32.totalorder %s62, %s63
    %p77 = scmp.eq.s32.totalorder %s15, 1
    %p78 = por %p76, %p77
    %p80 = scmp.ne.s32.totalorder %s63, %s79
    %p81 = scmp.eq.s32.totalorder %s15, 0
    %p82 = por %p80, %p81
    %s83 = ssub.s32 %s16, %s28
    %p84 = scmp.eq.s32.totalorder %s83, 0
    %s86 = sadd.s32 %s85, 1
    %s87 = scalar_select %p84, %s85, %s86
    %p90 = pneg %p84
    %p91 = scmp.eq.s32.totalorder %s9, 1
    %p92 = por %p90, %p91
    %p93 = scmp.ne.s32.totalorder %s85, %s88
    %p94 = scmp.eq.s32.totalorder %s9, 0
    %p95 = por %p93, %p94
    %p96 = scmp.ne.s32.totalorder %s85, %s88
    %p97 = scmp.eq.s32.totalorder %s14, 1
    %p98 = por %p96, %p97
    %p99 = scmp.ne.s32.totalorder %s88, %s89
    %p100 = scmp.eq.s32.totalorder %s14, 0
    %p101 = por %p99, %p100
    %p102 = scmp.ne.s32.totalorder %s88, %s89
    %p103 = scmp.eq.s32.totalorder %s15, 1
    %p104 = por %p102, %p103
    %p106 = scmp.ne.s32.totalorder %s89, %s105
    %p107 = scmp.eq.s32.totalorder %s15, 0
    %p108 = por %p106, %p107
    %s109 = ssub.s32 %s16, %s28
    %s110 = ssub.s32 %s17, %s24
    %s111 = sor.u32 %s109, %s110
    %p112 = scmp.eq.s32.totalorder %s111, 0
    %s114 = sadd.s32 %s113, 1
    %s115 = scalar_select %p112, %s113, %s114
    %p118 = pneg %p112
    %p119 = scmp.eq.s32.totalorder %s9, 1
    %p120 = por %p118, %p119
    %p121 = scmp.ne.s32.totalorder %s113, %s116
    %p122 = scmp.eq.s32.totalorder %s9, 0
    %p123 = por %p121, %p122
    %p124 = scmp.ne.s32.totalorder %s113, %s116
    %p125 = scmp.eq.s32.totalorder %s14, 1
    %p126 = por %p124, %p125
    %p127 = scmp.ne.s32.totalorder %s116, %s117
    %p128 = scmp.eq.s32.totalorder %s14, 0
    %p129 = por %p127, %p128
    %p130 = scmp.ne.s32.totalorder %s116, %s117
    %p131 = scmp.eq.s32.totalorder %s15, 1
    %p132 = por %p130, %p131
    %p134 = scmp.ne.s32.totalorder %s117, %s133
    %p135 = scmp.eq.s32.totalorder %s15, 0
    %p136 = por %p134, %p135
    %p137 = scmp.le.s32.totalorder 1, %s9
    %p138 = scmp.lt.s32.totalorder %s9, 3
    %p139 = pnand %p137, %p138
    %p140 = pneg %p139
    // Predicated region
    $region9: #{csp_dark_forward.27} parent=5 // pred_check
      _
    $region10: #{csp_dark_forward.27} parent=5 // pred_check_branch
      %142 = sbr.rel (%p139) target = $region12
    $region11: #{csp_dark_forward.27} parent=5 // pred_region
      %s143 = ssub.s32 %s9, 1
    $region12: #{csp_dark_forward.27} parent=5 // pred_fallthru
      _
    %p144 = scmp.lt.s32.totalorder %s9, 2
    // Predicated region
    $region13: #{csp_dark_forward.27} parent=5 // pred_check
      %p145 = pneg %p144
    $region14: #{csp_dark_forward.27} parent=5 // pred_check_branch
      %147 = sbr.rel (%p145) target = $region16
    $region15: #{csp_dark_forward.27} parent=5 // pred_region
      // Predicated region
      $region17: #{csp_dark_forward.27} parent=15 // pred_check
        %p148 = pneg %p43
      $region18: #{csp_dark_forward.27} parent=15 // pred_check_branch
        %150 = sbr.rel (%p148) target = $region20
      $region19: #{csp_dark_forward.27} parent=15 // pred_region
        %s151 = smul.u32 8, %s17
        %p152 = scmp.lt.s32.totalorder %s16, 1
        %s153 = scalar_select %p152, %s16, 1
        %p154 = scmp.lt.s32.totalorder %s151, 7
        %s155 = scalar_select %p154, %s151, 7
        %s156 = smul.addr %s153, 8
        %s157 = sadd.s32 %s155, %s156
        %s158 = smul.addr %s157, 4
        %s159 = scalar_lea.vmem %s0, %s158
        %s160 = smul.u32 8, %s17
      $region20: #{csp_dark_forward.27} parent=15 // pred_fallthru
        _
      // Predicated region
      $region21: #{csp_dark_forward.27} parent=15 // pred_check
        %p161 = pneg %p69
      $region22: #{csp_dark_forward.27} parent=15 // pred_check_branch
        %163 = sbr.rel (%p161) target = $region24
      $region23: #{csp_dark_forward.27} parent=15 // pred_region
        %p164 = scmp.lt.s32.totalorder %s16, 1
        %s165 = scalar_select %p164, %s16, 1
        %s166 = scalar_lea.vmem %s1, %s165
      $region24: #{csp_dark_forward.27} parent=15 // pred_fallthru
        _
      // Predicated region
      $region25: #{csp_dark_forward.27} parent=15 // pred_check
        %p167 = pneg %p95
      $region26: #{csp_dark_forward.27} parent=15 // pred_check_branch
        %169 = sbr.rel (%p167) target = $region28
      $region27: #{csp_dark_forward.27} parent=15 // pred_region
        %p170 = scmp.lt.s32.totalorder %s16, 1
        %s171 = scalar_select %p170, %s16, 1
        %s172 = scalar_lea.vmem %s2, %s171
      $region28: #{csp_dark_forward.27} parent=15 // pred_fallthru
        _
    $region16: #{csp_dark_forward.27} parent=5 // pred_fallthru
      _
    %p173 = scmp.le.s32.totalorder 1, %s9
    %p174 = scmp.lt.s32.totalorder %s9, 3
    %p175 = pnand %p173, %p174
    %p176 = pneg %p175
    // Predicated region
    $region29: #{csp_dark_forward.27} parent=5 // pred_check
      _
    $region30: #{csp_dark_forward.27} parent=5 // pred_check_branch
      %178 = sbr.rel (%p175) target = $region32
    $region31: #{csp_dark_forward.27} parent=5 // pred_region
      %s179 = ssub.s32 %s9, 1
      %s180 = smul.u32 8, %s19
      %p181 = scmp.lt.s32.totalorder %s18, 1
      %s182 = scalar_select %p181, %s18, 1
      %p183 = scmp.lt.s32.totalorder %s180, 7
      %s184 = scalar_select %p183, %s180, 7
      %s185 = smul.addr %s182, 8
      %s186 = sadd.s32 %s184, %s185
      %s187 = smul.addr %s186, 4
      %s188 = scalar_lea.vmem %s0, %s187
      %p189 = pneg %p49
      %p190 = pneg %p46
      %p191 = scmp.lt.s32.totalorder %s18, 1
      %s192 = scalar_select %p191, %s18, 1
      %s193 = scalar_lea.vmem %s1, %s192
      %p194 = pneg %p75
      %p195 = pneg %p72
      %p196 = scmp.lt.s32.totalorder %s18, 1
      %s197 = scalar_select %p196, %s18, 1
      %s198 = scalar_lea.vmem %s2, %s197
      %p199 = pneg %p101
      %p200 = pneg %p98
      %p201 = pneg %p129
      %p202 = pneg %p126
      %s203 = smul.u32 8, %s19
      %p204 = scmp.lt.s32.totalorder %s18, 1
      %s205 = scalar_select %p204, %s18, 1
      %p206 = scmp.lt.s32.totalorder %s203, 7
      %s207 = scalar_select %p206, %s203, 7
      %s208 = smul.addr %s205, 8
      %s209 = sadd.s32 %s207, %s208
      %s210 = smul.addr %s209, 8
      %s211 = scalar_lea.vmem %s3, %s210
      %s212 = smul.u32 8, %s19
      %p213 = scmp.lt.s32.totalorder %s18, 1
      %s214 = scalar_select %p213, %s18, 1
      %p215 = scmp.lt.s32.totalorder %s212, 7
      %s216 = scalar_select %p215, %s212, 7
      %s217 = smul.addr %s214, 8
      %s218 = sadd.s32 %s216, %s217
      %s219 = smul.addr %s218, 4
      %s220 = scalar_lea.vmem %s0, %s219
      %s221 = smul.u32 8, %s19
      %p222 = scmp.lt.s32.totalorder %s18, 1
      %s223 = scalar_select %p222, %s18, 1
      %s224 = scalar_lea.vmem %s1, %s223
      %p225 = scmp.lt.s32.totalorder %s18, 1
      %s226 = scalar_select %p225, %s18, 1
      %s227 = scalar_lea.vmem %s2, %s226
      %s228 = smul.u32 8, %s19
      %p229 = scmp.lt.s32.totalorder %s18, 1
      %s230 = scalar_select %p229, %s18, 1
      %p231 = scmp.lt.s32.totalorder %s228, 7
      %s232 = scalar_select %p231, %s228, 7
      %s233 = smul.addr %s230, 8
      %s234 = sadd.s32 %s232, %s233
      %s235 = smul.addr %s234, 8
      %s236 = scalar_lea.vmem %s3, %s235
      %s237 = smul.u32 8, %s19
      %v238 = vld [vmem:[%s220] sm:$0xf]
      %v239 = vld [vmem:[%s220 + $0x4] sm:$0xf]
      %v240 = vld [vmem:[%s220 + $0x8] sm:$0xf]
      %v241 = vld [vmem:[%s220 + $0xc] sm:$0xf]
      %v242 = vld [vmem:[%s220 + $0x10] sm:$0xf]
      %v243 = vld [vmem:[%s220 + $0x14] sm:$0xf]
      %v244 = vld [vmem:[%s220 + $0x18] sm:$0xf]
      %v245 = vld [vmem:[%s220 + $0x1c] sm:$0xf]
      %v246 = vunpack.c.l.bf16 %v238
      %v247 = vunpack.c.l.bf16 %v239
      %v248 = vunpack.c.l.bf16 %v240
      %v249 = vunpack.c.l.bf16 %v241
      %v250 = vunpack.c.l.bf16 %v242
      %v251 = vunpack.c.l.bf16 %v243
      %v252 = vunpack.c.l.bf16 %v244
      %v253 = vunpack.c.l.bf16 %v245
      %v254 = vld [vmem:[%s224] sm:$0x1]
      %v256 = vlaneseq
      %v257 = vshrl.u32 %v256, 7
      %v258 = vsub.s32 0, %v257
      %v259 = vrot.slane %v254, %v258
      %v261 = vmul.f32 %v246, %v259
      %v262 = vmul.f32 %v247, %v259
      %v263 = vmul.f32 %v248, %v259
      %v264 = vmul.f32 %v249, %v259
      %v265 = vmul.f32 %v250, %v259
      %v266 = vmul.f32 %v251, %v259
      %v267 = vmul.f32 %v252, %v259
      %v268 = vmul.f32 %v253, %v259
      %v269 = vld [vmem:[%s227] sm:$0x1]
      %v271 = vlaneseq
      %v272 = vshrl.u32 %v271, 7
      %v273 = vsub.s32 0, %v272
      %v274 = vrot.slane %v269, %v273
      %v276 = vadd.f32 %v261, %v274
      %v277 = vadd.f32 %v262, %v274
      %v278 = vadd.f32 %v263, %v274
      %v279 = vadd.f32 %v264, %v274
      %v280 = vadd.f32 %v265, %v274
      %v281 = vadd.f32 %v266, %v274
      %v282 = vadd.f32 %v267, %v274
      %v283 = vadd.f32 %v268, %v274
      %v284 = vmax.f32 %v276, 0.0
      %v285 = vmax.f32 %v277, 0.0
      %v286 = vmax.f32 %v278, 0.0
      %v287 = vmax.f32 %v279, 0.0
      %v288 = vmax.f32 %v280, 0.0
      %v289 = vmax.f32 %v281, 0.0
      %v290 = vmax.f32 %v282, 0.0
      %v291 = vmax.f32 %v283, 0.0
      %vm292 = vcmask 64512
      %293 = vst.msk [vmem:[%s236] sm:$0xff] %vm292, %v284
      %294 = vst.msk [vmem:[%s236 + $0x8] sm:$0xff] %vm292, %v285
      %295 = vst.msk [vmem:[%s236 + $0x10] sm:$0xff] %vm292, %v286
      %296 = vst.msk [vmem:[%s236 + $0x18] sm:$0xff] %vm292, %v287
      %297 = vst.msk [vmem:[%s236 + $0x20] sm:$0xff] %vm292, %v288
      %298 = vst.msk [vmem:[%s236 + $0x28] sm:$0xff] %vm292, %v289
      %299 = vst.msk [vmem:[%s236 + $0x30] sm:$0xff] %vm292, %v290
      %300 = vst.msk [vmem:[%s236 + $0x38] sm:$0xff] %vm292, %v291
      %s301 = smul.u32 8, %s19
      %p302 = scmp.lt.s32.totalorder %s18, 1
      %s303 = scalar_select %p302, %s18, 1
      %p304 = scmp.lt.s32.totalorder %s301, 7
      %s305 = scalar_select %p304, %s301, 7
      %s306 = smul.addr %s303, 8
      %s307 = sadd.s32 %s305, %s306
      %s308 = smul.addr %s307, 8
      %s309 = scalar_lea.vmem %s3, %s308
      // Predicated region
      $region33: #{csp_dark_forward.27} parent=31 // pred_check
        %p310 = pneg %p126
      $region34: #{csp_dark_forward.27} parent=31 // pred_check_branch
        %312 = sbr.rel (%p310) target = $region36
      $region35: #{csp_dark_forward.27} parent=31 // pred_region
        %s313 = smul.u32 8, %s19
      $region36: #{csp_dark_forward.27} parent=31 // pred_fallthru
        _
    $region32: #{csp_dark_forward.27} parent=5 // pred_fallthru
      _
    %p314 = scmp.le.s32.totalorder 2, %s9
    // Predicated region
    $region37: #{csp_dark_forward.27} parent=5 // pred_check
      %p315 = pneg %p314
    $region38: #{csp_dark_forward.27} parent=5 // pred_check_branch
      %317 = sbr.rel (%p315) target = $region40
    $region39: #{csp_dark_forward.27} parent=5 // pred_region
      %s318 = ssub.s32 %s9, 2
      // Predicated region
      $region41: #{csp_dark_forward.27} parent=39 // pred_check
        %p319 = pneg %p132
      $region42: #{csp_dark_forward.27} parent=39 // pred_check_branch
        %321 = sbr.rel (%p319) target = $region44
      $region43: #{csp_dark_forward.27} parent=39 // pred_region
        %s322 = smul.u32 8, %s21
        %p323 = scmp.lt.s32.totalorder %s20, 1
        %s324 = scalar_select %p323, %s20, 1
        %p325 = scmp.lt.s32.totalorder %s322, 7
        %s326 = scalar_select %p325, %s322, 7
        %s327 = smul.addr %s324, 8
        %s328 = sadd.s32 %s326, %s327
        %s329 = smul.addr %s328, 8
        %s330 = scalar_lea.vmem %s3, %s329
      $region44: #{csp_dark_forward.27} parent=39 // pred_fallthru
        _
    $region40: #{csp_dark_forward.27} parent=5 // pred_fallthru
      _
  $region6: #{csp_dark_forward.27} parent=0 // loop_footer
    %s13 = sadd.s32 1, %s9
  $region7: #{csp_dark_forward.27} parent=0 // loop_footer_branch
    %8 = sbr.rel target = $region3
  $region8: #{csp_dark_forward.27} parent=0 // loop_exit
    _

// kernel: csp_dark_forward.26
$region0: #{csp_dark_forward.26}
  #allocation0 [shape = 'u32[]', space=smem, size = 0x4, offset = 0x4, fixed_abs, tag = 'smem constant byte address 0x4 - core index']
  #allocation1 [shape = 'u32[144,128]{1,0:T(1,128)}', space=vmem, size = 0x12000, scoped, tag = 'internal scratch']
  %s0 = inlined_call_operand.vmem [shape: bf16[2,64,4], index: 0, kind: input, shape index: {}]
  %s1 = inlined_call_operand.vmem [shape: bf16[4,8], index: 1, kind: input, shape index: {}]
  %s2 = inlined_call_operand.vmem [shape: f32[2,1,4], index: 2, kind: input, shape index: {}]
  %s3 = inlined_call_operand.vmem [shape: f32[2,1,4], index: 3, kind: input, shape index: {}]
  %s4 = inlined_call_operand.vmem [shape: bf16[2,64,4], index: 4, kind: input, shape index: {}]
  %s5 = inlined_call_operand.vmem [shape: bf16[4,8], index: 5, kind: input, shape index: {}]
  %s6 = inlined_call_operand.vmem [shape: f32[2,1,4], index: 6, kind: input, shape index: {}]
  %s7 = inlined_call_operand.vmem [shape: f32[2,1,4], index: 7, kind: input, shape index: {}]
  %s8 = inlined_call_operand.vmem [shape: bf16[2,64,8], index: 8, kind: output, shape index: {0}]
  %s9 = inlined_call_operand.vmem [shape: f32[2,1,8], index: 9, kind: output, shape index: {1}]
  %s10 = inlined_call_operand.vmem [shape: f32[2,1,8], index: 10, kind: output, shape index: {2}]
  %11 = xla_tuple %s8, %s9, %s10
  %s12 = sld [smem:[#allocation0]]
  $region85: #{csp_dark_forward.26} parent=0
    _
  %s14 = ssub.s32 1, %s12
  %s15 = scalar_select 0, %s14, %s12
  loop: start=0, step=1, limit=4
  $region2: #{csp_dark_forward.26} parent=0 // loop_pre_header
    _
  $region3: #{csp_dark_forward.26} parent=0 // loop_header
    %s17 = sphi 0, %s21
    %p18 = scmp.ge.s32.totalorder %s17, 4
    %s24 = sphi 0, %s36
    %s25 = sphi 0, %s32
    %s26 = sphi 0, %s24
    %s27 = sphi 0, %s25
    %s28 = sphi 0, %s26
    %s29 = sphi 0, %s27
    %s41 = sphi 0, %s43
    %s44 = sphi 0, %s41
    %s45 = sphi 0, %s44
    %s61 = sphi 0, %s45
    %s65 = sphi 0, %s65
    %s67 = sphi 0, %s65
    %s68 = sphi 0, %s67
    %s82 = sphi 0, %s68
    %s88 = sphi 0, %s90
    %s91 = sphi 0, %s88
    %s92 = sphi 0, %s91
    %s108 = sphi 0, %s92
    %s114 = sphi 0, %s116
    %s117 = sphi 0, %s114
    %s118 = sphi 0, %s117
    %s134 = sphi 0, %s118
    %s142 = sphi 0, %s144
    %s145 = sphi 0, %s142
    %s146 = sphi 0, %s145
    %s162 = sphi 0, %s146
    %s166 = sphi 0, %s166
    %s168 = sphi 0, %s166
    %s169 = sphi 0, %s168
    %s183 = sphi 0, %s169
    %s189 = sphi 0, %s191
    %s192 = sphi 0, %s189
    %s193 = sphi 0, %s192
    %s209 = sphi 0, %s193
    %s215 = sphi 0, %s217
    %s218 = sphi 0, %s215
    %s219 = sphi 0, %s218
    %s235 = sphi 0, %s219
    %s243 = sphi 0, %s245
    %s246 = sphi 0, %s243
    %s247 = sphi 0, %s246
    %s263 = sphi 0, %s247
    %s269 = sphi 0, %s271
    %s272 = sphi 0, %s269
    %s273 = sphi 0, %s272
    %s289 = sphi 0, %s273
    %s295 = sphi 0, %s297
    %s298 = sphi 0, %s295
    %s299 = sphi 0, %s298
    %s315 = sphi 0, %s299
  $region4: #{csp_dark_forward.26} parent=0 // loop_header_branch
    %20 = sbr.rel (%p18) target = $region8
  $region5: #{csp_dark_forward.26} parent=0 // loop_body
    %s22 = ssub.s32 %s17, 1
    %s23 = ssub.s32 %s17, 2
    %s30 = sadd.s32 1, %s25
    %p31 = scmp.ge.s32.totalorder %s30, 1
    %s32 = scalar_select %p31, 0, %s30
    %s33 = sadd.s32 1, %s24
    %s34 = scalar_select %p31, %s33, %s24
    %p35 = scmp.ge.s32.totalorder %s34, 2
    %s36 = scalar_select %p35, 0, %s34
    %s37 = ssub.s32 %s24, %s36
    %s38 = ssub.s32 %s25, %s32
    %s39 = sor.u32 %s37, %s38
    %p40 = scmp.eq.s32.totalorder %s39, 0
    %s42 = sadd.s32 %s41, 1
    %s43 = scalar_select %p40, %s41, %s42
    %p46 = pneg %p40
    %p47 = scmp.eq.s32.totalorder %s17, 1
    %p48 = por %p46, %p47
    %p49 = scmp.ne.s32.totalorder %s41, %s44
    %p50 = scmp.eq.s32.totalorder %s17, 0
    %p51 = por %p49, %p50
    %p52 = scmp.ne.s32.totalorder %s41, %s44
    %p53 = scmp.eq.s32.totalorder %s22, 1
    %p54 = por %p52, %p53
    %p55 = scmp.ne.s32.totalorder %s44, %s45
    %p56 = scmp.eq.s32.totalorder %s22, 0
    %p57 = por %p55, %p56
    %p58 = scmp.ne.s32.totalorder %s44, %s45
    %p59 = scmp.eq.s32.totalorder %s23, 1
    %p60 = por %p58, %p59
    %p62 = scmp.ne.s32.totalorder %s45, %s61
    %p63 = scmp.eq.s32.totalorder %s23, 0
    %p64 = por %p62, %p63
    %s66 = sadd.s32 %s65, 1
    %p69 = scmp.eq.s32.totalorder %s17, 1
    %p70 = scmp.ne.s32.totalorder %s65, %s67
    %p71 = scmp.eq.s32.totalorder %s17, 0
    %p72 = por %p70, %p71
    %p73 = scmp.ne.s32.totalorder %s65, %s67
    %p74 = scmp.eq.s32.totalorder %s22, 1
    %p75 = por %p73, %p74
    %p76 = scmp.ne.s32.totalorder %s67, %s68
    %p77 = scmp.eq.s32.totalorder %s22, 0
    %p78 = por %p76, %p77
    %p79 = scmp.ne.s32.totalorder %s67, %s68
    %p80 = scmp.eq.s32.totalorder %s23, 1
    %p81 = por %p79, %p80
    %p83 = scmp.ne.s32.totalorder %s68, %s82
    %p84 = scmp.eq.s32.totalorder %s23, 0
    %p85 = por %p83, %p84
    %s86 = ssub.s32 %s24, %s36
    %p87 = scmp.eq.s32.totalorder %s86, 0
    %s89 = sadd.s32 %s88, 1
    %s90 = scalar_select %p87, %s88, %s89
    %p93 = pneg %p87
    %p94 = scmp.eq.s32.totalorder %s17, 1
    %p95 = por %p93, %p94
    %p96 = scmp.ne.s32.totalorder %s88, %s91
    %p97 = scmp.eq.s32.totalorder %s17, 0
    %p98 = por %p96, %p97
    %p99 = scmp.ne.s32.totalorder %s88, %s91
    %p100 = scmp.eq.s32.totalorder %s22, 1
    %p101 = por %p99, %p100
    %p102 = scmp.ne.s32.totalorder %s91, %s92
    %p103 = scmp.eq.s32.totalorder %s22, 0
    %p104 = por %p102, %p103
    %p105 = scmp.ne.s32.totalorder %s91, %s92
    %p106 = scmp.eq.s32.totalorder %s23, 1
    %p107 = por %p105, %p106
    %p109 = scmp.ne.s32.totalorder %s92, %s108
    %p110 = scmp.eq.s32.totalorder %s23, 0
    %p111 = por %p109, %p110
    %s112 = ssub.s32 %s24, %s36
    %p113 = scmp.eq.s32.totalorder %s112, 0
    %s115 = sadd.s32 %s114, 1
    %s116 = scalar_select %p113, %s114, %s115
    %p119 = pneg %p113
    %p120 = scmp.eq.s32.totalorder %s17, 1
    %p121 = por %p119, %p120
    %p122 = scmp.ne.s32.totalorder %s114, %s117
    %p123 = scmp.eq.s32.totalorder %s17, 0
    %p124 = por %p122, %p123
    %p125 = scmp.ne.s32.totalorder %s114, %s117
    %p126 = scmp.eq.s32.totalorder %s22, 1
    %p127 = por %p125, %p126
    %p128 = scmp.ne.s32.totalorder %s117, %s118
    %p129 = scmp.eq.s32.totalorder %s22, 0
    %p130 = por %p128, %p129
    %p131 = scmp.ne.s32.totalorder %s117, %s118
    %p132 = scmp.eq.s32.totalorder %s23, 1
    %p133 = por %p131, %p132
    %p135 = scmp.ne.s32.totalorder %s118, %s134
    %p136 = scmp.eq.s32.totalorder %s23, 0
    %p137 = por %p135, %p136
    %s138 = ssub.s32 %s24, %s36
    %s139 = ssub.s32 %s25, %s32
    %s140 = sor.u32 %s138, %s139
    %p141 = scmp.eq.s32.totalorder %s140, 0
    %s143 = sadd.s32 %s142, 1
    %s144 = scalar_select %p141, %s142, %s143
    %p147 = pneg %p141
    %p148 = scmp.eq.s32.totalorder %s17, 1
    %p149 = por %p147, %p148
    %p150 = scmp.ne.s32.totalorder %s142, %s145
    %p151 = scmp.eq.s32.totalorder %s17, 0
    %p152 = por %p150, %p151
    %p153 = scmp.ne.s32.totalorder %s142, %s145
    %p154 = scmp.eq.s32.totalorder %s22, 1
    %p155 = por %p153, %p154
    %p156 = scmp.ne.s32.totalorder %s145, %s146
    %p157 = scmp.eq.s32.totalorder %s22, 0
    %p158 = por %p156, %p157
    %p159 = scmp.ne.s32.totalorder %s145, %s146
    %p160 = scmp.eq.s32.totalorder %s23, 1
    %p161 = por %p159, %p160
    %p163 = scmp.ne.s32.totalorder %s146, %s162
    %p164 = scmp.eq.s32.totalorder %s23, 0
    %p165 = por %p163, %p164
    %s167 = sadd.s32 %s166, 1
    %p170 = scmp.eq.s32.totalorder %s17, 1
    %p171 = scmp.ne.s32.totalorder %s166, %s168
    %p172 = scmp.eq.s32.totalorder %s17, 0
    %p173 = por %p171, %p172
    %p174 = scmp.ne.s32.totalorder %s166, %s168
    %p175 = scmp.eq.s32.totalorder %s22, 1
    %p176 = por %p174, %p175
    %p177 = scmp.ne.s32.totalorder %s168, %s169
    %p178 = scmp.eq.s32.totalorder %s22, 0
    %p179 = por %p177, %p178
    %p180 = scmp.ne.s32.totalorder %s168, %s169
    %p181 = scmp.eq.s32.totalorder %s23, 1
    %p182 = por %p180, %p181
    %p184 = scmp.ne.s32.totalorder %s169, %s183
    %p185 = scmp.eq.s32.totalorder %s23, 0
    %p186 = por %p184, %p185
    %s187 = ssub.s32 %s24, %s36
    %p188 = scmp.eq.s32.totalorder %s187, 0
    %s190 = sadd.s32 %s189, 1
    %s191 = scalar_select %p188, %s189, %s190
    %p194 = pneg %p188
    %p195 = scmp.eq.s32.totalorder %s17, 1
    %p196 = por %p194, %p195
    %p197 = scmp.ne.s32.totalorder %s189, %s192
    %p198 = scmp.eq.s32.totalorder %s17, 0
    %p199 = por %p197, %p198
    %p200 = scmp.ne.s32.totalorder %s189, %s192
    %p201 = scmp.eq.s32.totalorder %s22, 1
    %p202 = por %p200, %p201
    %p203 = scmp.ne.s32.totalorder %s192, %s193
    %p204 = scmp.eq.s32.totalorder %s22, 0
    %p205 = por %p203, %p204
    %p206 = scmp.ne.s32.totalorder %s192, %s193
    %p207 = scmp.eq.s32.totalorder %s23, 1
    %p208 = por %p206, %p207
    %p210 = scmp.ne.s32.totalorder %s193, %s209
    %p211 = scmp.eq.s32.totalorder %s23, 0
    %p212 = por %p210, %p211
    %s213 = ssub.s32 %s24, %s36
    %p214 = scmp.eq.s32.totalorder %s213, 0
    %s216 = sadd.s32 %s215, 1
    %s217 = scalar_select %p214, %s215, %s216
    %p220 = pneg %p214
    %p221 = scmp.eq.s32.totalorder %s17, 1
    %p222 = por %p220, %p221
    %p223 = scmp.ne.s32.totalorder %s215, %s218
    %p224 = scmp.eq.s32.totalorder %s17, 0
    %p225 = por %p223, %p224
    %p226 = scmp.ne.s32.totalorder %s215, %s218
    %p227 = scmp.eq.s32.totalorder %s22, 1
    %p228 = por %p226, %p227
    %p229 = scmp.ne.s32.totalorder %s218, %s219
    %p230 = scmp.eq.s32.totalorder %s22, 0
    %p231 = por %p229, %p230
    %p232 = scmp.ne.s32.totalorder %s218, %s219
    %p233 = scmp.eq.s32.totalorder %s23, 1
    %p234 = por %p232, %p233
    %p236 = scmp.ne.s32.totalorder %s219, %s235
    %p237 = scmp.eq.s32.totalorder %s23, 0
    %p238 = por %p236, %p237
    %s239 = ssub.s32 %s24, %s36
    %s240 = ssub.s32 %s25, %s32
    %s241 = sor.u32 %s239, %s240
    %p242 = scmp.eq.s32.totalorder %s241, 0
    %s244 = sadd.s32 %s243, 1
    %s245 = scalar_select %p242, %s243, %s244
    %p248 = pneg %p242
    %p249 = scmp.eq.s32.totalorder %s17, 1
    %p250 = por %p248, %p249
    %p251 = scmp.ne.s32.totalorder %s243, %s246
    %p252 = scmp.eq.s32.totalorder %s17, 0
    %p253 = por %p251, %p252
    %p254 = scmp.ne.s32.totalorder %s243, %s246
    %p255 = scmp.eq.s32.totalorder %s22, 1
    %p256 = por %p254, %p255
    %p257 = scmp.ne.s32.totalorder %s246, %s247
    %p258 = scmp.eq.s32.totalorder %s22, 0
    %p259 = por %p257, %p258
    %p260 = scmp.ne.s32.totalorder %s246, %s247
    %p261 = scmp.eq.s32.totalorder %s23, 1
    %p262 = por %p260, %p261
    %p264 = scmp.ne.s32.totalorder %s247, %s263
    %p265 = scmp.eq.s32.totalorder %s23, 0
    %p266 = por %p264, %p265
    %s267 = ssub.s32 %s24, %s36
    %p268 = scmp.eq.s32.totalorder %s267, 0
    %s270 = sadd.s32 %s269, 1
    %s271 = scalar_select %p268, %s269, %s270
    %p274 = pneg %p268
    %p275 = scmp.eq.s32.totalorder %s17, 1
    %p276 = por %p274, %p275
    %p277 = scmp.ne.s32.totalorder %s269, %s272
    %p278 = scmp.eq.s32.totalorder %s17, 0
    %p279 = por %p277, %p278
    %p280 = scmp.ne.s32.totalorder %s269, %s272
    %p281 = scmp.eq.s32.totalorder %s22, 1
    %p282 = por %p280, %p281
    %p283 = scmp.ne.s32.totalorder %s272, %s273
    %p284 = scmp.eq.s32.totalorder %s22, 0
    %p285 = por %p283, %p284
    %p286 = scmp.ne.s32.totalorder %s272, %s273
    %p287 = scmp.eq.s32.totalorder %s23, 1
    %p288 = por %p286, %p287
    %p290 = scmp.ne.s32.totalorder %s273, %s289
    %p291 = scmp.eq.s32.totalorder %s23, 0
    %p292 = por %p290, %p291
    %s293 = ssub.s32 %s24, %s36
    %p294 = scmp.eq.s32.totalorder %s293, 0
    %s296 = sadd.s32 %s295, 1
    %s297 = scalar_select %p294, %s295, %s296
    %p300 = pneg %p294
    %p301 = scmp.eq.s32.totalorder %s17, 1
    %p302 = por %p300, %p301
    %p303 = scmp.ne.s32.totalorder %s295, %s298
    %p304 = scmp.eq.s32.totalorder %s17, 0
    %p305 = por %p303, %p304
    %p306 = scmp.ne.s32.totalorder %s295, %s298
    %p307 = scmp.eq.s32.totalorder %s22, 1
    %p308 = por %p306, %p307
    %p309 = scmp.ne.s32.totalorder %s298, %s299
    %p310 = scmp.eq.s32.totalorder %s22, 0
    %p311 = por %p309, %p310
    %p312 = scmp.ne.s32.totalorder %s298, %s299
    %p313 = scmp.eq.s32.totalorder %s23, 1
    %p314 = por %p312, %p313
    %p316 = scmp.ne.s32.totalorder %s299, %s315
    %p317 = scmp.eq.s32.totalorder %s23, 0
    %p318 = por %p316, %p317
    %p319 = scmp.le.s32.totalorder 1, %s17
    %p320 = scmp.lt.s32.totalorder %s17, 3
    %p321 = pnand %p319, %p320
    %p322 = pneg %p321
    // Predicated region
    $region9: #{csp_dark_forward.26} parent=5 // pred_check
      _
    $region10: #{csp_dark_forward.26} parent=5 // pred_check_branch
      %324 = sbr.rel (%p321) target = $region12
    $region11: #{csp_dark_forward.26} parent=5 // pred_region
      %s325 = ssub.s32 %s17, 1
      // Predicated region
      $region13: #{csp_dark_forward.26} parent=11 // pred_check
        %p326 = pneg %p78
      $region14: #{csp_dark_forward.26} parent=11 // pred_check_branch
        %328 = sbr.rel (%p326) target = $region16
      $region15: #{csp_dark_forward.26} parent=11 // pred_region
        _
      $region16: #{csp_dark_forward.26} parent=11 // pred_fallthru
        _
      // Predicated region
      $region17: #{csp_dark_forward.26} parent=11 // pred_check
        %p329 = pneg %p179
      $region18: #{csp_dark_forward.26} parent=11 // pred_check_branch
        %331 = sbr.rel (%p329) target = $region20
      $region19: #{csp_dark_forward.26} parent=11 // pred_region
        _
      $region20: #{csp_dark_forward.26} parent=11 // pred_fallthru
        _
    $region12: #{csp_dark_forward.26} parent=5 // pred_fallthru
      _
    %p332 = scmp.lt.s32.totalorder %s17, 2
    // Predicated region
    $region21: #{csp_dark_forward.26} parent=5 // pred_check
      %p333 = pneg %p332
    $region22: #{csp_dark_forward.26} parent=5 // pred_check_branch
      %335 = sbr.rel (%p333) target = $region24
    $region23: #{csp_dark_forward.26} parent=5 // pred_region
      // Predicated region
      $region25: #{csp_dark_forward.26} parent=23 // pred_check
        %p336 = pneg %p51
      $region26: #{csp_dark_forward.26} parent=23 // pred_check_branch
        %338 = sbr.rel (%p336) target = $region28
      $region27: #{csp_dark_forward.26} parent=23 // pred_region
        %s339 = smul.u32 8, %s25
        %p340 = scmp.lt.s32.totalorder %s24, 1
        %s341 = scalar_select %p340, %s24, 1
        %p342 = scmp.lt.s32.totalorder %s339, 7
        %s343 = scalar_select %p342, %s339, 7
        %s344 = smul.addr %s341, 8
        %s345 = sadd.s32 %s343, %s344
        %s346 = smul.addr %s345, 4
        %s347 = scalar_lea.vmem %s0, %s346
        %s348 = smul.u32 8, %s25
      $region28: #{csp_dark_forward.26} parent=23 // pred_fallthru
        _
      // Predicated region
      $region29: #{csp_dark_forward.26} parent=23 // pred_check
        %p349 = pneg %p98
      $region30: #{csp_dark_forward.26} parent=23 // pred_check_branch
        %351 = sbr.rel (%p349) target = $region32
      $region31: #{csp_dark_forward.26} parent=23 // pred_region
        %p352 = scmp.lt.s32.totalorder %s24, 1
        %s353 = scalar_select %p352, %s24, 1
        %s354 = scalar_lea.vmem %s2, %s353
      $region32: #{csp_dark_forward.26} parent=23 // pred_fallthru
        _
      // Predicated region
      $region33: #{csp_dark_forward.26} parent=23 // pred_check
        %p355 = pneg %p124
      $region34: #{csp_dark_forward.26} parent=23 // pred_check_branch
        %357 = sbr.rel (%p355) target = $region36
      $region35: #{csp_dark_forward.26} parent=23 // pred_region
        %p358 = scmp.lt.s32.totalorder %s24, 1
        %s359 = scalar_select %p358, %s24, 1
        %s360 = scalar_lea.vmem %s3, %s359
      $region36: #{csp_dark_forward.26} parent=23 // pred_fallthru
        _
      // Predicated region
      $region37: #{csp_dark_forward.26} parent=23 // pred_check
        %p361 = pneg %p152
      $region38: #{csp_dark_forward.26} parent=23 // pred_check_branch
        %363 = sbr.rel (%p361) target = $region40
      $region39: #{csp_dark_forward.26} parent=23 // pred_region
        %s364 = smul.u32 8, %s25
        %p365 = scmp.lt.s32.totalorder %s24, 1
        %s366 = scalar_select %p365, %s24, 1
        %p367 = scmp.lt.s32.totalorder %s364, 7
        %s368 = scalar_select %p367, %s364, 7
        %s369 = smul.addr %s366, 8
        %s370 = sadd.s32 %s368, %s369
        %s371 = smul.addr %s370, 4
        %s372 = scalar_lea.vmem %s4, %s371
        %s373 = smul.u32 8, %s25
      $region40: #{csp_dark_forward.26} parent=23 // pred_fallthru
        _
      // Predicated region
      $region41: #{csp_dark_forward.26} parent=23 // pred_check
        %p374 = pneg %p199
      $region42: #{csp_dark_forward.26} parent=23 // pred_check_branch
        %376 = sbr.rel (%p374) target = $region44
      $region43: #{csp_dark_forward.26} parent=23 // pred_region
        %p377 = scmp.lt.s32.totalorder %s24, 1
        %s378 = scalar_select %p377, %s24, 1
        %s379 = scalar_lea.vmem %s6, %s378
      $region44: #{csp_dark_forward.26} parent=23 // pred_fallthru
        _
      // Predicated region
      $region45: #{csp_dark_forward.26} parent=23 // pred_check
        %p380 = pneg %p225
      $region46: #{csp_dark_forward.26} parent=23 // pred_check_branch
        %382 = sbr.rel (%p380) target = $region48
      $region47: #{csp_dark_forward.26} parent=23 // pred_region
        %p383 = scmp.lt.s32.totalorder %s24, 1
        %s384 = scalar_select %p383, %s24, 1
        %s385 = scalar_lea.vmem %s7, %s384
      $region48: #{csp_dark_forward.26} parent=23 // pred_fallthru
        _
    $region24: #{csp_dark_forward.26} parent=5 // pred_fallthru
      _
    %p386 = scmp.le.s32.totalorder 1, %s17
    %p387 = scmp.lt.s32.totalorder %s17, 3
    %p388 = pnand %p386, %p387
    %p389 = pneg %p388
    // Predicated region
    $region49: #{csp_dark_forward.26} parent=5 // pred_check
      _
    $region50: #{csp_dark_forward.26} parent=5 // pred_check_branch
      %391 = sbr.rel (%p388) target = $region52
    $region51: #{csp_dark_forward.26} parent=5 // pred_region
      %s392 = ssub.s32 %s17, 1
      %s393 = smul.u32 8, %s27
      %p394 = scmp.lt.s32.totalorder %s26, 1
      %s395 = scalar_select %p394, %s26, 1
      %p396 = scmp.lt.s32.totalorder %s393, 7
      %s397 = scalar_select %p396, %s393, 7
      %s398 = smul.addr %s395, 8
      %s399 = sadd.s32 %s397, %s398
      %s400 = smul.addr %s399, 4
      %s401 = scalar_lea.vmem %s0, %s400
      %p402 = pneg %p57
      %p403 = pneg %p54
      %p404 = pneg %p78
      %p405 = pneg %p75
      %p406 = scmp.lt.s32.totalorder %s26, 1
      %s407 = scalar_select %p406, %s26, 1
      %s408 = scalar_lea.vmem %s2, %s407
      %p409 = pneg %p104
      %p410 = pneg %p101
      %p411 = scmp.lt.s32.totalorder %s26, 1
      %s412 = scalar_select %p411, %s26, 1
      %s413 = scalar_lea.vmem %s3, %s412
      %p414 = pneg %p130
      %p415 = pneg %p127
      %s416 = smul.u32 8, %s27
      %p417 = scmp.lt.s32.totalorder %s26, 1
      %s418 = scalar_select %p417, %s26, 1
      %p419 = scmp.lt.s32.totalorder %s416, 7
      %s420 = scalar_select %p419, %s416, 7
      %s421 = smul.addr %s418, 8
      %s422 = sadd.s32 %s420, %s421
      %s423 = smul.addr %s422, 4
      %s424 = scalar_lea.vmem %s4, %s423
      %p425 = pneg %p158
      %p426 = pneg %p155
      %p427 = pneg %p179
      %p428 = pneg %p176
      %p429 = scmp.lt.s32.totalorder %s26, 1
      %s430 = scalar_select %p429, %s26, 1
      %s431 = scalar_lea.vmem %s6, %s430
      %p432 = pneg %p205
      %p433 = pneg %p202
      %p434 = scmp.lt.s32.totalorder %s26, 1
      %s435 = scalar_select %p434, %s26, 1
      %s436 = scalar_lea.vmem %s7, %s435
      %p437 = pneg %p231
      %p438 = pneg %p228
      %p439 = pneg %p259
      %p440 = pneg %p256
      %s441 = smul.u32 8, %s27
      %p442 = scmp.lt.s32.totalorder %s26, 1
      %s443 = scalar_select %p442, %s26, 1
      %p444 = scmp.lt.s32.totalorder %s441, 7
      %s445 = scalar_select %p444, %s441, 7
      %s446 = smul.addr %s443, 8
      %s447 = sadd.s32 %s445, %s446
      %s448 = smul.addr %s447, 4
      %s449 = scalar_lea.vmem %s8, %s448
      %p450 = pneg %p285
      %p451 = pneg %p282
      %p452 = scmp.lt.s32.totalorder %s26, 1
      %s453 = scalar_select %p452, %s26, 1
      %s454 = scalar_lea.vmem %s9, %s453
      %p455 = pneg %p311
      %p456 = pneg %p308
      %p457 = scmp.lt.s32.totalorder %s26, 1
      %s458 = scalar_select %p457, %s26, 1
      %s459 = scalar_lea.vmem %s10, %s458
      %s460 = smul.u32 8, %s27
      %p461 = scmp.lt.s32.totalorder %s26, 1
      %s462 = scalar_select %p461, %s26, 1
      %p463 = scmp.lt.s32.totalorder %s460, 7
      %s464 = scalar_select %p463, %s460, 7
      %s465 = smul.addr %s462, 8
      %s466 = sadd.s32 %s464, %s465
      %s467 = smul.addr %s466, 4
      %s468 = scalar_lea.vmem %s0, %s467
      %s469 = smul.u32 8, %s27
      %p470 = scmp.lt.s32.totalorder %s26, 1
      %s471 = scalar_select %p470, %s26, 1
      %s472 = scalar_lea.vmem %s2, %s471
      %p473 = scmp.lt.s32.totalorder %s26, 1
      %s474 = scalar_select %p473, %s26, 1
      %s475 = scalar_lea.vmem %s3, %s474
      %s476 = smul.u32 8, %s27
      %p477 = scmp.lt.s32.totalorder %s26, 1
      %s478 = scalar_select %p477, %s26, 1
      %p479 = scmp.lt.s32.totalorder %s476, 7
      %s480 = scalar_select %p479, %s476, 7
      %s481 = smul.addr %s478, 8
      %s482 = sadd.s32 %s480, %s481
      %s483 = smul.addr %s482, 4
      %s484 = scalar_lea.vmem %s4, %s483
      %s485 = smul.u32 8, %s27
      %p486 = scmp.lt.s32.totalorder %s26, 1
      %s487 = scalar_select %p486, %s26, 1
      %s488 = scalar_lea.vmem %s6, %s487
      %p489 = scmp.lt.s32.totalorder %s26, 1
      %s490 = scalar_select %p489, %s26, 1
      %s491 = scalar_lea.vmem %s7, %s490
      %s492 = smul.u32 8, %s27
      %p493 = scmp.lt.s32.totalorder %s26, 1
      %s494 = scalar_select %p493, %s26, 1
      %p495 = scmp.lt.s32.totalorder %s492, 7
      %s496 = scalar_select %p495, %s492, 7
      %s497 = smul.addr %s494, 8
      %s498 = sadd.s32 %s496, %s497
      %s499 = smul.addr %s498, 4
      %s500 = scalar_lea.vmem %s8, %s499
      %s501 = smul.u32 8, %s27
      %p502 = scmp.lt.s32.totalorder %s26, 1
      %s503 = scalar_select %p502, %s26, 1
      %s504 = scalar_lea.vmem %s9, %s503
      %p505 = scmp.lt.s32.totalorder %s26, 1
      %s506 = scalar_select %p505, %s26, 1
      %s507 = scalar_lea.vmem %s10, %s506
      %p509 = scmp.eq.s32.totalorder %s27, 0
      // Predicated region
      $region53: #{csp_dark_forward.26} parent=51 // pred_check
        %p510 = pneg %p509
      $region54: #{csp_dark_forward.26} parent=51 // pred_check_branch
        %512 = sbr.rel (%p510) target = $region56
      $region55: #{csp_dark_forward.26} parent=51 // pred_region
        %vm513 = vcmask 57344
        %514 = vst.msk [vmem:[%s504] sm:$0x1] %vm513, 0.0
        %515 = vst.msk [vmem:[%s507] sm:$0x1] %vm513, 0.0
      $region56: #{csp_dark_forward.26} parent=51 // pred_fallthru
        _
      %v516 = vld [vmem:[%s468] sm:$0xf]
      %v517 = vld [vmem:[%s468 + $0x4] sm:$0xf]
      %v518 = vld [vmem:[%s468 + $0x8] sm:$0xf]
      %v519 = vld [vmem:[%s468 + $0xc] sm:$0xf]
      %v520 = vld [vmem:[%s468 + $0x10] sm:$0xf]
      %v521 = vld [vmem:[%s468 + $0x14] sm:$0xf]
      %v522 = vld [vmem:[%s468 + $0x18] sm:$0xf]
      %v523 = vld [vmem:[%s468 + $0x1c] sm:$0xf]
      %v524 = vunpack.c.l.bf16 %v516
      %v525 = vunpack.c.l.bf16 %v517
      %v526 = vunpack.c.l.bf16 %v518
      %v527 = vunpack.c.l.bf16 %v519
      %v528 = vunpack.c.l.bf16 %v520
      %v529 = vunpack.c.l.bf16 %v521
      %v530 = vunpack.c.l.bf16 %v522
      %v531 = vunpack.c.l.bf16 %v523
      %v532 = vld [vmem:[%s472] sm:$0x1]
      %v534 = vlaneseq
      %v535 = vshrl.u32 %v534, 7
      %v536 = vsub.s32 0, %v535
      %v537 = vrot.slane %v532, %v536
      %v539 = vmul.f32 %v524, %v537
      %v540 = vmul.f32 %v525, %v537
      %v541 = vmul.f32 %v526, %v537
      %v542 = vmul.f32 %v527, %v537
      %v543 = vmul.f32 %v528, %v537
      %v544 = vmul.f32 %v529, %v537
      %v545 = vmul.f32 %v530, %v537
      %v546 = vmul.f32 %v531, %v537
      %v547 = vld [vmem:[%s475] sm:$0x1]
      %v549 = vlaneseq
      %v550 = vshrl.u32 %v549, 7
      %v551 = vsub.s32 0, %v550
      %v552 = vrot.slane %v547, %v551
      %v554 = vadd.f32 %v539, %v552
      %v555 = vadd.f32 %v540, %v552
      %v556 = vadd.f32 %v541, %v552
      %v557 = vadd.f32 %v542, %v552
      %v558 = vadd.f32 %v543, %v552
      %v559 = vadd.f32 %v544, %v552
      %v560 = vadd.f32 %v545, %v552
      %v561 = vadd.f32 %v546, %v552
      %v562 = vmax.f32 %v554, 0.0
      %v563 = vmax.f32 %v555, 0.0
      %v564 = vmax.f32 %v556, 0.0
      %v565 = vmax.f32 %v557, 0.0
      %v566 = vmax.f32 %v558, 0.0
      %v567 = vmax.f32 %v559, 0.0
      %v568 = vmax.f32 %v560, 0.0
      %v569 = vmax.f32 %v561, 0.0
      %v570 = vpack.c.bf16 %v563, %v562
      %v571 = vpack.c.bf16 %v565, %v564
      %v572 = vpack.c.bf16 %v567, %v566
      %v573 = vpack.c.bf16 %v569, %v568
      %v574 = vld [vmem:[%s1] sm:$0x3]
      %v575 = vld [vmem:[%s484] sm:$0xf]
      %v576 = vld [vmem:[%s484 + $0x4] sm:$0xf]
      %v577 = vld [vmem:[%s484 + $0x8] sm:$0xf]
      %v578 = vld [vmem:[%s484 + $0xc] sm:$0xf]
      %v579 = vld [vmem:[%s484 + $0x10] sm:$0xf]
      %v580 = vld [vmem:[%s484 + $0x14] sm:$0xf]
      %v581 = vld [vmem:[%s484 + $0x18] sm:$0xf]
      %v582 = vld [vmem:[%s484 + $0x1c] sm:$0xf]
      %v583 = vunpack.c.l.bf16 %v575
      %v584 = vunpack.c.l.bf16 %v576
      %v585 = vunpack.c.l.bf16 %v577
      %v586 = vunpack.c.l.bf16 %v578
      %v587 = vunpack.c.l.bf16 %v579
      %v588 = vunpack.c.l.bf16 %v580
      %v589 = vunpack.c.l.bf16 %v581
      %v590 = vunpack.c.l.bf16 %v582
      %v591 = vld [vmem:[%s488] sm:$0x1]
      %v593 = vlaneseq
      %v594 = vshrl.u32 %v593, 7
      %v595 = vsub.s32 0, %v594
      %v596 = vrot.slane %v591, %v595
      %v598 = vmul.f32 %v583, %v596
      %v599 = vmul.f32 %v584, %v596
      %v600 = vmul.f32 %v585, %v596
      %v601 = vmul.f32 %v586, %v596
      %v602 = vmul.f32 %v587, %v596
      %v603 = vmul.f32 %v588, %v596
      %v604 = vmul.f32 %v589, %v596
      %v605 = vmul.f32 %v590, %v596
      %v606 = vld [vmem:[%s491] sm:$0x1]
      %v608 = vlaneseq
      %v609 = vshrl.u32 %v608, 7
      %v610 = vsub.s32 0, %v609
      %v611 = vrot.slane %v606, %v610
      %v613 = vadd.f32 %v598, %v611
      %v614 = vadd.f32 %v599, %v611
      %v615 = vadd.f32 %v600, %v611
      %v616 = vadd.f32 %v601, %v611
      %v617 = vadd.f32 %v602, %v611
      %v618 = vadd.f32 %v603, %v611
      %v619 = vadd.f32 %v604, %v611
      %v620 = vadd.f32 %v605, %v611
      %v621 = vmax.f32 %v613, 0.0
      %v622 = vmax.f32 %v614, 0.0
      %v623 = vmax.f32 %v615, 0.0
      %v624 = vmax.f32 %v616, 0.0
      %v625 = vmax.f32 %v617, 0.0
      %v626 = vmax.f32 %v618, 0.0
      %v627 = vmax.f32 %v619, 0.0
      %v628 = vmax.f32 %v620, 0.0
      %v629 = vpack.c.bf16 %v622, %v621
      %v630 = vpack.c.bf16 %v624, %v623
      %v631 = vpack.c.bf16 %v626, %v625
      %v632 = vpack.c.bf16 %v628, %v627
      %v633 = vld [vmem:[%s5] sm:$0x3]
      %vm634 = vcmask 31744
      %v636 = vsel %vm634, %v629, 0
      %v639 = vsel %vm634, %v630, 0
      %v642 = vsel %vm634, %v631, 0
      %v645 = vsel %vm634, %v632, 0
      %vm647 = vcmask 1041408
      %v649 = vsel %vm647, %v633, 0
      %651 = vmatprep.subr.bf16.mxu0 0
      %652 = vmatpush1.bf16.msra.mxu0 %v649
      %653 = vmatprep.subr.bf16.mxu0 0
      %654 = vmatpush1.bf16.msra.mxu0 0
      %655 = vmatprep.subr.bf16.mxu0 0
      %656 = vmatpush1.bf16.msra.mxu0 0
      %657 = vmatprep.subr.bf16.mxu0 0
      %658 = vmatpush1.bf16.msra.mxu0 0
      %659 = vmatprep.subr.bf16.mxu0 0
      %660 = vmatpush1.bf16.msra.mxu0 0
      %661 = vmatprep.subr.bf16.mxu0 0
      %662 = vmatpush1.bf16.msra.mxu0 0
      %663 = vmatprep.subr.bf16.mxu0 0
      %664 = vmatpush1.bf16.msra.mxu0 0
      %665 = vmatprep.subr.bf16.mxu0 0
      %666 = vmatpush1.bf16.msra.mxu0 0
      %667 = vmatprep.subr.bf16.mxu0 0
      %668 = vmatpush1.bf16.msra.mxu0 0
      %669 = vmatprep.subr.bf16.mxu0 0
      %670 = vmatpush1.bf16.msra.mxu0 0
      %671 = vmatprep.subr.bf16.mxu0 0
      %672 = vmatpush1.bf16.msra.mxu0 0
      %673 = vmatprep.subr.bf16.mxu0 0
      %674 = vmatpush1.bf16.msra.mxu0 0
      %675 = vmatprep.subr.bf16.mxu0 0
      %676 = vmatpush1.bf16.msra.mxu0 0
      %677 = vmatprep.subr.bf16.mxu0 0
      %678 = vmatpush1.bf16.msra.mxu0 0
      %679 = vmatprep.subr.bf16.mxu0 0
      %680 = vmatpush1.bf16.msra.mxu0 0
      %681 = vmatprep.subr.bf16.mxu0 0
      %682 = vmatpush1.bf16.msra.mxu0 0
      %683 = vmatprep.mubr.bf16.mxu0 0
      %684 = vmatmul.mubr.bf16.gmra.mrb[0].mxu0 %v636
      %v685 = vpop.f32.mrb[0].mxu0
      %v686 = vadd.f32 0.0, %v685
      %v687 = vpop.f32.mrb[0].mxu0
      %v688 = vpop.f32.mrb[0].mxu0
      %v689 = vadd.f32 0.0, %v688
      %v690 = vpop.f32.mrb[0].mxu0
      %691 = vmatprep.mubr.bf16.mxu0 0
      %692 = vmatmul.mubr.bf16.gmra.mrb[0].mxu0 %v639
      %v693 = vpop.f32.mrb[0].mxu0
      %v694 = vadd.f32 0.0, %v693
      %v695 = vpop.f32.mrb[0].mxu0
      %v696 = vpop.f32.mrb[0].mxu0
      %v697 = vadd.f32 0.0, %v696
      %v698 = vpop.f32.mrb[0].mxu0
      %699 = vmatprep.mubr.bf16.mxu0 0
      %700 = vmatmul.mubr.bf16.gmra.mrb[0].mxu0 %v642
      %v701 = vpop.f32.mrb[0].mxu0
      %v702 = vadd.f32 0.0, %v701
      %v703 = vpop.f32.mrb[0].mxu0
      %v704 = vpop.f32.mrb[0].mxu0
      %v705 = vadd.f32 0.0, %v704
      %v706 = vpop.f32.mrb[0].mxu0
      %707 = vmatprep.mubr.bf16.mxu0 0
      %708 = vmatmul.mubr.bf16.gmra.mrb[0].mxu0 %v645
      %v709 = vpop.f32.mrb[0].mxu0
      %v710 = vadd.f32 0.0, %v709
      %v711 = vpop.f32.mrb[0].mxu0
      %v712 = vpop.f32.mrb[0].mxu0
      %v713 = vadd.f32 0.0, %v712
      %v714 = vpop.f32.mrb[0].mxu0
      %715 = vdwg.mxu0
      %v717 = vsel %vm634, %v570, 0
      %v720 = vsel %vm634, %v571, 0
      %v723 = vsel %vm634, %v572, 0
      %v726 = vsel %vm634, %v573, 0
      %v729 = vsel %vm647, %v574, 0
      %731 = vmatprep.subr.bf16.mxu0 0
      %732 = vmatpush1.bf16.msra.mxu0 %v729
      %733 = vmatprep.subr.bf16.mxu0 0
      %734 = vmatpush1.bf16.msra.mxu0 0
      %735 = vmatprep.subr.bf16.mxu0 0
      %736 = vmatpush1.bf16.msra.mxu0 0
      %737 = vmatprep.subr.bf16.mxu0 0
      %738 = vmatpush1.bf16.msra.mxu0 0
      %739 = vmatprep.subr.bf16.mxu0 0
      %740 = vmatpush1.bf16.msra.mxu0 0
      %741 = vmatprep.subr.bf16.mxu0 0
      %742 = vmatpush1.bf16.msra.mxu0 0
      %743 = vmatprep.subr.bf16.mxu0 0
      %744 = vmatpush1.bf16.msra.mxu0 0
      %745 = vmatprep.subr.bf16.mxu0 0
      %746 = vmatpush1.bf16.msra.mxu0 0
      %747 = vmatprep.subr.bf16.mxu0 0
      %748 = vmatpush1.bf16.msra.mxu0 0
      %749 = vmatprep.subr.bf16.mxu0 0
      %750 = vmatpush1.bf16.msra.mxu0 0
      %751 = vmatprep.subr.bf16.mxu0 0
      %752 = vmatpush1.bf16.msra.mxu0 0
      %753 = vmatprep.subr.bf16.mxu0 0
      %754 = vmatpush1.bf16.msra.mxu0 0
      %755 = vmatprep.subr.bf16.mxu0 0
      %756 = vmatpush1.bf16.msra.mxu0 0
      %757 = vmatprep.subr.bf16.mxu0 0
      %758 = vmatpush1.bf16.msra.mxu0 0
      %759 = vmatprep.subr.bf16.mxu0 0
      %760 = vmatpush1.bf16.msra.mxu0 0
      %761 = vmatprep.subr.bf16.mxu0 0
      %762 = vmatpush1.bf16.msra.mxu0 0
      %763 = vmatprep.mubr.bf16.mxu0 0
      %764 = vmatmul.mubr.bf16.gmra.mrb[0].mxu0 %v717
      %v765 = vpop.f32.mrb[0].mxu0
      %v766 = vadd.f32 %v686, %v765
      %v767 = vpop.f32.mrb[0].mxu0
      %v768 = vpop.f32.mrb[0].mxu0
      %v769 = vadd.f32 %v689, %v768
      %v770 = vpop.f32.mrb[0].mxu0
      %771 = vmatprep.mubr.bf16.mxu0 0
      %772 = vmatmul.mubr.bf16.gmra.mrb[0].mxu0 %v720
      %v773 = vpop.f32.mrb[0].mxu0
      %v774 = vadd.f32 %v694, %v773
      %v775 = vpop.f32.mrb[0].mxu0
      %v776 = vpop.f32.mrb[0].mxu0
      %v777 = vadd.f32 %v697, %v776
      %v778 = vpop.f32.mrb[0].mxu0
      %779 = vmatprep.mubr.bf16.mxu0 0
      %780 = vmatmul.mubr.bf16.gmra.mrb[0].mxu0 %v723
      %v781 = vpop.f32.mrb[0].mxu0
      %v782 = vadd.f32 %v702, %v781
      %v783 = vpop.f32.mrb[0].mxu0
      %v784 = vpop.f32.mrb[0].mxu0
      %v785 = vadd.f32 %v705, %v784
      %v786 = vpop.f32.mrb[0].mxu0
      %787 = vmatprep.mubr.bf16.mxu0 0
      %788 = vmatmul.mubr.bf16.gmra.mrb[0].mxu0 %v726
      %v789 = vpop.f32.mrb[0].mxu0
      %v790 = vadd.f32 %v710, %v789
      %v791 = vpop.f32.mrb[0].mxu0
      %v792 = vpop.f32.mrb[0].mxu0
      %v793 = vadd.f32 %v713, %v792
      %v794 = vpop.f32.mrb[0].mxu0
      %795 = vdwg.mxu0
      %v796 = vpack.c.bf16 %v769, %v766
      %v797 = vpack.c.bf16 %v777, %v774
      %v798 = vpack.c.bf16 %v785, %v782
      %v799 = vpack.c.bf16 %v793, %v790
      %v804 = vunpack.c.l.b16 %v796
      %v805 = vunpack.c.h.b16 %v796
      %v806 = vunpack.c.l.b16 %v797
      %v807 = vunpack.c.h.b16 %v797
      %v808 = vunpack.c.l.b16 %v798
      %v809 = vunpack.c.h.b16 %v798
      %v810 = vunpack.c.l.b16 %v799
      %v811 = vunpack.c.h.b16 %v799
      %v812 = vpack.c.b16 %v804, %v804
      %v813 = vpack.c.b16 %v805, %v805
      %v814 = vpack.c.b16 %v806, %v806
      %v815 = vpack.c.b16 %v807, %v807
      %v816 = vpack.c.b16 %v808, %v808
      %v817 = vpack.c.b16 %v809, %v809
      %v818 = vpack.c.b16 %v810, %v810
      %v819 = vpack.c.b16 %v811, %v811
      %vm828 = vcmask 60416
      %829 = vst.msk [vmem:[%s500] sm:$0xf] %vm828, %v812
      %830 = vst.msk [vmem:[%s500 + $0x4] sm:$0xf] %vm828, %v813
      %831 = vst.msk [vmem:[%s500 + $0x8] sm:$0xf] %vm828, %v814
      %832 = vst.msk [vmem:[%s500 + $0xc] sm:$0xf] %vm828, %v815
      %833 = vst.msk [vmem:[%s500 + $0x10] sm:$0xf] %vm828, %v816
      %834 = vst.msk [vmem:[%s500 + $0x14] sm:$0xf] %vm828, %v817
      %835 = vst.msk [vmem:[%s500 + $0x18] sm:$0xf] %vm828, %v818
      %836 = vst.msk [vmem:[%s500 + $0x1c] sm:$0xf] %vm828, %v819
      %v837 = vld [vmem:[%s504] sm:$0x1]
      %vm838 = vcmask 64512
      %v839 = vsel %vm838, %v766, 0.0
      %v840 = vsel %vm838, %v769, 0.0
      %v841 = vadd.f32 %v839, %v840
      %v842 = vsel %vm838, %v774, 0.0
      %v843 = vadd.f32 %v841, %v842
      %v844 = vsel %vm838, %v777, 0.0
      %v845 = vadd.f32 %v843, %v844
      %v846 = vsel %vm838, %v782, 0.0
      %v847 = vadd.f32 %v845, %v846
      %v848 = vsel %vm838, %v785, 0.0
      %v849 = vadd.f32 %v847, %v848
      %v850 = vsel %vm838, %v790, 0.0
      %v851 = vadd.f32 %v849, %v850
      %v852 = vsel %vm838, %v793, 0.0
      %v853 = vadd.f32 %v851, %v852
      %v854 = vrot.slane %v853, 4
      %v855 = vadd.f32 %v853, %v854
      %v856 = vrot.slane %v855, 2
      %v857 = vadd.f32 %v855, %v856
      %v858 = vrot.slane %v857, 1
      %v859 = vadd.f32 %v857, %v858
      %v860 = vadd.f32 %v837, %v859
      %vm861 = vcmask 57344
      %862 = vst.msk [vmem:[%s504] sm:$0x1] %vm861, %v860
      %v863 = vld [vmem:[%s507] sm:$0x1]
      %v864 = vmul.f32 %v766, %v766
      %v865 = vmul.f32 %v769, %v769
      %v866 = vmul.f32 %v774, %v774
      %v867 = vmul.f32 %v777, %v777
      %v868 = vmul.f32 %v782, %v782
      %v869 = vmul.f32 %v785, %v785
      %v870 = vmul.f32 %v790, %v790
      %v871 = vmul.f32 %v793, %v793
      %v872 = vsel %vm838, %v864, 0.0
      %v873 = vsel %vm838, %v865, 0.0
      %v874 = vadd.f32 %v872, %v873
      %v875 = vsel %vm838, %v866, 0.0
      %v876 = vadd.f32 %v874, %v875
      %v877 = vsel %vm838, %v867, 0.0
      %v878 = vadd.f32 %v876, %v877
      %v879 = vsel %vm838, %v868, 0.0
      %v880 = vadd.f32 %v878, %v879
      %v881 = vsel %vm838, %v869, 0.0
      %v882 = vadd.f32 %v880, %v881
      %v883 = vsel %vm838, %v870, 0.0
      %v884 = vadd.f32 %v882, %v883
      %v885 = vsel %vm838, %v871, 0.0
      %v886 = vadd.f32 %v884, %v885
      %v887 = vrot.slane %v886, 4
      %v888 = vadd.f32 %v886, %v887
      %v889 = vrot.slane %v888, 2
      %v890 = vadd.f32 %v888, %v889
      %v891 = vrot.slane %v890, 1
      %v892 = vadd.f32 %v890, %v891
      %v893 = vadd.f32 %v863, %v892
      %894 = vst.msk [vmem:[%s507] sm:$0x1] %vm861, %v893
      %s895 = smul.u32 8, %s27
      %p896 = scmp.lt.s32.totalorder %s26, 1
      %s897 = scalar_select %p896, %s26, 1
      %p898 = scmp.lt.s32.totalorder %s895, 7
      %s899 = scalar_select %p898, %s895, 7
      %s900 = smul.addr %s897, 8
      %s901 = sadd.s32 %s899, %s900
      %s902 = smul.addr %s901, 4
      %s903 = scalar_lea.vmem %s8, %s902
      %p904 = scmp.lt.s32.totalorder %s26, 1
      %s905 = scalar_select %p904, %s26, 1
      %s906 = scalar_lea.vmem %s9, %s905
      %p907 = scmp.lt.s32.totalorder %s26, 1
      %s908 = scalar_select %p907, %s26, 1
      %s909 = scalar_lea.vmem %s10, %s908
      // Predicated region
      $region57: #{csp_dark_forward.26} parent=51 // pred_check
        %p910 = pneg %p256
      $region58: #{csp_dark_forward.26} parent=51 // pred_check_branch
        %912 = sbr.rel (%p910) target = $region60
      $region59: #{csp_dark_forward.26} parent=51 // pred_region
        %s913 = smul.u32 8, %s27
      $region60: #{csp_dark_forward.26} parent=51 // pred_fallthru
        _
      // Predicated region
      $region61: #{csp_dark_forward.26} parent=51 // pred_check
        %p914 = pneg %p282
      $region62: #{csp_dark_forward.26} parent=51 // pred_check_branch
        %916 = sbr.rel (%p914) target = $region64
      $region63: #{csp_dark_forward.26} parent=51 // pred_region
        _
      $region64: #{csp_dark_forward.26} parent=51 // pred_fallthru
        _
      // Predicated region
      $region65: #{csp_dark_forward.26} parent=51 // pred_check
        %p917 = pneg %p308
      $region66: #{csp_dark_forward.26} parent=51 // pred_check_branch
        %919 = sbr.rel (%p917) target = $region68
      $region67: #{csp_dark_forward.26} parent=51 // pred_region
        _
      $region68: #{csp_dark_forward.26} parent=51 // pred_fallthru
        _
    $region52: #{csp_dark_forward.26} parent=5 // pred_fallthru
      _
    %p920 = scmp.le.s32.totalorder 2, %s17
    // Predicated region
    $region69: #{csp_dark_forward.26} parent=5 // pred_check
      %p921 = pneg %p920
    $region70: #{csp_dark_forward.26} parent=5 // pred_check_branch
      %923 = sbr.rel (%p921) target = $region72
    $region71: #{csp_dark_forward.26} parent=5 // pred_region
      %s924 = ssub.s32 %s17, 2
      // Predicated region
      $region73: #{csp_dark_forward.26} parent=71 // pred_check
        %p925 = pneg %p262
      $region74: #{csp_dark_forward.26} parent=71 // pred_check_branch
        %927 = sbr.rel (%p925) target = $region76
      $region75: #{csp_dark_forward.26} parent=71 // pred_region
        %s928 = smul.u32 8, %s29
        %p929 = scmp.lt.s32.totalorder %s28, 1
        %s930 = scalar_select %p929, %s28, 1
        %p931 = scmp.lt.s32.totalorder %s928, 7
        %s932 = scalar_select %p931, %s928, 7
        %s933 = smul.addr %s930, 8
        %s934 = sadd.s32 %s932, %s933
        %s935 = smul.addr %s934, 4
        %s936 = scalar_lea.vmem %s8, %s935
      $region76: #{csp_dark_forward.26} parent=71 // pred_fallthru
        _
      // Predicated region
      $region77: #{csp_dark_forward.26} parent=71 // pred_check
        %p937 = pneg %p288
      $region78: #{csp_dark_forward.26} parent=71 // pred_check_branch
        %939 = sbr.rel (%p937) target = $region80
      $region79: #{csp_dark_forward.26} parent=71 // pred_region
        %p940 = scmp.lt.s32.totalorder %s28, 1
        %s941 = scalar_select %p940, %s28, 1
        %s942 = scalar_lea.vmem %s9, %s941
      $region80: #{csp_dark_forward.26} parent=71 // pred_fallthru
        _
      // Predicated region
      $region81: #{csp_dark_forward.26} parent=71 // pred_check
        %p943 = pneg %p314
      $region82: #{csp_dark_forward.26} parent=71 // pred_check_branch
        %945 = sbr.rel (%p943) target = $region84
      $region83: #{csp_dark_forward.26} parent=71 // pred_region
        %p946 = scmp.lt.s32.totalorder %s28, 1
        %s947 = scalar_select %p946, %s28, 1
        %s948 = scalar_lea.vmem %s10, %s947
      $region84: #{csp_dark_forward.26} parent=71 // pred_fallthru
        _
    $region72: #{csp_dark_forward.26} parent=5 // pred_fallthru
      _
  $region6: #{csp_dark_forward.26} parent=0 // loop_footer
    %s21 = sadd.s32 1, %s17
  $region7: #{csp_dark_forward.26} parent=0 // loop_footer_branch
    %16 = sbr.rel target = $region3
  $region8: #{csp_dark_forward.26} parent=0 // loop_exit
    _

</llo_original>
